<compile_context>
chip_gen: v6e
topology: v6e:2x2x1
jax: 0.10.0
libtpu: 0.0.40
codegen_flags: <defaults>
</compile_context>

<pallas_src>
import functools

import jax
import jax.numpy as jnp
from jax.experimental import pallas as pl
from jax.experimental.pallas import tpu as pltpu

_LANE = 128   # channel dims are zero-padded to a multiple of the TPU lane width
_PL = 16      # left zero-pad columns in the halo buffers (bf16 packed-sublane aligned)
_PR = 8       # right zero-pad columns (>= 1 required by the 3x3 taps)


def _round_up(n, m):
    return ((n + m - 1) // m) * m


# ---------------------------------------------------------------------------
# fused kernel:
#   bn1+relu -> conv1(3x3,pad1)+bias -> [dropout=id] -> bn2+relu
#   -> conv2(3x3,pad1,stride)+bias -> + shortcut  (identity or 1x1 conv)
# ---------------------------------------------------------------------------
def _wide_basic_kernel(*refs, H, W, Ho, stride, co_tile, sc_is_conv, cdt):
    if sc_is_conv:
        (x_ref, s1_ref, b1_ref, w1_ref, cb1_ref, s2_ref, b2_ref, w2_ref, cb2_ref,
         wsc_ref, scb_ref,
         o_ref, xpad_ref, hpad_ref, acc1_ref, acc2_ref) = refs
    else:
        (x_ref, s1_ref, b1_ref, w1_ref, cb1_ref, s2_ref, b2_ref, w2_ref, cb2_ref,
         xsc_ref,
         o_ref, xpad_ref, hpad_ref, acc1_ref, acc2_ref) = refs

    Cin = x_ref.shape[-1]
    Cmid = w1_ref.shape[-1]
    j = pl.program_id(1)          # output-channel tile index (inner, "arbitrary")

    # ---- stage 1 (once per image, at the first cout tile) ---------------------
    @pl.when(j == 0)
    def _stage1():
        # Zero the halo buffers once per image; the interiors are fully overwritten
        # below, only the 1-pixel border that the taps read must stay zero. Done
        # per-image (not once per kernel) so it stays correct if the "parallel"
        # batch axis is sharded across TensorCores with per-core scratch.
        xpad_ref[...] = jnp.zeros_like(xpad_ref)
        hpad_ref[...] = jnp.zeros_like(hpad_ref)

        x = x_ref[0].astype(jnp.float32)                          # (H, W, Cin)
        act = jnp.maximum(x * s1_ref[0] + b1_ref[0], 0.0)         # bn1 fold + relu
        xpad_ref[1:H + 1, _PL:_PL + W, :] = act.astype(cdt)       # aligned interior

        # conv1: 9 taps, each a lane-dense MXU dot, accumulated in a f32 VMEM scratch.
        # (taps keep K = Cin_padded >= 128; row-strip im2col with K=3*Cin is a possible
        #  further MXU optimization at the cost of extra VMEM copies.)
        t = 0
        for dh in range(3):
            for dw in range(3):
                patch = xpad_ref[dh:dh + H, _PL - 1 + dw:_PL - 1 + dw + W, :]
                part = jnp.dot(patch.reshape(H * W, Cin), w1_ref[dh, dw],
                               preferred_element_type=jnp.float32)
                if t == 0:
                    acc1_ref[...] = part       # first tap initializes (no zero store)
                else:
                    acc1_ref[...] += part
                t += 1

        # conv1 bias (dropout = identity in eval) + bn2 fold + relu, kept resident.
        h = jnp.maximum((acc1_ref[...] + cb1_ref[0]) * s2_ref[0] + b2_ref[0], 0.0)
        hpad_ref[1:H + 1, _PL:_PL + W, :] = h.reshape(H, W, Cmid).astype(cdt)

    # ---- stage 2 (every cout tile): conv2 + bias + shortcut --------------------
    # stride handling: rows are phase-selected with a layout-free leading-dim reshape;
    # columns stay dense (the wrapper subsamples W afterwards), so there is no
    # sublane-strided access or reshape-phase-split relayout inside the kernel.
    def conv2_tap(dh, dw):
        rows = hpad_ref[dh:dh + H, _PL - 1 + dw:_PL - 1 + dw + W, :]   # (H, W, Cmid)
        if stride > 1:
            rows = rows.reshape(Ho, stride, W, Cmid)[:, 0]             # rows dh + i*stride
        return jnp.dot(rows.reshape(Ho * W, Cmid), w2_ref[dh, dw],
                       preferred_element_type=jnp.float32)

    t = 0
    for dh in range(3):
        for dw in range(3):
            part = conv2_tap(dh, dw)
            if t == 0:
                acc2_ref[...] = part
            else:
                acc2_ref[...] += part
            t += 1

    res = acc2_ref[...] + cb2_ref[0]                                   # (Ho*W, co_tile)

    if sc_is_conv:
        xs = x_ref[0]                                                  # (H, W, Cin)
        if stride > 1:
            xs = xs.reshape(Ho, stride, W, Cin)[:, 0]
        sc = jnp.dot(xs.reshape(Ho * W, Cin), wsc_ref[...],
                     preferred_element_type=jnp.float32) + scb_ref[0]
    else:
        # identity shortcut (stride == 1, Cin == Cout): cout-tiled channel slab of x
        sc = xsc_ref[0].reshape(Ho * W, co_tile).astype(jnp.float32)

    o_ref[...] = (res + sc).reshape(1, Ho, W, co_tile)


# ---------------------------------------------------------------------------
# pallas_call wrapper
# ---------------------------------------------------------------------------
def _wide_basic_block(x_p, q, *, stride, sc_is_conv, compute_dtype, co_tile=None):
    B, H, W, Cin_p = x_p.shape
    C_p = q["w1"].shape[-1]
    Ho = H // stride
    if co_tile is None:
        co_tile = 256 if C_p % 256 == 0 else 128
    assert C_p % co_tile == 0 and co_tile % _LANE == 0
    n_co = C_p // co_tile
    Wp = W + _PL + _PR

    kernel = functools.partial(
        _wide_basic_kernel, H=H, W=W, Ho=Ho, stride=stride,
        co_tile=co_tile, sc_is_conv=sc_is_conv, cdt=compute_dtype)

    in_specs = [
        pl.BlockSpec((1, H, W, Cin_p), lambda b, j: (b, 0, 0, 0)),      # x
        pl.BlockSpec((1, Cin_p), lambda b, j: (0, 0)),                  # bn1 scale
        pl.BlockSpec((1, Cin_p), lambda b, j: (0, 0)),                  # bn1 bias
        pl.BlockSpec((3, 3, Cin_p, C_p), lambda b, j: (0, 0, 0, 0)),    # conv1 w (resident)
        pl.BlockSpec((1, C_p), lambda b, j: (0, 0)),                    # conv1 bias
        pl.BlockSpec((1, C_p), lambda b, j: (0, 0)),                    # bn2 scale
        pl.BlockSpec((1, C_p), lambda b, j: (0, 0)),                    # bn2 bias
        pl.BlockSpec((3, 3, C_p, co_tile), lambda b, j: (0, 0, 0, j)),  # conv2 w (cout-tiled)
        pl.BlockSpec((1, co_tile), lambda b, j: (0, j)),                # conv2 bias
    ]
    inputs = [x_p, q["s1"], q["b1"], q["w1"], q["cb1"], q["s2"], q["b2"],
              q["w2"], q["cb2"]]
    if sc_is_conv:
        in_specs += [pl.BlockSpec((Cin_p, co_tile), lambda b, j: (0, j)),   # 1x1 shortcut w
                     pl.BlockSpec((1, co_tile), lambda b, j: (0, j))]       # shortcut bias
        inputs += [q["wsc"], q["scb"]]
    else:
        # identity shortcut: re-read only the cout-tiled channel slab of x (no dummy weights)
        in_specs += [pl.BlockSpec((1, H, W, co_tile), lambda b, j: (b, 0, 0, j))]
        inputs += [x_p]

    return pl.pallas_call(
        kernel,
        out_shape=jax.ShapeDtypeStruct((B, Ho, W, C_p), jnp.float32),
        grid_spec=pltpu.PrefetchScalarGridSpec(
            num_scalar_prefetch=0,
            grid=(B, n_co),
            in_specs=in_specs,
            out_specs=pl.BlockSpec((1, Ho, W, co_tile), lambda b, j: (b, 0, 0, j)),
            scratch_shapes=[
                pltpu.VMEM((H + 2, Wp, Cin_p), compute_dtype),   # padded relu(bn1(x))
                pltpu.VMEM((H + 2, Wp, C_p), compute_dtype),     # padded relu(bn2(conv1))
                pltpu.VMEM((H * W, C_p), jnp.float32),           # conv1 accumulator
                pltpu.VMEM((Ho * W, co_tile), jnp.float32),      # conv2 accumulator
            ],
        ),
        compiler_params=pltpu.CompilerParams(
            dimension_semantics=("parallel", "arbitrary"),
            vmem_limit_bytes=64 * 1024 * 1024,
        ),
    )(*inputs)


# ---------------------------------------------------------------------------
# parameters (deterministic, matching nn.Module shapes) + BN fold / padding
# ---------------------------------------------------------------------------
def init_params(key, in_planes, planes, stride, use_bn=True):
    ks = jax.random.split(key, 16)
    sc_is_conv = (stride != 1) or (in_planes != planes)
    p = {"sc_is_conv": sc_is_conv}
    p["gamma1"] = 1.0 + 0.1 * jax.random.normal(ks[0], (in_planes,), jnp.float32)
    p["beta1"] = 0.1 * jax.random.normal(ks[1], (in_planes,), jnp.float32)
    p["mean1"] = 0.1 * jax.random.normal(ks[2], (in_planes,), jnp.float32)
    p["var1"] = jax.random.uniform(ks[3], (in_planes,), jnp.float32, 0.5, 1.5)
    p["gamma2"] = 1.0 + 0.1 * jax.random.normal(ks[4], (planes,), jnp.float32)
    p["beta2"] = 0.1 * jax.random.normal(ks[5], (planes,), jnp.float32)
    p["mean2"] = 0.1 * jax.random.normal(ks[6], (planes,), jnp.float32)
    p["var2"] = jax.random.uniform(ks[7], (planes,), jnp.float32, 0.5, 1.5)
    p["w1_oihw"] = jax.random.normal(ks[8], (planes, in_planes, 3, 3), jnp.float32)
    p["w1_oihw"] = p["w1_oihw"] / jnp.sqrt(9.0 * in_planes)
    p["w2_oihw"] = jax.random.normal(ks[9], (planes, planes, 3, 3), jnp.float32)
    p["w2_oihw"] = p["w2_oihw"] / jnp.sqrt(9.0 * planes)
    if sc_is_conv:
        p["wsc_oihw"] = jax.random.normal(ks[10], (planes, in_planes, 1, 1), jnp.float32)
        p["wsc_oihw"] = p["wsc_oihw"] / jnp.sqrt(1.0 * in_planes)
    if use_bn:   # conv bias only exists when use_bn=False (bias = not use_bn)
        p["cb1"] = jnp.zeros((planes,), jnp.float32)
        p["cb2"] = jnp.zeros((planes,), jnp.float32)
        p["scb"] = jnp.zeros((planes,), jnp.float32)
    else:
        p["cb1"] = 0.1 * jax.random.normal(ks[11], (planes,), jnp.float32)
        p["cb2"] = 0.1 * jax.random.normal(ks[12], (planes,), jnp.float32)
        p["scb"] = 0.1 * jax.random.normal(ks[13], (planes,), jnp.float32)
    return p


def _prep(p, in_planes, planes, use_bn, compute_dtype, eps=1e-5):
    """Fold BN (eval) into scale/bias, convert conv weights to HWIO, zero-pad channel
    dims to lane-dense multiples of 128, cast matmul operands to compute_dtype."""
    Cin_p = _round_up(in_planes, _LANE)
    C_p = _round_up(planes, _LANE)
    if use_bn:
        s1 = p["gamma1"] / jnp.sqrt(p["var1"] + eps)
        b1 = p["beta1"] - p["mean1"] * s1
        s2 = p["gamma2"] / jnp.sqrt(p["var2"] + eps)
        b2 = p["beta2"] - p["mean2"] * s2
    else:   # bn skipped in forward -> identity affine
        s1, b1 = jnp.ones((in_planes,), jnp.float32), jnp.zeros((in_planes,), jnp.float32)
        s2, b2 = jnp.ones((planes,), jnp.float32), jnp.zeros((planes,), jnp.float32)

    def padc(v, n):   # zero-pad last dim to n
        return jnp.pad(v, [(0, 0)] * (v.ndim - 1) + [(0, n - v.shape[-1])])

    w1 = jnp.transpose(p["w1_oihw"], (2, 3, 1, 0))       # HWIO (3,3,Cin,Cmid)
    w1 = jnp.pad(w1, ((0, 0), (0, 0), (0, Cin_p - in_planes), (0, C_p - planes)))
    w2 = jnp.transpose(p["w2_oihw"], (2, 3, 1, 0))
    w2 = jnp.pad(w2, ((0, 0), (0, 0), (0, C_p - planes), (0, C_p - planes)))

    q = dict(
        s1=padc(s1, Cin_p)[None].astype(jnp.float32),
        b1=padc(b1, Cin_p)[None].astype(jnp.float32),
        s2=padc(s2, C_p)[None].astype(jnp.float32),
        b2=padc(b2, C_p)[None].astype(jnp.float32),
        cb1=padc(p["cb1"], C_p)[None].astype(jnp.float32),
        cb2=padc(p["cb2"], C_p)[None].astype(jnp.float32),
        w1=w1.astype(compute_dtype),
        w2=w2.astype(compute_dtype),
    )
    if p["sc_is_conv"]:
        wsc = p["wsc_oihw"][:, :, 0, 0].T                 # (Cin, Cout)
        wsc = jnp.pad(wsc, ((0, Cin_p - in_planes), (0, C_p - planes)))
        q["wsc"] = wsc.astype(compute_dtype)
        q["scb"] = padc(p["scb"], C_p)[None].astype(jnp.float32)
    return q


# ---------------------------------------------------------------------------
# public forward (NHWC entry point + NCHW wrapper matching the PyTorch module)
# ---------------------------------------------------------------------------
def wide_basic_forward_nhwc(x_nhwc, params, *, stride, use_bn=True,
                            compute_dtype=jnp.bfloat16, co_tile=None):
    B, H, W, in_planes = x_nhwc.shape
    planes = params["w1_oihw"].shape[0]
    assert H % stride == 0 and W % stride == 0
    sc_is_conv = params["sc_is_conv"]
    if not sc_is_conv:
        assert stride == 1 and in_planes == planes

    q = _prep(params, in_planes, planes, use_bn, compute_dtype)
    Cin_p = q["w1"].shape[2]
    x_p = jnp.pad(x_nhwc.astype(jnp.float32),
                  ((0, 0), (0, 0), (0, 0), (0, Cin_p - in_planes))).astype(compute_dtype)

    out_p = _wide_basic_block(x_p, q, stride=stride, sc_is_conv=sc_is_conv,
                              compute_dtype=compute_dtype, co_tile=co_tile)
    # kernel output is dense in W (stride applied to rows only) and channel-padded;
    # subsample W and drop the channel padding here (cheap fused XLA slice).
    return out_p[:, :, ::stride, :planes]


def wide_basic_forward(x_nchw, params, *, stride, use_bn=True,
                       compute_dtype=jnp.bfloat16, co_tile=None):
    """NCHW wrapper matching the PyTorch module; prefer the NHWC entry point when
    stacking blocks so the transposes are not paid per block."""
    x = jnp.transpose(x_nchw, (0, 2, 3, 1))
    out = wide_basic_forward_nhwc(x, params, stride=stride, use_bn=use_bn,
                                  compute_dtype=compute_dtype, co_tile=co_tile)
    return jnp.transpose(out, (0, 3, 1, 2))


# ---------------------------------------------------------------------------
# pure-JAX reference (f32, lax conv) for correctness checks
# ---------------------------------------------------------------------------
def reference_forward(x_nchw, params, *, stride, use_bn=True, eps=1e-5):
    in_planes = x_nchw.shape[1]
    planes = params["w1_oihw"].shape[0]
    x = jnp.transpose(x_nchw, (0, 2, 3, 1)).astype(jnp.float32)
    if use_bn:
        s1 = params["gamma1"] / jnp.sqrt(params["var1"] + eps)
        b1 = params["beta1"] - params["mean1"] * s1
        s2 = params["gamma2"] / jnp.sqrt(params["var2"] + eps)
        b2 = params["beta2"] - params["mean2"] * s2
    else:
        s1, b1 = jnp.ones((in_planes,)), jnp.zeros((in_planes,))
        s2, b2 = jnp.ones((planes,)), jnp.zeros((planes,))
    w1 = jnp.transpose(params["w1_oihw"], (2, 3, 1, 0))
    w2 = jnp.transpose(params["w2_oihw"], (2, 3, 1, 0))

    def conv(a, w, s, pad):
        return jax.lax.conv_general_dilated(
            a, w, (s, s), [(pad, pad), (pad, pad)],
            dimension_numbers=("NHWC", "HWIO", "NHWC"))

    out = jnp.maximum(x * s1 + b1, 0.0)
    out = conv(out, w1, 1, 1) + params["cb1"]
    out = jnp.maximum(out * s2 + b2, 0.0)
    out = conv(out, w2, stride, 1) + params["cb2"]
    if params["sc_is_conv"]:
        wsc = jnp.transpose(params["wsc_oihw"], (2, 3, 1, 0))
        sc = conv(x, wsc, stride, 0) + params["scb"]
    else:
        sc = x
    return jnp.transpose(out + sc, (0, 3, 1, 2))


# ---------------------------------------------------------------------------
if __name__ == "__main__":
    key = jax.random.PRNGKey(0)
    kx1, kx2, kx3, kp1, kp2, kp3 = jax.random.split(key, 6)
    B, H, W = 2, 16, 16

    # Config A: channel expansion (1x1-conv shortcut), stride=1, f32 compute (tight check)
    in_planes, planes = 4, 8
    xA = jax.random.normal(kx1, (B, in_planes, H, W), jnp.float32)
    pA = init_params(kp1, in_planes, planes, 1, use_bn=True)
    outA = wide_basic_forward(xA, pA, stride=1, use_bn=True, compute_dtype=jnp.float32)
    jax.block_until_ready(outA)
    refA = reference_forward(xA, pA, stride=1, use_bn=True)
    assert outA.shape == (B, planes, H, W)
    assert jnp.allclose(outA, refA, atol=1e-3, rtol=1e-3), "config A mismatch"

    # Config B: identity shortcut (in==out, stride=1), bf16 compute (loose check)
    xB = jax.random.normal(kx2, (B, 8, H, W), jnp.float32)
    pB = init_params(kp2, 8, 8, 1, use_bn=True)
    outB = wide_basic_forward(xB, pB, stride=1, use_bn=True, compute_dtype=jnp.bfloat16)
    jax.block_until_ready(outB)
    refB = reference_forward(xB, pB, stride=1, use_bn=True)
    assert outB.shape == (B, 8, H, W)
    assert jnp.allclose(outB, refB, atol=5e-2, rtol=5e-2), "config B mismatch"

    # Config C: strided block (stride=2, conv shortcut, conv biases via use_bn=False),
    # bf16 compute, forced co_tile=128 so the output-channel grid axis has 2 tiles.
    xC = jax.random.normal(kx3, (B, 8, H, W), jnp.float32)
    pC = init_params(kp3, 8, 136, 2, use_bn=False)
    outC = wide_basic_forward(xC, pC, stride=2, use_bn=False,
                              compute_dtype=jnp.bfloat16, co_tile=128)
    jax.block_until_ready(outC)
    refC = reference_forward(xC, pC, stride=2, use_bn=False)
    assert outC.shape == (B, 136, H // 2, W // 2)
    assert jnp.allclose(outC, refC, atol=5e-2, rtol=5e-2), "config C mismatch"

    print("KERNEL_OK")
</pallas_src>

<mosaic_0001>
module attributes {stable_mosaic.version = 11 : i64} {
  func.func @_wide_basic_kernel(%arg0: i32, %arg1: i32, %arg2: memref<1x16x16x128xf32, #tpu.memory_space<vmem>>, %arg3: memref<1x128xf32, #tpu.memory_space<vmem>>, %arg4: memref<1x128xf32, #tpu.memory_space<vmem>>, %arg5: memref<3x3x128x128xf32, #tpu.memory_space<vmem>>, %arg6: memref<1x128xf32, #tpu.memory_space<vmem>>, %arg7: memref<1x128xf32, #tpu.memory_space<vmem>>, %arg8: memref<1x128xf32, #tpu.memory_space<vmem>>, %arg9: memref<3x3x128x128xf32, #tpu.memory_space<vmem>>, %arg10: memref<1x128xf32, #tpu.memory_space<vmem>>, %arg11: memref<128x128xf32, #tpu.memory_space<vmem>>, %arg12: memref<1x128xf32, #tpu.memory_space<vmem>>, %arg13: memref<1x16x16x128xf32, #tpu.memory_space<vmem>>, %arg14: memref<18x40x128xf32, #tpu.memory_space<vmem>>, %arg15: memref<18x40x128xf32, #tpu.memory_space<vmem>>, %arg16: memref<256x128xf32, #tpu.memory_space<vmem>>, %arg17: memref<256x128xf32, #tpu.memory_space<vmem>>) attributes {dimension_semantics = [#tpu.dimension_semantics<parallel>, #tpu.dimension_semantics<arbitrary>], iteration_bounds = array<i64: 2, 1>, scalar_prefetch = 0 : i64, scratch_operands = 4 : i64, tpu.core_type = #tpu.core_type<tc>, window_params = [{transform_indices = @transform_0, window_bounds = array<i64: 1, 16, 16, 128>}, {pipeline_mode = #tpu.pipeline_mode<synchronous>, transform_indices = @transform_1, window_bounds = array<i64: 1, 128>}, {pipeline_mode = #tpu.pipeline_mode<synchronous>, transform_indices = @transform_2, window_bounds = array<i64: 1, 128>}, {pipeline_mode = #tpu.pipeline_mode<synchronous>, transform_indices = @transform_3, window_bounds = array<i64: 3, 3, 128, 128>}, {pipeline_mode = #tpu.pipeline_mode<synchronous>, transform_indices = @transform_4, window_bounds = array<i64: 1, 128>}, {pipeline_mode = #tpu.pipeline_mode<synchronous>, transform_indices = @transform_5, window_bounds = array<i64: 1, 128>}, {pipeline_mode = #tpu.pipeline_mode<synchronous>, transform_indices = @transform_6, window_bounds = array<i64: 1, 128>}, {transform_indices = @transform_7, window_bounds = array<i64: 3, 3, 128, 128>}, {transform_indices = @transform_8, window_bounds = array<i64: 1, 128>}, {transform_indices = @transform_9, window_bounds = array<i64: 128, 128>}, {transform_indices = @transform_10, window_bounds = array<i64: 1, 128>}, {transform_indices = @transform_11, window_bounds = array<i64: 1, 16, 16, 128>}]} {
    %c0_i32 = arith.constant 0 : i32
    %0 = arith.cmpi eq, %arg1, %c0_i32 : i32
    %1 = arith.extui %0 : i1 to i32
    %c0_i32_0 = arith.constant 0 : i32
    %2 = arith.cmpi ne, %1, %c0_i32_0 : i32
    scf.if %2 {
      %cst_117 = arith.constant 0.000000e+00 : f32
      %92 = vector.broadcast %cst_117 : f32 to vector<18x40x128xf32>
      %c0_118 = arith.constant 0 : index
      %c0_119 = arith.constant 0 : index
      %c0_120 = arith.constant 0 : index
      %93 = vector.load %arg14[%c0_118, %c0_119, %c0_120] : memref<18x40x128xf32, #tpu.memory_space<vmem>>, vector<18x40x128xf32>
      tpu.vector_store %arg14[%c0_118, %c0_119, %c0_120], %92 {strides = array<i32>} : memref<18x40x128xf32, #tpu.memory_space<vmem>>, vector<18x40x128xf32>,
      %cst_121 = arith.constant 0.000000e+00 : f32
      %94 = vector.broadcast %cst_121 : f32 to vector<18x40x128xf32>
      %c0_122 = arith.constant 0 : index
      %c0_123 = arith.constant 0 : index
      %c0_124 = arith.constant 0 : index
      %95 = vector.load %arg15[%c0_122, %c0_123, %c0_124] : memref<18x40x128xf32, #tpu.memory_space<vmem>>, vector<18x40x128xf32>
      tpu.vector_store %arg15[%c0_122, %c0_123, %c0_124], %94 {strides = array<i32>} : memref<18x40x128xf32, #tpu.memory_space<vmem>>, vector<18x40x128xf32>,
      %c0_125 = arith.constant 0 : index
      %c0_126 = arith.constant 0 : index
      %c0_127 = arith.constant 0 : index
      %c0_128 = arith.constant 0 : index
      %96 = vector.load %arg2[%c0_125, %c0_126, %c0_127, %c0_128] : memref<1x16x16x128xf32, #tpu.memory_space<vmem>>, vector<1x16x16x128xf32>
      %97 = vector.shape_cast %96 : vector<1x16x16x128xf32> to vector<16x16x128xf32>
      %c0_129 = arith.constant 0 : index
      %c0_130 = arith.constant 0 : index
      %98 = vector.load %arg3[%c0_129, %c0_130] : memref<1x128xf32, #tpu.memory_space<vmem>>, vector<1x128xf32>
      %99 = vector.shape_cast %98 : vector<1x128xf32> to vector<128xf32>
      %100 = vector.shape_cast %99 : vector<128xf32> to vector<1x1x128xf32>
      %101 = vector.broadcast %100 : vector<1x1x128xf32> to vector<16x16x128xf32>
      %102 = arith.mulf %97, %101 : vector<16x16x128xf32>
      %c0_131 = arith.constant 0 : index
      %c0_132 = arith.constant 0 : index
      %103 = vector.load %arg4[%c0_131, %c0_132] : memref<1x128xf32, #tpu.memory_space<vmem>>, vector<1x128xf32>
      %104 = vector.shape_cast %103 : vector<1x128xf32> to vector<128xf32>
      %105 = vector.shape_cast %104 : vector<128xf32> to vector<1x1x128xf32>
      %106 = vector.broadcast %105 : vector<1x1x128xf32> to vector<16x16x128xf32>
      %107 = arith.addf %102, %106 : vector<16x16x128xf32>
      %cst_133 = arith.constant 0.000000e+00 : f32
      %108 = vector.broadcast %cst_133 : f32 to vector<16x16x128xf32>
      %109 = arith.maximumf %107, %108 : vector<16x16x128xf32>
      %c1_134 = arith.constant 1 : index
      %c16_135 = arith.constant 16 : index
      %c0_136 = arith.constant 0 : index
      %110 = vector.load %arg14[%c1_134, %c16_135, %c0_136] : memref<18x40x128xf32, #tpu.memory_space<vmem>>, vector<16x16x128xf32>
      tpu.vector_store %arg14[%c1_134, %c16_135, %c0_136], %109 {strides = array<i32>} : memref<18x40x128xf32, #tpu.memory_space<vmem>>, vector<16x16x128xf32>,
      %c0_137 = arith.constant 0 : index
      %c15_138 = arith.constant 15 : index
      %c0_139 = arith.constant 0 : index
      %111 = vector.load %arg14[%c0_137, %c15_138, %c0_139] : memref<18x40x128xf32, #tpu.memory_space<vmem>>, vector<16x16x128xf32>
      %112 = vector.shape_cast %111 : vector<16x16x128xf32> to vector<256x128xf32>
      %c0_140 = arith.constant 0 : index
      %c0_141 = arith.constant 0 : index
      %c0_142 = arith.constant 0 : index
      %c0_143 = arith.constant 0 : index
      %113 = vector.load %arg5[%c0_140, %c0_141, %c0_142, %c0_143] : memref<3x3x128x128xf32, #tpu.memory_space<vmem>>, vector<1x1x128x128xf32>
      %114 = vector.shape_cast %113 : vector<1x1x128x128xf32> to vector<128x128xf32>
      %cst_144 = arith.constant dense<0.000000e+00> : vector<256x128xf32>
      %115 = tpu.matmul %112, %114, %cst_144 {dimension_numbers = #tpu.dot_dimension_numbers<[1], [0], [0], [1], [0, 0, 1, 1], [], []>} : vector<256x128xf32>, vector<128x128xf32>, vector<256x128xf32> -> vector<256x128xf32>
      %c0_145 = arith.constant 0 : index
      %c0_146 = arith.constant 0 : index
      %116 = vector.load %arg16[%c0_145, %c0_146] : memref<256x128xf32, #tpu.memory_space<vmem>>, vector<256x128xf32>
      tpu.vector_store %arg16[%c0_145, %c0_146], %115 {strides = array<i32>} : memref<256x128xf32, #tpu.memory_space<vmem>>, vector<256x128xf32>,
      %c0_147 = arith.constant 0 : index
      %c16_148 = arith.constant 16 : index
      %c0_149 = arith.constant 0 : index
      %117 = vector.load %arg14[%c0_147, %c16_148, %c0_149] : memref<18x40x128xf32, #tpu.memory_space<vmem>>, vector<16x16x128xf32>
      %118 = vector.shape_cast %117 : vector<16x16x128xf32> to vector<256x128xf32>
      %c0_150 = arith.constant 0 : index
      %c1_151 = arith.constant 1 : index
      %c0_152 = arith.constant 0 : index
      %c0_153 = arith.constant 0 : index
      %119 = vector.load %arg5[%c0_150, %c1_151, %c0_152, %c0_153] : memref<3x3x128x128xf32, #tpu.memory_space<vmem>>, vector<1x1x128x128xf32>
      %120 = vector.shape_cast %119 : vector<1x1x128x128xf32> to vector<128x128xf32>
      %cst_154 = arith.constant dense<0.000000e+00> : vector<256x128xf32>
      %121 = tpu.matmul %118, %120, %cst_154 {dimension_numbers = #tpu.dot_dimension_numbers<[1], [0], [0], [1], [0, 0, 1, 1], [], []>} : vector<256x128xf32>, vector<128x128xf32>, vector<256x128xf32> -> vector<256x128xf32>
      %c0_155 = arith.constant 0 : index
      %c0_156 = arith.constant 0 : index
      %122 = vector.load %arg16[%c0_155, %c0_156] : memref<256x128xf32, #tpu.memory_space<vmem>>, vector<256x128xf32>
      %123 = arith.addf %122, %121 : vector<256x128xf32>
      %c0_157 = arith.constant 0 : index
      %c0_158 = arith.constant 0 : index
      %124 = vector.load %arg16[%c0_157, %c0_158] : memref<256x128xf32, #tpu.memory_space<vmem>>, vector<256x128xf32>
      tpu.vector_store %arg16[%c0_157, %c0_158], %123 {strides = array<i32>} : memref<256x128xf32, #tpu.memory_space<vmem>>, vector<256x128xf32>,
      %c0_159 = arith.constant 0 : index
      %c17_160 = arith.constant 17 : index
      %c0_161 = arith.constant 0 : index
      %125 = vector.load %arg14[%c0_159, %c17_160, %c0_161] : memref<18x40x128xf32, #tpu.memory_space<vmem>>, vector<16x16x128xf32>
      %126 = vector.shape_cast %125 : vector<16x16x128xf32> to vector<256x128xf32>
      %c0_162 = arith.constant 0 : index
      %c2_163 = arith.constant 2 : index
      %c0_164 = arith.constant 0 : index
      %c0_165 = arith.constant 0 : index
      %127 = vector.load %arg5[%c0_162, %c2_163, %c0_164, %c0_165] : memref<3x3x128x128xf32, #tpu.memory_space<vmem>>, vector<1x1x128x128xf32>
      %128 = vector.shape_cast %127 : vector<1x1x128x128xf32> to vector<128x128xf32>
      %cst_166 = arith.constant dense<0.000000e+00> : vector<256x128xf32>
      %129 = tpu.matmul %126, %128, %cst_166 {dimension_numbers = #tpu.dot_dimension_numbers<[1], [0], [0], [1], [0, 0, 1, 1], [], []>} : vector<256x128xf32>, vector<128x128xf32>, vector<256x128xf32> -> vector<256x128xf32>
      %c0_167 = arith.constant 0 : index
      %c0_168 = arith.constant 0 : index
      %130 = vector.load %arg16[%c0_167, %c0_168] : memref<256x128xf32, #tpu.memory_space<vmem>>, vector<256x128xf32>
      %131 = arith.addf %130, %129 : vector<256x128xf32>
      %c0_169 = arith.constant 0 : index
      %c0_170 = arith.constant 0 : index
      %132 = vector.load %arg16[%c0_169, %c0_170] : memref<256x128xf32, #tpu.memory_space<vmem>>, vector<256x128xf32>
      tpu.vector_store %arg16[%c0_169, %c0_170], %131 {strides = array<i32>} : memref<256x128xf32, #tpu.memory_space<vmem>>, vector<256x128xf32>,
      %c1_171 = arith.constant 1 : index
      %c15_172 = arith.constant 15 : index
      %c0_173 = arith.constant 0 : index
      %133 = vector.load %arg14[%c1_171, %c15_172, %c0_173] : memref<18x40x128xf32, #tpu.memory_space<vmem>>, vector<16x16x128xf32>
      %134 = vector.shape_cast %133 : vector<16x16x128xf32> to vector<256x128xf32>
      %c1_174 = arith.constant 1 : index
      %c0_175 = arith.constant 0 : index
      %c0_176 = arith.constant 0 : index
      %c0_177 = arith.constant 0 : index
      %135 = vector.load %arg5[%c1_174, %c0_175, %c0_176, %c0_177] : memref<3x3x128x128xf32, #tpu.memory_space<vmem>>, vector<1x1x128x128xf32>
      %136 = vector.shape_cast %135 : vector<1x1x128x128xf32> to vector<128x128xf32>
      %cst_178 = arith.constant dense<0.000000e+00> : vector<256x128xf32>
      %137 = tpu.matmul %134, %136, %cst_178 {dimension_numbers = #tpu.dot_dimension_numbers<[1], [0], [0], [1], [0, 0, 1, 1], [], []>} : vector<256x128xf32>, vector<128x128xf32>, vector<256x128xf32> -> vector<256x128xf32>
      %c0_179 = arith.constant 0 : index
      %c0_180 = arith.constant 0 : index
      %138 = vector.load %arg16[%c0_179, %c0_180] : memref<256x128xf32, #tpu.memory_space<vmem>>, vector<256x128xf32>
      %139 = arith.addf %138, %137 : vector<256x128xf32>
      %c0_181 = arith.constant 0 : index
      %c0_182 = arith.constant 0 : index
      %140 = vector.load %arg16[%c0_181, %c0_182] : memref<256x128xf32, #tpu.memory_space<vmem>>, vector<256x128xf32>
      tpu.vector_store %arg16[%c0_181, %c0_182], %139 {strides = array<i32>} : memref<256x128xf32, #tpu.memory_space<vmem>>, vector<256x128xf32>,
      %c1_183 = arith.constant 1 : index
      %c16_184 = arith.constant 16 : index
      %c0_185 = arith.constant 0 : index
      %141 = vector.load %arg14[%c1_183, %c16_184, %c0_185] : memref<18x40x128xf32, #tpu.memory_space<vmem>>, vector<16x16x128xf32>
      %142 = vector.shape_cast %141 : vector<16x16x128xf32> to vector<256x128xf32>
      %c1_186 = arith.constant 1 : index
      %c1_187 = arith.constant 1 : index
      %c0_188 = arith.constant 0 : index
      %c0_189 = arith.constant 0 : index
      %143 = vector.load %arg5[%c1_186, %c1_187, %c0_188, %c0_189] : memref<3x3x128x128xf32, #tpu.memory_space<vmem>>, vector<1x1x128x128xf32>
      %144 = vector.shape_cast %143 : vector<1x1x128x128xf32> to vector<128x128xf32>
      %cst_190 = arith.constant dense<0.000000e+00> : vector<256x128xf32>
      %145 = tpu.matmul %142, %144, %cst_190 {dimension_numbers = #tpu.dot_dimension_numbers<[1], [0], [0], [1], [0, 0, 1, 1], [], []>} : vector<256x128xf32>, vector<128x128xf32>, vector<256x128xf32> -> vector<256x128xf32>
      %c0_191 = arith.constant 0 : index
      %c0_192 = arith.constant 0 : index
      %146 = vector.load %arg16[%c0_191, %c0_192] : memref<256x128xf32, #tpu.memory_space<vmem>>, vector<256x128xf32>
      %147 = arith.addf %146, %145 : vector<256x128xf32>
      %c0_193 = arith.constant 0 : index
      %c0_194 = arith.constant 0 : index
      %148 = vector.load %arg16[%c0_193, %c0_194] : memref<256x128xf32, #tpu.memory_space<vmem>>, vector<256x128xf32>
      tpu.vector_store %arg16[%c0_193, %c0_194], %147 {strides = array<i32>} : memref<256x128xf32, #tpu.memory_space<vmem>>, vector<256x128xf32>,
      %c1_195 = arith.constant 1 : index
      %c17_196 = arith.constant 17 : index
      %c0_197 = arith.constant 0 : index
      %149 = vector.load %arg14[%c1_195, %c17_196, %c0_197] : memref<18x40x128xf32, #tpu.memory_space<vmem>>, vector<16x16x128xf32>
      %150 = vector.shape_cast %149 : vector<16x16x128xf32> to vector<256x128xf32>
      %c1_198 = arith.constant 1 : index
      %c2_199 = arith.constant 2 : index
      %c0_200 = arith.constant 0 : index
      %c0_201 = arith.constant 0 : index
      %151 = vector.load %arg5[%c1_198, %c2_199, %c0_200, %c0_201] : memref<3x3x128x128xf32, #tpu.memory_space<vmem>>, vector<1x1x128x128xf32>
      %152 = vector.shape_cast %151 : vector<1x1x128x128xf32> to vector<128x128xf32>
      %cst_202 = arith.constant dense<0.000000e+00> : vector<256x128xf32>
      %153 = tpu.matmul %150, %152, %cst_202 {dimension_numbers = #tpu.dot_dimension_numbers<[1], [0], [0], [1], [0, 0, 1, 1], [], []>} : vector<256x128xf32>, vector<128x128xf32>, vector<256x128xf32> -> vector<256x128xf32>
      %c0_203 = arith.constant 0 : index
      %c0_204 = arith.constant 0 : index
      %154 = vector.load %arg16[%c0_203, %c0_204] : memref<256x128xf32, #tpu.memory_space<vmem>>, vector<256x128xf32>
      %155 = arith.addf %154, %153 : vector<256x128xf32>
      %c0_205 = arith.constant 0 : index
      %c0_206 = arith.constant 0 : index
      %156 = vector.load %arg16[%c0_205, %c0_206] : memref<256x128xf32, #tpu.memory_space<vmem>>, vector<256x128xf32>
      tpu.vector_store %arg16[%c0_205, %c0_206], %155 {strides = array<i32>} : memref<256x128xf32, #tpu.memory_space<vmem>>, vector<256x128xf32>,
      %c2_207 = arith.constant 2 : index
      %c15_208 = arith.constant 15 : index
      %c0_209 = arith.constant 0 : index
      %157 = vector.load %arg14[%c2_207, %c15_208, %c0_209] : memref<18x40x128xf32, #tpu.memory_space<vmem>>, vector<16x16x128xf32>
      %158 = vector.shape_cast %157 : vector<16x16x128xf32> to vector<256x128xf32>
      %c2_210 = arith.constant 2 : index
      %c0_211 = arith.constant 0 : index
      %c0_212 = arith.constant 0 : index
      %c0_213 = arith.constant 0 : index
      %159 = vector.load %arg5[%c2_210, %c0_211, %c0_212, %c0_213] : memref<3x3x128x128xf32, #tpu.memory_space<vmem>>, vector<1x1x128x128xf32>
      %160 = vector.shape_cast %159 : vector<1x1x128x128xf32> to vector<128x128xf32>
      %cst_214 = arith.constant dense<0.000000e+00> : vector<256x128xf32>
      %161 = tpu.matmul %158, %160, %cst_214 {dimension_numbers = #tpu.dot_dimension_numbers<[1], [0], [0], [1], [0, 0, 1, 1], [], []>} : vector<256x128xf32>, vector<128x128xf32>, vector<256x128xf32> -> vector<256x128xf32>
      %c0_215 = arith.constant 0 : index
      %c0_216 = arith.constant 0 : index
      %162 = vector.load %arg16[%c0_215, %c0_216] : memref<256x128xf32, #tpu.memory_space<vmem>>, vector<256x128xf32>
      %163 = arith.addf %162, %161 : vector<256x128xf32>
      %c0_217 = arith.constant 0 : index
      %c0_218 = arith.constant 0 : index
      %164 = vector.load %arg16[%c0_217, %c0_218] : memref<256x128xf32, #tpu.memory_space<vmem>>, vector<256x128xf32>
      tpu.vector_store %arg16[%c0_217, %c0_218], %163 {strides = array<i32>} : memref<256x128xf32, #tpu.memory_space<vmem>>, vector<256x128xf32>,
      %c2_219 = arith.constant 2 : index
      %c16_220 = arith.constant 16 : index
      %c0_221 = arith.constant 0 : index
      %165 = vector.load %arg14[%c2_219, %c16_220, %c0_221] : memref<18x40x128xf32, #tpu.memory_space<vmem>>, vector<16x16x128xf32>
      %166 = vector.shape_cast %165 : vector<16x16x128xf32> to vector<256x128xf32>
      %c2_222 = arith.constant 2 : index
      %c1_223 = arith.constant 1 : index
      %c0_224 = arith.constant 0 : index
      %c0_225 = arith.constant 0 : index
      %167 = vector.load %arg5[%c2_222, %c1_223, %c0_224, %c0_225] : memref<3x3x128x128xf32, #tpu.memory_space<vmem>>, vector<1x1x128x128xf32>
      %168 = vector.shape_cast %167 : vector<1x1x128x128xf32> to vector<128x128xf32>
      %cst_226 = arith.constant dense<0.000000e+00> : vector<256x128xf32>
      %169 = tpu.matmul %166, %168, %cst_226 {dimension_numbers = #tpu.dot_dimension_numbers<[1], [0], [0], [1], [0, 0, 1, 1], [], []>} : vector<256x128xf32>, vector<128x128xf32>, vector<256x128xf32> -> vector<256x128xf32>
      %c0_227 = arith.constant 0 : index
      %c0_228 = arith.constant 0 : index
      %170 = vector.load %arg16[%c0_227, %c0_228] : memref<256x128xf32, #tpu.memory_space<vmem>>, vector<256x128xf32>
      %171 = arith.addf %170, %169 : vector<256x128xf32>
      %c0_229 = arith.constant 0 : index
      %c0_230 = arith.constant 0 : index
      %172 = vector.load %arg16[%c0_229, %c0_230] : memref<256x128xf32, #tpu.memory_space<vmem>>, vector<256x128xf32>
      tpu.vector_store %arg16[%c0_229, %c0_230], %171 {strides = array<i32>} : memref<256x128xf32, #tpu.memory_space<vmem>>, vector<256x128xf32>,
      %c2_231 = arith.constant 2 : index
      %c17_232 = arith.constant 17 : index
      %c0_233 = arith.constant 0 : index
      %173 = vector.load %arg14[%c2_231, %c17_232, %c0_233] : memref<18x40x128xf32, #tpu.memory_space<vmem>>, vector<16x16x128xf32>
      %174 = vector.shape_cast %173 : vector<16x16x128xf32> to vector<256x128xf32>
      %c2_234 = arith.constant 2 : index
      %c2_235 = arith.constant 2 : index
      %c0_236 = arith.constant 0 : index
      %c0_237 = arith.constant 0 : index
      %175 = vector.load %arg5[%c2_234, %c2_235, %c0_236, %c0_237] : memref<3x3x128x128xf32, #tpu.memory_space<vmem>>, vector<1x1x128x128xf32>
      %176 = vector.shape_cast %175 : vector<1x1x128x128xf32> to vector<128x128xf32>
      %cst_238 = arith.constant dense<0.000000e+00> : vector<256x128xf32>
      %177 = tpu.matmul %174, %176, %cst_238 {dimension_numbers = #tpu.dot_dimension_numbers<[1], [0], [0], [1], [0, 0, 1, 1], [], []>} : vector<256x128xf32>, vector<128x128xf32>, vector<256x128xf32> -> vector<256x128xf32>
      %c0_239 = arith.constant 0 : index
      %c0_240 = arith.constant 0 : index
      %178 = vector.load %arg16[%c0_239, %c0_240] : memref<256x128xf32, #tpu.memory_space<vmem>>, vector<256x128xf32>
      %179 = arith.addf %178, %177 : vector<256x128xf32>
      %c0_241 = arith.constant 0 : index
      %c0_242 = arith.constant 0 : index
      %180 = vector.load %arg16[%c0_241, %c0_242] : memref<256x128xf32, #tpu.memory_space<vmem>>, vector<256x128xf32>
      tpu.vector_store %arg16[%c0_241, %c0_242], %179 {strides = array<i32>} : memref<256x128xf32, #tpu.memory_space<vmem>>, vector<256x128xf32>,
      %c0_243 = arith.constant 0 : index
      %c0_244 = arith.constant 0 : index
      %181 = vector.load %arg16[%c0_243, %c0_244] : memref<256x128xf32, #tpu.memory_space<vmem>>, vector<256x128xf32>
      %c0_245 = arith.constant 0 : index
      %c0_246 = arith.constant 0 : index
      %182 = vector.load %arg6[%c0_245, %c0_246] : memref<1x128xf32, #tpu.memory_space<vmem>>, vector<1x128xf32>
      %183 = vector.shape_cast %182 : vector<1x128xf32> to vector<128xf32>
      %184 = vector.shape_cast %183 : vector<128xf32> to vector<1x128xf32>
      %185 = vector.broadcast %184 : vector<1x128xf32> to vector<256x128xf32>
      %186 = arith.addf %181, %185 : vector<256x128xf32>
      %c0_247 = arith.constant 0 : index
      %c0_248 = arith.constant 0 : index
      %187 = vector.load %arg7[%c0_247, %c0_248] : memref<1x128xf32, #tpu.memory_space<vmem>>, vector<1x128xf32>
      %188 = vector.shape_cast %187 : vector<1x128xf32> to vector<128xf32>
      %189 = vector.shape_cast %188 : vector<128xf32> to vector<1x128xf32>
      %190 = vector.broadcast %189 : vector<1x128xf32> to vector<256x128xf32>
      %191 = arith.mulf %186, %190 : vector<256x128xf32>
      %c0_249 = arith.constant 0 : index
      %c0_250 = arith.constant 0 : index
      %192 = vector.load %arg8[%c0_249, %c0_250] : memref<1x128xf32, #tpu.memory_space<vmem>>, vector<1x128xf32>
      %193 = vector.shape_cast %192 : vector<1x128xf32> to vector<128xf32>
      %194 = vector.shape_cast %193 : vector<128xf32> to vector<1x128xf32>
      %195 = vector.broadcast %194 : vector<1x128xf32> to vector<256x128xf32>
      %196 = arith.addf %191, %195 : vector<256x128xf32>
      %cst_251 = arith.constant 0.000000e+00 : f32
      %197 = vector.broadcast %cst_251 : f32 to vector<256x128xf32>
      %198 = arith.maximumf %196, %197 : vector<256x128xf32>
      %199 = vector.shape_cast %198 : vector<256x128xf32> to vector<16x16x128xf32>
      %c1_252 = arith.constant 1 : index
      %c16_253 = arith.constant 16 : index
      %c0_254 = arith.constant 0 : index
      %200 = vector.load %arg15[%c1_252, %c16_253, %c0_254] : memref<18x40x128xf32, #tpu.memory_space<vmem>>, vector<16x16x128xf32>
      tpu.vector_store %arg15[%c1_252, %c16_253, %c0_254], %199 {strides = array<i32>} : memref<18x40x128xf32, #tpu.memory_space<vmem>>, vector<16x16x128xf32>,
    } else {
    }
    %c0 = arith.constant 0 : index
    %c15 = arith.constant 15 : index
    %c0_1 = arith.constant 0 : index
    %3 = vector.load %arg15[%c0, %c15, %c0_1] : memref<18x40x128xf32, #tpu.memory_space<vmem>>, vector<16x16x128xf32>
    %4 = vector.shape_cast %3 : vector<16x16x128xf32> to vector<256x128xf32>
    %c0_2 = arith.constant 0 : index
    %c0_3 = arith.constant 0 : index
    %c0_4 = arith.constant 0 : index
    %c0_5 = arith.constant 0 : index
    %5 = vector.load %arg9[%c0_2, %c0_3, %c0_4, %c0_5] : memref<3x3x128x128xf32, #tpu.memory_space<vmem>>, vector<1x1x128x128xf32>
    %6 = vector.shape_cast %5 : vector<1x1x128x128xf32> to vector<128x128xf32>
    %cst = arith.constant dense<0.000000e+00> : vector<256x128xf32>
    %7 = tpu.matmul %4, %6, %cst {dimension_numbers = #tpu.dot_dimension_numbers<[1], [0], [0], [1], [0, 0, 1, 1], [], []>} : vector<256x128xf32>, vector<128x128xf32>, vector<256x128xf32> -> vector<256x128xf32>
    %c0_6 = arith.constant 0 : index
    %c0_7 = arith.constant 0 : index
    %8 = vector.load %arg17[%c0_6, %c0_7] : memref<256x128xf32, #tpu.memory_space<vmem>>, vector<256x128xf32>
    tpu.vector_store %arg17[%c0_6, %c0_7], %7 {strides = array<i32>} : memref<256x128xf32, #tpu.memory_space<vmem>>, vector<256x128xf32>,
    %c0_8 = arith.constant 0 : index
    %c16 = arith.constant 16 : index
    %c0_9 = arith.constant 0 : index
    %9 = vector.load %arg15[%c0_8, %c16, %c0_9] : memref<18x40x128xf32, #tpu.memory_space<vmem>>, vector<16x16x128xf32>
    %10 = vector.shape_cast %9 : vector<16x16x128xf32> to vector<256x128xf32>
    %c0_10 = arith.constant 0 : index
    %c1 = arith.constant 1 : index
    %c0_11 = arith.constant 0 : index
    %c0_12 = arith.constant 0 : index
    %11 = vector.load %arg9[%c0_10, %c1, %c0_11, %c0_12] : memref<3x3x128x128xf32, #tpu.memory_space<vmem>>, vector<1x1x128x128xf32>
    %12 = vector.shape_cast %11 : vector<1x1x128x128xf32> to vector<128x128xf32>
    %cst_13 = arith.constant dense<0.000000e+00> : vector<256x128xf32>
    %13 = tpu.matmul %10, %12, %cst_13 {dimension_numbers = #tpu.dot_dimension_numbers<[1], [0], [0], [1], [0, 0, 1, 1], [], []>} : vector<256x128xf32>, vector<128x128xf32>, vector<256x128xf32> -> vector<256x128xf32>
    %c0_14 = arith.constant 0 : index
    %c0_15 = arith.constant 0 : index
    %14 = vector.load %arg17[%c0_14, %c0_15] : memref<256x128xf32, #tpu.memory_space<vmem>>, vector<256x128xf32>
    %15 = arith.addf %14, %13 : vector<256x128xf32>
    %c0_16 = arith.constant 0 : index
    %c0_17 = arith.constant 0 : index
    %16 = vector.load %arg17[%c0_16, %c0_17] : memref<256x128xf32, #tpu.memory_space<vmem>>, vector<256x128xf32>
    tpu.vector_store %arg17[%c0_16, %c0_17], %15 {strides = array<i32>} : memref<256x128xf32, #tpu.memory_space<vmem>>, vector<256x128xf32>,
    %c0_18 = arith.constant 0 : index
    %c17 = arith.constant 17 : index
    %c0_19 = arith.constant 0 : index
    %17 = vector.load %arg15[%c0_18, %c17, %c0_19] : memref<18x40x128xf32, #tpu.memory_space<vmem>>, vector<16x16x128xf32>
    %18 = vector.shape_cast %17 : vector<16x16x128xf32> to vector<256x128xf32>
    %c0_20 = arith.constant 0 : index
    %c2 = arith.constant 2 : index
    %c0_21 = arith.constant 0 : index
    %c0_22 = arith.constant 0 : index
    %19 = vector.load %arg9[%c0_20, %c2, %c0_21, %c0_22] : memref<3x3x128x128xf32, #tpu.memory_space<vmem>>, vector<1x1x128x128xf32>
    %20 = vector.shape_cast %19 : vector<1x1x128x128xf32> to vector<128x128xf32>
    %cst_23 = arith.constant dense<0.000000e+00> : vector<256x128xf32>
    %21 = tpu.matmul %18, %20, %cst_23 {dimension_numbers = #tpu.dot_dimension_numbers<[1], [0], [0], [1], [0, 0, 1, 1], [], []>} : vector<256x128xf32>, vector<128x128xf32>, vector<256x128xf32> -> vector<256x128xf32>
    %c0_24 = arith.constant 0 : index
    %c0_25 = arith.constant 0 : index
    %22 = vector.load %arg17[%c0_24, %c0_25] : memref<256x128xf32, #tpu.memory_space<vmem>>, vector<256x128xf32>
    %23 = arith.addf %22, %21 : vector<256x128xf32>
    %c0_26 = arith.constant 0 : index
    %c0_27 = arith.constant 0 : index
    %24 = vector.load %arg17[%c0_26, %c0_27] : memref<256x128xf32, #tpu.memory_space<vmem>>, vector<256x128xf32>
    tpu.vector_store %arg17[%c0_26, %c0_27], %23 {strides = array<i32>} : memref<256x128xf32, #tpu.memory_space<vmem>>, vector<256x128xf32>,
    %c1_28 = arith.constant 1 : index
    %c15_29 = arith.constant 15 : index
    %c0_30 = arith.constant 0 : index
    %25 = vector.load %arg15[%c1_28, %c15_29, %c0_30] : memref<18x40x128xf32, #tpu.memory_space<vmem>>, vector<16x16x128xf32>
    %26 = vector.shape_cast %25 : vector<16x16x128xf32> to vector<256x128xf32>
    %c1_31 = arith.constant 1 : index
    %c0_32 = arith.constant 0 : index
    %c0_33 = arith.constant 0 : index
    %c0_34 = arith.constant 0 : index
    %27 = vector.load %arg9[%c1_31, %c0_32, %c0_33, %c0_34] : memref<3x3x128x128xf32, #tpu.memory_space<vmem>>, vector<1x1x128x128xf32>
    %28 = vector.shape_cast %27 : vector<1x1x128x128xf32> to vector<128x128xf32>
    %cst_35 = arith.constant dense<0.000000e+00> : vector<256x128xf32>
    %29 = tpu.matmul %26, %28, %cst_35 {dimension_numbers = #tpu.dot_dimension_numbers<[1], [0], [0], [1], [0, 0, 1, 1], [], []>} : vector<256x128xf32>, vector<128x128xf32>, vector<256x128xf32> -> vector<256x128xf32>
    %c0_36 = arith.constant 0 : index
    %c0_37 = arith.constant 0 : index
    %30 = vector.load %arg17[%c0_36, %c0_37] : memref<256x128xf32, #tpu.memory_space<vmem>>, vector<256x128xf32>
    %31 = arith.addf %30, %29 : vector<256x128xf32>
    %c0_38 = arith.constant 0 : index
    %c0_39 = arith.constant 0 : index
    %32 = vector.load %arg17[%c0_38, %c0_39] : memref<256x128xf32, #tpu.memory_space<vmem>>, vector<256x128xf32>
    tpu.vector_store %arg17[%c0_38, %c0_39], %31 {strides = array<i32>} : memref<256x128xf32, #tpu.memory_space<vmem>>, vector<256x128xf32>,
    %c1_40 = arith.constant 1 : index
    %c16_41 = arith.constant 16 : index
    %c0_42 = arith.constant 0 : index
    %33 = vector.load %arg15[%c1_40, %c16_41, %c0_42] : memref<18x40x128xf32, #tpu.memory_space<vmem>>, vector<16x16x128xf32>
    %34 = vector.shape_cast %33 : vector<16x16x128xf32> to vector<256x128xf32>
    %c1_43 = arith.constant 1 : index
    %c1_44 = arith.constant 1 : index
    %c0_45 = arith.constant 0 : index
    %c0_46 = arith.constant 0 : index
    %35 = vector.load %arg9[%c1_43, %c1_44, %c0_45, %c0_46] : memref<3x3x128x128xf32, #tpu.memory_space<vmem>>, vector<1x1x128x128xf32>
    %36 = vector.shape_cast %35 : vector<1x1x128x128xf32> to vector<128x128xf32>
    %cst_47 = arith.constant dense<0.000000e+00> : vector<256x128xf32>
    %37 = tpu.matmul %34, %36, %cst_47 {dimension_numbers = #tpu.dot_dimension_numbers<[1], [0], [0], [1], [0, 0, 1, 1], [], []>} : vector<256x128xf32>, vector<128x128xf32>, vector<256x128xf32> -> vector<256x128xf32>
    %c0_48 = arith.constant 0 : index
    %c0_49 = arith.constant 0 : index
    %38 = vector.load %arg17[%c0_48, %c0_49] : memref<256x128xf32, #tpu.memory_space<vmem>>, vector<256x128xf32>
    %39 = arith.addf %38, %37 : vector<256x128xf32>
    %c0_50 = arith.constant 0 : index
    %c0_51 = arith.constant 0 : index
    %40 = vector.load %arg17[%c0_50, %c0_51] : memref<256x128xf32, #tpu.memory_space<vmem>>, vector<256x128xf32>
    tpu.vector_store %arg17[%c0_50, %c0_51], %39 {strides = array<i32>} : memref<256x128xf32, #tpu.memory_space<vmem>>, vector<256x128xf32>,
    %c1_52 = arith.constant 1 : index
    %c17_53 = arith.constant 17 : index
    %c0_54 = arith.constant 0 : index
    %41 = vector.load %arg15[%c1_52, %c17_53, %c0_54] : memref<18x40x128xf32, #tpu.memory_space<vmem>>, vector<16x16x128xf32>
    %42 = vector.shape_cast %41 : vector<16x16x128xf32> to vector<256x128xf32>
    %c1_55 = arith.constant 1 : index
    %c2_56 = arith.constant 2 : index
    %c0_57 = arith.constant 0 : index
    %c0_58 = arith.constant 0 : index
    %43 = vector.load %arg9[%c1_55, %c2_56, %c0_57, %c0_58] : memref<3x3x128x128xf32, #tpu.memory_space<vmem>>, vector<1x1x128x128xf32>
    %44 = vector.shape_cast %43 : vector<1x1x128x128xf32> to vector<128x128xf32>
    %cst_59 = arith.constant dense<0.000000e+00> : vector<256x128xf32>
    %45 = tpu.matmul %42, %44, %cst_59 {dimension_numbers = #tpu.dot_dimension_numbers<[1], [0], [0], [1], [0, 0, 1, 1], [], []>} : vector<256x128xf32>, vector<128x128xf32>, vector<256x128xf32> -> vector<256x128xf32>
    %c0_60 = arith.constant 0 : index
    %c0_61 = arith.constant 0 : index
    %46 = vector.load %arg17[%c0_60, %c0_61] : memref<256x128xf32, #tpu.memory_space<vmem>>, vector<256x128xf32>
    %47 = arith.addf %46, %45 : vector<256x128xf32>
    %c0_62 = arith.constant 0 : index
    %c0_63 = arith.constant 0 : index
    %48 = vector.load %arg17[%c0_62, %c0_63] : memref<256x128xf32, #tpu.memory_space<vmem>>, vector<256x128xf32>
    tpu.vector_store %arg17[%c0_62, %c0_63], %47 {strides = array<i32>} : memref<256x128xf32, #tpu.memory_space<vmem>>, vector<256x128xf32>,
    %c2_64 = arith.constant 2 : index
    %c15_65 = arith.constant 15 : index
    %c0_66 = arith.constant 0 : index
    %49 = vector.load %arg15[%c2_64, %c15_65, %c0_66] : memref<18x40x128xf32, #tpu.memory_space<vmem>>, vector<16x16x128xf32>
    %50 = vector.shape_cast %49 : vector<16x16x128xf32> to vector<256x128xf32>
    %c2_67 = arith.constant 2 : index
    %c0_68 = arith.constant 0 : index
    %c0_69 = arith.constant 0 : index
    %c0_70 = arith.constant 0 : index
    %51 = vector.load %arg9[%c2_67, %c0_68, %c0_69, %c0_70] : memref<3x3x128x128xf32, #tpu.memory_space<vmem>>, vector<1x1x128x128xf32>
    %52 = vector.shape_cast %51 : vector<1x1x128x128xf32> to vector<128x128xf32>
    %cst_71 = arith.constant dense<0.000000e+00> : vector<256x128xf32>
    %53 = tpu.matmul %50, %52, %cst_71 {dimension_numbers = #tpu.dot_dimension_numbers<[1], [0], [0], [1], [0, 0, 1, 1], [], []>} : vector<256x128xf32>, vector<128x128xf32>, vector<256x128xf32> -> vector<256x128xf32>
    %c0_72 = arith.constant 0 : index
    %c0_73 = arith.constant 0 : index
    %54 = vector.load %arg17[%c0_72, %c0_73] : memref<256x128xf32, #tpu.memory_space<vmem>>, vector<256x128xf32>
    %55 = arith.addf %54, %53 : vector<256x128xf32>
    %c0_74 = arith.constant 0 : index
    %c0_75 = arith.constant 0 : index
    %56 = vector.load %arg17[%c0_74, %c0_75] : memref<256x128xf32, #tpu.memory_space<vmem>>, vector<256x128xf32>
    tpu.vector_store %arg17[%c0_74, %c0_75], %55 {strides = array<i32>} : memref<256x128xf32, #tpu.memory_space<vmem>>, vector<256x128xf32>,
    %c2_76 = arith.constant 2 : index
    %c16_77 = arith.constant 16 : index
    %c0_78 = arith.constant 0 : index
    %57 = vector.load %arg15[%c2_76, %c16_77, %c0_78] : memref<18x40x128xf32, #tpu.memory_space<vmem>>, vector<16x16x128xf32>
    %58 = vector.shape_cast %57 : vector<16x16x128xf32> to vector<256x128xf32>
    %c2_79 = arith.constant 2 : index
    %c1_80 = arith.constant 1 : index
    %c0_81 = arith.constant 0 : index
    %c0_82 = arith.constant 0 : index
    %59 = vector.load %arg9[%c2_79, %c1_80, %c0_81, %c0_82] : memref<3x3x128x128xf32, #tpu.memory_space<vmem>>, vector<1x1x128x128xf32>
    %60 = vector.shape_cast %59 : vector<1x1x128x128xf32> to vector<128x128xf32>
    %cst_83 = arith.constant dense<0.000000e+00> : vector<256x128xf32>
    %61 = tpu.matmul %58, %60, %cst_83 {dimension_numbers = #tpu.dot_dimension_numbers<[1], [0], [0], [1], [0, 0, 1, 1], [], []>} : vector<256x128xf32>, vector<128x128xf32>, vector<256x128xf32> -> vector<256x128xf32>
    %c0_84 = arith.constant 0 : index
    %c0_85 = arith.constant 0 : index
    %62 = vector.load %arg17[%c0_84, %c0_85] : memref<256x128xf32, #tpu.memory_space<vmem>>, vector<256x128xf32>
    %63 = arith.addf %62, %61 : vector<256x128xf32>
    %c0_86 = arith.constant 0 : index
    %c0_87 = arith.constant 0 : index
    %64 = vector.load %arg17[%c0_86, %c0_87] : memref<256x128xf32, #tpu.memory_space<vmem>>, vector<256x128xf32>
    tpu.vector_store %arg17[%c0_86, %c0_87], %63 {strides = array<i32>} : memref<256x128xf32, #tpu.memory_space<vmem>>, vector<256x128xf32>,
    %c2_88 = arith.constant 2 : index
    %c17_89 = arith.constant 17 : index
    %c0_90 = arith.constant 0 : index
    %65 = vector.load %arg15[%c2_88, %c17_89, %c0_90] : memref<18x40x128xf32, #tpu.memory_space<vmem>>, vector<16x16x128xf32>
    %66 = vector.shape_cast %65 : vector<16x16x128xf32> to vector<256x128xf32>
    %c2_91 = arith.constant 2 : index
    %c2_92 = arith.constant 2 : index
    %c0_93 = arith.constant 0 : index
    %c0_94 = arith.constant 0 : index
    %67 = vector.load %arg9[%c2_91, %c2_92, %c0_93, %c0_94] : memref<3x3x128x128xf32, #tpu.memory_space<vmem>>, vector<1x1x128x128xf32>
    %68 = vector.shape_cast %67 : vector<1x1x128x128xf32> to vector<128x128xf32>
    %cst_95 = arith.constant dense<0.000000e+00> : vector<256x128xf32>
    %69 = tpu.matmul %66, %68, %cst_95 {dimension_numbers = #tpu.dot_dimension_numbers<[1], [0], [0], [1], [0, 0, 1, 1], [], []>} : vector<256x128xf32>, vector<128x128xf32>, vector<256x128xf32> -> vector<256x128xf32>
    %c0_96 = arith.constant 0 : index
    %c0_97 = arith.constant 0 : index
    %70 = vector.load %arg17[%c0_96, %c0_97] : memref<256x128xf32, #tpu.memory_space<vmem>>, vector<256x128xf32>
    %71 = arith.addf %70, %69 : vector<256x128xf32>
    %c0_98 = arith.constant 0 : index
    %c0_99 = arith.constant 0 : index
    %72 = vector.load %arg17[%c0_98, %c0_99] : memref<256x128xf32, #tpu.memory_space<vmem>>, vector<256x128xf32>
    tpu.vector_store %arg17[%c0_98, %c0_99], %71 {strides = array<i32>} : memref<256x128xf32, #tpu.memory_space<vmem>>, vector<256x128xf32>,
    %c0_100 = arith.constant 0 : index
    %c0_101 = arith.constant 0 : index
    %73 = vector.load %arg17[%c0_100, %c0_101] : memref<256x128xf32, #tpu.memory_space<vmem>>, vector<256x128xf32>
    %c0_102 = arith.constant 0 : index
    %c0_103 = arith.constant 0 : index
    %74 = vector.load %arg10[%c0_102, %c0_103] : memref<1x128xf32, #tpu.memory_space<vmem>>, vector<1x128xf32>
    %75 = vector.shape_cast %74 : vector<1x128xf32> to vector<128xf32>
    %76 = vector.shape_cast %75 : vector<128xf32> to vector<1x128xf32>
    %77 = vector.broadcast %76 : vector<1x128xf32> to vector<256x128xf32>
    %78 = arith.addf %73, %77 : vector<256x128xf32>
    %c0_104 = arith.constant 0 : index
    %c0_105 = arith.constant 0 : index
    %c0_106 = arith.constant 0 : index
    %c0_107 = arith.constant 0 : index
    %79 = vector.load %arg2[%c0_104, %c0_105, %c0_106, %c0_107] : memref<1x16x16x128xf32, #tpu.memory_space<vmem>>, vector<1x16x16x128xf32>
    %80 = vector.shape_cast %79 : vector<1x16x16x128xf32> to vector<16x16x128xf32>
    %81 = vector.shape_cast %80 : vector<16x16x128xf32> to vector<256x128xf32>
    %c0_108 = arith.constant 0 : index
    %c0_109 = arith.constant 0 : index
    %82 = vector.load %arg11[%c0_108, %c0_109] : memref<128x128xf32, #tpu.memory_space<vmem>>, vector<128x128xf32>
    %cst_110 = arith.constant dense<0.000000e+00> : vector<256x128xf32>
    %83 = tpu.matmul %81, %82, %cst_110 {dimension_numbers = #tpu.dot_dimension_numbers<[1], [0], [0], [1], [0, 0, 1, 1], [], []>} : vector<256x128xf32>, vector<128x128xf32>, vector<256x128xf32> -> vector<256x128xf32>
    %c0_111 = arith.constant 0 : index
    %c0_112 = arith.constant 0 : index
    %84 = vector.load %arg12[%c0_111, %c0_112] : memref<1x128xf32, #tpu.memory_space<vmem>>, vector<1x128xf32>
    %85 = vector.shape_cast %84 : vector<1x128xf32> to vector<128xf32>
    %86 = vector.shape_cast %85 : vector<128xf32> to vector<1x128xf32>
    %87 = vector.broadcast %86 : vector<1x128xf32> to vector<256x128xf32>
    %88 = arith.addf %83, %87 : vector<256x128xf32>
    %89 = arith.addf %78, %88 : vector<256x128xf32>
    %90 = vector.shape_cast %89 : vector<256x128xf32> to vector<1x16x16x128xf32>
    %c0_113 = arith.constant 0 : index
    %c0_114 = arith.constant 0 : index
    %c0_115 = arith.constant 0 : index
    %c0_116 = arith.constant 0 : index
    %91 = vector.load %arg13[%c0_113, %c0_114, %c0_115, %c0_116] : memref<1x16x16x128xf32, #tpu.memory_space<vmem>>, vector<1x16x16x128xf32>
    tpu.vector_store %arg13[%c0_113, %c0_114, %c0_115, %c0_116], %90 {strides = array<i32>} : memref<1x16x16x128xf32, #tpu.memory_space<vmem>>, vector<1x16x16x128xf32>,
    return
  }
  func.func @transform_0(%arg0: i32, %arg1: i32) -> (i32, i32, i32, i32) {
    %c0_i32 = arith.constant 0 : i32
    %c0_i32_0 = arith.constant 0 : i32
    %c0_i32_1 = arith.constant 0 : i32
    %c0_i32_2 = arith.constant 0 : i32
    return %arg0, %c0_i32, %c0_i32_0, %c0_i32_1 : i32, i32, i32, i32
  }
  func.func @transform_1(%arg0: i32, %arg1: i32) -> (i32, i32) {
    %c0_i32 = arith.constant 0 : i32
    %c0_i32_0 = arith.constant 0 : i32
    %c0_i32_1 = arith.constant 0 : i32
    return %c0_i32, %c0_i32_0 : i32, i32
  }
  func.func @transform_2(%arg0: i32, %arg1: i32) -> (i32, i32) {
    %c0_i32 = arith.constant 0 : i32
    %c0_i32_0 = arith.constant 0 : i32
    %c0_i32_1 = arith.constant 0 : i32
    return %c0_i32, %c0_i32_0 : i32, i32
  }
  func.func @transform_3(%arg0: i32, %arg1: i32) -> (i32, i32, i32, i32) {
    %c0_i32 = arith.constant 0 : i32
    %c0_i32_0 = arith.constant 0 : i32
    %c0_i32_1 = arith.constant 0 : i32
    %c0_i32_2 = arith.constant 0 : i32
    %c0_i32_3 = arith.constant 0 : i32
    return %c0_i32, %c0_i32_0, %c0_i32_1, %c0_i32_2 : i32, i32, i32, i32
  }
  func.func @transform_4(%arg0: i32, %arg1: i32) -> (i32, i32) {
    %c0_i32 = arith.constant 0 : i32
    %c0_i32_0 = arith.constant 0 : i32
    %c0_i32_1 = arith.constant 0 : i32
    return %c0_i32, %c0_i32_0 : i32, i32
  }
  func.func @transform_5(%arg0: i32, %arg1: i32) -> (i32, i32) {
    %c0_i32 = arith.constant 0 : i32
    %c0_i32_0 = arith.constant 0 : i32
    %c0_i32_1 = arith.constant 0 : i32
    return %c0_i32, %c0_i32_0 : i32, i32
  }
  func.func @transform_6(%arg0: i32, %arg1: i32) -> (i32, i32) {
    %c0_i32 = arith.constant 0 : i32
    %c0_i32_0 = arith.constant 0 : i32
    %c0_i32_1 = arith.constant 0 : i32
    return %c0_i32, %c0_i32_0 : i32, i32
  }
  func.func @transform_7(%arg0: i32, %arg1: i32) -> (i32, i32, i32, i32) {
    %c0_i32 = arith.constant 0 : i32
    %c0_i32_0 = arith.constant 0 : i32
    %c0_i32_1 = arith.constant 0 : i32
    %c0_i32_2 = arith.constant 0 : i32
    return %c0_i32, %c0_i32_0, %c0_i32_1, %arg1 : i32, i32, i32, i32
  }
  func.func @transform_8(%arg0: i32, %arg1: i32) -> (i32, i32) {
    %c0_i32 = arith.constant 0 : i32
    %c0_i32_0 = arith.constant 0 : i32
    return %c0_i32, %arg1 : i32, i32
  }
  func.func @transform_9(%arg0: i32, %arg1: i32) -> (i32, i32) {
    %c0_i32 = arith.constant 0 : i32
    %c0_i32_0 = arith.constant 0 : i32
    return %c0_i32, %arg1 : i32, i32
  }
  func.func @transform_10(%arg0: i32, %arg1: i32) -> (i32, i32) {
    %c0_i32 = arith.constant 0 : i32
    %c0_i32_0 = arith.constant 0 : i32
    return %c0_i32, %arg1 : i32, i32
  }
  func.func @transform_11(%arg0: i32, %arg1: i32) -> (i32, i32, i32, i32) {
    %c0_i32 = arith.constant 0 : i32
    %c0_i32_0 = arith.constant 0 : i32
    %c0_i32_1 = arith.constant 0 : i32
    return %arg0, %c0_i32, %c0_i32_0, %arg1 : i32, i32, i32, i32
  }
}

</mosaic_0001>

<llo_original>
// kernel: tpu_custom_call.1
$region0: #{tpu_custom_call.1}
  #allocation0 [shape = 'u32[]', space=smem, size = 0x4, offset = 0x4, fixed_abs, tag = 'smem constant byte address 0x4 - core index']
  #allocation1 [shape = 'u32[144,128]{1,0:T(1,128)}', space=vmem, size = 0x12000, scoped, tag = 'internal scratch']
  #allocation2 [shape = 'f32[18,40,128]{2,1,0:T(8,128)}', space=vmem, size = 0x5a000, scoped, tag = 'scratch operand']
  #allocation3 [shape = 'f32[18,40,128]{2,1,0:T(8,128)}', space=vmem, size = 0x5a000, scoped, tag = 'scratch operand']
  #allocation4 [shape = 'f32[256,128]{1,0:T(8,128)}', space=vmem, size = 0x20000, scoped, tag = 'scratch operand']
  #allocation5 [shape = 'f32[256,128]{1,0:T(8,128)}', space=vmem, size = 0x20000, scoped, tag = 'scratch operand']
  %s0 = inlined_call_operand.hbm [shape: f32[2,16,16,128], index: 0, kind: input, shape index: {}]
  %s1 = inlined_call_operand.vmem [shape: f32[1,128], index: 1, kind: input, shape index: {}]
  %s2 = inlined_call_operand.vmem [shape: f32[1,128], index: 2, kind: input, shape index: {}]
  %s3 = inlined_call_operand.hbm [shape: f32[3,3,128,128], index: 3, kind: input, shape index: {}]
  %s4 = inlined_call_operand.vmem [shape: f32[1,128], index: 4, kind: input, shape index: {}]
  %s5 = inlined_call_operand.vmem [shape: f32[1,128], index: 5, kind: input, shape index: {}]
  %s6 = inlined_call_operand.vmem [shape: f32[1,128], index: 6, kind: input, shape index: {}]
  %s7 = inlined_call_operand.hbm [shape: f32[3,3,128,128], index: 7, kind: input, shape index: {}]
  %s8 = inlined_call_operand.vmem [shape: f32[1,128], index: 8, kind: input, shape index: {}]
  %s9 = inlined_call_operand.hbm [shape: f32[128,128], index: 9, kind: input, shape index: {}]
  %s10 = inlined_call_operand.vmem [shape: f32[1,128], index: 10, kind: input, shape index: {}]
  %s11 = inlined_call_operand.hbm [shape: f32[2,16,16,128], index: 11, kind: output, shape index: {}]
  %s12 = sld [smem:[#allocation0]]
  $region97: #{tpu_custom_call.1} parent=0
    _
  %s14 = ssub.s32 1, %s12
  %s15 = scalar_select 0, %s14, %s12
  $region1: #{tpu_custom_call.1} parent=0
    #allocation6 [shape = 'u8[262144]{0}', space=vmem, size = 0x40000, scoped, tag = 'input window, operand 0']
    #allocation7 [shape = 's32[2]{0}', space=sflag, size = 0x8, scoped, tag = 'scoped memory for tpu_custom_call.1']
    #allocation8 [shape = 's32[2]{0}', space=sflag, size = 0x8, scoped, tag = 'scoped memory for tpu_custom_call.1']
    #allocation9 [shape = 'u8[589824]{0}', space=vmem, size = 0x90000, scoped, tag = 'input window, operand 3, single buffered']
    #allocation10 [shape = 's32[1]{0}', space=sflag, size = 0x4, scoped, tag = 'scoped memory for tpu_custom_call.1']
    #allocation11 [shape = 'u8[589824]{0}', space=vmem, size = 0x90000, scoped, tag = 'input window, operand 7, single buffered']
    #allocation12 [shape = 'u8[65536]{0}', space=vmem, size = 0x10000, scoped, tag = 'input window, operand 9, single buffered']
    #allocation13 [shape = 's32[1]{0}', space=sflag, size = 0x4, scoped, tag = 'scoped memory for tpu_custom_call.1']
    #allocation14 [shape = 'u8[262144]{0}', space=vmem, size = 0x40000, scoped, tag = 'output window, operand 0']
    %16 = vsyncpa [#allocation7], 0
    %s17 = scalar_lea.sflag [#allocation7], 1
    %18 = vsyncpa %s17, 0
    %19 = vsyncpa [#allocation10], 0
    %20 = vsyncpa [#allocation13], 0
    %21 = vsyncpa [#allocation8], 0
    %s22 = scalar_lea.sflag [#allocation8], 1
    %23 = vsyncpa %s22, 0
    loop: start=0, step=1, limit=4
    $region2: #{tpu_custom_call.1} parent=1 // loop_pre_header
      _
    $region3: #{tpu_custom_call.1} parent=1 // loop_header
      %s25 = sphi 0, %s29
      %p26 = scmp.ge.s32.totalorder %s25, 4
      %s32 = sphi 0, %s44
      %s33 = sphi 0, %s40
      %s34 = sphi 0, %s32
      %s35 = sphi 0, %s33
      %s36 = sphi 0, %s34
      %s37 = sphi 0, %s35
      %s47 = sphi 0, %s49
      %s50 = sphi 0, %s47
      %s51 = sphi 0, %s50
      %s67 = sphi 0, %s51
      %s71 = sphi 0, %s71
      %s73 = sphi 0, %s71
      %s74 = sphi 0, %s73
      %s88 = sphi 0, %s74
      %s92 = sphi 0, %s92
      %s94 = sphi 0, %s92
      %s95 = sphi 0, %s94
      %s109 = sphi 0, %s95
      %s113 = sphi 0, %s113
      %s115 = sphi 0, %s113
      %s116 = sphi 0, %s115
      %s130 = sphi 0, %s116
      %s134 = sphi 0, %s134
      %s136 = sphi 0, %s134
      %s137 = sphi 0, %s136
      %s151 = sphi 0, %s137
      %s155 = sphi 0, %s155
      %s157 = sphi 0, %s155
      %s158 = sphi 0, %s157
      %s172 = sphi 0, %s158
      %s176 = sphi 0, %s176
      %s178 = sphi 0, %s176
      %s179 = sphi 0, %s178
      %s193 = sphi 0, %s179
      %s199 = sphi 0, %s201
      %s202 = sphi 0, %s199
      %s203 = sphi 0, %s202
      %s219 = sphi 0, %s203
      %s225 = sphi 0, %s227
      %s228 = sphi 0, %s225
      %s229 = sphi 0, %s228
      %s245 = sphi 0, %s229
      %s251 = sphi 0, %s253
      %s254 = sphi 0, %s251
      %s255 = sphi 0, %s254
      %s271 = sphi 0, %s255
      %s277 = sphi 0, %s279
      %s280 = sphi 0, %s277
      %s281 = sphi 0, %s280
      %s297 = sphi 0, %s281
      %s305 = sphi 0, %s307
      %s308 = sphi 0, %s305
      %s309 = sphi 0, %s308
      %s325 = sphi 0, %s309
    $region4: #{tpu_custom_call.1} parent=1 // loop_header_branch
      %28 = sbr.rel (%p26) target = $region8
    $region5: #{tpu_custom_call.1} parent=1 // loop_body
      %s30 = ssub.s32 %s25, 1
      %s31 = ssub.s32 %s25, 2
      %s38 = sadd.s32 1, %s33
      %p39 = scmp.ge.s32.totalorder %s38, 1
      %s40 = scalar_select %p39, 0, %s38
      %s41 = sadd.s32 1, %s32
      %s42 = scalar_select %p39, %s41, %s32
      %p43 = scmp.ge.s32.totalorder %s42, 2
      %s44 = scalar_select %p43, 0, %s42
      %s45 = ssub.s32 %s32, %s44
      %p46 = scmp.eq.s32.totalorder %s45, 0
      %s48 = sadd.s32 %s47, 1
      %s49 = scalar_select %p46, %s47, %s48
      %p52 = pneg %p46
      %p53 = scmp.eq.s32.totalorder %s25, 1
      %p54 = por %p52, %p53
      %p55 = scmp.ne.s32.totalorder %s47, %s50
      %p56 = scmp.eq.s32.totalorder %s25, 0
      %p57 = por %p55, %p56
      %p58 = scmp.ne.s32.totalorder %s47, %s50
      %p59 = scmp.eq.s32.totalorder %s30, 1
      %p60 = por %p58, %p59
      %p61 = scmp.ne.s32.totalorder %s50, %s51
      %p62 = scmp.eq.s32.totalorder %s30, 0
      %p63 = por %p61, %p62
      %p64 = scmp.ne.s32.totalorder %s50, %s51
      %p65 = scmp.eq.s32.totalorder %s31, 1
      %p66 = por %p64, %p65
      %p68 = scmp.ne.s32.totalorder %s51, %s67
      %p69 = scmp.eq.s32.totalorder %s31, 0
      %p70 = por %p68, %p69
      %s72 = sadd.s32 %s71, 1
      %p75 = scmp.eq.s32.totalorder %s25, 1
      %p76 = scmp.ne.s32.totalorder %s71, %s73
      %p77 = scmp.eq.s32.totalorder %s25, 0
      %p78 = por %p76, %p77
      %p79 = scmp.ne.s32.totalorder %s71, %s73
      %p80 = scmp.eq.s32.totalorder %s30, 1
      %p81 = por %p79, %p80
      %p82 = scmp.ne.s32.totalorder %s73, %s74
      %p83 = scmp.eq.s32.totalorder %s30, 0
      %p84 = por %p82, %p83
      %p85 = scmp.ne.s32.totalorder %s73, %s74
      %p86 = scmp.eq.s32.totalorder %s31, 1
      %p87 = por %p85, %p86
      %p89 = scmp.ne.s32.totalorder %s74, %s88
      %p90 = scmp.eq.s32.totalorder %s31, 0
      %p91 = por %p89, %p90
      %s93 = sadd.s32 %s92, 1
      %p96 = scmp.eq.s32.totalorder %s25, 1
      %p97 = scmp.ne.s32.totalorder %s92, %s94
      %p98 = scmp.eq.s32.totalorder %s25, 0
      %p99 = por %p97, %p98
      %p100 = scmp.ne.s32.totalorder %s92, %s94
      %p101 = scmp.eq.s32.totalorder %s30, 1
      %p102 = por %p100, %p101
      %p103 = scmp.ne.s32.totalorder %s94, %s95
      %p104 = scmp.eq.s32.totalorder %s30, 0
      %p105 = por %p103, %p104
      %p106 = scmp.ne.s32.totalorder %s94, %s95
      %p107 = scmp.eq.s32.totalorder %s31, 1
      %p108 = por %p106, %p107
      %p110 = scmp.ne.s32.totalorder %s95, %s109
      %p111 = scmp.eq.s32.totalorder %s31, 0
      %p112 = por %p110, %p111
      %s114 = sadd.s32 %s113, 1
      %p117 = scmp.eq.s32.totalorder %s25, 1
      %p118 = scmp.ne.s32.totalorder %s113, %s115
      %p119 = scmp.eq.s32.totalorder %s25, 0
      %p120 = por %p118, %p119
      %p121 = scmp.ne.s32.totalorder %s113, %s115
      %p122 = scmp.eq.s32.totalorder %s30, 1
      %p123 = por %p121, %p122
      %p124 = scmp.ne.s32.totalorder %s115, %s116
      %p125 = scmp.eq.s32.totalorder %s30, 0
      %p126 = por %p124, %p125
      %p127 = scmp.ne.s32.totalorder %s115, %s116
      %p128 = scmp.eq.s32.totalorder %s31, 1
      %p129 = por %p127, %p128
      %p131 = scmp.ne.s32.totalorder %s116, %s130
      %p132 = scmp.eq.s32.totalorder %s31, 0
      %p133 = por %p131, %p132
      %s135 = sadd.s32 %s134, 1
      %p138 = scmp.eq.s32.totalorder %s25, 1
      %p139 = scmp.ne.s32.totalorder %s134, %s136
      %p140 = scmp.eq.s32.totalorder %s25, 0
      %p141 = por %p139, %p140
      %p142 = scmp.ne.s32.totalorder %s134, %s136
      %p143 = scmp.eq.s32.totalorder %s30, 1
      %p144 = por %p142, %p143
      %p145 = scmp.ne.s32.totalorder %s136, %s137
      %p146 = scmp.eq.s32.totalorder %s30, 0
      %p147 = por %p145, %p146
      %p148 = scmp.ne.s32.totalorder %s136, %s137
      %p149 = scmp.eq.s32.totalorder %s31, 1
      %p150 = por %p148, %p149
      %p152 = scmp.ne.s32.totalorder %s137, %s151
      %p153 = scmp.eq.s32.totalorder %s31, 0
      %p154 = por %p152, %p153
      %s156 = sadd.s32 %s155, 1
      %p159 = scmp.eq.s32.totalorder %s25, 1
      %p160 = scmp.ne.s32.totalorder %s155, %s157
      %p161 = scmp.eq.s32.totalorder %s25, 0
      %p162 = por %p160, %p161
      %p163 = scmp.ne.s32.totalorder %s155, %s157
      %p164 = scmp.eq.s32.totalorder %s30, 1
      %p165 = por %p163, %p164
      %p166 = scmp.ne.s32.totalorder %s157, %s158
      %p167 = scmp.eq.s32.totalorder %s30, 0
      %p168 = por %p166, %p167
      %p169 = scmp.ne.s32.totalorder %s157, %s158
      %p170 = scmp.eq.s32.totalorder %s31, 1
      %p171 = por %p169, %p170
      %p173 = scmp.ne.s32.totalorder %s158, %s172
      %p174 = scmp.eq.s32.totalorder %s31, 0
      %p175 = por %p173, %p174
      %s177 = sadd.s32 %s176, 1
      %p180 = scmp.eq.s32.totalorder %s25, 1
      %p181 = scmp.ne.s32.totalorder %s176, %s178
      %p182 = scmp.eq.s32.totalorder %s25, 0
      %p183 = por %p181, %p182
      %p184 = scmp.ne.s32.totalorder %s176, %s178
      %p185 = scmp.eq.s32.totalorder %s30, 1
      %p186 = por %p184, %p185
      %p187 = scmp.ne.s32.totalorder %s178, %s179
      %p188 = scmp.eq.s32.totalorder %s30, 0
      %p189 = por %p187, %p188
      %p190 = scmp.ne.s32.totalorder %s178, %s179
      %p191 = scmp.eq.s32.totalorder %s31, 1
      %p192 = por %p190, %p191
      %p194 = scmp.ne.s32.totalorder %s179, %s193
      %p195 = scmp.eq.s32.totalorder %s31, 0
      %p196 = por %p194, %p195
      %s197 = ssub.s32 %s33, %s40
      %p198 = scmp.eq.s32.totalorder %s197, 0
      %s200 = sadd.s32 %s199, 1
      %s201 = scalar_select %p198, %s199, %s200
      %p204 = pneg %p198
      %p205 = scmp.eq.s32.totalorder %s25, 1
      %p206 = por %p204, %p205
      %p207 = scmp.ne.s32.totalorder %s199, %s202
      %p208 = scmp.eq.s32.totalorder %s25, 0
      %p209 = por %p207, %p208
      %p210 = scmp.ne.s32.totalorder %s199, %s202
      %p211 = scmp.eq.s32.totalorder %s30, 1
      %p212 = por %p210, %p211
      %p213 = scmp.ne.s32.totalorder %s202, %s203
      %p214 = scmp.eq.s32.totalorder %s30, 0
      %p215 = por %p213, %p214
      %p216 = scmp.ne.s32.totalorder %s202, %s203
      %p217 = scmp.eq.s32.totalorder %s31, 1
      %p218 = por %p216, %p217
      %p220 = scmp.ne.s32.totalorder %s203, %s219
      %p221 = scmp.eq.s32.totalorder %s31, 0
      %p222 = por %p220, %p221
      %s223 = ssub.s32 %s33, %s40
      %p224 = scmp.eq.s32.totalorder %s223, 0
      %s226 = sadd.s32 %s225, 1
      %s227 = scalar_select %p224, %s225, %s226
      %p230 = pneg %p224
      %p231 = scmp.eq.s32.totalorder %s25, 1
      %p232 = por %p230, %p231
      %p233 = scmp.ne.s32.totalorder %s225, %s228
      %p234 = scmp.eq.s32.totalorder %s25, 0
      %p235 = por %p233, %p234
      %p236 = scmp.ne.s32.totalorder %s225, %s228
      %p237 = scmp.eq.s32.totalorder %s30, 1
      %p238 = por %p236, %p237
      %p239 = scmp.ne.s32.totalorder %s228, %s229
      %p240 = scmp.eq.s32.totalorder %s30, 0
      %p241 = por %p239, %p240
      %p242 = scmp.ne.s32.totalorder %s228, %s229
      %p243 = scmp.eq.s32.totalorder %s31, 1
      %p244 = por %p242, %p243
      %p246 = scmp.ne.s32.totalorder %s229, %s245
      %p247 = scmp.eq.s32.totalorder %s31, 0
      %p248 = por %p246, %p247
      %s249 = ssub.s32 %s33, %s40
      %p250 = scmp.eq.s32.totalorder %s249, 0
      %s252 = sadd.s32 %s251, 1
      %s253 = scalar_select %p250, %s251, %s252
      %p256 = pneg %p250
      %p257 = scmp.eq.s32.totalorder %s25, 1
      %p258 = por %p256, %p257
      %p259 = scmp.ne.s32.totalorder %s251, %s254
      %p260 = scmp.eq.s32.totalorder %s25, 0
      %p261 = por %p259, %p260
      %p262 = scmp.ne.s32.totalorder %s251, %s254
      %p263 = scmp.eq.s32.totalorder %s30, 1
      %p264 = por %p262, %p263
      %p265 = scmp.ne.s32.totalorder %s254, %s255
      %p266 = scmp.eq.s32.totalorder %s30, 0
      %p267 = por %p265, %p266
      %p268 = scmp.ne.s32.totalorder %s254, %s255
      %p269 = scmp.eq.s32.totalorder %s31, 1
      %p270 = por %p268, %p269
      %p272 = scmp.ne.s32.totalorder %s255, %s271
      %p273 = scmp.eq.s32.totalorder %s31, 0
      %p274 = por %p272, %p273
      %s275 = ssub.s32 %s33, %s40
      %p276 = scmp.eq.s32.totalorder %s275, 0
      %s278 = sadd.s32 %s277, 1
      %s279 = scalar_select %p276, %s277, %s278
      %p282 = pneg %p276
      %p283 = scmp.eq.s32.totalorder %s25, 1
      %p284 = por %p282, %p283
      %p285 = scmp.ne.s32.totalorder %s277, %s280
      %p286 = scmp.eq.s32.totalorder %s25, 0
      %p287 = por %p285, %p286
      %p288 = scmp.ne.s32.totalorder %s277, %s280
      %p289 = scmp.eq.s32.totalorder %s30, 1
      %p290 = por %p288, %p289
      %p291 = scmp.ne.s32.totalorder %s280, %s281
      %p292 = scmp.eq.s32.totalorder %s30, 0
      %p293 = por %p291, %p292
      %p294 = scmp.ne.s32.totalorder %s280, %s281
      %p295 = scmp.eq.s32.totalorder %s31, 1
      %p296 = por %p294, %p295
      %p298 = scmp.ne.s32.totalorder %s281, %s297
      %p299 = scmp.eq.s32.totalorder %s31, 0
      %p300 = por %p298, %p299
      %s301 = ssub.s32 %s32, %s44
      %s302 = ssub.s32 %s33, %s40
      %s303 = sor.u32 %s301, %s302
      %p304 = scmp.eq.s32.totalorder %s303, 0
      %s306 = sadd.s32 %s305, 1
      %s307 = scalar_select %p304, %s305, %s306
      %p310 = pneg %p304
      %p311 = scmp.eq.s32.totalorder %s25, 1
      %p312 = por %p310, %p311
      %p313 = scmp.ne.s32.totalorder %s305, %s308
      %p314 = scmp.eq.s32.totalorder %s25, 0
      %p315 = por %p313, %p314
      %p316 = scmp.ne.s32.totalorder %s305, %s308
      %p317 = scmp.eq.s32.totalorder %s30, 1
      %p318 = por %p316, %p317
      %p319 = scmp.ne.s32.totalorder %s308, %s309
      %p320 = scmp.eq.s32.totalorder %s30, 0
      %p321 = por %p319, %p320
      %p322 = scmp.ne.s32.totalorder %s308, %s309
      %p323 = scmp.eq.s32.totalorder %s31, 1
      %p324 = por %p322, %p323
      %p326 = scmp.ne.s32.totalorder %s309, %s325
      %p327 = scmp.eq.s32.totalorder %s31, 0
      %p328 = por %p326, %p327
      %p329 = scmp.le.s32.totalorder 1, %s25
      %p330 = scmp.lt.s32.totalorder %s25, 3
      %p331 = pnand %p329, %p330
      %p332 = pneg %p331
      // Predicated region
      $region9: #{tpu_custom_call.1} parent=5 // pred_check
        _
      $region10: #{tpu_custom_call.1} parent=5 // pred_check_branch
        %334 = sbr.rel (%p331) target = $region12
      $region11: #{tpu_custom_call.1} parent=5 // pred_region
        %s335 = ssub.s32 %s25, 1
        // Predicated region
        $region13: #{tpu_custom_call.1} parent=11 // pred_check
          %p336 = pneg %p84
        $region14: #{tpu_custom_call.1} parent=11 // pred_check_branch
          %338 = sbr.rel (%p336) target = $region16
        $region15: #{tpu_custom_call.1} parent=11 // pred_region
          _
        $region16: #{tpu_custom_call.1} parent=11 // pred_fallthru
          _
        // Predicated region
        $region17: #{tpu_custom_call.1} parent=11 // pred_check
          %p339 = pneg %p105
        $region18: #{tpu_custom_call.1} parent=11 // pred_check_branch
          %341 = sbr.rel (%p339) target = $region20
        $region19: #{tpu_custom_call.1} parent=11 // pred_region
          _
        $region20: #{tpu_custom_call.1} parent=11 // pred_fallthru
          _
        // Predicated region
        $region21: #{tpu_custom_call.1} parent=11 // pred_check
          %p342 = pneg %p126
        $region22: #{tpu_custom_call.1} parent=11 // pred_check_branch
          %344 = sbr.rel (%p342) target = $region24
        $region23: #{tpu_custom_call.1} parent=11 // pred_region
          %s346 = ssub.s32 18432, 18432
          %347 = vsyncadd [#allocation10], %s346
          %s348 = sshll.u32 [#allocation9], 4
          %s349 = int_to_ptr.vmem [resolvable:$true] %s348
          %354 = dma.hbm_to_vmem [thread:$0]  %s3, 18432, %s349, [#allocation10], 128, 128, 8
        $region24: #{tpu_custom_call.1} parent=11 // pred_fallthru
          _
        // Predicated region
        $region25: #{tpu_custom_call.1} parent=11 // pred_check
          %p355 = pneg %p147
        $region26: #{tpu_custom_call.1} parent=11 // pred_check_branch
          %357 = sbr.rel (%p355) target = $region28
        $region27: #{tpu_custom_call.1} parent=11 // pred_region
          _
        $region28: #{tpu_custom_call.1} parent=11 // pred_fallthru
          _
        // Predicated region
        $region29: #{tpu_custom_call.1} parent=11 // pred_check
          %p358 = pneg %p168
        $region30: #{tpu_custom_call.1} parent=11 // pred_check_branch
          %360 = sbr.rel (%p358) target = $region32
        $region31: #{tpu_custom_call.1} parent=11 // pred_region
          _
        $region32: #{tpu_custom_call.1} parent=11 // pred_fallthru
          _
        // Predicated region
        $region33: #{tpu_custom_call.1} parent=11 // pred_check
          %p361 = pneg %p189
        $region34: #{tpu_custom_call.1} parent=11 // pred_check_branch
          %363 = sbr.rel (%p361) target = $region36
        $region35: #{tpu_custom_call.1} parent=11 // pred_region
          _
        $region36: #{tpu_custom_call.1} parent=11 // pred_fallthru
          _
        // Predicated region
        $region37: #{tpu_custom_call.1} parent=11 // pred_check
          %p364 = pneg %p215
        $region38: #{tpu_custom_call.1} parent=11 // pred_check_branch
          %366 = sbr.rel (%p364) target = $region40
        $region39: #{tpu_custom_call.1} parent=11 // pred_region
          %s368 = ssub.s32 18432, 18432
          %369 = vsyncadd [#allocation10], %s368
          %s370 = smul.addr %s35, 128
          %s371 = scalar_lea.hbm %s7, %s370
          %s372 = sshll.u32 [#allocation11], 4
          %s373 = int_to_ptr.vmem [resolvable:$true] %s372
          %378 = dma.hbm_to_vmem [thread:$0]  %s371, 18432, %s373, [#allocation10], 128, 128, 8
        $region40: #{tpu_custom_call.1} parent=11 // pred_fallthru
          _
        // Predicated region
        $region41: #{tpu_custom_call.1} parent=11 // pred_check
          %p379 = pneg %p241
        $region42: #{tpu_custom_call.1} parent=11 // pred_check_branch
          %381 = sbr.rel (%p379) target = $region44
        $region43: #{tpu_custom_call.1} parent=11 // pred_region
          %p382 = scmp.lt.s32.totalorder %s35, 0
          %s383 = scalar_select %p382, %s35, 0
          %s384 = scalar_lea.vmem %s8, %s383
        $region44: #{tpu_custom_call.1} parent=11 // pred_fallthru
          _
        // Predicated region
        $region45: #{tpu_custom_call.1} parent=11 // pred_check
          %p385 = pneg %p267
        $region46: #{tpu_custom_call.1} parent=11 // pred_check_branch
          %387 = sbr.rel (%p385) target = $region48
        $region47: #{tpu_custom_call.1} parent=11 // pred_region
          %s389 = ssub.s32 2048, 2048
          %390 = vsyncadd [#allocation13], %s389
          %s391 = smul.addr %s35, 128
          %s392 = scalar_lea.hbm %s9, %s391
          %s393 = sshll.u32 [#allocation12], 4
          %s394 = int_to_ptr.vmem [resolvable:$true] %s393
          %399 = dma.hbm_to_vmem [thread:$0]  %s392, 2048, %s394, [#allocation13], 128, 128, 8
        $region48: #{tpu_custom_call.1} parent=11 // pred_fallthru
          _
        // Predicated region
        $region49: #{tpu_custom_call.1} parent=11 // pred_check
          %p400 = pneg %p293
        $region50: #{tpu_custom_call.1} parent=11 // pred_check_branch
          %402 = sbr.rel (%p400) target = $region52
        $region51: #{tpu_custom_call.1} parent=11 // pred_region
          %p403 = scmp.lt.s32.totalorder %s35, 0
          %s404 = scalar_select %p403, %s35, 0
          %s405 = scalar_lea.vmem %s10, %s404
        $region52: #{tpu_custom_call.1} parent=11 // pred_fallthru
          _
      $region12: #{tpu_custom_call.1} parent=5 // pred_fallthru
        _
      %p406 = scmp.lt.s32.totalorder %s25, 2
      // Predicated region
      $region53: #{tpu_custom_call.1} parent=5 // pred_check
        %p407 = pneg %p406
      $region54: #{tpu_custom_call.1} parent=5 // pred_check_branch
        %409 = sbr.rel (%p407) target = $region56
      $region55: #{tpu_custom_call.1} parent=5 // pred_region
        // Predicated region
        $region57: #{tpu_custom_call.1} parent=55 // pred_check
          %p410 = pneg %p57
        $region58: #{tpu_custom_call.1} parent=55 // pred_check_branch
          %412 = sbr.rel (%p410) target = $region60
        $region59: #{tpu_custom_call.1} parent=55 // pred_region
          %s413 = sand.u32 %s47, 1
          %s414 = scalar_lea.sflag [#allocation7], %s413
          %s415 = sand.u32 %s47, 1
          %s416 = smul.addr %s415, 256
          %s417 = scalar_lea.vmem [#allocation6], %s416
          %s419 = ssub.s32 4096, 4096
          %420 = vsyncadd %s414, %s419
          %s421 = smul.addr %s32, 32
          %s422 = smul.addr %s421, 128
          %s423 = scalar_lea.hbm %s0, %s422
          %s424 = sshll.u32 %s417, 4
          %s425 = int_to_ptr.vmem [resolvable:$true] %s424
          %430 = dma.hbm_to_vmem [thread:$0]  %s423, 4096, %s425, %s414, 128, 128, 8
        $region60: #{tpu_custom_call.1} parent=55 // pred_fallthru
          _
      $region56: #{tpu_custom_call.1} parent=5 // pred_fallthru
        _
      %p431 = scmp.le.s32.totalorder 1, %s25
      %p432 = scmp.lt.s32.totalorder %s25, 3
      %p433 = pnand %p431, %p432
      %p434 = pneg %p433
      // Predicated region
      $region61: #{tpu_custom_call.1} parent=5 // pred_check
        _
      $region62: #{tpu_custom_call.1} parent=5 // pred_check_branch
        %436 = sbr.rel (%p433) target = $region64
      $region63: #{tpu_custom_call.1} parent=5 // pred_region
        %s437 = ssub.s32 %s25, 1
        %s438 = sand.u32 %s50, 1
        %s439 = scalar_lea.sflag [#allocation7], %s438
        %s440 = sand.u32 %s50, 1
        %s441 = smul.addr %s440, 256
        %s442 = scalar_lea.vmem [#allocation6], %s441
        // Predicated region
        $region65: #{tpu_custom_call.1} parent=63 // pred_check
          %p443 = pneg %p63
        $region66: #{tpu_custom_call.1} parent=63 // pred_check_branch
          %445 = sbr.rel (%p443) target = $region68
        $region67: #{tpu_custom_call.1} parent=63 // pred_region
          %446 = dma.done %s439, 4096
        $region68: #{tpu_custom_call.1} parent=63 // pred_fallthru
          _
        // Predicated region
        $region69: #{tpu_custom_call.1} parent=63 // pred_check
          %p447 = pneg %p126
        $region70: #{tpu_custom_call.1} parent=63 // pred_check_branch
          %449 = sbr.rel (%p447) target = $region72
        $region71: #{tpu_custom_call.1} parent=63 // pred_region
          %450 = dma.done [#allocation10], 18432
        $region72: #{tpu_custom_call.1} parent=63 // pred_fallthru
          _
        // Predicated region
        $region73: #{tpu_custom_call.1} parent=63 // pred_check
          %p451 = pneg %p215
        $region74: #{tpu_custom_call.1} parent=63 // pred_check_branch
          %453 = sbr.rel (%p451) target = $region76
        $region75: #{tpu_custom_call.1} parent=63 // pred_region
          %454 = dma.done [#allocation10], 18432
        $region76: #{tpu_custom_call.1} parent=63 // pred_fallthru
          _
        // Predicated region
        $region77: #{tpu_custom_call.1} parent=63 // pred_check
          %p455 = pneg %p267
        $region78: #{tpu_custom_call.1} parent=63 // pred_check_branch
          %457 = sbr.rel (%p455) target = $region80
        $region79: #{tpu_custom_call.1} parent=63 // pred_region
          %458 = dma.done [#allocation13], 2048
        $region80: #{tpu_custom_call.1} parent=63 // pred_fallthru
          _
        %s459 = sand.u32 %s50, 1
        %s460 = scalar_lea.sflag [#allocation7], %s459
        %s461 = sand.u32 %s50, 1
        %s462 = smul.addr %s461, 256
        %s463 = scalar_lea.vmem [#allocation6], %s462
        %p464 = pneg %p63
        %p465 = pneg %p60
        %p466 = pneg %p84
        %p467 = pneg %p81
        %p468 = pneg %p105
        %p469 = pneg %p102
        %p470 = pneg %p126
        %p471 = pneg %p123
        %p472 = pneg %p147
        %p473 = pneg %p144
        %p474 = pneg %p168
        %p475 = pneg %p165
        %p476 = pneg %p189
        %p477 = pneg %p186
        %p478 = pneg %p215
        %p479 = pneg %p212
        %p480 = scmp.lt.s32.totalorder %s35, 0
        %s481 = scalar_select %p480, %s35, 0
        %s482 = scalar_lea.vmem %s8, %s481
        %p483 = pneg %p241
        %p484 = pneg %p238
        %p485 = pneg %p267
        %p486 = pneg %p264
        %p487 = scmp.lt.s32.totalorder %s35, 0
        %s488 = scalar_select %p487, %s35, 0
        %s489 = scalar_lea.vmem %s10, %s488
        %p490 = pneg %p293
        %p491 = pneg %p290
        %p492 = pneg %p321
        %p493 = pneg %p318
        %s494 = sand.u32 %s308, 1
        %s495 = scalar_lea.sflag [#allocation8], %s494
        %s496 = sand.u32 %s308, 1
        %s497 = smul.addr %s496, 256
        %s498 = scalar_lea.vmem [#allocation14], %s497
        %p499 = scmp.lt.s32.totalorder %s35, 0
        %s500 = scalar_select %p499, %s35, 0
        %s501 = scalar_lea.vmem %s8, %s500
        %p502 = scmp.lt.s32.totalorder %s35, 0
        %s503 = scalar_select %p502, %s35, 0
        %s504 = scalar_lea.vmem %s10, %s503
        %p505 = scmp.eq.s32.totalorder %s35, 0
        // Predicated region
        $region81: #{tpu_custom_call.1} parent=63 // pred_check
          %p506 = pneg %p505
        $region82: #{tpu_custom_call.1} parent=63 // pred_check_branch
          %508 = sbr.rel (%p506) target = $region84
        $region83: #{tpu_custom_call.1} parent=63 // pred_region
          %509 = vst [vmem:[#allocation2] sm:$0xff] 0.0
          %510 = vst [vmem:[#allocation2 + $0x8] sm:$0xff] 0.0
          %511 = vst [vmem:[#allocation2 + $0x10] sm:$0xff] 0.0
          %512 = vst [vmem:[#allocation2 + $0x18] sm:$0xff] 0.0
          %513 = vst [vmem:[#allocation2 + $0x20] sm:$0xff] 0.0
          %514 = vst [vmem:[#allocation2 + $0x28] sm:$0xff] 0.0
          %515 = vst [vmem:[#allocation2 + $0x30] sm:$0xff] 0.0
          %516 = vst [vmem:[#allocation2 + $0x38] sm:$0xff] 0.0
          %517 = vst [vmem:[#allocation2 + $0x40] sm:$0xff] 0.0
          %518 = vst [vmem:[#allocation2 + $0x48] sm:$0xff] 0.0
          %519 = vst [vmem:[#allocation2 + $0x50] sm:$0xff] 0.0
          %520 = vst [vmem:[#allocation2 + $0x58] sm:$0xff] 0.0
          %521 = vst [vmem:[#allocation2 + $0x60] sm:$0xff] 0.0
          %522 = vst [vmem:[#allocation2 + $0x68] sm:$0xff] 0.0
          %523 = vst [vmem:[#allocation2 + $0x70] sm:$0xff] 0.0
          %524 = vst [vmem:[#allocation2 + $0x78] sm:$0xff] 0.0
          %525 = vst [vmem:[#allocation2 + $0x80] sm:$0xff] 0.0
          %526 = vst [vmem:[#allocation2 + $0x88] sm:$0xff] 0.0
          %527 = vst [vmem:[#allocation2 + $0x90] sm:$0xff] 0.0
          %528 = vst [vmem:[#allocation2 + $0x98] sm:$0xff] 0.0
          %529 = vst [vmem:[#allocation2 + $0xa0] sm:$0xff] 0.0
          %530 = vst [vmem:[#allocation2 + $0xa8] sm:$0xff] 0.0
          %531 = vst [vmem:[#allocation2 + $0xb0] sm:$0xff] 0.0
          %532 = vst [vmem:[#allocation2 + $0xb8] sm:$0xff] 0.0
          %533 = vst [vmem:[#allocation2 + $0xc0] sm:$0xff] 0.0
          %534 = vst [vmem:[#allocation2 + $0xc8] sm:$0xff] 0.0
          %535 = vst [vmem:[#allocation2 + $0xd0] sm:$0xff] 0.0
          %536 = vst [vmem:[#allocation2 + $0xd8] sm:$0xff] 0.0
          %537 = vst [vmem:[#allocation2 + $0xe0] sm:$0xff] 0.0
          %538 = vst [vmem:[#allocation2 + $0xe8] sm:$0xff] 0.0
          %539 = vst [vmem:[#allocation2 + $0xf0] sm:$0xff] 0.0
          %540 = vst [vmem:[#allocation2 + $0xf8] sm:$0xff] 0.0
          %541 = vst [vmem:[#allocation2 + $0x100] sm:$0xff] 0.0
          %542 = vst [vmem:[#allocation2 + $0x108] sm:$0xff] 0.0
          %543 = vst [vmem:[#allocation2 + $0x110] sm:$0xff] 0.0
          %544 = vst [vmem:[#allocation2 + $0x118] sm:$0xff] 0.0
          %545 = vst [vmem:[#allocation2 + $0x120] sm:$0xff] 0.0
          %546 = vst [vmem:[#allocation2 + $0x128] sm:$0xff] 0.0
          %547 = vst [vmem:[#allocation2 + $0x130] sm:$0xff] 0.0
          %548 = vst [vmem:[#allocation2 + $0x138] sm:$0xff] 0.0
          %549 = vst [vmem:[#allocation2 + $0x140] sm:$0xff] 0.0
          %550 = vst [vmem:[#allocation2 + $0x148] sm:$0xff] 0.0
          %551 = vst [vmem:[#allocation2 + $0x150] sm:$0xff] 0.0
          %552 = vst [vmem:[#allocation2 + $0x158] sm:$0xff] 0.0
          %553 = vst [vmem:[#allocation2 + $0x160] sm:$0xff] 0.0
          %554 = vst [vmem:[#allocation2 + $0x168] sm:$0xff] 0.0
          %555 = vst [vmem:[#allocation2 + $0x170] sm:$0xff] 0.0
          %556 = vst [vmem:[#allocation2 + $0x178] sm:$0xff] 0.0
          %557 = vst [vmem:[#allocation2 + $0x180] sm:$0xff] 0.0
          %558 = vst [vmem:[#allocation2 + $0x188] sm:$0xff] 0.0
          %559 = vst [vmem:[#allocation2 + $0x190] sm:$0xff] 0.0
          %560 = vst [vmem:[#allocation2 + $0x198] sm:$0xff] 0.0
          %561 = vst [vmem:[#allocation2 + $0x1a0] sm:$0xff] 0.0
          %562 = vst [vmem:[#allocation2 + $0x1a8] sm:$0xff] 0.0
          %563 = vst [vmem:[#allocation2 + $0x1b0] sm:$0xff] 0.0
          %564 = vst [vmem:[#allocation2 + $0x1b8] sm:$0xff] 0.0
          %565 = vst [vmem:[#allocation2 + $0x1c0] sm:$0xff] 0.0
          %566 = vst [vmem:[#allocation2 + $0x1c8] sm:$0xff] 0.0
          %567 = vst [vmem:[#allocation2 + $0x1d0] sm:$0xff] 0.0
          %568 = vst [vmem:[#allocation2 + $0x1d8] sm:$0xff] 0.0
          %569 = vst [vmem:[#allocation2 + $0x1e0] sm:$0xff] 0.0
          %570 = vst [vmem:[#allocation2 + $0x1e8] sm:$0xff] 0.0
          %571 = vst [vmem:[#allocation2 + $0x1f0] sm:$0xff] 0.0
          %572 = vst [vmem:[#allocation2 + $0x1f8] sm:$0xff] 0.0
          %573 = vst [vmem:[#allocation2 + $0x200] sm:$0xff] 0.0
          %574 = vst [vmem:[#allocation2 + $0x208] sm:$0xff] 0.0
          %575 = vst [vmem:[#allocation2 + $0x210] sm:$0xff] 0.0
          %576 = vst [vmem:[#allocation2 + $0x218] sm:$0xff] 0.0
          %577 = vst [vmem:[#allocation2 + $0x220] sm:$0xff] 0.0
          %578 = vst [vmem:[#allocation2 + $0x228] sm:$0xff] 0.0
          %579 = vst [vmem:[#allocation2 + $0x230] sm:$0xff] 0.0
          %580 = vst [vmem:[#allocation2 + $0x238] sm:$0xff] 0.0
          %581 = vst [vmem:[#allocation2 + $0x240] sm:$0xff] 0.0
          %582 = vst [vmem:[#allocation2 + $0x248] sm:$0xff] 0.0
          %583 = vst [vmem:[#allocation2 + $0x250] sm:$0xff] 0.0
          %584 = vst [vmem:[#allocation2 + $0x258] sm:$0xff] 0.0
          %585 = vst [vmem:[#allocation2 + $0x260] sm:$0xff] 0.0
          %586 = vst [vmem:[#allocation2 + $0x268] sm:$0xff] 0.0
          %587 = vst [vmem:[#allocation2 + $0x270] sm:$0xff] 0.0
          %588 = vst [vmem:[#allocation2 + $0x278] sm:$0xff] 0.0
          %589 = vst [vmem:[#allocation2 + $0x280] sm:$0xff] 0.0
          %590 = vst [vmem:[#allocation2 + $0x288] sm:$0xff] 0.0
          %591 = vst [vmem:[#allocation2 + $0x290] sm:$0xff] 0.0
          %592 = vst [vmem:[#allocation2 + $0x298] sm:$0xff] 0.0
          %593 = vst [vmem:[#allocation2 + $0x2a0] sm:$0xff] 0.0
          %594 = vst [vmem:[#allocation2 + $0x2a8] sm:$0xff] 0.0
          %595 = vst [vmem:[#allocation2 + $0x2b0] sm:$0xff] 0.0
          %596 = vst [vmem:[#allocation2 + $0x2b8] sm:$0xff] 0.0
          %597 = vst [vmem:[#allocation2 + $0x2c0] sm:$0xff] 0.0
          %598 = vst [vmem:[#allocation2 + $0x2c8] sm:$0xff] 0.0
          %599 = vst [vmem:[#allocation3] sm:$0xff] 0.0
          %600 = vst [vmem:[#allocation3 + $0x8] sm:$0xff] 0.0
          %601 = vst [vmem:[#allocation3 + $0x10] sm:$0xff] 0.0
          %602 = vst [vmem:[#allocation3 + $0x18] sm:$0xff] 0.0
          %603 = vst [vmem:[#allocation3 + $0x20] sm:$0xff] 0.0
          %604 = vst [vmem:[#allocation3 + $0x28] sm:$0xff] 0.0
          %605 = vst [vmem:[#allocation3 + $0x30] sm:$0xff] 0.0
          %606 = vst [vmem:[#allocation3 + $0x38] sm:$0xff] 0.0
          %607 = vst [vmem:[#allocation3 + $0x40] sm:$0xff] 0.0
          %608 = vst [vmem:[#allocation3 + $0x48] sm:$0xff] 0.0
          %609 = vst [vmem:[#allocation3 + $0x50] sm:$0xff] 0.0
          %610 = vst [vmem:[#allocation3 + $0x58] sm:$0xff] 0.0
          %611 = vst [vmem:[#allocation3 + $0x60] sm:$0xff] 0.0
          %612 = vst [vmem:[#allocation3 + $0x68] sm:$0xff] 0.0
          %613 = vst [vmem:[#allocation3 + $0x70] sm:$0xff] 0.0
          %614 = vst [vmem:[#allocation3 + $0x78] sm:$0xff] 0.0
          %615 = vst [vmem:[#allocation3 + $0x80] sm:$0xff] 0.0
          %616 = vst [vmem:[#allocation3 + $0x88] sm:$0xff] 0.0
          %617 = vst [vmem:[#allocation3 + $0x90] sm:$0xff] 0.0
          %618 = vst [vmem:[#allocation3 + $0x98] sm:$0xff] 0.0
          %619 = vst [vmem:[#allocation3 + $0xa0] sm:$0xff] 0.0
          %620 = vst [vmem:[#allocation3 + $0xa8] sm:$0xff] 0.0
          %621 = vst [vmem:[#allocation3 + $0xb0] sm:$0xff] 0.0
          %622 = vst [vmem:[#allocation3 + $0xb8] sm:$0xff] 0.0
          %623 = vst [vmem:[#allocation3 + $0xc0] sm:$0xff] 0.0
          %624 = vst [vmem:[#allocation3 + $0xc8] sm:$0xff] 0.0
          %625 = vst [vmem:[#allocation3 + $0xd0] sm:$0xff] 0.0
          %626 = vst [vmem:[#allocation3 + $0xd8] sm:$0xff] 0.0
          %627 = vst [vmem:[#allocation3 + $0xe0] sm:$0xff] 0.0
          %628 = vst [vmem:[#allocation3 + $0xe8] sm:$0xff] 0.0
          %629 = vst [vmem:[#allocation3 + $0xf0] sm:$0xff] 0.0
          %630 = vst [vmem:[#allocation3 + $0xf8] sm:$0xff] 0.0
          %631 = vst [vmem:[#allocation3 + $0x100] sm:$0xff] 0.0
          %632 = vst [vmem:[#allocation3 + $0x108] sm:$0xff] 0.0
          %633 = vst [vmem:[#allocation3 + $0x110] sm:$0xff] 0.0
          %634 = vst [vmem:[#allocation3 + $0x118] sm:$0xff] 0.0
          %635 = vst [vmem:[#allocation3 + $0x120] sm:$0xff] 0.0
          %636 = vst [vmem:[#allocation3 + $0x128] sm:$0xff] 0.0
          %637 = vst [vmem:[#allocation3 + $0x130] sm:$0xff] 0.0
          %638 = vst [vmem:[#allocation3 + $0x138] sm:$0xff] 0.0
          %639 = vst [vmem:[#allocation3 + $0x140] sm:$0xff] 0.0
          %640 = vst [vmem:[#allocation3 + $0x148] sm:$0xff] 0.0
          %641 = vst [vmem:[#allocation3 + $0x150] sm:$0xff] 0.0
          %642 = vst [vmem:[#allocation3 + $0x158] sm:$0xff] 0.0
          %643 = vst [vmem:[#allocation3 + $0x160] sm:$0xff] 0.0
          %644 = vst [vmem:[#allocation3 + $0x168] sm:$0xff] 0.0
          %645 = vst [vmem:[#allocation3 + $0x170] sm:$0xff] 0.0
          %646 = vst [vmem:[#allocation3 + $0x178] sm:$0xff] 0.0
          %647 = vst [vmem:[#allocation3 + $0x180] sm:$0xff] 0.0
          %648 = vst [vmem:[#allocation3 + $0x188] sm:$0xff] 0.0
          %649 = vst [vmem:[#allocation3 + $0x190] sm:$0xff] 0.0
          %650 = vst [vmem:[#allocation3 + $0x198] sm:$0xff] 0.0
          %651 = vst [vmem:[#allocation3 + $0x1a0] sm:$0xff] 0.0
          %652 = vst [vmem:[#allocation3 + $0x1a8] sm:$0xff] 0.0
          %653 = vst [vmem:[#allocation3 + $0x1b0] sm:$0xff] 0.0
          %654 = vst [vmem:[#allocation3 + $0x1b8] sm:$0xff] 0.0
          %655 = vst [vmem:[#allocation3 + $0x1c0] sm:$0xff] 0.0
          %656 = vst [vmem:[#allocation3 + $0x1c8] sm:$0xff] 0.0
          %657 = vst [vmem:[#allocation3 + $0x1d0] sm:$0xff] 0.0
          %658 = vst [vmem:[#allocation3 + $0x1d8] sm:$0xff] 0.0
          %659 = vst [vmem:[#allocation3 + $0x1e0] sm:$0xff] 0.0
          %660 = vst [vmem:[#allocation3 + $0x1e8] sm:$0xff] 0.0
          %661 = vst [vmem:[#allocation3 + $0x1f0] sm:$0xff] 0.0
          %662 = vst [vmem:[#allocation3 + $0x1f8] sm:$0xff] 0.0
          %663 = vst [vmem:[#allocation3 + $0x200] sm:$0xff] 0.0
          %664 = vst [vmem:[#allocation3 + $0x208] sm:$0xff] 0.0
          %665 = vst [vmem:[#allocation3 + $0x210] sm:$0xff] 0.0
          %666 = vst [vmem:[#allocation3 + $0x218] sm:$0xff] 0.0
          %667 = vst [vmem:[#allocation3 + $0x220] sm:$0xff] 0.0
          %668 = vst [vmem:[#allocation3 + $0x228] sm:$0xff] 0.0
          %669 = vst [vmem:[#allocation3 + $0x230] sm:$0xff] 0.0
          %670 = vst [vmem:[#allocation3 + $0x238] sm:$0xff] 0.0
          %671 = vst [vmem:[#allocation3 + $0x240] sm:$0xff] 0.0
          %672 = vst [vmem:[#allocation3 + $0x248] sm:$0xff] 0.0
          %673 = vst [vmem:[#allocation3 + $0x250] sm:$0xff] 0.0
          %674 = vst [vmem:[#allocation3 + $0x258] sm:$0xff] 0.0
          %675 = vst [vmem:[#allocation3 + $0x260] sm:$0xff] 0.0
          %676 = vst [vmem:[#allocation3 + $0x268] sm:$0xff] 0.0
          %677 = vst [vmem:[#allocation3 + $0x270] sm:$0xff] 0.0
          %678 = vst [vmem:[#allocation3 + $0x278] sm:$0xff] 0.0
          %679 = vst [vmem:[#allocation3 + $0x280] sm:$0xff] 0.0
          %680 = vst [vmem:[#allocation3 + $0x288] sm:$0xff] 0.0
          %681 = vst [vmem:[#allocation3 + $0x290] sm:$0xff] 0.0
          %682 = vst [vmem:[#allocation3 + $0x298] sm:$0xff] 0.0
          %683 = vst [vmem:[#allocation3 + $0x2a0] sm:$0xff] 0.0
          %684 = vst [vmem:[#allocation3 + $0x2a8] sm:$0xff] 0.0
          %685 = vst [vmem:[#allocation3 + $0x2b0] sm:$0xff] 0.0
          %686 = vst [vmem:[#allocation3 + $0x2b8] sm:$0xff] 0.0
          %687 = vst [vmem:[#allocation3 + $0x2c0] sm:$0xff] 0.0
          %688 = vst [vmem:[#allocation3 + $0x2c8] sm:$0xff] 0.0
          %v689 = vld [vmem:[%s442] sm:$0xff]
          %v690 = vld [vmem:[%s442 + $0x8] sm:$0xff]
          %v691 = vld [vmem:[%s442 + $0x10] sm:$0xff]
          %v692 = vld [vmem:[%s442 + $0x18] sm:$0xff]
          %v693 = vld [vmem:[%s442 + $0x20] sm:$0xff]
          %v694 = vld [vmem:[%s442 + $0x28] sm:$0xff]
          %v695 = vld [vmem:[%s442 + $0x30] sm:$0xff]
          %v696 = vld [vmem:[%s442 + $0x38] sm:$0xff]
          %v697 = vld [vmem:[%s442 + $0x40] sm:$0xff]
          %v698 = vld [vmem:[%s442 + $0x48] sm:$0xff]
          %v699 = vld [vmem:[%s442 + $0x50] sm:$0xff]
          %v700 = vld [vmem:[%s442 + $0x58] sm:$0xff]
          %v701 = vld [vmem:[%s442 + $0x60] sm:$0xff]
          %v702 = vld [vmem:[%s442 + $0x68] sm:$0xff]
          %v703 = vld [vmem:[%s442 + $0x70] sm:$0xff]
          %v704 = vld [vmem:[%s442 + $0x78] sm:$0xff]
          %v705 = vld [vmem:[%s442 + $0x80] sm:$0xff]
          %v706 = vld [vmem:[%s442 + $0x88] sm:$0xff]
          %v707 = vld [vmem:[%s442 + $0x90] sm:$0xff]
          %v708 = vld [vmem:[%s442 + $0x98] sm:$0xff]
          %v709 = vld [vmem:[%s442 + $0xa0] sm:$0xff]
          %v710 = vld [vmem:[%s442 + $0xa8] sm:$0xff]
          %v711 = vld [vmem:[%s442 + $0xb0] sm:$0xff]
          %v712 = vld [vmem:[%s442 + $0xb8] sm:$0xff]
          %v713 = vld [vmem:[%s442 + $0xc0] sm:$0xff]
          %v714 = vld [vmem:[%s442 + $0xc8] sm:$0xff]
          %v715 = vld [vmem:[%s442 + $0xd0] sm:$0xff]
          %v716 = vld [vmem:[%s442 + $0xd8] sm:$0xff]
          %v717 = vld [vmem:[%s442 + $0xe0] sm:$0xff]
          %v718 = vld [vmem:[%s442 + $0xe8] sm:$0xff]
          %v719 = vld [vmem:[%s442 + $0xf0] sm:$0xff]
          %v720 = vld [vmem:[%s442 + $0xf8] sm:$0xff]
          %v721 = vld [vmem:[%s1] sm:$0x1]
          %v723 = vlaneseq
          %v724 = vshrl.u32 %v723, 7
          %v725 = vsub.s32 0, %v724
          %v726 = vrot.slane %v721, %v725
          %v728 = vmul.f32 %v689, %v726
          %v729 = vmul.f32 %v690, %v726
          %v730 = vmul.f32 %v691, %v726
          %v731 = vmul.f32 %v692, %v726
          %v732 = vmul.f32 %v693, %v726
          %v733 = vmul.f32 %v694, %v726
          %v734 = vmul.f32 %v695, %v726
          %v735 = vmul.f32 %v696, %v726
          %v736 = vmul.f32 %v697, %v726
          %v737 = vmul.f32 %v698, %v726
          %v738 = vmul.f32 %v699, %v726
          %v739 = vmul.f32 %v700, %v726
          %v740 = vmul.f32 %v701, %v726
          %v741 = vmul.f32 %v702, %v726
          %v742 = vmul.f32 %v703, %v726
          %v743 = vmul.f32 %v704, %v726
          %v744 = vmul.f32 %v705, %v726
          %v745 = vmul.f32 %v706, %v726
          %v746 = vmul.f32 %v707, %v726
          %v747 = vmul.f32 %v708, %v726
          %v748 = vmul.f32 %v709, %v726
          %v749 = vmul.f32 %v710, %v726
          %v750 = vmul.f32 %v711, %v726
          %v751 = vmul.f32 %v712, %v726
          %v752 = vmul.f32 %v713, %v726
          %v753 = vmul.f32 %v714, %v726
          %v754 = vmul.f32 %v715, %v726
          %v755 = vmul.f32 %v716, %v726
          %v756 = vmul.f32 %v717, %v726
          %v757 = vmul.f32 %v718, %v726
          %v758 = vmul.f32 %v719, %v726
          %v759 = vmul.f32 %v720, %v726
          %v760 = vld [vmem:[%s2] sm:$0x1]
          %v762 = vlaneseq
          %v763 = vshrl.u32 %v762, 7
          %v764 = vsub.s32 0, %v763
          %v765 = vrot.slane %v760, %v764
          %v767 = vadd.f32 %v728, %v765
          %v768 = vadd.f32 %v729, %v765
          %v769 = vadd.f32 %v730, %v765
          %v770 = vadd.f32 %v731, %v765
          %v771 = vadd.f32 %v732, %v765
          %v772 = vadd.f32 %v733, %v765
          %v773 = vadd.f32 %v734, %v765
          %v774 = vadd.f32 %v735, %v765
          %v775 = vadd.f32 %v736, %v765
          %v776 = vadd.f32 %v737, %v765
          %v777 = vadd.f32 %v738, %v765
          %v778 = vadd.f32 %v739, %v765
          %v779 = vadd.f32 %v740, %v765
          %v780 = vadd.f32 %v741, %v765
          %v781 = vadd.f32 %v742, %v765
          %v782 = vadd.f32 %v743, %v765
          %v783 = vadd.f32 %v744, %v765
          %v784 = vadd.f32 %v745, %v765
          %v785 = vadd.f32 %v746, %v765
          %v786 = vadd.f32 %v747, %v765
          %v787 = vadd.f32 %v748, %v765
          %v788 = vadd.f32 %v749, %v765
          %v789 = vadd.f32 %v750, %v765
          %v790 = vadd.f32 %v751, %v765
          %v791 = vadd.f32 %v752, %v765
          %v792 = vadd.f32 %v753, %v765
          %v793 = vadd.f32 %v754, %v765
          %v794 = vadd.f32 %v755, %v765
          %v795 = vadd.f32 %v756, %v765
          %v796 = vadd.f32 %v757, %v765
          %v797 = vadd.f32 %v758, %v765
          %v798 = vadd.f32 %v759, %v765
          %v799 = vmax.f32 %v767, 0.0
          %v800 = vmax.f32 %v768, 0.0
          %v801 = vmax.f32 %v769, 0.0
          %v802 = vmax.f32 %v770, 0.0
          %v803 = vmax.f32 %v771, 0.0
          %v804 = vmax.f32 %v772, 0.0
          %v805 = vmax.f32 %v773, 0.0
          %v806 = vmax.f32 %v774, 0.0
          %v807 = vmax.f32 %v775, 0.0
          %v808 = vmax.f32 %v776, 0.0
          %v809 = vmax.f32 %v777, 0.0
          %v810 = vmax.f32 %v778, 0.0
          %v811 = vmax.f32 %v779, 0.0
          %v812 = vmax.f32 %v780, 0.0
          %v813 = vmax.f32 %v781, 0.0
          %v814 = vmax.f32 %v782, 0.0
          %v815 = vmax.f32 %v783, 0.0
          %v816 = vmax.f32 %v784, 0.0
          %v817 = vmax.f32 %v785, 0.0
          %v818 = vmax.f32 %v786, 0.0
          %v819 = vmax.f32 %v787, 0.0
          %v820 = vmax.f32 %v788, 0.0
          %v821 = vmax.f32 %v789, 0.0
          %v822 = vmax.f32 %v790, 0.0
          %v823 = vmax.f32 %v791, 0.0
          %v824 = vmax.f32 %v792, 0.0
          %v825 = vmax.f32 %v793, 0.0
          %v826 = vmax.f32 %v794, 0.0
          %v827 = vmax.f32 %v795, 0.0
          %v828 = vmax.f32 %v796, 0.0
          %v829 = vmax.f32 %v797, 0.0
          %v830 = vmax.f32 %v798, 0.0
          %s831 = scalar_lea.vmem [#allocation2], 40
          %832 = vst [vmem:[%s831 + $0x10] sm:$0xff] %v799
          %833 = vst [vmem:[%s831 + $0x18] sm:$0xff] %v800
          %834 = vst [vmem:[%s831 + $0x38] sm:$0xff] %v801
          %835 = vst [vmem:[%s831 + $0x40] sm:$0xff] %v802
          %836 = vst [vmem:[%s831 + $0x60] sm:$0xff] %v803
          %837 = vst [vmem:[%s831 + $0x68] sm:$0xff] %v804
          %838 = vst [vmem:[%s831 + $0x88] sm:$0xff] %v805
          %839 = vst [vmem:[%s831 + $0x90] sm:$0xff] %v806
          %840 = vst [vmem:[%s831 + $0xb0] sm:$0xff] %v807
          %841 = vst [vmem:[%s831 + $0xb8] sm:$0xff] %v808
          %842 = vst [vmem:[%s831 + $0xd8] sm:$0xff] %v809
          %843 = vst [vmem:[%s831 + $0xe0] sm:$0xff] %v810
          %844 = vst [vmem:[%s831 + $0x100] sm:$0xff] %v811
          %845 = vst [vmem:[%s831 + $0x108] sm:$0xff] %v812
          %846 = vst [vmem:[%s831 + $0x128] sm:$0xff] %v813
          %847 = vst [vmem:[%s831 + $0x130] sm:$0xff] %v814
          %848 = vst [vmem:[%s831 + $0x150] sm:$0xff] %v815
          %849 = vst [vmem:[%s831 + $0x158] sm:$0xff] %v816
          %850 = vst [vmem:[%s831 + $0x178] sm:$0xff] %v817
          %851 = vst [vmem:[%s831 + $0x180] sm:$0xff] %v818
          %852 = vst [vmem:[%s831 + $0x1a0] sm:$0xff] %v819
          %853 = vst [vmem:[%s831 + $0x1a8] sm:$0xff] %v820
          %854 = vst [vmem:[%s831 + $0x1c8] sm:$0xff] %v821
          %855 = vst [vmem:[%s831 + $0x1d0] sm:$0xff] %v822
          %856 = vst [vmem:[%s831 + $0x1f0] sm:$0xff] %v823
          %857 = vst [vmem:[%s831 + $0x1f8] sm:$0xff] %v824
          %858 = vst [vmem:[%s831 + $0x218] sm:$0xff] %v825
          %859 = vst [vmem:[%s831 + $0x220] sm:$0xff] %v826
          %860 = vst [vmem:[%s831 + $0x240] sm:$0xff] %v827
          %861 = vst [vmem:[%s831 + $0x248] sm:$0xff] %v828
          %862 = vst [vmem:[%s831 + $0x268] sm:$0xff] %v829
          %863 = vst [vmem:[%s831 + $0x270] sm:$0xff] %v830
          %v864 = vld [vmem:[#allocation2 + $0xf] sm:$0xff]
          %v865 = vld [vmem:[#allocation2 + $0x17] sm:$0xff]
          %v866 = vld [vmem:[#allocation2 + $0x37] sm:$0xff]
          %v867 = vld [vmem:[#allocation2 + $0x3f] sm:$0xff]
          %v868 = vld [vmem:[#allocation2 + $0x5f] sm:$0xff]
          %v869 = vld [vmem:[#allocation2 + $0x67] sm:$0xff]
          %v870 = vld [vmem:[#allocation2 + $0x87] sm:$0xff]
          %v871 = vld [vmem:[#allocation2 + $0x8f] sm:$0xff]
          %v872 = vld [vmem:[#allocation2 + $0xaf] sm:$0xff]
          %v873 = vld [vmem:[#allocation2 + $0xb7] sm:$0xff]
          %v874 = vld [vmem:[#allocation2 + $0xd7] sm:$0xff]
          %v875 = vld [vmem:[#allocation2 + $0xdf] sm:$0xff]
          %v876 = vld [vmem:[#allocation2 + $0xff] sm:$0xff]
          %v877 = vld [vmem:[#allocation2 + $0x107] sm:$0xff]
          %v878 = vld [vmem:[#allocation2 + $0x127] sm:$0xff]
          %v879 = vld [vmem:[#allocation2 + $0x12f] sm:$0xff]
          %v880 = vld [vmem:[#allocation2 + $0x14f] sm:$0xff]
          %v881 = vld [vmem:[#allocation2 + $0x157] sm:$0xff]
          %v882 = vld [vmem:[#allocation2 + $0x177] sm:$0xff]
          %v883 = vld [vmem:[#allocation2 + $0x17f] sm:$0xff]
          %v884 = vld [vmem:[#allocation2 + $0x19f] sm:$0xff]
          %v885 = vld [vmem:[#allocation2 + $0x1a7] sm:$0xff]
          %v886 = vld [vmem:[#allocation2 + $0x1c7] sm:$0xff]
          %v887 = vld [vmem:[#allocation2 + $0x1cf] sm:$0xff]
          %v888 = vld [vmem:[#allocation2 + $0x1ef] sm:$0xff]
          %v889 = vld [vmem:[#allocation2 + $0x1f7] sm:$0xff]
          %v890 = vld [vmem:[#allocation2 + $0x217] sm:$0xff]
          %v891 = vld [vmem:[#allocation2 + $0x21f] sm:$0xff]
          %v892 = vld [vmem:[#allocation2 + $0x23f] sm:$0xff]
          %v893 = vld [vmem:[#allocation2 + $0x247] sm:$0xff]
          %v894 = vld [vmem:[#allocation2 + $0x267] sm:$0xff]
          %v895 = vld [vmem:[#allocation2 + $0x26f] sm:$0xff]
          %v896 = vld [vmem:[#allocation9] sm:$0xff]
          %v897 = vld [vmem:[#allocation9 + $0x8] sm:$0xff]
          %v898 = vld [vmem:[#allocation9 + $0x10] sm:$0xff]
          %v899 = vld [vmem:[#allocation9 + $0x18] sm:$0xff]
          %v900 = vld [vmem:[#allocation9 + $0x20] sm:$0xff]
          %v901 = vld [vmem:[#allocation9 + $0x28] sm:$0xff]
          %v902 = vld [vmem:[#allocation9 + $0x30] sm:$0xff]
          %v903 = vld [vmem:[#allocation9 + $0x38] sm:$0xff]
          %v904 = vld [vmem:[#allocation9 + $0x40] sm:$0xff]
          %v905 = vld [vmem:[#allocation9 + $0x48] sm:$0xff]
          %v906 = vld [vmem:[#allocation9 + $0x50] sm:$0xff]
          %v907 = vld [vmem:[#allocation9 + $0x58] sm:$0xff]
          %v908 = vld [vmem:[#allocation9 + $0x60] sm:$0xff]
          %v909 = vld [vmem:[#allocation9 + $0x68] sm:$0xff]
          %v910 = vld [vmem:[#allocation9 + $0x70] sm:$0xff]
          %v911 = vld [vmem:[#allocation9 + $0x78] sm:$0xff]
          %912 = vmatprep.subr.mxu0 0.0
          %913 = vmatpush1.msra.mxu0 %v911
          %914 = vmatprep.subr.mxu0 0.0
          %915 = vmatpush1.msra.mxu0 %v910
          %916 = vmatprep.subr.mxu0 0.0
          %917 = vmatpush1.msra.mxu0 %v909
          %918 = vmatprep.subr.mxu0 0.0
          %919 = vmatpush1.msra.mxu0 %v908
          %920 = vmatprep.subr.mxu0 0.0
          %921 = vmatpush1.msra.mxu0 %v907
          %922 = vmatprep.subr.mxu0 0.0
          %923 = vmatpush1.msra.mxu0 %v906
          %924 = vmatprep.subr.mxu0 0.0
          %925 = vmatpush1.msra.mxu0 %v905
          %926 = vmatprep.subr.mxu0 0.0
          %927 = vmatpush1.msra.mxu0 %v904
          %928 = vmatprep.subr.mxu0 0.0
          %929 = vmatpush1.msra.mxu0 %v903
          %930 = vmatprep.subr.mxu0 0.0
          %931 = vmatpush1.msra.mxu0 %v902
          %932 = vmatprep.subr.mxu0 0.0
          %933 = vmatpush1.msra.mxu0 %v901
          %934 = vmatprep.subr.mxu0 0.0
          %935 = vmatpush1.msra.mxu0 %v900
          %936 = vmatprep.subr.mxu0 0.0
          %937 = vmatpush1.msra.mxu0 %v899
          %938 = vmatprep.subr.mxu0 0.0
          %939 = vmatpush1.msra.mxu0 %v898
          %940 = vmatprep.subr.mxu0 0.0
          %941 = vmatpush1.msra.mxu0 %v897
          %942 = vmatprep.subr.mxu0 0.0
          %943 = vmatpush1.msra.mxu0 %v896
          %944 = vmatprep.subr.mxu0 0.0
          %945 = vmatpush2.msra.mxu0 0.0
          %946 = vmatprep.subr.mxu0 0.0
          %947 = vmatpush2.msra.mxu0 0.0
          %948 = vmatprep.subr.mxu0 0.0
          %949 = vmatpush2.msra.mxu0 0.0
          %950 = vmatprep.subr.mxu0 0.0
          %951 = vmatpush2.msra.mxu0 0.0
          %952 = vmatprep.subr.mxu0 0.0
          %953 = vmatpush2.msra.mxu0 0.0
          %954 = vmatprep.subr.mxu0 0.0
          %955 = vmatpush2.msra.mxu0 0.0
          %956 = vmatprep.subr.mxu0 0.0
          %957 = vmatpush2.msra.mxu0 0.0
          %958 = vmatprep.subr.mxu0 0.0
          %959 = vmatpush2.msra.mxu0 0.0
          %960 = vmatprep.subr.mxu0 0.0
          %961 = vmatpush2.msra.mxu0 0.0
          %962 = vmatprep.subr.mxu0 0.0
          %963 = vmatpush2.msra.mxu0 0.0
          %964 = vmatprep.subr.mxu0 0.0
          %965 = vmatpush2.msra.mxu0 0.0
          %966 = vmatprep.subr.mxu0 0.0
          %967 = vmatpush2.msra.mxu0 0.0
          %968 = vmatprep.subr.mxu0 0.0
          %969 = vmatpush2.msra.mxu0 0.0
          %970 = vmatprep.subr.mxu0 0.0
          %971 = vmatpush2.msra.mxu0 0.0
          %972 = vmatprep.subr.mxu0 0.0
          %973 = vmatpush2.msra.mxu0 0.0
          %974 = vmatprep.subr.mxu0 0.0
          %975 = vmatpush2.msra.mxu0 0.0
          %976 = vmatprep.mubr.f32.mxu0 0.0
          %977 = vmatmul.mubr.f32.gmra.mxu0 %v864
          %v978 = vpop.f32.mrf.mxu0
          %v979 = vadd.f32 0.0, %v978
          %v980 = vpop.f32.mrf.mxu0
          %981 = vmatprep.mubr.f32.mxu0 0.0
          %982 = vmatmul.mubr.f32.gmra.mxu0 %v865
          %v983 = vpop.f32.mrf.mxu0
          %v984 = vadd.f32 0.0, %v983
          %v985 = vpop.f32.mrf.mxu0
          %986 = vmatprep.mubr.f32.mxu0 0.0
          %987 = vmatmul.mubr.f32.gmra.mxu0 %v866
          %v988 = vpop.f32.mrf.mxu0
          %v989 = vadd.f32 0.0, %v988
          %v990 = vpop.f32.mrf.mxu0
          %991 = vmatprep.mubr.f32.mxu0 0.0
          %992 = vmatmul.mubr.f32.gmra.mxu0 %v867
          %v993 = vpop.f32.mrf.mxu0
          %v994 = vadd.f32 0.0, %v993
          %v995 = vpop.f32.mrf.mxu0
          %996 = vmatprep.mubr.f32.mxu0 0.0
          %997 = vmatmul.mubr.f32.gmra.mxu0 %v868
          %v998 = vpop.f32.mrf.mxu0
          %v999 = vadd.f32 0.0, %v998
          %v1000 = vpop.f32.mrf.mxu0
          %1001 = vmatprep.mubr.f32.mxu0 0.0
          %1002 = vmatmul.mubr.f32.gmra.mxu0 %v869
          %v1003 = vpop.f32.mrf.mxu0
          %v1004 = vadd.f32 0.0, %v1003
          %v1005 = vpop.f32.mrf.mxu0
          %1006 = vmatprep.mubr.f32.mxu0 0.0
          %1007 = vmatmul.mubr.f32.gmra.mxu0 %v870
          %v1008 = vpop.f32.mrf.mxu0
          %v1009 = vadd.f32 0.0, %v1008
          %v1010 = vpop.f32.mrf.mxu0
          %1011 = vmatprep.mubr.f32.mxu0 0.0
          %1012 = vmatmul.mubr.f32.gmra.mxu0 %v871
          %v1013 = vpop.f32.mrf.mxu0
          %v1014 = vadd.f32 0.0, %v1013
          %v1015 = vpop.f32.mrf.mxu0
          %1016 = vmatprep.mubr.f32.mxu0 0.0
          %1017 = vmatmul.mubr.f32.gmra.mxu0 %v872
          %v1018 = vpop.f32.mrf.mxu0
          %v1019 = vadd.f32 0.0, %v1018
          %v1020 = vpop.f32.mrf.mxu0
          %1021 = vmatprep.mubr.f32.mxu0 0.0
          %1022 = vmatmul.mubr.f32.gmra.mxu0 %v873
          %v1023 = vpop.f32.mrf.mxu0
          %v1024 = vadd.f32 0.0, %v1023
          %v1025 = vpop.f32.mrf.mxu0
          %1026 = vmatprep.mubr.f32.mxu0 0.0
          %1027 = vmatmul.mubr.f32.gmra.mxu0 %v874
          %v1028 = vpop.f32.mrf.mxu0
          %v1029 = vadd.f32 0.0, %v1028
          %v1030 = vpop.f32.mrf.mxu0
          %1031 = vmatprep.mubr.f32.mxu0 0.0
          %1032 = vmatmul.mubr.f32.gmra.mxu0 %v875
          %v1033 = vpop.f32.mrf.mxu0
          %v1034 = vadd.f32 0.0, %v1033
          %v1035 = vpop.f32.mrf.mxu0
          %1036 = vmatprep.mubr.f32.mxu0 0.0
          %1037 = vmatmul.mubr.f32.gmra.mxu0 %v876
          %v1038 = vpop.f32.mrf.mxu0
          %v1039 = vadd.f32 0.0, %v1038
          %v1040 = vpop.f32.mrf.mxu0
          %1041 = vmatprep.mubr.f32.mxu0 0.0
          %1042 = vmatmul.mubr.f32.gmra.mxu0 %v877
          %v1043 = vpop.f32.mrf.mxu0
          %v1044 = vadd.f32 0.0, %v1043
          %v1045 = vpop.f32.mrf.mxu0
          %1046 = vmatprep.mubr.f32.mxu0 0.0
          %1047 = vmatmul.mubr.f32.gmra.mxu0 %v878
          %v1048 = vpop.f32.mrf.mxu0
          %v1049 = vadd.f32 0.0, %v1048
          %v1050 = vpop.f32.mrf.mxu0
          %1051 = vmatprep.mubr.f32.mxu0 0.0
          %1052 = vmatmul.mubr.f32.gmra.mxu0 %v879
          %v1053 = vpop.f32.mrf.mxu0
          %v1054 = vadd.f32 0.0, %v1053
          %v1055 = vpop.f32.mrf.mxu0
          %1056 = vmatprep.mubr.f32.mxu0 0.0
          %1057 = vmatmul.mubr.f32.gmra.mxu0 %v880
          %v1058 = vpop.f32.mrf.mxu0
          %v1059 = vadd.f32 0.0, %v1058
          %v1060 = vpop.f32.mrf.mxu0
          %1061 = vmatprep.mubr.f32.mxu0 0.0
          %1062 = vmatmul.mubr.f32.gmra.mxu0 %v881
          %v1063 = vpop.f32.mrf.mxu0
          %v1064 = vadd.f32 0.0, %v1063
          %v1065 = vpop.f32.mrf.mxu0
          %1066 = vmatprep.mubr.f32.mxu0 0.0
          %1067 = vmatmul.mubr.f32.gmra.mxu0 %v882
          %v1068 = vpop.f32.mrf.mxu0
          %v1069 = vadd.f32 0.0, %v1068
          %v1070 = vpop.f32.mrf.mxu0
          %1071 = vmatprep.mubr.f32.mxu0 0.0
          %1072 = vmatmul.mubr.f32.gmra.mxu0 %v883
          %v1073 = vpop.f32.mrf.mxu0
          %v1074 = vadd.f32 0.0, %v1073
          %v1075 = vpop.f32.mrf.mxu0
          %1076 = vmatprep.mubr.f32.mxu0 0.0
          %1077 = vmatmul.mubr.f32.gmra.mxu0 %v884
          %v1078 = vpop.f32.mrf.mxu0
          %v1079 = vadd.f32 0.0, %v1078
          %v1080 = vpop.f32.mrf.mxu0
          %1081 = vmatprep.mubr.f32.mxu0 0.0
          %1082 = vmatmul.mubr.f32.gmra.mxu0 %v885
          %v1083 = vpop.f32.mrf.mxu0
          %v1084 = vadd.f32 0.0, %v1083
          %v1085 = vpop.f32.mrf.mxu0
          %1086 = vmatprep.mubr.f32.mxu0 0.0
          %1087 = vmatmul.mubr.f32.gmra.mxu0 %v886
          %v1088 = vpop.f32.mrf.mxu0
          %v1089 = vadd.f32 0.0, %v1088
          %v1090 = vpop.f32.mrf.mxu0
          %1091 = vmatprep.mubr.f32.mxu0 0.0
          %1092 = vmatmul.mubr.f32.gmra.mxu0 %v887
          %v1093 = vpop.f32.mrf.mxu0
          %v1094 = vadd.f32 0.0, %v1093
          %v1095 = vpop.f32.mrf.mxu0
          %1096 = vmatprep.mubr.f32.mxu0 0.0
          %1097 = vmatmul.mubr.f32.gmra.mxu0 %v888
          %v1098 = vpop.f32.mrf.mxu0
          %v1099 = vadd.f32 0.0, %v1098
          %v1100 = vpop.f32.mrf.mxu0
          %1101 = vmatprep.mubr.f32.mxu0 0.0
          %1102 = vmatmul.mubr.f32.gmra.mxu0 %v889
          %v1103 = vpop.f32.mrf.mxu0
          %v1104 = vadd.f32 0.0, %v1103
          %v1105 = vpop.f32.mrf.mxu0
          %1106 = vmatprep.mubr.f32.mxu0 0.0
          %1107 = vmatmul.mubr.f32.gmra.mxu0 %v890
          %v1108 = vpop.f32.mrf.mxu0
          %v1109 = vadd.f32 0.0, %v1108
          %v1110 = vpop.f32.mrf.mxu0
          %1111 = vmatprep.mubr.f32.mxu0 0.0
          %1112 = vmatmul.mubr.f32.gmra.mxu0 %v891
          %v1113 = vpop.f32.mrf.mxu0
          %v1114 = vadd.f32 0.0, %v1113
          %v1115 = vpop.f32.mrf.mxu0
          %1116 = vmatprep.mubr.f32.mxu0 0.0
          %1117 = vmatmul.mubr.f32.gmra.mxu0 %v892
          %v1118 = vpop.f32.mrf.mxu0
          %v1119 = vadd.f32 0.0, %v1118
          %v1120 = vpop.f32.mrf.mxu0
          %1121 = vmatprep.mubr.f32.mxu0 0.0
          %1122 = vmatmul.mubr.f32.gmra.mxu0 %v893
          %v1123 = vpop.f32.mrf.mxu0
          %v1124 = vadd.f32 0.0, %v1123
          %v1125 = vpop.f32.mrf.mxu0
          %1126 = vmatprep.mubr.f32.mxu0 0.0
          %1127 = vmatmul.mubr.f32.gmra.mxu0 %v894
          %v1128 = vpop.f32.mrf.mxu0
          %v1129 = vadd.f32 0.0, %v1128
          %v1130 = vpop.f32.mrf.mxu0
          %1131 = vmatprep.mubr.f32.mxu0 0.0
          %1132 = vmatmul.mubr.f32.gmra.mxu0 %v895
          %v1133 = vpop.f32.mrf.mxu0
          %v1134 = vadd.f32 0.0, %v1133
          %v1135 = vpop.f32.mrf.mxu0
          %1136 = vdwg.mxu0
          %1137 = vst [vmem:[#allocation4] sm:$0xff] %v979
          %1138 = vst [vmem:[#allocation4 + $0x8] sm:$0xff] %v984
          %1139 = vst [vmem:[#allocation4 + $0x10] sm:$0xff] %v989
          %1140 = vst [vmem:[#allocation4 + $0x18] sm:$0xff] %v994
          %1141 = vst [vmem:[#allocation4 + $0x20] sm:$0xff] %v999
          %1142 = vst [vmem:[#allocation4 + $0x28] sm:$0xff] %v1004
          %1143 = vst [vmem:[#allocation4 + $0x30] sm:$0xff] %v1009
          %1144 = vst [vmem:[#allocation4 + $0x38] sm:$0xff] %v1014
          %1145 = vst [vmem:[#allocation4 + $0x40] sm:$0xff] %v1019
          %1146 = vst [vmem:[#allocation4 + $0x48] sm:$0xff] %v1024
          %1147 = vst [vmem:[#allocation4 + $0x50] sm:$0xff] %v1029
          %1148 = vst [vmem:[#allocation4 + $0x58] sm:$0xff] %v1034
          %1149 = vst [vmem:[#allocation4 + $0x60] sm:$0xff] %v1039
          %1150 = vst [vmem:[#allocation4 + $0x68] sm:$0xff] %v1044
          %1151 = vst [vmem:[#allocation4 + $0x70] sm:$0xff] %v1049
          %1152 = vst [vmem:[#allocation4 + $0x78] sm:$0xff] %v1054
          %1153 = vst [vmem:[#allocation4 + $0x80] sm:$0xff] %v1059
          %1154 = vst [vmem:[#allocation4 + $0x88] sm:$0xff] %v1064
          %1155 = vst [vmem:[#allocation4 + $0x90] sm:$0xff] %v1069
          %1156 = vst [vmem:[#allocation4 + $0x98] sm:$0xff] %v1074
          %1157 = vst [vmem:[#allocation4 + $0xa0] sm:$0xff] %v1079
          %1158 = vst [vmem:[#allocation4 + $0xa8] sm:$0xff] %v1084
          %1159 = vst [vmem:[#allocation4 + $0xb0] sm:$0xff] %v1089
          %1160 = vst [vmem:[#allocation4 + $0xb8] sm:$0xff] %v1094
          %1161 = vst [vmem:[#allocation4 + $0xc0] sm:$0xff] %v1099
          %1162 = vst [vmem:[#allocation4 + $0xc8] sm:$0xff] %v1104
          %1163 = vst [vmem:[#allocation4 + $0xd0] sm:$0xff] %v1109
          %1164 = vst [vmem:[#allocation4 + $0xd8] sm:$0xff] %v1114
          %1165 = vst [vmem:[#allocation4 + $0xe0] sm:$0xff] %v1119
          %1166 = vst [vmem:[#allocation4 + $0xe8] sm:$0xff] %v1124
          %1167 = vst [vmem:[#allocation4 + $0xf0] sm:$0xff] %v1129
          %1168 = vst [vmem:[#allocation4 + $0xf8] sm:$0xff] %v1134
          %v1169 = vld [vmem:[#allocation2 + $0x10] sm:$0xff]
          %v1170 = vld [vmem:[#allocation2 + $0x18] sm:$0xff]
          %v1171 = vld [vmem:[#allocation2 + $0x38] sm:$0xff]
          %v1172 = vld [vmem:[#allocation2 + $0x40] sm:$0xff]
          %v1173 = vld [vmem:[#allocation2 + $0x60] sm:$0xff]
          %v1174 = vld [vmem:[#allocation2 + $0x68] sm:$0xff]
          %v1175 = vld [vmem:[#allocation2 + $0x88] sm:$0xff]
          %v1176 = vld [vmem:[#allocation2 + $0x90] sm:$0xff]
          %v1177 = vld [vmem:[#allocation2 + $0xb0] sm:$0xff]
          %v1178 = vld [vmem:[#allocation2 + $0xb8] sm:$0xff]
          %v1179 = vld [vmem:[#allocation2 + $0xd8] sm:$0xff]
          %v1180 = vld [vmem:[#allocation2 + $0xe0] sm:$0xff]
          %v1181 = vld [vmem:[#allocation2 + $0x100] sm:$0xff]
          %v1182 = vld [vmem:[#allocation2 + $0x108] sm:$0xff]
          %v1183 = vld [vmem:[#allocation2 + $0x128] sm:$0xff]
          %v1184 = vld [vmem:[#allocation2 + $0x130] sm:$0xff]
          %v1185 = vld [vmem:[#allocation2 + $0x150] sm:$0xff]
          %v1186 = vld [vmem:[#allocation2 + $0x158] sm:$0xff]
          %v1187 = vld [vmem:[#allocation2 + $0x178] sm:$0xff]
          %v1188 = vld [vmem:[#allocation2 + $0x180] sm:$0xff]
          %v1189 = vld [vmem:[#allocation2 + $0x1a0] sm:$0xff]
          %v1190 = vld [vmem:[#allocation2 + $0x1a8] sm:$0xff]
          %v1191 = vld [vmem:[#allocation2 + $0x1c8] sm:$0xff]
          %v1192 = vld [vmem:[#allocation2 + $0x1d0] sm:$0xff]
          %v1193 = vld [vmem:[#allocation2 + $0x1f0] sm:$0xff]
          %v1194 = vld [vmem:[#allocation2 + $0x1f8] sm:$0xff]
          %v1195 = vld [vmem:[#allocation2 + $0x218] sm:$0xff]
          %v1196 = vld [vmem:[#allocation2 + $0x220] sm:$0xff]
          %v1197 = vld [vmem:[#allocation2 + $0x240] sm:$0xff]
          %v1198 = vld [vmem:[#allocation2 + $0x248] sm:$0xff]
          %v1199 = vld [vmem:[#allocation2 + $0x268] sm:$0xff]
          %v1200 = vld [vmem:[#allocation2 + $0x270] sm:$0xff]
          %s1201 = scalar_lea.vmem [#allocation9], 128
          %v1202 = vld [vmem:[%s1201] sm:$0xff]
          %v1203 = vld [vmem:[%s1201 + $0x8] sm:$0xff]
          %v1204 = vld [vmem:[%s1201 + $0x10] sm:$0xff]
          %v1205 = vld [vmem:[%s1201 + $0x18] sm:$0xff]
          %v1206 = vld [vmem:[%s1201 + $0x20] sm:$0xff]
          %v1207 = vld [vmem:[%s1201 + $0x28] sm:$0xff]
          %v1208 = vld [vmem:[%s1201 + $0x30] sm:$0xff]
          %v1209 = vld [vmem:[%s1201 + $0x38] sm:$0xff]
          %v1210 = vld [vmem:[%s1201 + $0x40] sm:$0xff]
          %v1211 = vld [vmem:[%s1201 + $0x48] sm:$0xff]
          %v1212 = vld [vmem:[%s1201 + $0x50] sm:$0xff]
          %v1213 = vld [vmem:[%s1201 + $0x58] sm:$0xff]
          %v1214 = vld [vmem:[%s1201 + $0x60] sm:$0xff]
          %v1215 = vld [vmem:[%s1201 + $0x68] sm:$0xff]
          %v1216 = vld [vmem:[%s1201 + $0x70] sm:$0xff]
          %v1217 = vld [vmem:[%s1201 + $0x78] sm:$0xff]
          %1218 = vmatprep.subr.mxu0 0.0
          %1219 = vmatpush1.msra.mxu0 %v1217
          %1220 = vmatprep.subr.mxu0 0.0
          %1221 = vmatpush1.msra.mxu0 %v1216
          %1222 = vmatprep.subr.mxu0 0.0
          %1223 = vmatpush1.msra.mxu0 %v1215
          %1224 = vmatprep.subr.mxu0 0.0
          %1225 = vmatpush1.msra.mxu0 %v1214
          %1226 = vmatprep.subr.mxu0 0.0
          %1227 = vmatpush1.msra.mxu0 %v1213
          %1228 = vmatprep.subr.mxu0 0.0
          %1229 = vmatpush1.msra.mxu0 %v1212
          %1230 = vmatprep.subr.mxu0 0.0
          %1231 = vmatpush1.msra.mxu0 %v1211
          %1232 = vmatprep.subr.mxu0 0.0
          %1233 = vmatpush1.msra.mxu0 %v1210
          %1234 = vmatprep.subr.mxu0 0.0
          %1235 = vmatpush1.msra.mxu0 %v1209
          %1236 = vmatprep.subr.mxu0 0.0
          %1237 = vmatpush1.msra.mxu0 %v1208
          %1238 = vmatprep.subr.mxu0 0.0
          %1239 = vmatpush1.msra.mxu0 %v1207
          %1240 = vmatprep.subr.mxu0 0.0
          %1241 = vmatpush1.msra.mxu0 %v1206
          %1242 = vmatprep.subr.mxu0 0.0
          %1243 = vmatpush1.msra.mxu0 %v1205
          %1244 = vmatprep.subr.mxu0 0.0
          %1245 = vmatpush1.msra.mxu0 %v1204
          %1246 = vmatprep.subr.mxu0 0.0
          %1247 = vmatpush1.msra.mxu0 %v1203
          %1248 = vmatprep.subr.mxu0 0.0
          %1249 = vmatpush1.msra.mxu0 %v1202
          %1250 = vmatprep.subr.mxu0 0.0
          %1251 = vmatpush2.msra.mxu0 0.0
          %1252 = vmatprep.subr.mxu0 0.0
          %1253 = vmatpush2.msra.mxu0 0.0
          %1254 = vmatprep.subr.mxu0 0.0
          %1255 = vmatpush2.msra.mxu0 0.0
          %1256 = vmatprep.subr.mxu0 0.0
          %1257 = vmatpush2.msra.mxu0 0.0
          %1258 = vmatprep.subr.mxu0 0.0
          %1259 = vmatpush2.msra.mxu0 0.0
          %1260 = vmatprep.subr.mxu0 0.0
          %1261 = vmatpush2.msra.mxu0 0.0
          %1262 = vmatprep.subr.mxu0 0.0
          %1263 = vmatpush2.msra.mxu0 0.0
          %1264 = vmatprep.subr.mxu0 0.0
          %1265 = vmatpush2.msra.mxu0 0.0
          %1266 = vmatprep.subr.mxu0 0.0
          %1267 = vmatpush2.msra.mxu0 0.0
          %1268 = vmatprep.subr.mxu0 0.0
          %1269 = vmatpush2.msra.mxu0 0.0
          %1270 = vmatprep.subr.mxu0 0.0
          %1271 = vmatpush2.msra.mxu0 0.0
          %1272 = vmatprep.subr.mxu0 0.0
          %1273 = vmatpush2.msra.mxu0 0.0
          %1274 = vmatprep.subr.mxu0 0.0
          %1275 = vmatpush2.msra.mxu0 0.0
          %1276 = vmatprep.subr.mxu0 0.0
          %1277 = vmatpush2.msra.mxu0 0.0
          %1278 = vmatprep.subr.mxu0 0.0
          %1279 = vmatpush2.msra.mxu0 0.0
          %1280 = vmatprep.subr.mxu0 0.0
          %1281 = vmatpush2.msra.mxu0 0.0
          %1282 = vmatprep.mubr.f32.mxu0 0.0
          %1283 = vmatmul.mubr.f32.gmra.mxu0 %v1169
          %v1284 = vpop.f32.mrf.mxu0
          %v1285 = vadd.f32 0.0, %v1284
          %v1286 = vpop.f32.mrf.mxu0
          %1287 = vmatprep.mubr.f32.mxu0 0.0
          %1288 = vmatmul.mubr.f32.gmra.mxu0 %v1170
          %v1289 = vpop.f32.mrf.mxu0
          %v1290 = vadd.f32 0.0, %v1289
          %v1291 = vpop.f32.mrf.mxu0
          %1292 = vmatprep.mubr.f32.mxu0 0.0
          %1293 = vmatmul.mubr.f32.gmra.mxu0 %v1171
          %v1294 = vpop.f32.mrf.mxu0
          %v1295 = vadd.f32 0.0, %v1294
          %v1296 = vpop.f32.mrf.mxu0
          %1297 = vmatprep.mubr.f32.mxu0 0.0
          %1298 = vmatmul.mubr.f32.gmra.mxu0 %v1172
          %v1299 = vpop.f32.mrf.mxu0
          %v1300 = vadd.f32 0.0, %v1299
          %v1301 = vpop.f32.mrf.mxu0
          %1302 = vmatprep.mubr.f32.mxu0 0.0
          %1303 = vmatmul.mubr.f32.gmra.mxu0 %v1173
          %v1304 = vpop.f32.mrf.mxu0
          %v1305 = vadd.f32 0.0, %v1304
          %v1306 = vpop.f32.mrf.mxu0
          %1307 = vmatprep.mubr.f32.mxu0 0.0
          %1308 = vmatmul.mubr.f32.gmra.mxu0 %v1174
          %v1309 = vpop.f32.mrf.mxu0
          %v1310 = vadd.f32 0.0, %v1309
          %v1311 = vpop.f32.mrf.mxu0
          %1312 = vmatprep.mubr.f32.mxu0 0.0
          %1313 = vmatmul.mubr.f32.gmra.mxu0 %v1175
          %v1314 = vpop.f32.mrf.mxu0
          %v1315 = vadd.f32 0.0, %v1314
          %v1316 = vpop.f32.mrf.mxu0
          %1317 = vmatprep.mubr.f32.mxu0 0.0
          %1318 = vmatmul.mubr.f32.gmra.mxu0 %v1176
          %v1319 = vpop.f32.mrf.mxu0
          %v1320 = vadd.f32 0.0, %v1319
          %v1321 = vpop.f32.mrf.mxu0
          %1322 = vmatprep.mubr.f32.mxu0 0.0
          %1323 = vmatmul.mubr.f32.gmra.mxu0 %v1177
          %v1324 = vpop.f32.mrf.mxu0
          %v1325 = vadd.f32 0.0, %v1324
          %v1326 = vpop.f32.mrf.mxu0
          %1327 = vmatprep.mubr.f32.mxu0 0.0
          %1328 = vmatmul.mubr.f32.gmra.mxu0 %v1178
          %v1329 = vpop.f32.mrf.mxu0
          %v1330 = vadd.f32 0.0, %v1329
          %v1331 = vpop.f32.mrf.mxu0
          %1332 = vmatprep.mubr.f32.mxu0 0.0
          %1333 = vmatmul.mubr.f32.gmra.mxu0 %v1179
          %v1334 = vpop.f32.mrf.mxu0
          %v1335 = vadd.f32 0.0, %v1334
          %v1336 = vpop.f32.mrf.mxu0
          %1337 = vmatprep.mubr.f32.mxu0 0.0
          %1338 = vmatmul.mubr.f32.gmra.mxu0 %v1180
          %v1339 = vpop.f32.mrf.mxu0
          %v1340 = vadd.f32 0.0, %v1339
          %v1341 = vpop.f32.mrf.mxu0
          %1342 = vmatprep.mubr.f32.mxu0 0.0
          %1343 = vmatmul.mubr.f32.gmra.mxu0 %v1181
          %v1344 = vpop.f32.mrf.mxu0
          %v1345 = vadd.f32 0.0, %v1344
          %v1346 = vpop.f32.mrf.mxu0
          %1347 = vmatprep.mubr.f32.mxu0 0.0
          %1348 = vmatmul.mubr.f32.gmra.mxu0 %v1182
          %v1349 = vpop.f32.mrf.mxu0
          %v1350 = vadd.f32 0.0, %v1349
          %v1351 = vpop.f32.mrf.mxu0
          %1352 = vmatprep.mubr.f32.mxu0 0.0
          %1353 = vmatmul.mubr.f32.gmra.mxu0 %v1183
          %v1354 = vpop.f32.mrf.mxu0
          %v1355 = vadd.f32 0.0, %v1354
          %v1356 = vpop.f32.mrf.mxu0
          %1357 = vmatprep.mubr.f32.mxu0 0.0
          %1358 = vmatmul.mubr.f32.gmra.mxu0 %v1184
          %v1359 = vpop.f32.mrf.mxu0
          %v1360 = vadd.f32 0.0, %v1359
          %v1361 = vpop.f32.mrf.mxu0
          %1362 = vmatprep.mubr.f32.mxu0 0.0
          %1363 = vmatmul.mubr.f32.gmra.mxu0 %v1185
          %v1364 = vpop.f32.mrf.mxu0
          %v1365 = vadd.f32 0.0, %v1364
          %v1366 = vpop.f32.mrf.mxu0
          %1367 = vmatprep.mubr.f32.mxu0 0.0
          %1368 = vmatmul.mubr.f32.gmra.mxu0 %v1186
          %v1369 = vpop.f32.mrf.mxu0
          %v1370 = vadd.f32 0.0, %v1369
          %v1371 = vpop.f32.mrf.mxu0
          %1372 = vmatprep.mubr.f32.mxu0 0.0
          %1373 = vmatmul.mubr.f32.gmra.mxu0 %v1187
          %v1374 = vpop.f32.mrf.mxu0
          %v1375 = vadd.f32 0.0, %v1374
          %v1376 = vpop.f32.mrf.mxu0
          %1377 = vmatprep.mubr.f32.mxu0 0.0
          %1378 = vmatmul.mubr.f32.gmra.mxu0 %v1188
          %v1379 = vpop.f32.mrf.mxu0
          %v1380 = vadd.f32 0.0, %v1379
          %v1381 = vpop.f32.mrf.mxu0
          %1382 = vmatprep.mubr.f32.mxu0 0.0
          %1383 = vmatmul.mubr.f32.gmra.mxu0 %v1189
          %v1384 = vpop.f32.mrf.mxu0
          %v1385 = vadd.f32 0.0, %v1384
          %v1386 = vpop.f32.mrf.mxu0
          %1387 = vmatprep.mubr.f32.mxu0 0.0
          %1388 = vmatmul.mubr.f32.gmra.mxu0 %v1190
          %v1389 = vpop.f32.mrf.mxu0
          %v1390 = vadd.f32 0.0, %v1389
          %v1391 = vpop.f32.mrf.mxu0
          %1392 = vmatprep.mubr.f32.mxu0 0.0
          %1393 = vmatmul.mubr.f32.gmra.mxu0 %v1191
          %v1394 = vpop.f32.mrf.mxu0
          %v1395 = vadd.f32 0.0, %v1394
          %v1396 = vpop.f32.mrf.mxu0
          %1397 = vmatprep.mubr.f32.mxu0 0.0
          %1398 = vmatmul.mubr.f32.gmra.mxu0 %v1192
          %v1399 = vpop.f32.mrf.mxu0
          %v1400 = vadd.f32 0.0, %v1399
          %v1401 = vpop.f32.mrf.mxu0
          %1402 = vmatprep.mubr.f32.mxu0 0.0
          %1403 = vmatmul.mubr.f32.gmra.mxu0 %v1193
          %v1404 = vpop.f32.mrf.mxu0
          %v1405 = vadd.f32 0.0, %v1404
          %v1406 = vpop.f32.mrf.mxu0
          %1407 = vmatprep.mubr.f32.mxu0 0.0
          %1408 = vmatmul.mubr.f32.gmra.mxu0 %v1194
          %v1409 = vpop.f32.mrf.mxu0
          %v1410 = vadd.f32 0.0, %v1409
          %v1411 = vpop.f32.mrf.mxu0
          %1412 = vmatprep.mubr.f32.mxu0 0.0
          %1413 = vmatmul.mubr.f32.gmra.mxu0 %v1195
          %v1414 = vpop.f32.mrf.mxu0
          %v1415 = vadd.f32 0.0, %v1414
          %v1416 = vpop.f32.mrf.mxu0
          %1417 = vmatprep.mubr.f32.mxu0 0.0
          %1418 = vmatmul.mubr.f32.gmra.mxu0 %v1196
          %v1419 = vpop.f32.mrf.mxu0
          %v1420 = vadd.f32 0.0, %v1419
          %v1421 = vpop.f32.mrf.mxu0
          %1422 = vmatprep.mubr.f32.mxu0 0.0
          %1423 = vmatmul.mubr.f32.gmra.mxu0 %v1197
          %v1424 = vpop.f32.mrf.mxu0
          %v1425 = vadd.f32 0.0, %v1424
          %v1426 = vpop.f32.mrf.mxu0
          %1427 = vmatprep.mubr.f32.mxu0 0.0
          %1428 = vmatmul.mubr.f32.gmra.mxu0 %v1198
          %v1429 = vpop.f32.mrf.mxu0
          %v1430 = vadd.f32 0.0, %v1429
          %v1431 = vpop.f32.mrf.mxu0
          %1432 = vmatprep.mubr.f32.mxu0 0.0
          %1433 = vmatmul.mubr.f32.gmra.mxu0 %v1199
          %v1434 = vpop.f32.mrf.mxu0
          %v1435 = vadd.f32 0.0, %v1434
          %v1436 = vpop.f32.mrf.mxu0
          %1437 = vmatprep.mubr.f32.mxu0 0.0
          %1438 = vmatmul.mubr.f32.gmra.mxu0 %v1200
          %v1439 = vpop.f32.mrf.mxu0
          %v1440 = vadd.f32 0.0, %v1439
          %v1441 = vpop.f32.mrf.mxu0
          %1442 = vdwg.mxu0
          %v1443 = vld [vmem:[#allocation4] sm:$0xff]
          %v1444 = vld [vmem:[#allocation4 + $0x8] sm:$0xff]
          %v1445 = vld [vmem:[#allocation4 + $0x10] sm:$0xff]
          %v1446 = vld [vmem:[#allocation4 + $0x18] sm:$0xff]
          %v1447 = vld [vmem:[#allocation4 + $0x20] sm:$0xff]
          %v1448 = vld [vmem:[#allocation4 + $0x28] sm:$0xff]
          %v1449 = vld [vmem:[#allocation4 + $0x30] sm:$0xff]
          %v1450 = vld [vmem:[#allocation4 + $0x38] sm:$0xff]
          %v1451 = vld [vmem:[#allocation4 + $0x40] sm:$0xff]
          %v1452 = vld [vmem:[#allocation4 + $0x48] sm:$0xff]
          %v1453 = vld [vmem:[#allocation4 + $0x50] sm:$0xff]
          %v1454 = vld [vmem:[#allocation4 + $0x58] sm:$0xff]
          %v1455 = vld [vmem:[#allocation4 + $0x60] sm:$0xff]
          %v1456 = vld [vmem:[#allocation4 + $0x68] sm:$0xff]
          %v1457 = vld [vmem:[#allocation4 + $0x70] sm:$0xff]
          %v1458 = vld [vmem:[#allocation4 + $0x78] sm:$0xff]
          %v1459 = vld [vmem:[#allocation4 + $0x80] sm:$0xff]
          %v1460 = vld [vmem:[#allocation4 + $0x88] sm:$0xff]
          %v1461 = vld [vmem:[#allocation4 + $0x90] sm:$0xff]
          %v1462 = vld [vmem:[#allocation4 + $0x98] sm:$0xff]
          %v1463 = vld [vmem:[#allocation4 + $0xa0] sm:$0xff]
          %v1464 = vld [vmem:[#allocation4 + $0xa8] sm:$0xff]
          %v1465 = vld [vmem:[#allocation4 + $0xb0] sm:$0xff]
          %v1466 = vld [vmem:[#allocation4 + $0xb8] sm:$0xff]
          %v1467 = vld [vmem:[#allocation4 + $0xc0] sm:$0xff]
          %v1468 = vld [vmem:[#allocation4 + $0xc8] sm:$0xff]
          %v1469 = vld [vmem:[#allocation4 + $0xd0] sm:$0xff]
          %v1470 = vld [vmem:[#allocation4 + $0xd8] sm:$0xff]
          %v1471 = vld [vmem:[#allocation4 + $0xe0] sm:$0xff]
          %v1472 = vld [vmem:[#allocation4 + $0xe8] sm:$0xff]
          %v1473 = vld [vmem:[#allocation4 + $0xf0] sm:$0xff]
          %v1474 = vld [vmem:[#allocation4 + $0xf8] sm:$0xff]
          %v1475 = vadd.f32 %v1443, %v1285
          %v1476 = vadd.f32 %v1444, %v1290
          %v1477 = vadd.f32 %v1445, %v1295
          %v1478 = vadd.f32 %v1446, %v1300
          %v1479 = vadd.f32 %v1447, %v1305
          %v1480 = vadd.f32 %v1448, %v1310
          %v1481 = vadd.f32 %v1449, %v1315
          %v1482 = vadd.f32 %v1450, %v1320
          %v1483 = vadd.f32 %v1451, %v1325
          %v1484 = vadd.f32 %v1452, %v1330
          %v1485 = vadd.f32 %v1453, %v1335
          %v1486 = vadd.f32 %v1454, %v1340
          %v1487 = vadd.f32 %v1455, %v1345
          %v1488 = vadd.f32 %v1456, %v1350
          %v1489 = vadd.f32 %v1457, %v1355
          %v1490 = vadd.f32 %v1458, %v1360
          %v1491 = vadd.f32 %v1459, %v1365
          %v1492 = vadd.f32 %v1460, %v1370
          %v1493 = vadd.f32 %v1461, %v1375
          %v1494 = vadd.f32 %v1462, %v1380
          %v1495 = vadd.f32 %v1463, %v1385
          %v1496 = vadd.f32 %v1464, %v1390
          %v1497 = vadd.f32 %v1465, %v1395
          %v1498 = vadd.f32 %v1466, %v1400
          %v1499 = vadd.f32 %v1467, %v1405
          %v1500 = vadd.f32 %v1468, %v1410
          %v1501 = vadd.f32 %v1469, %v1415
          %v1502 = vadd.f32 %v1470, %v1420
          %v1503 = vadd.f32 %v1471, %v1425
          %v1504 = vadd.f32 %v1472, %v1430
          %v1505 = vadd.f32 %v1473, %v1435
          %v1506 = vadd.f32 %v1474, %v1440
          %1507 = vst [vmem:[#allocation4] sm:$0xff] %v1475
          %1508 = vst [vmem:[#allocation4 + $0x8] sm:$0xff] %v1476
          %1509 = vst [vmem:[#allocation4 + $0x10] sm:$0xff] %v1477
          %1510 = vst [vmem:[#allocation4 + $0x18] sm:$0xff] %v1478
          %1511 = vst [vmem:[#allocation4 + $0x20] sm:$0xff] %v1479
          %1512 = vst [vmem:[#allocation4 + $0x28] sm:$0xff] %v1480
          %1513 = vst [vmem:[#allocation4 + $0x30] sm:$0xff] %v1481
          %1514 = vst [vmem:[#allocation4 + $0x38] sm:$0xff] %v1482
          %1515 = vst [vmem:[#allocation4 + $0x40] sm:$0xff] %v1483
          %1516 = vst [vmem:[#allocation4 + $0x48] sm:$0xff] %v1484
          %1517 = vst [vmem:[#allocation4 + $0x50] sm:$0xff] %v1485
          %1518 = vst [vmem:[#allocation4 + $0x58] sm:$0xff] %v1486
          %1519 = vst [vmem:[#allocation4 + $0x60] sm:$0xff] %v1487
          %1520 = vst [vmem:[#allocation4 + $0x68] sm:$0xff] %v1488
          %1521 = vst [vmem:[#allocation4 + $0x70] sm:$0xff] %v1489
          %1522 = vst [vmem:[#allocation4 + $0x78] sm:$0xff] %v1490
          %1523 = vst [vmem:[#allocation4 + $0x80] sm:$0xff] %v1491
          %1524 = vst [vmem:[#allocation4 + $0x88] sm:$0xff] %v1492
          %1525 = vst [vmem:[#allocation4 + $0x90] sm:$0xff] %v1493
          %1526 = vst [vmem:[#allocation4 + $0x98] sm:$0xff] %v1494
          %1527 = vst [vmem:[#allocation4 + $0xa0] sm:$0xff] %v1495
          %1528 = vst [vmem:[#allocation4 + $0xa8] sm:$0xff] %v1496
          %1529 = vst [vmem:[#allocation4 + $0xb0] sm:$0xff] %v1497
          %1530 = vst [vmem:[#allocation4 + $0xb8] sm:$0xff] %v1498
          %1531 = vst [vmem:[#allocation4 + $0xc0] sm:$0xff] %v1499
          %1532 = vst [vmem:[#allocation4 + $0xc8] sm:$0xff] %v1500
          %1533 = vst [vmem:[#allocation4 + $0xd0] sm:$0xff] %v1501
          %1534 = vst [vmem:[#allocation4 + $0xd8] sm:$0xff] %v1502
          %1535 = vst [vmem:[#allocation4 + $0xe0] sm:$0xff] %v1503
          %1536 = vst [vmem:[#allocation4 + $0xe8] sm:$0xff] %v1504
          %1537 = vst [vmem:[#allocation4 + $0xf0] sm:$0xff] %v1505
          %1538 = vst [vmem:[#allocation4 + $0xf8] sm:$0xff] %v1506
          %v1539 = vld [vmem:[#allocation2 + $0x11] sm:$0xff]
          %v1540 = vld [vmem:[#allocation2 + $0x19] sm:$0xff]
          %v1541 = vld [vmem:[#allocation2 + $0x39] sm:$0xff]
          %v1542 = vld [vmem:[#allocation2 + $0x41] sm:$0xff]
          %v1543 = vld [vmem:[#allocation2 + $0x61] sm:$0xff]
          %v1544 = vld [vmem:[#allocation2 + $0x69] sm:$0xff]
          %v1545 = vld [vmem:[#allocation2 + $0x89] sm:$0xff]
          %v1546 = vld [vmem:[#allocation2 + $0x91] sm:$0xff]
          %v1547 = vld [vmem:[#allocation2 + $0xb1] sm:$0xff]
          %v1548 = vld [vmem:[#allocation2 + $0xb9] sm:$0xff]
          %v1549 = vld [vmem:[#allocation2 + $0xd9] sm:$0xff]
          %v1550 = vld [vmem:[#allocation2 + $0xe1] sm:$0xff]
          %v1551 = vld [vmem:[#allocation2 + $0x101] sm:$0xff]
          %v1552 = vld [vmem:[#allocation2 + $0x109] sm:$0xff]
          %v1553 = vld [vmem:[#allocation2 + $0x129] sm:$0xff]
          %v1554 = vld [vmem:[#allocation2 + $0x131] sm:$0xff]
          %v1555 = vld [vmem:[#allocation2 + $0x151] sm:$0xff]
          %v1556 = vld [vmem:[#allocation2 + $0x159] sm:$0xff]
          %v1557 = vld [vmem:[#allocation2 + $0x179] sm:$0xff]
          %v1558 = vld [vmem:[#allocation2 + $0x181] sm:$0xff]
          %v1559 = vld [vmem:[#allocation2 + $0x1a1] sm:$0xff]
          %v1560 = vld [vmem:[#allocation2 + $0x1a9] sm:$0xff]
          %v1561 = vld [vmem:[#allocation2 + $0x1c9] sm:$0xff]
          %v1562 = vld [vmem:[#allocation2 + $0x1d1] sm:$0xff]
          %v1563 = vld [vmem:[#allocation2 + $0x1f1] sm:$0xff]
          %v1564 = vld [vmem:[#allocation2 + $0x1f9] sm:$0xff]
          %v1565 = vld [vmem:[#allocation2 + $0x219] sm:$0xff]
          %v1566 = vld [vmem:[#allocation2 + $0x221] sm:$0xff]
          %v1567 = vld [vmem:[#allocation2 + $0x241] sm:$0xff]
          %v1568 = vld [vmem:[#allocation2 + $0x249] sm:$0xff]
          %v1569 = vld [vmem:[#allocation2 + $0x269] sm:$0xff]
          %v1570 = vld [vmem:[#allocation2 + $0x271] sm:$0xff]
          %s1571 = scalar_lea.vmem [#allocation9], 256
          %v1572 = vld [vmem:[%s1571] sm:$0xff]
          %v1573 = vld [vmem:[%s1571 + $0x8] sm:$0xff]
          %v1574 = vld [vmem:[%s1571 + $0x10] sm:$0xff]
          %v1575 = vld [vmem:[%s1571 + $0x18] sm:$0xff]
          %v1576 = vld [vmem:[%s1571 + $0x20] sm:$0xff]
          %v1577 = vld [vmem:[%s1571 + $0x28] sm:$0xff]
          %v1578 = vld [vmem:[%s1571 + $0x30] sm:$0xff]
          %v1579 = vld [vmem:[%s1571 + $0x38] sm:$0xff]
          %v1580 = vld [vmem:[%s1571 + $0x40] sm:$0xff]
          %v1581 = vld [vmem:[%s1571 + $0x48] sm:$0xff]
          %v1582 = vld [vmem:[%s1571 + $0x50] sm:$0xff]
          %v1583 = vld [vmem:[%s1571 + $0x58] sm:$0xff]
          %v1584 = vld [vmem:[%s1571 + $0x60] sm:$0xff]
          %v1585 = vld [vmem:[%s1571 + $0x68] sm:$0xff]
          %v1586 = vld [vmem:[%s1571 + $0x70] sm:$0xff]
          %v1587 = vld [vmem:[%s1571 + $0x78] sm:$0xff]
          %1588 = vmatprep.subr.mxu0 0.0
          %1589 = vmatpush1.msra.mxu0 %v1587
          %1590 = vmatprep.subr.mxu0 0.0
          %1591 = vmatpush1.msra.mxu0 %v1586
          %1592 = vmatprep.subr.mxu0 0.0
          %1593 = vmatpush1.msra.mxu0 %v1585
          %1594 = vmatprep.subr.mxu0 0.0
          %1595 = vmatpush1.msra.mxu0 %v1584
          %1596 = vmatprep.subr.mxu0 0.0
          %1597 = vmatpush1.msra.mxu0 %v1583
          %1598 = vmatprep.subr.mxu0 0.0
          %1599 = vmatpush1.msra.mxu0 %v1582
          %1600 = vmatprep.subr.mxu0 0.0
          %1601 = vmatpush1.msra.mxu0 %v1581
          %1602 = vmatprep.subr.mxu0 0.0
          %1603 = vmatpush1.msra.mxu0 %v1580
          %1604 = vmatprep.subr.mxu0 0.0
          %1605 = vmatpush1.msra.mxu0 %v1579
          %1606 = vmatprep.subr.mxu0 0.0
          %1607 = vmatpush1.msra.mxu0 %v1578
          %1608 = vmatprep.subr.mxu0 0.0
          %1609 = vmatpush1.msra.mxu0 %v1577
          %1610 = vmatprep.subr.mxu0 0.0
          %1611 = vmatpush1.msra.mxu0 %v1576
          %1612 = vmatprep.subr.mxu0 0.0
          %1613 = vmatpush1.msra.mxu0 %v1575
          %1614 = vmatprep.subr.mxu0 0.0
          %1615 = vmatpush1.msra.mxu0 %v1574
          %1616 = vmatprep.subr.mxu0 0.0
          %1617 = vmatpush1.msra.mxu0 %v1573
          %1618 = vmatprep.subr.mxu0 0.0
          %1619 = vmatpush1.msra.mxu0 %v1572
          %1620 = vmatprep.subr.mxu0 0.0
          %1621 = vmatpush2.msra.mxu0 0.0
          %1622 = vmatprep.subr.mxu0 0.0
          %1623 = vmatpush2.msra.mxu0 0.0
          %1624 = vmatprep.subr.mxu0 0.0
          %1625 = vmatpush2.msra.mxu0 0.0
          %1626 = vmatprep.subr.mxu0 0.0
          %1627 = vmatpush2.msra.mxu0 0.0
          %1628 = vmatprep.subr.mxu0 0.0
          %1629 = vmatpush2.msra.mxu0 0.0
          %1630 = vmatprep.subr.mxu0 0.0
          %1631 = vmatpush2.msra.mxu0 0.0
          %1632 = vmatprep.subr.mxu0 0.0
          %1633 = vmatpush2.msra.mxu0 0.0
          %1634 = vmatprep.subr.mxu0 0.0
          %1635 = vmatpush2.msra.mxu0 0.0
          %1636 = vmatprep.subr.mxu0 0.0
          %1637 = vmatpush2.msra.mxu0 0.0
          %1638 = vmatprep.subr.mxu0 0.0
          %1639 = vmatpush2.msra.mxu0 0.0
          %1640 = vmatprep.subr.mxu0 0.0
          %1641 = vmatpush2.msra.mxu0 0.0
          %1642 = vmatprep.subr.mxu0 0.0
          %1643 = vmatpush2.msra.mxu0 0.0
          %1644 = vmatprep.subr.mxu0 0.0
          %1645 = vmatpush2.msra.mxu0 0.0
          %1646 = vmatprep.subr.mxu0 0.0
          %1647 = vmatpush2.msra.mxu0 0.0
          %1648 = vmatprep.subr.mxu0 0.0
          %1649 = vmatpush2.msra.mxu0 0.0
          %1650 = vmatprep.subr.mxu0 0.0
          %1651 = vmatpush2.msra.mxu0 0.0
          %1652 = vmatprep.mubr.f32.mxu0 0.0
          %1653 = vmatmul.mubr.f32.gmra.mxu0 %v1539
          %v1654 = vpop.f32.mrf.mxu0
          %v1655 = vadd.f32 0.0, %v1654
          %v1656 = vpop.f32.mrf.mxu0
          %1657 = vmatprep.mubr.f32.mxu0 0.0
          %1658 = vmatmul.mubr.f32.gmra.mxu0 %v1540
          %v1659 = vpop.f32.mrf.mxu0
          %v1660 = vadd.f32 0.0, %v1659
          %v1661 = vpop.f32.mrf.mxu0
          %1662 = vmatprep.mubr.f32.mxu0 0.0
          %1663 = vmatmul.mubr.f32.gmra.mxu0 %v1541
          %v1664 = vpop.f32.mrf.mxu0
          %v1665 = vadd.f32 0.0, %v1664
          %v1666 = vpop.f32.mrf.mxu0
          %1667 = vmatprep.mubr.f32.mxu0 0.0
          %1668 = vmatmul.mubr.f32.gmra.mxu0 %v1542
          %v1669 = vpop.f32.mrf.mxu0
          %v1670 = vadd.f32 0.0, %v1669
          %v1671 = vpop.f32.mrf.mxu0
          %1672 = vmatprep.mubr.f32.mxu0 0.0
          %1673 = vmatmul.mubr.f32.gmra.mxu0 %v1543
          %v1674 = vpop.f32.mrf.mxu0
          %v1675 = vadd.f32 0.0, %v1674
          %v1676 = vpop.f32.mrf.mxu0
          %1677 = vmatprep.mubr.f32.mxu0 0.0
          %1678 = vmatmul.mubr.f32.gmra.mxu0 %v1544
          %v1679 = vpop.f32.mrf.mxu0
          %v1680 = vadd.f32 0.0, %v1679
          %v1681 = vpop.f32.mrf.mxu0
          %1682 = vmatprep.mubr.f32.mxu0 0.0
          %1683 = vmatmul.mubr.f32.gmra.mxu0 %v1545
          %v1684 = vpop.f32.mrf.mxu0
          %v1685 = vadd.f32 0.0, %v1684
          %v1686 = vpop.f32.mrf.mxu0
          %1687 = vmatprep.mubr.f32.mxu0 0.0
          %1688 = vmatmul.mubr.f32.gmra.mxu0 %v1546
          %v1689 = vpop.f32.mrf.mxu0
          %v1690 = vadd.f32 0.0, %v1689
          %v1691 = vpop.f32.mrf.mxu0
          %1692 = vmatprep.mubr.f32.mxu0 0.0
          %1693 = vmatmul.mubr.f32.gmra.mxu0 %v1547
          %v1694 = vpop.f32.mrf.mxu0
          %v1695 = vadd.f32 0.0, %v1694
          %v1696 = vpop.f32.mrf.mxu0
          %1697 = vmatprep.mubr.f32.mxu0 0.0
          %1698 = vmatmul.mubr.f32.gmra.mxu0 %v1548
          %v1699 = vpop.f32.mrf.mxu0
          %v1700 = vadd.f32 0.0, %v1699
          %v1701 = vpop.f32.mrf.mxu0
          %1702 = vmatprep.mubr.f32.mxu0 0.0
          %1703 = vmatmul.mubr.f32.gmra.mxu0 %v1549
          %v1704 = vpop.f32.mrf.mxu0
          %v1705 = vadd.f32 0.0, %v1704
          %v1706 = vpop.f32.mrf.mxu0
          %1707 = vmatprep.mubr.f32.mxu0 0.0
          %1708 = vmatmul.mubr.f32.gmra.mxu0 %v1550
          %v1709 = vpop.f32.mrf.mxu0
          %v1710 = vadd.f32 0.0, %v1709
          %v1711 = vpop.f32.mrf.mxu0
          %1712 = vmatprep.mubr.f32.mxu0 0.0
          %1713 = vmatmul.mubr.f32.gmra.mxu0 %v1551
          %v1714 = vpop.f32.mrf.mxu0
          %v1715 = vadd.f32 0.0, %v1714
          %v1716 = vpop.f32.mrf.mxu0
          %1717 = vmatprep.mubr.f32.mxu0 0.0
          %1718 = vmatmul.mubr.f32.gmra.mxu0 %v1552
          %v1719 = vpop.f32.mrf.mxu0
          %v1720 = vadd.f32 0.0, %v1719
          %v1721 = vpop.f32.mrf.mxu0
          %1722 = vmatprep.mubr.f32.mxu0 0.0
          %1723 = vmatmul.mubr.f32.gmra.mxu0 %v1553
          %v1724 = vpop.f32.mrf.mxu0
          %v1725 = vadd.f32 0.0, %v1724
          %v1726 = vpop.f32.mrf.mxu0
          %1727 = vmatprep.mubr.f32.mxu0 0.0
          %1728 = vmatmul.mubr.f32.gmra.mxu0 %v1554
          %v1729 = vpop.f32.mrf.mxu0
          %v1730 = vadd.f32 0.0, %v1729
          %v1731 = vpop.f32.mrf.mxu0
          %1732 = vmatprep.mubr.f32.mxu0 0.0
          %1733 = vmatmul.mubr.f32.gmra.mxu0 %v1555
          %v1734 = vpop.f32.mrf.mxu0
          %v1735 = vadd.f32 0.0, %v1734
          %v1736 = vpop.f32.mrf.mxu0
          %1737 = vmatprep.mubr.f32.mxu0 0.0
          %1738 = vmatmul.mubr.f32.gmra.mxu0 %v1556
          %v1739 = vpop.f32.mrf.mxu0
          %v1740 = vadd.f32 0.0, %v1739
          %v1741 = vpop.f32.mrf.mxu0
          %1742 = vmatprep.mubr.f32.mxu0 0.0
          %1743 = vmatmul.mubr.f32.gmra.mxu0 %v1557
          %v1744 = vpop.f32.mrf.mxu0
          %v1745 = vadd.f32 0.0, %v1744
          %v1746 = vpop.f32.mrf.mxu0
          %1747 = vmatprep.mubr.f32.mxu0 0.0
          %1748 = vmatmul.mubr.f32.gmra.mxu0 %v1558
          %v1749 = vpop.f32.mrf.mxu0
          %v1750 = vadd.f32 0.0, %v1749
          %v1751 = vpop.f32.mrf.mxu0
          %1752 = vmatprep.mubr.f32.mxu0 0.0
          %1753 = vmatmul.mubr.f32.gmra.mxu0 %v1559
          %v1754 = vpop.f32.mrf.mxu0
          %v1755 = vadd.f32 0.0, %v1754
          %v1756 = vpop.f32.mrf.mxu0
          %1757 = vmatprep.mubr.f32.mxu0 0.0
          %1758 = vmatmul.mubr.f32.gmra.mxu0 %v1560
          %v1759 = vpop.f32.mrf.mxu0
          %v1760 = vadd.f32 0.0, %v1759
          %v1761 = vpop.f32.mrf.mxu0
          %1762 = vmatprep.mubr.f32.mxu0 0.0
          %1763 = vmatmul.mubr.f32.gmra.mxu0 %v1561
          %v1764 = vpop.f32.mrf.mxu0
          %v1765 = vadd.f32 0.0, %v1764
          %v1766 = vpop.f32.mrf.mxu0
          %1767 = vmatprep.mubr.f32.mxu0 0.0
          %1768 = vmatmul.mubr.f32.gmra.mxu0 %v1562
          %v1769 = vpop.f32.mrf.mxu0
          %v1770 = vadd.f32 0.0, %v1769
          %v1771 = vpop.f32.mrf.mxu0
          %1772 = vmatprep.mubr.f32.mxu0 0.0
          %1773 = vmatmul.mubr.f32.gmra.mxu0 %v1563
          %v1774 = vpop.f32.mrf.mxu0
          %v1775 = vadd.f32 0.0, %v1774
          %v1776 = vpop.f32.mrf.mxu0
          %1777 = vmatprep.mubr.f32.mxu0 0.0
          %1778 = vmatmul.mubr.f32.gmra.mxu0 %v1564
          %v1779 = vpop.f32.mrf.mxu0
          %v1780 = vadd.f32 0.0, %v1779
          %v1781 = vpop.f32.mrf.mxu0
          %1782 = vmatprep.mubr.f32.mxu0 0.0
          %1783 = vmatmul.mubr.f32.gmra.mxu0 %v1565
          %v1784 = vpop.f32.mrf.mxu0
          %v1785 = vadd.f32 0.0, %v1784
          %v1786 = vpop.f32.mrf.mxu0
          %1787 = vmatprep.mubr.f32.mxu0 0.0
          %1788 = vmatmul.mubr.f32.gmra.mxu0 %v1566
          %v1789 = vpop.f32.mrf.mxu0
          %v1790 = vadd.f32 0.0, %v1789
          %v1791 = vpop.f32.mrf.mxu0
          %1792 = vmatprep.mubr.f32.mxu0 0.0
          %1793 = vmatmul.mubr.f32.gmra.mxu0 %v1567
          %v1794 = vpop.f32.mrf.mxu0
          %v1795 = vadd.f32 0.0, %v1794
          %v1796 = vpop.f32.mrf.mxu0
          %1797 = vmatprep.mubr.f32.mxu0 0.0
          %1798 = vmatmul.mubr.f32.gmra.mxu0 %v1568
          %v1799 = vpop.f32.mrf.mxu0
          %v1800 = vadd.f32 0.0, %v1799
          %v1801 = vpop.f32.mrf.mxu0
          %1802 = vmatprep.mubr.f32.mxu0 0.0
          %1803 = vmatmul.mubr.f32.gmra.mxu0 %v1569
          %v1804 = vpop.f32.mrf.mxu0
          %v1805 = vadd.f32 0.0, %v1804
          %v1806 = vpop.f32.mrf.mxu0
          %1807 = vmatprep.mubr.f32.mxu0 0.0
          %1808 = vmatmul.mubr.f32.gmra.mxu0 %v1570
          %v1809 = vpop.f32.mrf.mxu0
          %v1810 = vadd.f32 0.0, %v1809
          %v1811 = vpop.f32.mrf.mxu0
          %1812 = vdwg.mxu0
          %v1813 = vld [vmem:[#allocation4] sm:$0xff]
          %v1814 = vld [vmem:[#allocation4 + $0x8] sm:$0xff]
          %v1815 = vld [vmem:[#allocation4 + $0x10] sm:$0xff]
          %v1816 = vld [vmem:[#allocation4 + $0x18] sm:$0xff]
          %v1817 = vld [vmem:[#allocation4 + $0x20] sm:$0xff]
          %v1818 = vld [vmem:[#allocation4 + $0x28] sm:$0xff]
          %v1819 = vld [vmem:[#allocation4 + $0x30] sm:$0xff]
          %v1820 = vld [vmem:[#allocation4 + $0x38] sm:$0xff]
          %v1821 = vld [vmem:[#allocation4 + $0x40] sm:$0xff]
          %v1822 = vld [vmem:[#allocation4 + $0x48] sm:$0xff]
          %v1823 = vld [vmem:[#allocation4 + $0x50] sm:$0xff]
          %v1824 = vld [vmem:[#allocation4 + $0x58] sm:$0xff]
          %v1825 = vld [vmem:[#allocation4 + $0x60] sm:$0xff]
          %v1826 = vld [vmem:[#allocation4 + $0x68] sm:$0xff]
          %v1827 = vld [vmem:[#allocation4 + $0x70] sm:$0xff]
          %v1828 = vld [vmem:[#allocation4 + $0x78] sm:$0xff]
          %v1829 = vld [vmem:[#allocation4 + $0x80] sm:$0xff]
          %v1830 = vld [vmem:[#allocation4 + $0x88] sm:$0xff]
          %v1831 = vld [vmem:[#allocation4 + $0x90] sm:$0xff]
          %v1832 = vld [vmem:[#allocation4 + $0x98] sm:$0xff]
          %v1833 = vld [vmem:[#allocation4 + $0xa0] sm:$0xff]
          %v1834 = vld [vmem:[#allocation4 + $0xa8] sm:$0xff]
          %v1835 = vld [vmem:[#allocation4 + $0xb0] sm:$0xff]
          %v1836 = vld [vmem:[#allocation4 + $0xb8] sm:$0xff]
          %v1837 = vld [vmem:[#allocation4 + $0xc0] sm:$0xff]
          %v1838 = vld [vmem:[#allocation4 + $0xc8] sm:$0xff]
          %v1839 = vld [vmem:[#allocation4 + $0xd0] sm:$0xff]
          %v1840 = vld [vmem:[#allocation4 + $0xd8] sm:$0xff]
          %v1841 = vld [vmem:[#allocation4 + $0xe0] sm:$0xff]
          %v1842 = vld [vmem:[#allocation4 + $0xe8] sm:$0xff]
          %v1843 = vld [vmem:[#allocation4 + $0xf0] sm:$0xff]
          %v1844 = vld [vmem:[#allocation4 + $0xf8] sm:$0xff]
          %v1845 = vadd.f32 %v1813, %v1655
          %v1846 = vadd.f32 %v1814, %v1660
          %v1847 = vadd.f32 %v1815, %v1665
          %v1848 = vadd.f32 %v1816, %v1670
          %v1849 = vadd.f32 %v1817, %v1675
          %v1850 = vadd.f32 %v1818, %v1680
          %v1851 = vadd.f32 %v1819, %v1685
          %v1852 = vadd.f32 %v1820, %v1690
          %v1853 = vadd.f32 %v1821, %v1695
          %v1854 = vadd.f32 %v1822, %v1700
          %v1855 = vadd.f32 %v1823, %v1705
          %v1856 = vadd.f32 %v1824, %v1710
          %v1857 = vadd.f32 %v1825, %v1715
          %v1858 = vadd.f32 %v1826, %v1720
          %v1859 = vadd.f32 %v1827, %v1725
          %v1860 = vadd.f32 %v1828, %v1730
          %v1861 = vadd.f32 %v1829, %v1735
          %v1862 = vadd.f32 %v1830, %v1740
          %v1863 = vadd.f32 %v1831, %v1745
          %v1864 = vadd.f32 %v1832, %v1750
          %v1865 = vadd.f32 %v1833, %v1755
          %v1866 = vadd.f32 %v1834, %v1760
          %v1867 = vadd.f32 %v1835, %v1765
          %v1868 = vadd.f32 %v1836, %v1770
          %v1869 = vadd.f32 %v1837, %v1775
          %v1870 = vadd.f32 %v1838, %v1780
          %v1871 = vadd.f32 %v1839, %v1785
          %v1872 = vadd.f32 %v1840, %v1790
          %v1873 = vadd.f32 %v1841, %v1795
          %v1874 = vadd.f32 %v1842, %v1800
          %v1875 = vadd.f32 %v1843, %v1805
          %v1876 = vadd.f32 %v1844, %v1810
          %1877 = vst [vmem:[#allocation4] sm:$0xff] %v1845
          %1878 = vst [vmem:[#allocation4 + $0x8] sm:$0xff] %v1846
          %1879 = vst [vmem:[#allocation4 + $0x10] sm:$0xff] %v1847
          %1880 = vst [vmem:[#allocation4 + $0x18] sm:$0xff] %v1848
          %1881 = vst [vmem:[#allocation4 + $0x20] sm:$0xff] %v1849
          %1882 = vst [vmem:[#allocation4 + $0x28] sm:$0xff] %v1850
          %1883 = vst [vmem:[#allocation4 + $0x30] sm:$0xff] %v1851
          %1884 = vst [vmem:[#allocation4 + $0x38] sm:$0xff] %v1852
          %1885 = vst [vmem:[#allocation4 + $0x40] sm:$0xff] %v1853
          %1886 = vst [vmem:[#allocation4 + $0x48] sm:$0xff] %v1854
          %1887 = vst [vmem:[#allocation4 + $0x50] sm:$0xff] %v1855
          %1888 = vst [vmem:[#allocation4 + $0x58] sm:$0xff] %v1856
          %1889 = vst [vmem:[#allocation4 + $0x60] sm:$0xff] %v1857
          %1890 = vst [vmem:[#allocation4 + $0x68] sm:$0xff] %v1858
          %1891 = vst [vmem:[#allocation4 + $0x70] sm:$0xff] %v1859
          %1892 = vst [vmem:[#allocation4 + $0x78] sm:$0xff] %v1860
          %1893 = vst [vmem:[#allocation4 + $0x80] sm:$0xff] %v1861
          %1894 = vst [vmem:[#allocation4 + $0x88] sm:$0xff] %v1862
          %1895 = vst [vmem:[#allocation4 + $0x90] sm:$0xff] %v1863
          %1896 = vst [vmem:[#allocation4 + $0x98] sm:$0xff] %v1864
          %1897 = vst [vmem:[#allocation4 + $0xa0] sm:$0xff] %v1865
          %1898 = vst [vmem:[#allocation4 + $0xa8] sm:$0xff] %v1866
          %1899 = vst [vmem:[#allocation4 + $0xb0] sm:$0xff] %v1867
          %1900 = vst [vmem:[#allocation4 + $0xb8] sm:$0xff] %v1868
          %1901 = vst [vmem:[#allocation4 + $0xc0] sm:$0xff] %v1869
          %1902 = vst [vmem:[#allocation4 + $0xc8] sm:$0xff] %v1870
          %1903 = vst [vmem:[#allocation4 + $0xd0] sm:$0xff] %v1871
          %1904 = vst [vmem:[#allocation4 + $0xd8] sm:$0xff] %v1872
          %1905 = vst [vmem:[#allocation4 + $0xe0] sm:$0xff] %v1873
          %1906 = vst [vmem:[#allocation4 + $0xe8] sm:$0xff] %v1874
          %1907 = vst [vmem:[#allocation4 + $0xf0] sm:$0xff] %v1875
          %1908 = vst [vmem:[#allocation4 + $0xf8] sm:$0xff] %v1876
          %v1909 = vld [vmem:[%s831 + $0xf] sm:$0xff]
          %v1910 = vld [vmem:[%s831 + $0x17] sm:$0xff]
          %v1911 = vld [vmem:[%s831 + $0x37] sm:$0xff]
          %v1912 = vld [vmem:[%s831 + $0x3f] sm:$0xff]
          %v1913 = vld [vmem:[%s831 + $0x5f] sm:$0xff]
          %v1914 = vld [vmem:[%s831 + $0x67] sm:$0xff]
          %v1915 = vld [vmem:[%s831 + $0x87] sm:$0xff]
          %v1916 = vld [vmem:[%s831 + $0x8f] sm:$0xff]
          %v1917 = vld [vmem:[%s831 + $0xaf] sm:$0xff]
          %v1918 = vld [vmem:[%s831 + $0xb7] sm:$0xff]
          %v1919 = vld [vmem:[%s831 + $0xd7] sm:$0xff]
          %v1920 = vld [vmem:[%s831 + $0xdf] sm:$0xff]
          %v1921 = vld [vmem:[%s831 + $0xff] sm:$0xff]
          %v1922 = vld [vmem:[%s831 + $0x107] sm:$0xff]
          %v1923 = vld [vmem:[%s831 + $0x127] sm:$0xff]
          %v1924 = vld [vmem:[%s831 + $0x12f] sm:$0xff]
          %v1925 = vld [vmem:[%s831 + $0x14f] sm:$0xff]
          %v1926 = vld [vmem:[%s831 + $0x157] sm:$0xff]
          %v1927 = vld [vmem:[%s831 + $0x177] sm:$0xff]
          %v1928 = vld [vmem:[%s831 + $0x17f] sm:$0xff]
          %v1929 = vld [vmem:[%s831 + $0x19f] sm:$0xff]
          %v1930 = vld [vmem:[%s831 + $0x1a7] sm:$0xff]
          %v1931 = vld [vmem:[%s831 + $0x1c7] sm:$0xff]
          %v1932 = vld [vmem:[%s831 + $0x1cf] sm:$0xff]
          %v1933 = vld [vmem:[%s831 + $0x1ef] sm:$0xff]
          %v1934 = vld [vmem:[%s831 + $0x1f7] sm:$0xff]
          %v1935 = vld [vmem:[%s831 + $0x217] sm:$0xff]
          %v1936 = vld [vmem:[%s831 + $0x21f] sm:$0xff]
          %v1937 = vld [vmem:[%s831 + $0x23f] sm:$0xff]
          %v1938 = vld [vmem:[%s831 + $0x247] sm:$0xff]
          %v1939 = vld [vmem:[%s831 + $0x267] sm:$0xff]
          %v1940 = vld [vmem:[%s831 + $0x26f] sm:$0xff]
          %s1941 = scalar_lea.vmem [#allocation9], 384
          %v1942 = vld [vmem:[%s1941] sm:$0xff]
          %v1943 = vld [vmem:[%s1941 + $0x8] sm:$0xff]
          %v1944 = vld [vmem:[%s1941 + $0x10] sm:$0xff]
          %v1945 = vld [vmem:[%s1941 + $0x18] sm:$0xff]
          %v1946 = vld [vmem:[%s1941 + $0x20] sm:$0xff]
          %v1947 = vld [vmem:[%s1941 + $0x28] sm:$0xff]
          %v1948 = vld [vmem:[%s1941 + $0x30] sm:$0xff]
          %v1949 = vld [vmem:[%s1941 + $0x38] sm:$0xff]
          %v1950 = vld [vmem:[%s1941 + $0x40] sm:$0xff]
          %v1951 = vld [vmem:[%s1941 + $0x48] sm:$0xff]
          %v1952 = vld [vmem:[%s1941 + $0x50] sm:$0xff]
          %v1953 = vld [vmem:[%s1941 + $0x58] sm:$0xff]
          %v1954 = vld [vmem:[%s1941 + $0x60] sm:$0xff]
          %v1955 = vld [vmem:[%s1941 + $0x68] sm:$0xff]
          %v1956 = vld [vmem:[%s1941 + $0x70] sm:$0xff]
          %v1957 = vld [vmem:[%s1941 + $0x78] sm:$0xff]
          %1958 = vmatprep.subr.mxu0 0.0
          %1959 = vmatpush1.msra.mxu0 %v1957
          %1960 = vmatprep.subr.mxu0 0.0
          %1961 = vmatpush1.msra.mxu0 %v1956
          %1962 = vmatprep.subr.mxu0 0.0
          %1963 = vmatpush1.msra.mxu0 %v1955
          %1964 = vmatprep.subr.mxu0 0.0
          %1965 = vmatpush1.msra.mxu0 %v1954
          %1966 = vmatprep.subr.mxu0 0.0
          %1967 = vmatpush1.msra.mxu0 %v1953
          %1968 = vmatprep.subr.mxu0 0.0
          %1969 = vmatpush1.msra.mxu0 %v1952
          %1970 = vmatprep.subr.mxu0 0.0
          %1971 = vmatpush1.msra.mxu0 %v1951
          %1972 = vmatprep.subr.mxu0 0.0
          %1973 = vmatpush1.msra.mxu0 %v1950
          %1974 = vmatprep.subr.mxu0 0.0
          %1975 = vmatpush1.msra.mxu0 %v1949
          %1976 = vmatprep.subr.mxu0 0.0
          %1977 = vmatpush1.msra.mxu0 %v1948
          %1978 = vmatprep.subr.mxu0 0.0
          %1979 = vmatpush1.msra.mxu0 %v1947
          %1980 = vmatprep.subr.mxu0 0.0
          %1981 = vmatpush1.msra.mxu0 %v1946
          %1982 = vmatprep.subr.mxu0 0.0
          %1983 = vmatpush1.msra.mxu0 %v1945
          %1984 = vmatprep.subr.mxu0 0.0
          %1985 = vmatpush1.msra.mxu0 %v1944
          %1986 = vmatprep.subr.mxu0 0.0
          %1987 = vmatpush1.msra.mxu0 %v1943
          %1988 = vmatprep.subr.mxu0 0.0
          %1989 = vmatpush1.msra.mxu0 %v1942
          %1990 = vmatprep.subr.mxu0 0.0
          %1991 = vmatpush2.msra.mxu0 0.0
          %1992 = vmatprep.subr.mxu0 0.0
          %1993 = vmatpush2.msra.mxu0 0.0
          %1994 = vmatprep.subr.mxu0 0.0
          %1995 = vmatpush2.msra.mxu0 0.0
          %1996 = vmatprep.subr.mxu0 0.0
          %1997 = vmatpush2.msra.mxu0 0.0
          %1998 = vmatprep.subr.mxu0 0.0
          %1999 = vmatpush2.msra.mxu0 0.0
          %2000 = vmatprep.subr.mxu0 0.0
          %2001 = vmatpush2.msra.mxu0 0.0
          %2002 = vmatprep.subr.mxu0 0.0
          %2003 = vmatpush2.msra.mxu0 0.0
          %2004 = vmatprep.subr.mxu0 0.0
          %2005 = vmatpush2.msra.mxu0 0.0
          %2006 = vmatprep.subr.mxu0 0.0
          %2007 = vmatpush2.msra.mxu0 0.0
          %2008 = vmatprep.subr.mxu0 0.0
          %2009 = vmatpush2.msra.mxu0 0.0
          %2010 = vmatprep.subr.mxu0 0.0
          %2011 = vmatpush2.msra.mxu0 0.0
          %2012 = vmatprep.subr.mxu0 0.0
          %2013 = vmatpush2.msra.mxu0 0.0
          %2014 = vmatprep.subr.mxu0 0.0
          %2015 = vmatpush2.msra.mxu0 0.0
          %2016 = vmatprep.subr.mxu0 0.0
          %2017 = vmatpush2.msra.mxu0 0.0
          %2018 = vmatprep.subr.mxu0 0.0
          %2019 = vmatpush2.msra.mxu0 0.0
          %2020 = vmatprep.subr.mxu0 0.0
          %2021 = vmatpush2.msra.mxu0 0.0
          %2022 = vmatprep.mubr.f32.mxu0 0.0
          %2023 = vmatmul.mubr.f32.gmra.mxu0 %v1909
          %v2024 = vpop.f32.mrf.mxu0
          %v2025 = vadd.f32 0.0, %v2024
          %v2026 = vpop.f32.mrf.mxu0
          %2027 = vmatprep.mubr.f32.mxu0 0.0
          %2028 = vmatmul.mubr.f32.gmra.mxu0 %v1910
          %v2029 = vpop.f32.mrf.mxu0
          %v2030 = vadd.f32 0.0, %v2029
          %v2031 = vpop.f32.mrf.mxu0
          %2032 = vmatprep.mubr.f32.mxu0 0.0
          %2033 = vmatmul.mubr.f32.gmra.mxu0 %v1911
          %v2034 = vpop.f32.mrf.mxu0
          %v2035 = vadd.f32 0.0, %v2034
          %v2036 = vpop.f32.mrf.mxu0
          %2037 = vmatprep.mubr.f32.mxu0 0.0
          %2038 = vmatmul.mubr.f32.gmra.mxu0 %v1912
          %v2039 = vpop.f32.mrf.mxu0
          %v2040 = vadd.f32 0.0, %v2039
          %v2041 = vpop.f32.mrf.mxu0
          %2042 = vmatprep.mubr.f32.mxu0 0.0
          %2043 = vmatmul.mubr.f32.gmra.mxu0 %v1913
          %v2044 = vpop.f32.mrf.mxu0
          %v2045 = vadd.f32 0.0, %v2044
          %v2046 = vpop.f32.mrf.mxu0
          %2047 = vmatprep.mubr.f32.mxu0 0.0
          %2048 = vmatmul.mubr.f32.gmra.mxu0 %v1914
          %v2049 = vpop.f32.mrf.mxu0
          %v2050 = vadd.f32 0.0, %v2049
          %v2051 = vpop.f32.mrf.mxu0
          %2052 = vmatprep.mubr.f32.mxu0 0.0
          %2053 = vmatmul.mubr.f32.gmra.mxu0 %v1915
          %v2054 = vpop.f32.mrf.mxu0
          %v2055 = vadd.f32 0.0, %v2054
          %v2056 = vpop.f32.mrf.mxu0
          %2057 = vmatprep.mubr.f32.mxu0 0.0
          %2058 = vmatmul.mubr.f32.gmra.mxu0 %v1916
          %v2059 = vpop.f32.mrf.mxu0
          %v2060 = vadd.f32 0.0, %v2059
          %v2061 = vpop.f32.mrf.mxu0
          %2062 = vmatprep.mubr.f32.mxu0 0.0
          %2063 = vmatmul.mubr.f32.gmra.mxu0 %v1917
          %v2064 = vpop.f32.mrf.mxu0
          %v2065 = vadd.f32 0.0, %v2064
          %v2066 = vpop.f32.mrf.mxu0
          %2067 = vmatprep.mubr.f32.mxu0 0.0
          %2068 = vmatmul.mubr.f32.gmra.mxu0 %v1918
          %v2069 = vpop.f32.mrf.mxu0
          %v2070 = vadd.f32 0.0, %v2069
          %v2071 = vpop.f32.mrf.mxu0
          %2072 = vmatprep.mubr.f32.mxu0 0.0
          %2073 = vmatmul.mubr.f32.gmra.mxu0 %v1919
          %v2074 = vpop.f32.mrf.mxu0
          %v2075 = vadd.f32 0.0, %v2074
          %v2076 = vpop.f32.mrf.mxu0
          %2077 = vmatprep.mubr.f32.mxu0 0.0
          %2078 = vmatmul.mubr.f32.gmra.mxu0 %v1920
          %v2079 = vpop.f32.mrf.mxu0
          %v2080 = vadd.f32 0.0, %v2079
          %v2081 = vpop.f32.mrf.mxu0
          %2082 = vmatprep.mubr.f32.mxu0 0.0
          %2083 = vmatmul.mubr.f32.gmra.mxu0 %v1921
          %v2084 = vpop.f32.mrf.mxu0
          %v2085 = vadd.f32 0.0, %v2084
          %v2086 = vpop.f32.mrf.mxu0
          %2087 = vmatprep.mubr.f32.mxu0 0.0
          %2088 = vmatmul.mubr.f32.gmra.mxu0 %v1922
          %v2089 = vpop.f32.mrf.mxu0
          %v2090 = vadd.f32 0.0, %v2089
          %v2091 = vpop.f32.mrf.mxu0
          %2092 = vmatprep.mubr.f32.mxu0 0.0
          %2093 = vmatmul.mubr.f32.gmra.mxu0 %v1923
          %v2094 = vpop.f32.mrf.mxu0
          %v2095 = vadd.f32 0.0, %v2094
          %v2096 = vpop.f32.mrf.mxu0
          %2097 = vmatprep.mubr.f32.mxu0 0.0
          %2098 = vmatmul.mubr.f32.gmra.mxu0 %v1924
          %v2099 = vpop.f32.mrf.mxu0
          %v2100 = vadd.f32 0.0, %v2099
          %v2101 = vpop.f32.mrf.mxu0
          %2102 = vmatprep.mubr.f32.mxu0 0.0
          %2103 = vmatmul.mubr.f32.gmra.mxu0 %v1925
          %v2104 = vpop.f32.mrf.mxu0
          %v2105 = vadd.f32 0.0, %v2104
          %v2106 = vpop.f32.mrf.mxu0
          %2107 = vmatprep.mubr.f32.mxu0 0.0
          %2108 = vmatmul.mubr.f32.gmra.mxu0 %v1926
          %v2109 = vpop.f32.mrf.mxu0
          %v2110 = vadd.f32 0.0, %v2109
          %v2111 = vpop.f32.mrf.mxu0
          %2112 = vmatprep.mubr.f32.mxu0 0.0
          %2113 = vmatmul.mubr.f32.gmra.mxu0 %v1927
          %v2114 = vpop.f32.mrf.mxu0
          %v2115 = vadd.f32 0.0, %v2114
          %v2116 = vpop.f32.mrf.mxu0
          %2117 = vmatprep.mubr.f32.mxu0 0.0
          %2118 = vmatmul.mubr.f32.gmra.mxu0 %v1928
          %v2119 = vpop.f32.mrf.mxu0
          %v2120 = vadd.f32 0.0, %v2119
          %v2121 = vpop.f32.mrf.mxu0
          %2122 = vmatprep.mubr.f32.mxu0 0.0
          %2123 = vmatmul.mubr.f32.gmra.mxu0 %v1929
          %v2124 = vpop.f32.mrf.mxu0
          %v2125 = vadd.f32 0.0, %v2124
          %v2126 = vpop.f32.mrf.mxu0
          %2127 = vmatprep.mubr.f32.mxu0 0.0
          %2128 = vmatmul.mubr.f32.gmra.mxu0 %v1930
          %v2129 = vpop.f32.mrf.mxu0
          %v2130 = vadd.f32 0.0, %v2129
          %v2131 = vpop.f32.mrf.mxu0
          %2132 = vmatprep.mubr.f32.mxu0 0.0
          %2133 = vmatmul.mubr.f32.gmra.mxu0 %v1931
          %v2134 = vpop.f32.mrf.mxu0
          %v2135 = vadd.f32 0.0, %v2134
          %v2136 = vpop.f32.mrf.mxu0
          %2137 = vmatprep.mubr.f32.mxu0 0.0
          %2138 = vmatmul.mubr.f32.gmra.mxu0 %v1932
          %v2139 = vpop.f32.mrf.mxu0
          %v2140 = vadd.f32 0.0, %v2139
          %v2141 = vpop.f32.mrf.mxu0
          %2142 = vmatprep.mubr.f32.mxu0 0.0
          %2143 = vmatmul.mubr.f32.gmra.mxu0 %v1933
          %v2144 = vpop.f32.mrf.mxu0
          %v2145 = vadd.f32 0.0, %v2144
          %v2146 = vpop.f32.mrf.mxu0
          %2147 = vmatprep.mubr.f32.mxu0 0.0
          %2148 = vmatmul.mubr.f32.gmra.mxu0 %v1934
          %v2149 = vpop.f32.mrf.mxu0
          %v2150 = vadd.f32 0.0, %v2149
          %v2151 = vpop.f32.mrf.mxu0
          %2152 = vmatprep.mubr.f32.mxu0 0.0
          %2153 = vmatmul.mubr.f32.gmra.mxu0 %v1935
          %v2154 = vpop.f32.mrf.mxu0
          %v2155 = vadd.f32 0.0, %v2154
          %v2156 = vpop.f32.mrf.mxu0
          %2157 = vmatprep.mubr.f32.mxu0 0.0
          %2158 = vmatmul.mubr.f32.gmra.mxu0 %v1936
          %v2159 = vpop.f32.mrf.mxu0
          %v2160 = vadd.f32 0.0, %v2159
          %v2161 = vpop.f32.mrf.mxu0
          %2162 = vmatprep.mubr.f32.mxu0 0.0
          %2163 = vmatmul.mubr.f32.gmra.mxu0 %v1937
          %v2164 = vpop.f32.mrf.mxu0
          %v2165 = vadd.f32 0.0, %v2164
          %v2166 = vpop.f32.mrf.mxu0
          %2167 = vmatprep.mubr.f32.mxu0 0.0
          %2168 = vmatmul.mubr.f32.gmra.mxu0 %v1938
          %v2169 = vpop.f32.mrf.mxu0
          %v2170 = vadd.f32 0.0, %v2169
          %v2171 = vpop.f32.mrf.mxu0
          %2172 = vmatprep.mubr.f32.mxu0 0.0
          %2173 = vmatmul.mubr.f32.gmra.mxu0 %v1939
          %v2174 = vpop.f32.mrf.mxu0
          %v2175 = vadd.f32 0.0, %v2174
          %v2176 = vpop.f32.mrf.mxu0
          %2177 = vmatprep.mubr.f32.mxu0 0.0
          %2178 = vmatmul.mubr.f32.gmra.mxu0 %v1940
          %v2179 = vpop.f32.mrf.mxu0
          %v2180 = vadd.f32 0.0, %v2179
          %v2181 = vpop.f32.mrf.mxu0
          %2182 = vdwg.mxu0
          %v2183 = vld [vmem:[#allocation4] sm:$0xff]
          %v2184 = vld [vmem:[#allocation4 + $0x8] sm:$0xff]
          %v2185 = vld [vmem:[#allocation4 + $0x10] sm:$0xff]
          %v2186 = vld [vmem:[#allocation4 + $0x18] sm:$0xff]
          %v2187 = vld [vmem:[#allocation4 + $0x20] sm:$0xff]
          %v2188 = vld [vmem:[#allocation4 + $0x28] sm:$0xff]
          %v2189 = vld [vmem:[#allocation4 + $0x30] sm:$0xff]
          %v2190 = vld [vmem:[#allocation4 + $0x38] sm:$0xff]
          %v2191 = vld [vmem:[#allocation4 + $0x40] sm:$0xff]
          %v2192 = vld [vmem:[#allocation4 + $0x48] sm:$0xff]
          %v2193 = vld [vmem:[#allocation4 + $0x50] sm:$0xff]
          %v2194 = vld [vmem:[#allocation4 + $0x58] sm:$0xff]
          %v2195 = vld [vmem:[#allocation4 + $0x60] sm:$0xff]
          %v2196 = vld [vmem:[#allocation4 + $0x68] sm:$0xff]
          %v2197 = vld [vmem:[#allocation4 + $0x70] sm:$0xff]
          %v2198 = vld [vmem:[#allocation4 + $0x78] sm:$0xff]
          %v2199 = vld [vmem:[#allocation4 + $0x80] sm:$0xff]
          %v2200 = vld [vmem:[#allocation4 + $0x88] sm:$0xff]
          %v2201 = vld [vmem:[#allocation4 + $0x90] sm:$0xff]
          %v2202 = vld [vmem:[#allocation4 + $0x98] sm:$0xff]
          %v2203 = vld [vmem:[#allocation4 + $0xa0] sm:$0xff]
          %v2204 = vld [vmem:[#allocation4 + $0xa8] sm:$0xff]
          %v2205 = vld [vmem:[#allocation4 + $0xb0] sm:$0xff]
          %v2206 = vld [vmem:[#allocation4 + $0xb8] sm:$0xff]
          %v2207 = vld [vmem:[#allocation4 + $0xc0] sm:$0xff]
          %v2208 = vld [vmem:[#allocation4 + $0xc8] sm:$0xff]
          %v2209 = vld [vmem:[#allocation4 + $0xd0] sm:$0xff]
          %v2210 = vld [vmem:[#allocation4 + $0xd8] sm:$0xff]
          %v2211 = vld [vmem:[#allocation4 + $0xe0] sm:$0xff]
          %v2212 = vld [vmem:[#allocation4 + $0xe8] sm:$0xff]
          %v2213 = vld [vmem:[#allocation4 + $0xf0] sm:$0xff]
          %v2214 = vld [vmem:[#allocation4 + $0xf8] sm:$0xff]
          %v2215 = vadd.f32 %v2183, %v2025
          %v2216 = vadd.f32 %v2184, %v2030
          %v2217 = vadd.f32 %v2185, %v2035
          %v2218 = vadd.f32 %v2186, %v2040
          %v2219 = vadd.f32 %v2187, %v2045
          %v2220 = vadd.f32 %v2188, %v2050
          %v2221 = vadd.f32 %v2189, %v2055
          %v2222 = vadd.f32 %v2190, %v2060
          %v2223 = vadd.f32 %v2191, %v2065
          %v2224 = vadd.f32 %v2192, %v2070
          %v2225 = vadd.f32 %v2193, %v2075
          %v2226 = vadd.f32 %v2194, %v2080
          %v2227 = vadd.f32 %v2195, %v2085
          %v2228 = vadd.f32 %v2196, %v2090
          %v2229 = vadd.f32 %v2197, %v2095
          %v2230 = vadd.f32 %v2198, %v2100
          %v2231 = vadd.f32 %v2199, %v2105
          %v2232 = vadd.f32 %v2200, %v2110
          %v2233 = vadd.f32 %v2201, %v2115
          %v2234 = vadd.f32 %v2202, %v2120
          %v2235 = vadd.f32 %v2203, %v2125
          %v2236 = vadd.f32 %v2204, %v2130
          %v2237 = vadd.f32 %v2205, %v2135
          %v2238 = vadd.f32 %v2206, %v2140
          %v2239 = vadd.f32 %v2207, %v2145
          %v2240 = vadd.f32 %v2208, %v2150
          %v2241 = vadd.f32 %v2209, %v2155
          %v2242 = vadd.f32 %v2210, %v2160
          %v2243 = vadd.f32 %v2211, %v2165
          %v2244 = vadd.f32 %v2212, %v2170
          %v2245 = vadd.f32 %v2213, %v2175
          %v2246 = vadd.f32 %v2214, %v2180
          %2247 = vst [vmem:[#allocation4] sm:$0xff] %v2215
          %2248 = vst [vmem:[#allocation4 + $0x8] sm:$0xff] %v2216
          %2249 = vst [vmem:[#allocation4 + $0x10] sm:$0xff] %v2217
          %2250 = vst [vmem:[#allocation4 + $0x18] sm:$0xff] %v2218
          %2251 = vst [vmem:[#allocation4 + $0x20] sm:$0xff] %v2219
          %2252 = vst [vmem:[#allocation4 + $0x28] sm:$0xff] %v2220
          %2253 = vst [vmem:[#allocation4 + $0x30] sm:$0xff] %v2221
          %2254 = vst [vmem:[#allocation4 + $0x38] sm:$0xff] %v2222
          %2255 = vst [vmem:[#allocation4 + $0x40] sm:$0xff] %v2223
          %2256 = vst [vmem:[#allocation4 + $0x48] sm:$0xff] %v2224
          %2257 = vst [vmem:[#allocation4 + $0x50] sm:$0xff] %v2225
          %2258 = vst [vmem:[#allocation4 + $0x58] sm:$0xff] %v2226
          %2259 = vst [vmem:[#allocation4 + $0x60] sm:$0xff] %v2227
          %2260 = vst [vmem:[#allocation4 + $0x68] sm:$0xff] %v2228
          %2261 = vst [vmem:[#allocation4 + $0x70] sm:$0xff] %v2229
          %2262 = vst [vmem:[#allocation4 + $0x78] sm:$0xff] %v2230
          %2263 = vst [vmem:[#allocation4 + $0x80] sm:$0xff] %v2231
          %2264 = vst [vmem:[#allocation4 + $0x88] sm:$0xff] %v2232
          %2265 = vst [vmem:[#allocation4 + $0x90] sm:$0xff] %v2233
          %2266 = vst [vmem:[#allocation4 + $0x98] sm:$0xff] %v2234
          %2267 = vst [vmem:[#allocation4 + $0xa0] sm:$0xff] %v2235
          %2268 = vst [vmem:[#allocation4 + $0xa8] sm:$0xff] %v2236
          %2269 = vst [vmem:[#allocation4 + $0xb0] sm:$0xff] %v2237
          %2270 = vst [vmem:[#allocation4 + $0xb8] sm:$0xff] %v2238
          %2271 = vst [vmem:[#allocation4 + $0xc0] sm:$0xff] %v2239
          %2272 = vst [vmem:[#allocation4 + $0xc8] sm:$0xff] %v2240
          %2273 = vst [vmem:[#allocation4 + $0xd0] sm:$0xff] %v2241
          %2274 = vst [vmem:[#allocation4 + $0xd8] sm:$0xff] %v2242
          %2275 = vst [vmem:[#allocation4 + $0xe0] sm:$0xff] %v2243
          %2276 = vst [vmem:[#allocation4 + $0xe8] sm:$0xff] %v2244
          %2277 = vst [vmem:[#allocation4 + $0xf0] sm:$0xff] %v2245
          %2278 = vst [vmem:[#allocation4 + $0xf8] sm:$0xff] %v2246
          %v2279 = vld [vmem:[%s831 + $0x10] sm:$0xff]
          %v2280 = vld [vmem:[%s831 + $0x18] sm:$0xff]
          %v2281 = vld [vmem:[%s831 + $0x38] sm:$0xff]
          %v2282 = vld [vmem:[%s831 + $0x40] sm:$0xff]
          %v2283 = vld [vmem:[%s831 + $0x60] sm:$0xff]
          %v2284 = vld [vmem:[%s831 + $0x68] sm:$0xff]
          %v2285 = vld [vmem:[%s831 + $0x88] sm:$0xff]
          %v2286 = vld [vmem:[%s831 + $0x90] sm:$0xff]
          %v2287 = vld [vmem:[%s831 + $0xb0] sm:$0xff]
          %v2288 = vld [vmem:[%s831 + $0xb8] sm:$0xff]
          %v2289 = vld [vmem:[%s831 + $0xd8] sm:$0xff]
          %v2290 = vld [vmem:[%s831 + $0xe0] sm:$0xff]
          %v2291 = vld [vmem:[%s831 + $0x100] sm:$0xff]
          %v2292 = vld [vmem:[%s831 + $0x108] sm:$0xff]
          %v2293 = vld [vmem:[%s831 + $0x128] sm:$0xff]
          %v2294 = vld [vmem:[%s831 + $0x130] sm:$0xff]
          %v2295 = vld [vmem:[%s831 + $0x150] sm:$0xff]
          %v2296 = vld [vmem:[%s831 + $0x158] sm:$0xff]
          %v2297 = vld [vmem:[%s831 + $0x178] sm:$0xff]
          %v2298 = vld [vmem:[%s831 + $0x180] sm:$0xff]
          %v2299 = vld [vmem:[%s831 + $0x1a0] sm:$0xff]
          %v2300 = vld [vmem:[%s831 + $0x1a8] sm:$0xff]
          %v2301 = vld [vmem:[%s831 + $0x1c8] sm:$0xff]
          %v2302 = vld [vmem:[%s831 + $0x1d0] sm:$0xff]
          %v2303 = vld [vmem:[%s831 + $0x1f0] sm:$0xff]
          %v2304 = vld [vmem:[%s831 + $0x1f8] sm:$0xff]
          %v2305 = vld [vmem:[%s831 + $0x218] sm:$0xff]
          %v2306 = vld [vmem:[%s831 + $0x220] sm:$0xff]
          %v2307 = vld [vmem:[%s831 + $0x240] sm:$0xff]
          %v2308 = vld [vmem:[%s831 + $0x248] sm:$0xff]
          %v2309 = vld [vmem:[%s831 + $0x268] sm:$0xff]
          %v2310 = vld [vmem:[%s831 + $0x270] sm:$0xff]
          %s2311 = scalar_lea.vmem [#allocation9], 512
          %v2312 = vld [vmem:[%s2311] sm:$0xff]
          %v2313 = vld [vmem:[%s2311 + $0x8] sm:$0xff]
          %v2314 = vld [vmem:[%s2311 + $0x10] sm:$0xff]
          %v2315 = vld [vmem:[%s2311 + $0x18] sm:$0xff]
          %v2316 = vld [vmem:[%s2311 + $0x20] sm:$0xff]
          %v2317 = vld [vmem:[%s2311 + $0x28] sm:$0xff]
          %v2318 = vld [vmem:[%s2311 + $0x30] sm:$0xff]
          %v2319 = vld [vmem:[%s2311 + $0x38] sm:$0xff]
          %v2320 = vld [vmem:[%s2311 + $0x40] sm:$0xff]
          %v2321 = vld [vmem:[%s2311 + $0x48] sm:$0xff]
          %v2322 = vld [vmem:[%s2311 + $0x50] sm:$0xff]
          %v2323 = vld [vmem:[%s2311 + $0x58] sm:$0xff]
          %v2324 = vld [vmem:[%s2311 + $0x60] sm:$0xff]
          %v2325 = vld [vmem:[%s2311 + $0x68] sm:$0xff]
          %v2326 = vld [vmem:[%s2311 + $0x70] sm:$0xff]
          %v2327 = vld [vmem:[%s2311 + $0x78] sm:$0xff]
          %2328 = vmatprep.subr.mxu0 0.0
          %2329 = vmatpush1.msra.mxu0 %v2327
          %2330 = vmatprep.subr.mxu0 0.0
          %2331 = vmatpush1.msra.mxu0 %v2326
          %2332 = vmatprep.subr.mxu0 0.0
          %2333 = vmatpush1.msra.mxu0 %v2325
          %2334 = vmatprep.subr.mxu0 0.0
          %2335 = vmatpush1.msra.mxu0 %v2324
          %2336 = vmatprep.subr.mxu0 0.0
          %2337 = vmatpush1.msra.mxu0 %v2323
          %2338 = vmatprep.subr.mxu0 0.0
          %2339 = vmatpush1.msra.mxu0 %v2322
          %2340 = vmatprep.subr.mxu0 0.0
          %2341 = vmatpush1.msra.mxu0 %v2321
          %2342 = vmatprep.subr.mxu0 0.0
          %2343 = vmatpush1.msra.mxu0 %v2320
          %2344 = vmatprep.subr.mxu0 0.0
          %2345 = vmatpush1.msra.mxu0 %v2319
          %2346 = vmatprep.subr.mxu0 0.0
          %2347 = vmatpush1.msra.mxu0 %v2318
          %2348 = vmatprep.subr.mxu0 0.0
          %2349 = vmatpush1.msra.mxu0 %v2317
          %2350 = vmatprep.subr.mxu0 0.0
          %2351 = vmatpush1.msra.mxu0 %v2316
          %2352 = vmatprep.subr.mxu0 0.0
          %2353 = vmatpush1.msra.mxu0 %v2315
          %2354 = vmatprep.subr.mxu0 0.0
          %2355 = vmatpush1.msra.mxu0 %v2314
          %2356 = vmatprep.subr.mxu0 0.0
          %2357 = vmatpush1.msra.mxu0 %v2313
          %2358 = vmatprep.subr.mxu0 0.0
          %2359 = vmatpush1.msra.mxu0 %v2312
          %2360 = vmatprep.subr.mxu0 0.0
          %2361 = vmatpush2.msra.mxu0 0.0
          %2362 = vmatprep.subr.mxu0 0.0
          %2363 = vmatpush2.msra.mxu0 0.0
          %2364 = vmatprep.subr.mxu0 0.0
          %2365 = vmatpush2.msra.mxu0 0.0
          %2366 = vmatprep.subr.mxu0 0.0
          %2367 = vmatpush2.msra.mxu0 0.0
          %2368 = vmatprep.subr.mxu0 0.0
          %2369 = vmatpush2.msra.mxu0 0.0
          %2370 = vmatprep.subr.mxu0 0.0
          %2371 = vmatpush2.msra.mxu0 0.0
          %2372 = vmatprep.subr.mxu0 0.0
          %2373 = vmatpush2.msra.mxu0 0.0
          %2374 = vmatprep.subr.mxu0 0.0
          %2375 = vmatpush2.msra.mxu0 0.0
          %2376 = vmatprep.subr.mxu0 0.0
          %2377 = vmatpush2.msra.mxu0 0.0
          %2378 = vmatprep.subr.mxu0 0.0
          %2379 = vmatpush2.msra.mxu0 0.0
          %2380 = vmatprep.subr.mxu0 0.0
          %2381 = vmatpush2.msra.mxu0 0.0
          %2382 = vmatprep.subr.mxu0 0.0
          %2383 = vmatpush2.msra.mxu0 0.0
          %2384 = vmatprep.subr.mxu0 0.0
          %2385 = vmatpush2.msra.mxu0 0.0
          %2386 = vmatprep.subr.mxu0 0.0
          %2387 = vmatpush2.msra.mxu0 0.0
          %2388 = vmatprep.subr.mxu0 0.0
          %2389 = vmatpush2.msra.mxu0 0.0
          %2390 = vmatprep.subr.mxu0 0.0
          %2391 = vmatpush2.msra.mxu0 0.0
          %2392 = vmatprep.mubr.f32.mxu0 0.0
          %2393 = vmatmul.mubr.f32.gmra.mxu0 %v2279
          %v2394 = vpop.f32.mrf.mxu0
          %v2395 = vadd.f32 0.0, %v2394
          %v2396 = vpop.f32.mrf.mxu0
          %2397 = vmatprep.mubr.f32.mxu0 0.0
          %2398 = vmatmul.mubr.f32.gmra.mxu0 %v2280
          %v2399 = vpop.f32.mrf.mxu0
          %v2400 = vadd.f32 0.0, %v2399
          %v2401 = vpop.f32.mrf.mxu0
          %2402 = vmatprep.mubr.f32.mxu0 0.0
          %2403 = vmatmul.mubr.f32.gmra.mxu0 %v2281
          %v2404 = vpop.f32.mrf.mxu0
          %v2405 = vadd.f32 0.0, %v2404
          %v2406 = vpop.f32.mrf.mxu0
          %2407 = vmatprep.mubr.f32.mxu0 0.0
          %2408 = vmatmul.mubr.f32.gmra.mxu0 %v2282
          %v2409 = vpop.f32.mrf.mxu0
          %v2410 = vadd.f32 0.0, %v2409
          %v2411 = vpop.f32.mrf.mxu0
          %2412 = vmatprep.mubr.f32.mxu0 0.0
          %2413 = vmatmul.mubr.f32.gmra.mxu0 %v2283
          %v2414 = vpop.f32.mrf.mxu0
          %v2415 = vadd.f32 0.0, %v2414
          %v2416 = vpop.f32.mrf.mxu0
          %2417 = vmatprep.mubr.f32.mxu0 0.0
          %2418 = vmatmul.mubr.f32.gmra.mxu0 %v2284
          %v2419 = vpop.f32.mrf.mxu0
          %v2420 = vadd.f32 0.0, %v2419
          %v2421 = vpop.f32.mrf.mxu0
          %2422 = vmatprep.mubr.f32.mxu0 0.0
          %2423 = vmatmul.mubr.f32.gmra.mxu0 %v2285
          %v2424 = vpop.f32.mrf.mxu0
          %v2425 = vadd.f32 0.0, %v2424
          %v2426 = vpop.f32.mrf.mxu0
          %2427 = vmatprep.mubr.f32.mxu0 0.0
          %2428 = vmatmul.mubr.f32.gmra.mxu0 %v2286
          %v2429 = vpop.f32.mrf.mxu0
          %v2430 = vadd.f32 0.0, %v2429
          %v2431 = vpop.f32.mrf.mxu0
          %2432 = vmatprep.mubr.f32.mxu0 0.0
          %2433 = vmatmul.mubr.f32.gmra.mxu0 %v2287
          %v2434 = vpop.f32.mrf.mxu0
          %v2435 = vadd.f32 0.0, %v2434
          %v2436 = vpop.f32.mrf.mxu0
          %2437 = vmatprep.mubr.f32.mxu0 0.0
          %2438 = vmatmul.mubr.f32.gmra.mxu0 %v2288
          %v2439 = vpop.f32.mrf.mxu0
          %v2440 = vadd.f32 0.0, %v2439
          %v2441 = vpop.f32.mrf.mxu0
          %2442 = vmatprep.mubr.f32.mxu0 0.0
          %2443 = vmatmul.mubr.f32.gmra.mxu0 %v2289
          %v2444 = vpop.f32.mrf.mxu0
          %v2445 = vadd.f32 0.0, %v2444
          %v2446 = vpop.f32.mrf.mxu0
          %2447 = vmatprep.mubr.f32.mxu0 0.0
          %2448 = vmatmul.mubr.f32.gmra.mxu0 %v2290
          %v2449 = vpop.f32.mrf.mxu0
          %v2450 = vadd.f32 0.0, %v2449
          %v2451 = vpop.f32.mrf.mxu0
          %2452 = vmatprep.mubr.f32.mxu0 0.0
          %2453 = vmatmul.mubr.f32.gmra.mxu0 %v2291
          %v2454 = vpop.f32.mrf.mxu0
          %v2455 = vadd.f32 0.0, %v2454
          %v2456 = vpop.f32.mrf.mxu0
          %2457 = vmatprep.mubr.f32.mxu0 0.0
          %2458 = vmatmul.mubr.f32.gmra.mxu0 %v2292
          %v2459 = vpop.f32.mrf.mxu0
          %v2460 = vadd.f32 0.0, %v2459
          %v2461 = vpop.f32.mrf.mxu0
          %2462 = vmatprep.mubr.f32.mxu0 0.0
          %2463 = vmatmul.mubr.f32.gmra.mxu0 %v2293
          %v2464 = vpop.f32.mrf.mxu0
          %v2465 = vadd.f32 0.0, %v2464
          %v2466 = vpop.f32.mrf.mxu0
          %2467 = vmatprep.mubr.f32.mxu0 0.0
          %2468 = vmatmul.mubr.f32.gmra.mxu0 %v2294
          %v2469 = vpop.f32.mrf.mxu0
          %v2470 = vadd.f32 0.0, %v2469
          %v2471 = vpop.f32.mrf.mxu0
          %2472 = vmatprep.mubr.f32.mxu0 0.0
          %2473 = vmatmul.mubr.f32.gmra.mxu0 %v2295
          %v2474 = vpop.f32.mrf.mxu0
          %v2475 = vadd.f32 0.0, %v2474
          %v2476 = vpop.f32.mrf.mxu0
          %2477 = vmatprep.mubr.f32.mxu0 0.0
          %2478 = vmatmul.mubr.f32.gmra.mxu0 %v2296
          %v2479 = vpop.f32.mrf.mxu0
          %v2480 = vadd.f32 0.0, %v2479
          %v2481 = vpop.f32.mrf.mxu0
          %2482 = vmatprep.mubr.f32.mxu0 0.0
          %2483 = vmatmul.mubr.f32.gmra.mxu0 %v2297
          %v2484 = vpop.f32.mrf.mxu0
          %v2485 = vadd.f32 0.0, %v2484
          %v2486 = vpop.f32.mrf.mxu0
          %2487 = vmatprep.mubr.f32.mxu0 0.0
          %2488 = vmatmul.mubr.f32.gmra.mxu0 %v2298
          %v2489 = vpop.f32.mrf.mxu0
          %v2490 = vadd.f32 0.0, %v2489
          %v2491 = vpop.f32.mrf.mxu0
          %2492 = vmatprep.mubr.f32.mxu0 0.0
          %2493 = vmatmul.mubr.f32.gmra.mxu0 %v2299
          %v2494 = vpop.f32.mrf.mxu0
          %v2495 = vadd.f32 0.0, %v2494
          %v2496 = vpop.f32.mrf.mxu0
          %2497 = vmatprep.mubr.f32.mxu0 0.0
          %2498 = vmatmul.mubr.f32.gmra.mxu0 %v2300
          %v2499 = vpop.f32.mrf.mxu0
          %v2500 = vadd.f32 0.0, %v2499
          %v2501 = vpop.f32.mrf.mxu0
          %2502 = vmatprep.mubr.f32.mxu0 0.0
          %2503 = vmatmul.mubr.f32.gmra.mxu0 %v2301
          %v2504 = vpop.f32.mrf.mxu0
          %v2505 = vadd.f32 0.0, %v2504
          %v2506 = vpop.f32.mrf.mxu0
          %2507 = vmatprep.mubr.f32.mxu0 0.0
          %2508 = vmatmul.mubr.f32.gmra.mxu0 %v2302
          %v2509 = vpop.f32.mrf.mxu0
          %v2510 = vadd.f32 0.0, %v2509
          %v2511 = vpop.f32.mrf.mxu0
          %2512 = vmatprep.mubr.f32.mxu0 0.0
          %2513 = vmatmul.mubr.f32.gmra.mxu0 %v2303
          %v2514 = vpop.f32.mrf.mxu0
          %v2515 = vadd.f32 0.0, %v2514
          %v2516 = vpop.f32.mrf.mxu0
          %2517 = vmatprep.mubr.f32.mxu0 0.0
          %2518 = vmatmul.mubr.f32.gmra.mxu0 %v2304
          %v2519 = vpop.f32.mrf.mxu0
          %v2520 = vadd.f32 0.0, %v2519
          %v2521 = vpop.f32.mrf.mxu0
          %2522 = vmatprep.mubr.f32.mxu0 0.0
          %2523 = vmatmul.mubr.f32.gmra.mxu0 %v2305
          %v2524 = vpop.f32.mrf.mxu0
          %v2525 = vadd.f32 0.0, %v2524
          %v2526 = vpop.f32.mrf.mxu0
          %2527 = vmatprep.mubr.f32.mxu0 0.0
          %2528 = vmatmul.mubr.f32.gmra.mxu0 %v2306
          %v2529 = vpop.f32.mrf.mxu0
          %v2530 = vadd.f32 0.0, %v2529
          %v2531 = vpop.f32.mrf.mxu0
          %2532 = vmatprep.mubr.f32.mxu0 0.0
          %2533 = vmatmul.mubr.f32.gmra.mxu0 %v2307
          %v2534 = vpop.f32.mrf.mxu0
          %v2535 = vadd.f32 0.0, %v2534
          %v2536 = vpop.f32.mrf.mxu0
          %2537 = vmatprep.mubr.f32.mxu0 0.0
          %2538 = vmatmul.mubr.f32.gmra.mxu0 %v2308
          %v2539 = vpop.f32.mrf.mxu0
          %v2540 = vadd.f32 0.0, %v2539
          %v2541 = vpop.f32.mrf.mxu0
          %2542 = vmatprep.mubr.f32.mxu0 0.0
          %2543 = vmatmul.mubr.f32.gmra.mxu0 %v2309
          %v2544 = vpop.f32.mrf.mxu0
          %v2545 = vadd.f32 0.0, %v2544
          %v2546 = vpop.f32.mrf.mxu0
          %2547 = vmatprep.mubr.f32.mxu0 0.0
          %2548 = vmatmul.mubr.f32.gmra.mxu0 %v2310
          %v2549 = vpop.f32.mrf.mxu0
          %v2550 = vadd.f32 0.0, %v2549
          %v2551 = vpop.f32.mrf.mxu0
          %2552 = vdwg.mxu0
          %v2553 = vld [vmem:[#allocation4] sm:$0xff]
          %v2554 = vld [vmem:[#allocation4 + $0x8] sm:$0xff]
          %v2555 = vld [vmem:[#allocation4 + $0x10] sm:$0xff]
          %v2556 = vld [vmem:[#allocation4 + $0x18] sm:$0xff]
          %v2557 = vld [vmem:[#allocation4 + $0x20] sm:$0xff]
          %v2558 = vld [vmem:[#allocation4 + $0x28] sm:$0xff]
          %v2559 = vld [vmem:[#allocation4 + $0x30] sm:$0xff]
          %v2560 = vld [vmem:[#allocation4 + $0x38] sm:$0xff]
          %v2561 = vld [vmem:[#allocation4 + $0x40] sm:$0xff]
          %v2562 = vld [vmem:[#allocation4 + $0x48] sm:$0xff]
          %v2563 = vld [vmem:[#allocation4 + $0x50] sm:$0xff]
          %v2564 = vld [vmem:[#allocation4 + $0x58] sm:$0xff]
          %v2565 = vld [vmem:[#allocation4 + $0x60] sm:$0xff]
          %v2566 = vld [vmem:[#allocation4 + $0x68] sm:$0xff]
          %v2567 = vld [vmem:[#allocation4 + $0x70] sm:$0xff]
          %v2568 = vld [vmem:[#allocation4 + $0x78] sm:$0xff]
          %v2569 = vld [vmem:[#allocation4 + $0x80] sm:$0xff]
          %v2570 = vld [vmem:[#allocation4 + $0x88] sm:$0xff]
          %v2571 = vld [vmem:[#allocation4 + $0x90] sm:$0xff]
          %v2572 = vld [vmem:[#allocation4 + $0x98] sm:$0xff]
          %v2573 = vld [vmem:[#allocation4 + $0xa0] sm:$0xff]
          %v2574 = vld [vmem:[#allocation4 + $0xa8] sm:$0xff]
          %v2575 = vld [vmem:[#allocation4 + $0xb0] sm:$0xff]
          %v2576 = vld [vmem:[#allocation4 + $0xb8] sm:$0xff]
          %v2577 = vld [vmem:[#allocation4 + $0xc0] sm:$0xff]
          %v2578 = vld [vmem:[#allocation4 + $0xc8] sm:$0xff]
          %v2579 = vld [vmem:[#allocation4 + $0xd0] sm:$0xff]
          %v2580 = vld [vmem:[#allocation4 + $0xd8] sm:$0xff]
          %v2581 = vld [vmem:[#allocation4 + $0xe0] sm:$0xff]
          %v2582 = vld [vmem:[#allocation4 + $0xe8] sm:$0xff]
          %v2583 = vld [vmem:[#allocation4 + $0xf0] sm:$0xff]
          %v2584 = vld [vmem:[#allocation4 + $0xf8] sm:$0xff]
          %v2585 = vadd.f32 %v2553, %v2395
          %v2586 = vadd.f32 %v2554, %v2400
          %v2587 = vadd.f32 %v2555, %v2405
          %v2588 = vadd.f32 %v2556, %v2410
          %v2589 = vadd.f32 %v2557, %v2415
          %v2590 = vadd.f32 %v2558, %v2420
          %v2591 = vadd.f32 %v2559, %v2425
          %v2592 = vadd.f32 %v2560, %v2430
          %v2593 = vadd.f32 %v2561, %v2435
          %v2594 = vadd.f32 %v2562, %v2440
          %v2595 = vadd.f32 %v2563, %v2445
          %v2596 = vadd.f32 %v2564, %v2450
          %v2597 = vadd.f32 %v2565, %v2455
          %v2598 = vadd.f32 %v2566, %v2460
          %v2599 = vadd.f32 %v2567, %v2465
          %v2600 = vadd.f32 %v2568, %v2470
          %v2601 = vadd.f32 %v2569, %v2475
          %v2602 = vadd.f32 %v2570, %v2480
          %v2603 = vadd.f32 %v2571, %v2485
          %v2604 = vadd.f32 %v2572, %v2490
          %v2605 = vadd.f32 %v2573, %v2495
          %v2606 = vadd.f32 %v2574, %v2500
          %v2607 = vadd.f32 %v2575, %v2505
          %v2608 = vadd.f32 %v2576, %v2510
          %v2609 = vadd.f32 %v2577, %v2515
          %v2610 = vadd.f32 %v2578, %v2520
          %v2611 = vadd.f32 %v2579, %v2525
          %v2612 = vadd.f32 %v2580, %v2530
          %v2613 = vadd.f32 %v2581, %v2535
          %v2614 = vadd.f32 %v2582, %v2540
          %v2615 = vadd.f32 %v2583, %v2545
          %v2616 = vadd.f32 %v2584, %v2550
          %2617 = vst [vmem:[#allocation4] sm:$0xff] %v2585
          %2618 = vst [vmem:[#allocation4 + $0x8] sm:$0xff] %v2586
          %2619 = vst [vmem:[#allocation4 + $0x10] sm:$0xff] %v2587
          %2620 = vst [vmem:[#allocation4 + $0x18] sm:$0xff] %v2588
          %2621 = vst [vmem:[#allocation4 + $0x20] sm:$0xff] %v2589
          %2622 = vst [vmem:[#allocation4 + $0x28] sm:$0xff] %v2590
          %2623 = vst [vmem:[#allocation4 + $0x30] sm:$0xff] %v2591
          %2624 = vst [vmem:[#allocation4 + $0x38] sm:$0xff] %v2592
          %2625 = vst [vmem:[#allocation4 + $0x40] sm:$0xff] %v2593
          %2626 = vst [vmem:[#allocation4 + $0x48] sm:$0xff] %v2594
          %2627 = vst [vmem:[#allocation4 + $0x50] sm:$0xff] %v2595
          %2628 = vst [vmem:[#allocation4 + $0x58] sm:$0xff] %v2596
          %2629 = vst [vmem:[#allocation4 + $0x60] sm:$0xff] %v2597
          %2630 = vst [vmem:[#allocation4 + $0x68] sm:$0xff] %v2598
          %2631 = vst [vmem:[#allocation4 + $0x70] sm:$0xff] %v2599
          %2632 = vst [vmem:[#allocation4 + $0x78] sm:$0xff] %v2600
          %2633 = vst [vmem:[#allocation4 + $0x80] sm:$0xff] %v2601
          %2634 = vst [vmem:[#allocation4 + $0x88] sm:$0xff] %v2602
          %2635 = vst [vmem:[#allocation4 + $0x90] sm:$0xff] %v2603
          %2636 = vst [vmem:[#allocation4 + $0x98] sm:$0xff] %v2604
          %2637 = vst [vmem:[#allocation4 + $0xa0] sm:$0xff] %v2605
          %2638 = vst [vmem:[#allocation4 + $0xa8] sm:$0xff] %v2606
          %2639 = vst [vmem:[#allocation4 + $0xb0] sm:$0xff] %v2607
          %2640 = vst [vmem:[#allocation4 + $0xb8] sm:$0xff] %v2608
          %2641 = vst [vmem:[#allocation4 + $0xc0] sm:$0xff] %v2609
          %2642 = vst [vmem:[#allocation4 + $0xc8] sm:$0xff] %v2610
          %2643 = vst [vmem:[#allocation4 + $0xd0] sm:$0xff] %v2611
          %2644 = vst [vmem:[#allocation4 + $0xd8] sm:$0xff] %v2612
          %2645 = vst [vmem:[#allocation4 + $0xe0] sm:$0xff] %v2613
          %2646 = vst [vmem:[#allocation4 + $0xe8] sm:$0xff] %v2614
          %2647 = vst [vmem:[#allocation4 + $0xf0] sm:$0xff] %v2615
          %2648 = vst [vmem:[#allocation4 + $0xf8] sm:$0xff] %v2616
          %v2649 = vld [vmem:[%s831 + $0x11] sm:$0xff]
          %v2650 = vld [vmem:[%s831 + $0x19] sm:$0xff]
          %v2651 = vld [vmem:[%s831 + $0x39] sm:$0xff]
          %v2652 = vld [vmem:[%s831 + $0x41] sm:$0xff]
          %v2653 = vld [vmem:[%s831 + $0x61] sm:$0xff]
          %v2654 = vld [vmem:[%s831 + $0x69] sm:$0xff]
          %v2655 = vld [vmem:[%s831 + $0x89] sm:$0xff]
          %v2656 = vld [vmem:[%s831 + $0x91] sm:$0xff]
          %v2657 = vld [vmem:[%s831 + $0xb1] sm:$0xff]
          %v2658 = vld [vmem:[%s831 + $0xb9] sm:$0xff]
          %v2659 = vld [vmem:[%s831 + $0xd9] sm:$0xff]
          %v2660 = vld [vmem:[%s831 + $0xe1] sm:$0xff]
          %v2661 = vld [vmem:[%s831 + $0x101] sm:$0xff]
          %v2662 = vld [vmem:[%s831 + $0x109] sm:$0xff]
          %v2663 = vld [vmem:[%s831 + $0x129] sm:$0xff]
          %v2664 = vld [vmem:[%s831 + $0x131] sm:$0xff]
          %v2665 = vld [vmem:[%s831 + $0x151] sm:$0xff]
          %v2666 = vld [vmem:[%s831 + $0x159] sm:$0xff]
          %v2667 = vld [vmem:[%s831 + $0x179] sm:$0xff]
          %v2668 = vld [vmem:[%s831 + $0x181] sm:$0xff]
          %v2669 = vld [vmem:[%s831 + $0x1a1] sm:$0xff]
          %v2670 = vld [vmem:[%s831 + $0x1a9] sm:$0xff]
          %v2671 = vld [vmem:[%s831 + $0x1c9] sm:$0xff]
          %v2672 = vld [vmem:[%s831 + $0x1d1] sm:$0xff]
          %v2673 = vld [vmem:[%s831 + $0x1f1] sm:$0xff]
          %v2674 = vld [vmem:[%s831 + $0x1f9] sm:$0xff]
          %v2675 = vld [vmem:[%s831 + $0x219] sm:$0xff]
          %v2676 = vld [vmem:[%s831 + $0x221] sm:$0xff]
          %v2677 = vld [vmem:[%s831 + $0x241] sm:$0xff]
          %v2678 = vld [vmem:[%s831 + $0x249] sm:$0xff]
          %v2679 = vld [vmem:[%s831 + $0x269] sm:$0xff]
          %v2680 = vld [vmem:[%s831 + $0x271] sm:$0xff]
          %s2681 = scalar_lea.vmem [#allocation9], 640
          %v2682 = vld [vmem:[%s2681] sm:$0xff]
          %v2683 = vld [vmem:[%s2681 + $0x8] sm:$0xff]
          %v2684 = vld [vmem:[%s2681 + $0x10] sm:$0xff]
          %v2685 = vld [vmem:[%s2681 + $0x18] sm:$0xff]
          %v2686 = vld [vmem:[%s2681 + $0x20] sm:$0xff]
          %v2687 = vld [vmem:[%s2681 + $0x28] sm:$0xff]
          %v2688 = vld [vmem:[%s2681 + $0x30] sm:$0xff]
          %v2689 = vld [vmem:[%s2681 + $0x38] sm:$0xff]
          %v2690 = vld [vmem:[%s2681 + $0x40] sm:$0xff]
          %v2691 = vld [vmem:[%s2681 + $0x48] sm:$0xff]
          %v2692 = vld [vmem:[%s2681 + $0x50] sm:$0xff]
          %v2693 = vld [vmem:[%s2681 + $0x58] sm:$0xff]
          %v2694 = vld [vmem:[%s2681 + $0x60] sm:$0xff]
          %v2695 = vld [vmem:[%s2681 + $0x68] sm:$0xff]
          %v2696 = vld [vmem:[%s2681 + $0x70] sm:$0xff]
          %v2697 = vld [vmem:[%s2681 + $0x78] sm:$0xff]
          %2698 = vmatprep.subr.mxu0 0.0
          %2699 = vmatpush1.msra.mxu0 %v2697
          %2700 = vmatprep.subr.mxu0 0.0
          %2701 = vmatpush1.msra.mxu0 %v2696
          %2702 = vmatprep.subr.mxu0 0.0
          %2703 = vmatpush1.msra.mxu0 %v2695
          %2704 = vmatprep.subr.mxu0 0.0
          %2705 = vmatpush1.msra.mxu0 %v2694
          %2706 = vmatprep.subr.mxu0 0.0
          %2707 = vmatpush1.msra.mxu0 %v2693
          %2708 = vmatprep.subr.mxu0 0.0
          %2709 = vmatpush1.msra.mxu0 %v2692
          %2710 = vmatprep.subr.mxu0 0.0
          %2711 = vmatpush1.msra.mxu0 %v2691
          %2712 = vmatprep.subr.mxu0 0.0
          %2713 = vmatpush1.msra.mxu0 %v2690
          %2714 = vmatprep.subr.mxu0 0.0
          %2715 = vmatpush1.msra.mxu0 %v2689
          %2716 = vmatprep.subr.mxu0 0.0
          %2717 = vmatpush1.msra.mxu0 %v2688
          %2718 = vmatprep.subr.mxu0 0.0
          %2719 = vmatpush1.msra.mxu0 %v2687
          %2720 = vmatprep.subr.mxu0 0.0
          %2721 = vmatpush1.msra.mxu0 %v2686
          %2722 = vmatprep.subr.mxu0 0.0
          %2723 = vmatpush1.msra.mxu0 %v2685
          %2724 = vmatprep.subr.mxu0 0.0
          %2725 = vmatpush1.msra.mxu0 %v2684
          %2726 = vmatprep.subr.mxu0 0.0
          %2727 = vmatpush1.msra.mxu0 %v2683
          %2728 = vmatprep.subr.mxu0 0.0
          %2729 = vmatpush1.msra.mxu0 %v2682
          %2730 = vmatprep.subr.mxu0 0.0
          %2731 = vmatpush2.msra.mxu0 0.0
          %2732 = vmatprep.subr.mxu0 0.0
          %2733 = vmatpush2.msra.mxu0 0.0
          %2734 = vmatprep.subr.mxu0 0.0
          %2735 = vmatpush2.msra.mxu0 0.0
          %2736 = vmatprep.subr.mxu0 0.0
          %2737 = vmatpush2.msra.mxu0 0.0
          %2738 = vmatprep.subr.mxu0 0.0
          %2739 = vmatpush2.msra.mxu0 0.0
          %2740 = vmatprep.subr.mxu0 0.0
          %2741 = vmatpush2.msra.mxu0 0.0
          %2742 = vmatprep.subr.mxu0 0.0
          %2743 = vmatpush2.msra.mxu0 0.0
          %2744 = vmatprep.subr.mxu0 0.0
          %2745 = vmatpush2.msra.mxu0 0.0
          %2746 = vmatprep.subr.mxu0 0.0
          %2747 = vmatpush2.msra.mxu0 0.0
          %2748 = vmatprep.subr.mxu0 0.0
          %2749 = vmatpush2.msra.mxu0 0.0
          %2750 = vmatprep.subr.mxu0 0.0
          %2751 = vmatpush2.msra.mxu0 0.0
          %2752 = vmatprep.subr.mxu0 0.0
          %2753 = vmatpush2.msra.mxu0 0.0
          %2754 = vmatprep.subr.mxu0 0.0
          %2755 = vmatpush2.msra.mxu0 0.0
          %2756 = vmatprep.subr.mxu0 0.0
          %2757 = vmatpush2.msra.mxu0 0.0
          %2758 = vmatprep.subr.mxu0 0.0
          %2759 = vmatpush2.msra.mxu0 0.0
          %2760 = vmatprep.subr.mxu0 0.0
          %2761 = vmatpush2.msra.mxu0 0.0
          %2762 = vmatprep.mubr.f32.mxu0 0.0
          %2763 = vmatmul.mubr.f32.gmra.mxu0 %v2649
          %v2764 = vpop.f32.mrf.mxu0
          %v2765 = vadd.f32 0.0, %v2764
          %v2766 = vpop.f32.mrf.mxu0
          %2767 = vmatprep.mubr.f32.mxu0 0.0
          %2768 = vmatmul.mubr.f32.gmra.mxu0 %v2650
          %v2769 = vpop.f32.mrf.mxu0
          %v2770 = vadd.f32 0.0, %v2769
          %v2771 = vpop.f32.mrf.mxu0
          %2772 = vmatprep.mubr.f32.mxu0 0.0
          %2773 = vmatmul.mubr.f32.gmra.mxu0 %v2651
          %v2774 = vpop.f32.mrf.mxu0
          %v2775 = vadd.f32 0.0, %v2774
          %v2776 = vpop.f32.mrf.mxu0
          %2777 = vmatprep.mubr.f32.mxu0 0.0
          %2778 = vmatmul.mubr.f32.gmra.mxu0 %v2652
          %v2779 = vpop.f32.mrf.mxu0
          %v2780 = vadd.f32 0.0, %v2779
          %v2781 = vpop.f32.mrf.mxu0
          %2782 = vmatprep.mubr.f32.mxu0 0.0
          %2783 = vmatmul.mubr.f32.gmra.mxu0 %v2653
          %v2784 = vpop.f32.mrf.mxu0
          %v2785 = vadd.f32 0.0, %v2784
          %v2786 = vpop.f32.mrf.mxu0
          %2787 = vmatprep.mubr.f32.mxu0 0.0
          %2788 = vmatmul.mubr.f32.gmra.mxu0 %v2654
          %v2789 = vpop.f32.mrf.mxu0
          %v2790 = vadd.f32 0.0, %v2789
          %v2791 = vpop.f32.mrf.mxu0
          %2792 = vmatprep.mubr.f32.mxu0 0.0
          %2793 = vmatmul.mubr.f32.gmra.mxu0 %v2655
          %v2794 = vpop.f32.mrf.mxu0
          %v2795 = vadd.f32 0.0, %v2794
          %v2796 = vpop.f32.mrf.mxu0
          %2797 = vmatprep.mubr.f32.mxu0 0.0
          %2798 = vmatmul.mubr.f32.gmra.mxu0 %v2656
          %v2799 = vpop.f32.mrf.mxu0
          %v2800 = vadd.f32 0.0, %v2799
          %v2801 = vpop.f32.mrf.mxu0
          %2802 = vmatprep.mubr.f32.mxu0 0.0
          %2803 = vmatmul.mubr.f32.gmra.mxu0 %v2657
          %v2804 = vpop.f32.mrf.mxu0
          %v2805 = vadd.f32 0.0, %v2804
          %v2806 = vpop.f32.mrf.mxu0
          %2807 = vmatprep.mubr.f32.mxu0 0.0
          %2808 = vmatmul.mubr.f32.gmra.mxu0 %v2658
          %v2809 = vpop.f32.mrf.mxu0
          %v2810 = vadd.f32 0.0, %v2809
          %v2811 = vpop.f32.mrf.mxu0
          %2812 = vmatprep.mubr.f32.mxu0 0.0
          %2813 = vmatmul.mubr.f32.gmra.mxu0 %v2659
          %v2814 = vpop.f32.mrf.mxu0
          %v2815 = vadd.f32 0.0, %v2814
          %v2816 = vpop.f32.mrf.mxu0
          %2817 = vmatprep.mubr.f32.mxu0 0.0
          %2818 = vmatmul.mubr.f32.gmra.mxu0 %v2660
          %v2819 = vpop.f32.mrf.mxu0
          %v2820 = vadd.f32 0.0, %v2819
          %v2821 = vpop.f32.mrf.mxu0
          %2822 = vmatprep.mubr.f32.mxu0 0.0
          %2823 = vmatmul.mubr.f32.gmra.mxu0 %v2661
          %v2824 = vpop.f32.mrf.mxu0
          %v2825 = vadd.f32 0.0, %v2824
          %v2826 = vpop.f32.mrf.mxu0
          %2827 = vmatprep.mubr.f32.mxu0 0.0
          %2828 = vmatmul.mubr.f32.gmra.mxu0 %v2662
          %v2829 = vpop.f32.mrf.mxu0
          %v2830 = vadd.f32 0.0, %v2829
          %v2831 = vpop.f32.mrf.mxu0
          %2832 = vmatprep.mubr.f32.mxu0 0.0
          %2833 = vmatmul.mubr.f32.gmra.mxu0 %v2663
          %v2834 = vpop.f32.mrf.mxu0
          %v2835 = vadd.f32 0.0, %v2834
          %v2836 = vpop.f32.mrf.mxu0
          %2837 = vmatprep.mubr.f32.mxu0 0.0
          %2838 = vmatmul.mubr.f32.gmra.mxu0 %v2664
          %v2839 = vpop.f32.mrf.mxu0
          %v2840 = vadd.f32 0.0, %v2839
          %v2841 = vpop.f32.mrf.mxu0
          %2842 = vmatprep.mubr.f32.mxu0 0.0
          %2843 = vmatmul.mubr.f32.gmra.mxu0 %v2665
          %v2844 = vpop.f32.mrf.mxu0
          %v2845 = vadd.f32 0.0, %v2844
          %v2846 = vpop.f32.mrf.mxu0
          %2847 = vmatprep.mubr.f32.mxu0 0.0
          %2848 = vmatmul.mubr.f32.gmra.mxu0 %v2666
          %v2849 = vpop.f32.mrf.mxu0
          %v2850 = vadd.f32 0.0, %v2849
          %v2851 = vpop.f32.mrf.mxu0
          %2852 = vmatprep.mubr.f32.mxu0 0.0
          %2853 = vmatmul.mubr.f32.gmra.mxu0 %v2667
          %v2854 = vpop.f32.mrf.mxu0
          %v2855 = vadd.f32 0.0, %v2854
          %v2856 = vpop.f32.mrf.mxu0
          %2857 = vmatprep.mubr.f32.mxu0 0.0
          %2858 = vmatmul.mubr.f32.gmra.mxu0 %v2668
          %v2859 = vpop.f32.mrf.mxu0
          %v2860 = vadd.f32 0.0, %v2859
          %v2861 = vpop.f32.mrf.mxu0
          %2862 = vmatprep.mubr.f32.mxu0 0.0
          %2863 = vmatmul.mubr.f32.gmra.mxu0 %v2669
          %v2864 = vpop.f32.mrf.mxu0
          %v2865 = vadd.f32 0.0, %v2864
          %v2866 = vpop.f32.mrf.mxu0
          %2867 = vmatprep.mubr.f32.mxu0 0.0
          %2868 = vmatmul.mubr.f32.gmra.mxu0 %v2670
          %v2869 = vpop.f32.mrf.mxu0
          %v2870 = vadd.f32 0.0, %v2869
          %v2871 = vpop.f32.mrf.mxu0
          %2872 = vmatprep.mubr.f32.mxu0 0.0
          %2873 = vmatmul.mubr.f32.gmra.mxu0 %v2671
          %v2874 = vpop.f32.mrf.mxu0
          %v2875 = vadd.f32 0.0, %v2874
          %v2876 = vpop.f32.mrf.mxu0
          %2877 = vmatprep.mubr.f32.mxu0 0.0
          %2878 = vmatmul.mubr.f32.gmra.mxu0 %v2672
          %v2879 = vpop.f32.mrf.mxu0
          %v2880 = vadd.f32 0.0, %v2879
          %v2881 = vpop.f32.mrf.mxu0
          %2882 = vmatprep.mubr.f32.mxu0 0.0
          %2883 = vmatmul.mubr.f32.gmra.mxu0 %v2673
          %v2884 = vpop.f32.mrf.mxu0
          %v2885 = vadd.f32 0.0, %v2884
          %v2886 = vpop.f32.mrf.mxu0
          %2887 = vmatprep.mubr.f32.mxu0 0.0
          %2888 = vmatmul.mubr.f32.gmra.mxu0 %v2674
          %v2889 = vpop.f32.mrf.mxu0
          %v2890 = vadd.f32 0.0, %v2889
          %v2891 = vpop.f32.mrf.mxu0
          %2892 = vmatprep.mubr.f32.mxu0 0.0
          %2893 = vmatmul.mubr.f32.gmra.mxu0 %v2675
          %v2894 = vpop.f32.mrf.mxu0
          %v2895 = vadd.f32 0.0, %v2894
          %v2896 = vpop.f32.mrf.mxu0
          %2897 = vmatprep.mubr.f32.mxu0 0.0
          %2898 = vmatmul.mubr.f32.gmra.mxu0 %v2676
          %v2899 = vpop.f32.mrf.mxu0
          %v2900 = vadd.f32 0.0, %v2899
          %v2901 = vpop.f32.mrf.mxu0
          %2902 = vmatprep.mubr.f32.mxu0 0.0
          %2903 = vmatmul.mubr.f32.gmra.mxu0 %v2677
          %v2904 = vpop.f32.mrf.mxu0
          %v2905 = vadd.f32 0.0, %v2904
          %v2906 = vpop.f32.mrf.mxu0
          %2907 = vmatprep.mubr.f32.mxu0 0.0
          %2908 = vmatmul.mubr.f32.gmra.mxu0 %v2678
          %v2909 = vpop.f32.mrf.mxu0
          %v2910 = vadd.f32 0.0, %v2909
          %v2911 = vpop.f32.mrf.mxu0
          %2912 = vmatprep.mubr.f32.mxu0 0.0
          %2913 = vmatmul.mubr.f32.gmra.mxu0 %v2679
          %v2914 = vpop.f32.mrf.mxu0
          %v2915 = vadd.f32 0.0, %v2914
          %v2916 = vpop.f32.mrf.mxu0
          %2917 = vmatprep.mubr.f32.mxu0 0.0
          %2918 = vmatmul.mubr.f32.gmra.mxu0 %v2680
          %v2919 = vpop.f32.mrf.mxu0
          %v2920 = vadd.f32 0.0, %v2919
          %v2921 = vpop.f32.mrf.mxu0
          %2922 = vdwg.mxu0
          %v2923 = vld [vmem:[#allocation4] sm:$0xff]
          %v2924 = vld [vmem:[#allocation4 + $0x8] sm:$0xff]
          %v2925 = vld [vmem:[#allocation4 + $0x10] sm:$0xff]
          %v2926 = vld [vmem:[#allocation4 + $0x18] sm:$0xff]
          %v2927 = vld [vmem:[#allocation4 + $0x20] sm:$0xff]
          %v2928 = vld [vmem:[#allocation4 + $0x28] sm:$0xff]
          %v2929 = vld [vmem:[#allocation4 + $0x30] sm:$0xff]
          %v2930 = vld [vmem:[#allocation4 + $0x38] sm:$0xff]
          %v2931 = vld [vmem:[#allocation4 + $0x40] sm:$0xff]
          %v2932 = vld [vmem:[#allocation4 + $0x48] sm:$0xff]
          %v2933 = vld [vmem:[#allocation4 + $0x50] sm:$0xff]
          %v2934 = vld [vmem:[#allocation4 + $0x58] sm:$0xff]
          %v2935 = vld [vmem:[#allocation4 + $0x60] sm:$0xff]
          %v2936 = vld [vmem:[#allocation4 + $0x68] sm:$0xff]
          %v2937 = vld [vmem:[#allocation4 + $0x70] sm:$0xff]
          %v2938 = vld [vmem:[#allocation4 + $0x78] sm:$0xff]
          %v2939 = vld [vmem:[#allocation4 + $0x80] sm:$0xff]
          %v2940 = vld [vmem:[#allocation4 + $0x88] sm:$0xff]
          %v2941 = vld [vmem:[#allocation4 + $0x90] sm:$0xff]
          %v2942 = vld [vmem:[#allocation4 + $0x98] sm:$0xff]
          %v2943 = vld [vmem:[#allocation4 + $0xa0] sm:$0xff]
          %v2944 = vld [vmem:[#allocation4 + $0xa8] sm:$0xff]
          %v2945 = vld [vmem:[#allocation4 + $0xb0] sm:$0xff]
          %v2946 = vld [vmem:[#allocation4 + $0xb8] sm:$0xff]
          %v2947 = vld [vmem:[#allocation4 + $0xc0] sm:$0xff]
          %v2948 = vld [vmem:[#allocation4 + $0xc8] sm:$0xff]
          %v2949 = vld [vmem:[#allocation4 + $0xd0] sm:$0xff]
          %v2950 = vld [vmem:[#allocation4 + $0xd8] sm:$0xff]
          %v2951 = vld [vmem:[#allocation4 + $0xe0] sm:$0xff]
          %v2952 = vld [vmem:[#allocation4 + $0xe8] sm:$0xff]
          %v2953 = vld [vmem:[#allocation4 + $0xf0] sm:$0xff]
          %v2954 = vld [vmem:[#allocation4 + $0xf8] sm:$0xff]
          %v2955 = vadd.f32 %v2923, %v2765
          %v2956 = vadd.f32 %v2924, %v2770
          %v2957 = vadd.f32 %v2925, %v2775
          %v2958 = vadd.f32 %v2926, %v2780
          %v2959 = vadd.f32 %v2927, %v2785
          %v2960 = vadd.f32 %v2928, %v2790
          %v2961 = vadd.f32 %v2929, %v2795
          %v2962 = vadd.f32 %v2930, %v2800
          %v2963 = vadd.f32 %v2931, %v2805
          %v2964 = vadd.f32 %v2932, %v2810
          %v2965 = vadd.f32 %v2933, %v2815
          %v2966 = vadd.f32 %v2934, %v2820
          %v2967 = vadd.f32 %v2935, %v2825
          %v2968 = vadd.f32 %v2936, %v2830
          %v2969 = vadd.f32 %v2937, %v2835
          %v2970 = vadd.f32 %v2938, %v2840
          %v2971 = vadd.f32 %v2939, %v2845
          %v2972 = vadd.f32 %v2940, %v2850
          %v2973 = vadd.f32 %v2941, %v2855
          %v2974 = vadd.f32 %v2942, %v2860
          %v2975 = vadd.f32 %v2943, %v2865
          %v2976 = vadd.f32 %v2944, %v2870
          %v2977 = vadd.f32 %v2945, %v2875
          %v2978 = vadd.f32 %v2946, %v2880
          %v2979 = vadd.f32 %v2947, %v2885
          %v2980 = vadd.f32 %v2948, %v2890
          %v2981 = vadd.f32 %v2949, %v2895
          %v2982 = vadd.f32 %v2950, %v2900
          %v2983 = vadd.f32 %v2951, %v2905
          %v2984 = vadd.f32 %v2952, %v2910
          %v2985 = vadd.f32 %v2953, %v2915
          %v2986 = vadd.f32 %v2954, %v2920
          %2987 = vst [vmem:[#allocation4] sm:$0xff] %v2955
          %2988 = vst [vmem:[#allocation4 + $0x8] sm:$0xff] %v2956
          %2989 = vst [vmem:[#allocation4 + $0x10] sm:$0xff] %v2957
          %2990 = vst [vmem:[#allocation4 + $0x18] sm:$0xff] %v2958
          %2991 = vst [vmem:[#allocation4 + $0x20] sm:$0xff] %v2959
          %2992 = vst [vmem:[#allocation4 + $0x28] sm:$0xff] %v2960
          %2993 = vst [vmem:[#allocation4 + $0x30] sm:$0xff] %v2961
          %2994 = vst [vmem:[#allocation4 + $0x38] sm:$0xff] %v2962
          %2995 = vst [vmem:[#allocation4 + $0x40] sm:$0xff] %v2963
          %2996 = vst [vmem:[#allocation4 + $0x48] sm:$0xff] %v2964
          %2997 = vst [vmem:[#allocation4 + $0x50] sm:$0xff] %v2965
          %2998 = vst [vmem:[#allocation4 + $0x58] sm:$0xff] %v2966
          %2999 = vst [vmem:[#allocation4 + $0x60] sm:$0xff] %v2967
          %3000 = vst [vmem:[#allocation4 + $0x68] sm:$0xff] %v2968
          %3001 = vst [vmem:[#allocation4 + $0x70] sm:$0xff] %v2969
          %3002 = vst [vmem:[#allocation4 + $0x78] sm:$0xff] %v2970
          %3003 = vst [vmem:[#allocation4 + $0x80] sm:$0xff] %v2971
          %3004 = vst [vmem:[#allocation4 + $0x88] sm:$0xff] %v2972
          %3005 = vst [vmem:[#allocation4 + $0x90] sm:$0xff] %v2973
          %3006 = vst [vmem:[#allocation4 + $0x98] sm:$0xff] %v2974
          %3007 = vst [vmem:[#allocation4 + $0xa0] sm:$0xff] %v2975
          %3008 = vst [vmem:[#allocation4 + $0xa8] sm:$0xff] %v2976
          %3009 = vst [vmem:[#allocation4 + $0xb0] sm:$0xff] %v2977
          %3010 = vst [vmem:[#allocation4 + $0xb8] sm:$0xff] %v2978
          %3011 = vst [vmem:[#allocation4 + $0xc0] sm:$0xff] %v2979
          %3012 = vst [vmem:[#allocation4 + $0xc8] sm:$0xff] %v2980
          %3013 = vst [vmem:[#allocation4 + $0xd0] sm:$0xff] %v2981
          %3014 = vst [vmem:[#allocation4 + $0xd8] sm:$0xff] %v2982
          %3015 = vst [vmem:[#allocation4 + $0xe0] sm:$0xff] %v2983
          %3016 = vst [vmem:[#allocation4 + $0xe8] sm:$0xff] %v2984
          %3017 = vst [vmem:[#allocation4 + $0xf0] sm:$0xff] %v2985
          %3018 = vst [vmem:[#allocation4 + $0xf8] sm:$0xff] %v2986
          %s3019 = scalar_lea.vmem [#allocation2], 80
          %v3020 = vld [vmem:[%s3019 + $0xf] sm:$0xff]
          %v3021 = vld [vmem:[%s3019 + $0x17] sm:$0xff]
          %v3022 = vld [vmem:[%s3019 + $0x37] sm:$0xff]
          %v3023 = vld [vmem:[%s3019 + $0x3f] sm:$0xff]
          %v3024 = vld [vmem:[%s3019 + $0x5f] sm:$0xff]
          %v3025 = vld [vmem:[%s3019 + $0x67] sm:$0xff]
          %v3026 = vld [vmem:[%s3019 + $0x87] sm:$0xff]
          %v3027 = vld [vmem:[%s3019 + $0x8f] sm:$0xff]
          %v3028 = vld [vmem:[%s3019 + $0xaf] sm:$0xff]
          %v3029 = vld [vmem:[%s3019 + $0xb7] sm:$0xff]
          %v3030 = vld [vmem:[%s3019 + $0xd7] sm:$0xff]
          %v3031 = vld [vmem:[%s3019 + $0xdf] sm:$0xff]
          %v3032 = vld [vmem:[%s3019 + $0xff] sm:$0xff]
          %v3033 = vld [vmem:[%s3019 + $0x107] sm:$0xff]
          %v3034 = vld [vmem:[%s3019 + $0x127] sm:$0xff]
          %v3035 = vld [vmem:[%s3019 + $0x12f] sm:$0xff]
          %v3036 = vld [vmem:[%s3019 + $0x14f] sm:$0xff]
          %v3037 = vld [vmem:[%s3019 + $0x157] sm:$0xff]
          %v3038 = vld [vmem:[%s3019 + $0x177] sm:$0xff]
          %v3039 = vld [vmem:[%s3019 + $0x17f] sm:$0xff]
          %v3040 = vld [vmem:[%s3019 + $0x19f] sm:$0xff]
          %v3041 = vld [vmem:[%s3019 + $0x1a7] sm:$0xff]
          %v3042 = vld [vmem:[%s3019 + $0x1c7] sm:$0xff]
          %v3043 = vld [vmem:[%s3019 + $0x1cf] sm:$0xff]
          %v3044 = vld [vmem:[%s3019 + $0x1ef] sm:$0xff]
          %v3045 = vld [vmem:[%s3019 + $0x1f7] sm:$0xff]
          %v3046 = vld [vmem:[%s3019 + $0x217] sm:$0xff]
          %v3047 = vld [vmem:[%s3019 + $0x21f] sm:$0xff]
          %v3048 = vld [vmem:[%s3019 + $0x23f] sm:$0xff]
          %v3049 = vld [vmem:[%s3019 + $0x247] sm:$0xff]
          %v3050 = vld [vmem:[%s3019 + $0x267] sm:$0xff]
          %v3051 = vld [vmem:[%s3019 + $0x26f] sm:$0xff]
          %s3052 = scalar_lea.vmem [#allocation9], 768
          %v3053 = vld [vmem:[%s3052] sm:$0xff]
          %v3054 = vld [vmem:[%s3052 + $0x8] sm:$0xff]
          %v3055 = vld [vmem:[%s3052 + $0x10] sm:$0xff]
          %v3056 = vld [vmem:[%s3052 + $0x18] sm:$0xff]
          %v3057 = vld [vmem:[%s3052 + $0x20] sm:$0xff]
          %v3058 = vld [vmem:[%s3052 + $0x28] sm:$0xff]
          %v3059 = vld [vmem:[%s3052 + $0x30] sm:$0xff]
          %v3060 = vld [vmem:[%s3052 + $0x38] sm:$0xff]
          %v3061 = vld [vmem:[%s3052 + $0x40] sm:$0xff]
          %v3062 = vld [vmem:[%s3052 + $0x48] sm:$0xff]
          %v3063 = vld [vmem:[%s3052 + $0x50] sm:$0xff]
          %v3064 = vld [vmem:[%s3052 + $0x58] sm:$0xff]
          %v3065 = vld [vmem:[%s3052 + $0x60] sm:$0xff]
          %v3066 = vld [vmem:[%s3052 + $0x68] sm:$0xff]
          %v3067 = vld [vmem:[%s3052 + $0x70] sm:$0xff]
          %v3068 = vld [vmem:[%s3052 + $0x78] sm:$0xff]
          %3069 = vmatprep.subr.mxu0 0.0
          %3070 = vmatpush1.msra.mxu0 %v3068
          %3071 = vmatprep.subr.mxu0 0.0
          %3072 = vmatpush1.msra.mxu0 %v3067
          %3073 = vmatprep.subr.mxu0 0.0
          %3074 = vmatpush1.msra.mxu0 %v3066
          %3075 = vmatprep.subr.mxu0 0.0
          %3076 = vmatpush1.msra.mxu0 %v3065
          %3077 = vmatprep.subr.mxu0 0.0
          %3078 = vmatpush1.msra.mxu0 %v3064
          %3079 = vmatprep.subr.mxu0 0.0
          %3080 = vmatpush1.msra.mxu0 %v3063
          %3081 = vmatprep.subr.mxu0 0.0
          %3082 = vmatpush1.msra.mxu0 %v3062
          %3083 = vmatprep.subr.mxu0 0.0
          %3084 = vmatpush1.msra.mxu0 %v3061
          %3085 = vmatprep.subr.mxu0 0.0
          %3086 = vmatpush1.msra.mxu0 %v3060
          %3087 = vmatprep.subr.mxu0 0.0
          %3088 = vmatpush1.msra.mxu0 %v3059
          %3089 = vmatprep.subr.mxu0 0.0
          %3090 = vmatpush1.msra.mxu0 %v3058
          %3091 = vmatprep.subr.mxu0 0.0
          %3092 = vmatpush1.msra.mxu0 %v3057
          %3093 = vmatprep.subr.mxu0 0.0
          %3094 = vmatpush1.msra.mxu0 %v3056
          %3095 = vmatprep.subr.mxu0 0.0
          %3096 = vmatpush1.msra.mxu0 %v3055
          %3097 = vmatprep.subr.mxu0 0.0
          %3098 = vmatpush1.msra.mxu0 %v3054
          %3099 = vmatprep.subr.mxu0 0.0
          %3100 = vmatpush1.msra.mxu0 %v3053
          %3101 = vmatprep.subr.mxu0 0.0
          %3102 = vmatpush2.msra.mxu0 0.0
          %3103 = vmatprep.subr.mxu0 0.0
          %3104 = vmatpush2.msra.mxu0 0.0
          %3105 = vmatprep.subr.mxu0 0.0
          %3106 = vmatpush2.msra.mxu0 0.0
          %3107 = vmatprep.subr.mxu0 0.0
          %3108 = vmatpush2.msra.mxu0 0.0
          %3109 = vmatprep.subr.mxu0 0.0
          %3110 = vmatpush2.msra.mxu0 0.0
          %3111 = vmatprep.subr.mxu0 0.0
          %3112 = vmatpush2.msra.mxu0 0.0
          %3113 = vmatprep.subr.mxu0 0.0
          %3114 = vmatpush2.msra.mxu0 0.0
          %3115 = vmatprep.subr.mxu0 0.0
          %3116 = vmatpush2.msra.mxu0 0.0
          %3117 = vmatprep.subr.mxu0 0.0
          %3118 = vmatpush2.msra.mxu0 0.0
          %3119 = vmatprep.subr.mxu0 0.0
          %3120 = vmatpush2.msra.mxu0 0.0
          %3121 = vmatprep.subr.mxu0 0.0
          %3122 = vmatpush2.msra.mxu0 0.0
          %3123 = vmatprep.subr.mxu0 0.0
          %3124 = vmatpush2.msra.mxu0 0.0
          %3125 = vmatprep.subr.mxu0 0.0
          %3126 = vmatpush2.msra.mxu0 0.0
          %3127 = vmatprep.subr.mxu0 0.0
          %3128 = vmatpush2.msra.mxu0 0.0
          %3129 = vmatprep.subr.mxu0 0.0
          %3130 = vmatpush2.msra.mxu0 0.0
          %3131 = vmatprep.subr.mxu0 0.0
          %3132 = vmatpush2.msra.mxu0 0.0
          %3133 = vmatprep.mubr.f32.mxu0 0.0
          %3134 = vmatmul.mubr.f32.gmra.mxu0 %v3020
          %v3135 = vpop.f32.mrf.mxu0
          %v3136 = vadd.f32 0.0, %v3135
          %v3137 = vpop.f32.mrf.mxu0
          %3138 = vmatprep.mubr.f32.mxu0 0.0
          %3139 = vmatmul.mubr.f32.gmra.mxu0 %v3021
          %v3140 = vpop.f32.mrf.mxu0
          %v3141 = vadd.f32 0.0, %v3140
          %v3142 = vpop.f32.mrf.mxu0
          %3143 = vmatprep.mubr.f32.mxu0 0.0
          %3144 = vmatmul.mubr.f32.gmra.mxu0 %v3022
          %v3145 = vpop.f32.mrf.mxu0
          %v3146 = vadd.f32 0.0, %v3145
          %v3147 = vpop.f32.mrf.mxu0
          %3148 = vmatprep.mubr.f32.mxu0 0.0
          %3149 = vmatmul.mubr.f32.gmra.mxu0 %v3023
          %v3150 = vpop.f32.mrf.mxu0
          %v3151 = vadd.f32 0.0, %v3150
          %v3152 = vpop.f32.mrf.mxu0
          %3153 = vmatprep.mubr.f32.mxu0 0.0
          %3154 = vmatmul.mubr.f32.gmra.mxu0 %v3024
          %v3155 = vpop.f32.mrf.mxu0
          %v3156 = vadd.f32 0.0, %v3155
          %v3157 = vpop.f32.mrf.mxu0
          %3158 = vmatprep.mubr.f32.mxu0 0.0
          %3159 = vmatmul.mubr.f32.gmra.mxu0 %v3025
          %v3160 = vpop.f32.mrf.mxu0
          %v3161 = vadd.f32 0.0, %v3160
          %v3162 = vpop.f32.mrf.mxu0
          %3163 = vmatprep.mubr.f32.mxu0 0.0
          %3164 = vmatmul.mubr.f32.gmra.mxu0 %v3026
          %v3165 = vpop.f32.mrf.mxu0
          %v3166 = vadd.f32 0.0, %v3165
          %v3167 = vpop.f32.mrf.mxu0
          %3168 = vmatprep.mubr.f32.mxu0 0.0
          %3169 = vmatmul.mubr.f32.gmra.mxu0 %v3027
          %v3170 = vpop.f32.mrf.mxu0
          %v3171 = vadd.f32 0.0, %v3170
          %v3172 = vpop.f32.mrf.mxu0
          %3173 = vmatprep.mubr.f32.mxu0 0.0
          %3174 = vmatmul.mubr.f32.gmra.mxu0 %v3028
          %v3175 = vpop.f32.mrf.mxu0
          %v3176 = vadd.f32 0.0, %v3175
          %v3177 = vpop.f32.mrf.mxu0
          %3178 = vmatprep.mubr.f32.mxu0 0.0
          %3179 = vmatmul.mubr.f32.gmra.mxu0 %v3029
          %v3180 = vpop.f32.mrf.mxu0
          %v3181 = vadd.f32 0.0, %v3180
          %v3182 = vpop.f32.mrf.mxu0
          %3183 = vmatprep.mubr.f32.mxu0 0.0
          %3184 = vmatmul.mubr.f32.gmra.mxu0 %v3030
          %v3185 = vpop.f32.mrf.mxu0
          %v3186 = vadd.f32 0.0, %v3185
          %v3187 = vpop.f32.mrf.mxu0
          %3188 = vmatprep.mubr.f32.mxu0 0.0
          %3189 = vmatmul.mubr.f32.gmra.mxu0 %v3031
          %v3190 = vpop.f32.mrf.mxu0
          %v3191 = vadd.f32 0.0, %v3190
          %v3192 = vpop.f32.mrf.mxu0
          %3193 = vmatprep.mubr.f32.mxu0 0.0
          %3194 = vmatmul.mubr.f32.gmra.mxu0 %v3032
          %v3195 = vpop.f32.mrf.mxu0
          %v3196 = vadd.f32 0.0, %v3195
          %v3197 = vpop.f32.mrf.mxu0
          %3198 = vmatprep.mubr.f32.mxu0 0.0
          %3199 = vmatmul.mubr.f32.gmra.mxu0 %v3033
          %v3200 = vpop.f32.mrf.mxu0
          %v3201 = vadd.f32 0.0, %v3200
          %v3202 = vpop.f32.mrf.mxu0
          %3203 = vmatprep.mubr.f32.mxu0 0.0
          %3204 = vmatmul.mubr.f32.gmra.mxu0 %v3034
          %v3205 = vpop.f32.mrf.mxu0
          %v3206 = vadd.f32 0.0, %v3205
          %v3207 = vpop.f32.mrf.mxu0
          %3208 = vmatprep.mubr.f32.mxu0 0.0
          %3209 = vmatmul.mubr.f32.gmra.mxu0 %v3035
          %v3210 = vpop.f32.mrf.mxu0
          %v3211 = vadd.f32 0.0, %v3210
          %v3212 = vpop.f32.mrf.mxu0
          %3213 = vmatprep.mubr.f32.mxu0 0.0
          %3214 = vmatmul.mubr.f32.gmra.mxu0 %v3036
          %v3215 = vpop.f32.mrf.mxu0
          %v3216 = vadd.f32 0.0, %v3215
          %v3217 = vpop.f32.mrf.mxu0
          %3218 = vmatprep.mubr.f32.mxu0 0.0
          %3219 = vmatmul.mubr.f32.gmra.mxu0 %v3037
          %v3220 = vpop.f32.mrf.mxu0
          %v3221 = vadd.f32 0.0, %v3220
          %v3222 = vpop.f32.mrf.mxu0
          %3223 = vmatprep.mubr.f32.mxu0 0.0
          %3224 = vmatmul.mubr.f32.gmra.mxu0 %v3038
          %v3225 = vpop.f32.mrf.mxu0
          %v3226 = vadd.f32 0.0, %v3225
          %v3227 = vpop.f32.mrf.mxu0
          %3228 = vmatprep.mubr.f32.mxu0 0.0
          %3229 = vmatmul.mubr.f32.gmra.mxu0 %v3039
          %v3230 = vpop.f32.mrf.mxu0
          %v3231 = vadd.f32 0.0, %v3230
          %v3232 = vpop.f32.mrf.mxu0
          %3233 = vmatprep.mubr.f32.mxu0 0.0
          %3234 = vmatmul.mubr.f32.gmra.mxu0 %v3040
          %v3235 = vpop.f32.mrf.mxu0
          %v3236 = vadd.f32 0.0, %v3235
          %v3237 = vpop.f32.mrf.mxu0
          %3238 = vmatprep.mubr.f32.mxu0 0.0
          %3239 = vmatmul.mubr.f32.gmra.mxu0 %v3041
          %v3240 = vpop.f32.mrf.mxu0
          %v3241 = vadd.f32 0.0, %v3240
          %v3242 = vpop.f32.mrf.mxu0
          %3243 = vmatprep.mubr.f32.mxu0 0.0
          %3244 = vmatmul.mubr.f32.gmra.mxu0 %v3042
          %v3245 = vpop.f32.mrf.mxu0
          %v3246 = vadd.f32 0.0, %v3245
          %v3247 = vpop.f32.mrf.mxu0
          %3248 = vmatprep.mubr.f32.mxu0 0.0
          %3249 = vmatmul.mubr.f32.gmra.mxu0 %v3043
          %v3250 = vpop.f32.mrf.mxu0
          %v3251 = vadd.f32 0.0, %v3250
          %v3252 = vpop.f32.mrf.mxu0
          %3253 = vmatprep.mubr.f32.mxu0 0.0
          %3254 = vmatmul.mubr.f32.gmra.mxu0 %v3044
          %v3255 = vpop.f32.mrf.mxu0
          %v3256 = vadd.f32 0.0, %v3255
          %v3257 = vpop.f32.mrf.mxu0
          %3258 = vmatprep.mubr.f32.mxu0 0.0
          %3259 = vmatmul.mubr.f32.gmra.mxu0 %v3045
          %v3260 = vpop.f32.mrf.mxu0
          %v3261 = vadd.f32 0.0, %v3260
          %v3262 = vpop.f32.mrf.mxu0
          %3263 = vmatprep.mubr.f32.mxu0 0.0
          %3264 = vmatmul.mubr.f32.gmra.mxu0 %v3046
          %v3265 = vpop.f32.mrf.mxu0
          %v3266 = vadd.f32 0.0, %v3265
          %v3267 = vpop.f32.mrf.mxu0
          %3268 = vmatprep.mubr.f32.mxu0 0.0
          %3269 = vmatmul.mubr.f32.gmra.mxu0 %v3047
          %v3270 = vpop.f32.mrf.mxu0
          %v3271 = vadd.f32 0.0, %v3270
          %v3272 = vpop.f32.mrf.mxu0
          %3273 = vmatprep.mubr.f32.mxu0 0.0
          %3274 = vmatmul.mubr.f32.gmra.mxu0 %v3048
          %v3275 = vpop.f32.mrf.mxu0
          %v3276 = vadd.f32 0.0, %v3275
          %v3277 = vpop.f32.mrf.mxu0
          %3278 = vmatprep.mubr.f32.mxu0 0.0
          %3279 = vmatmul.mubr.f32.gmra.mxu0 %v3049
          %v3280 = vpop.f32.mrf.mxu0
          %v3281 = vadd.f32 0.0, %v3280
          %v3282 = vpop.f32.mrf.mxu0
          %3283 = vmatprep.mubr.f32.mxu0 0.0
          %3284 = vmatmul.mubr.f32.gmra.mxu0 %v3050
          %v3285 = vpop.f32.mrf.mxu0
          %v3286 = vadd.f32 0.0, %v3285
          %v3287 = vpop.f32.mrf.mxu0
          %3288 = vmatprep.mubr.f32.mxu0 0.0
          %3289 = vmatmul.mubr.f32.gmra.mxu0 %v3051
          %v3290 = vpop.f32.mrf.mxu0
          %v3291 = vadd.f32 0.0, %v3290
          %v3292 = vpop.f32.mrf.mxu0
          %3293 = vdwg.mxu0
          %v3294 = vld [vmem:[#allocation4] sm:$0xff]
          %v3295 = vld [vmem:[#allocation4 + $0x8] sm:$0xff]
          %v3296 = vld [vmem:[#allocation4 + $0x10] sm:$0xff]
          %v3297 = vld [vmem:[#allocation4 + $0x18] sm:$0xff]
          %v3298 = vld [vmem:[#allocation4 + $0x20] sm:$0xff]
          %v3299 = vld [vmem:[#allocation4 + $0x28] sm:$0xff]
          %v3300 = vld [vmem:[#allocation4 + $0x30] sm:$0xff]
          %v3301 = vld [vmem:[#allocation4 + $0x38] sm:$0xff]
          %v3302 = vld [vmem:[#allocation4 + $0x40] sm:$0xff]
          %v3303 = vld [vmem:[#allocation4 + $0x48] sm:$0xff]
          %v3304 = vld [vmem:[#allocation4 + $0x50] sm:$0xff]
          %v3305 = vld [vmem:[#allocation4 + $0x58] sm:$0xff]
          %v3306 = vld [vmem:[#allocation4 + $0x60] sm:$0xff]
          %v3307 = vld [vmem:[#allocation4 + $0x68] sm:$0xff]
          %v3308 = vld [vmem:[#allocation4 + $0x70] sm:$0xff]
          %v3309 = vld [vmem:[#allocation4 + $0x78] sm:$0xff]
          %v3310 = vld [vmem:[#allocation4 + $0x80] sm:$0xff]
          %v3311 = vld [vmem:[#allocation4 + $0x88] sm:$0xff]
          %v3312 = vld [vmem:[#allocation4 + $0x90] sm:$0xff]
          %v3313 = vld [vmem:[#allocation4 + $0x98] sm:$0xff]
          %v3314 = vld [vmem:[#allocation4 + $0xa0] sm:$0xff]
          %v3315 = vld [vmem:[#allocation4 + $0xa8] sm:$0xff]
          %v3316 = vld [vmem:[#allocation4 + $0xb0] sm:$0xff]
          %v3317 = vld [vmem:[#allocation4 + $0xb8] sm:$0xff]
          %v3318 = vld [vmem:[#allocation4 + $0xc0] sm:$0xff]
          %v3319 = vld [vmem:[#allocation4 + $0xc8] sm:$0xff]
          %v3320 = vld [vmem:[#allocation4 + $0xd0] sm:$0xff]
          %v3321 = vld [vmem:[#allocation4 + $0xd8] sm:$0xff]
          %v3322 = vld [vmem:[#allocation4 + $0xe0] sm:$0xff]
          %v3323 = vld [vmem:[#allocation4 + $0xe8] sm:$0xff]
          %v3324 = vld [vmem:[#allocation4 + $0xf0] sm:$0xff]
          %v3325 = vld [vmem:[#allocation4 + $0xf8] sm:$0xff]
          %v3326 = vadd.f32 %v3294, %v3136
          %v3327 = vadd.f32 %v3295, %v3141
          %v3328 = vadd.f32 %v3296, %v3146
          %v3329 = vadd.f32 %v3297, %v3151
          %v3330 = vadd.f32 %v3298, %v3156
          %v3331 = vadd.f32 %v3299, %v3161
          %v3332 = vadd.f32 %v3300, %v3166
          %v3333 = vadd.f32 %v3301, %v3171
          %v3334 = vadd.f32 %v3302, %v3176
          %v3335 = vadd.f32 %v3303, %v3181
          %v3336 = vadd.f32 %v3304, %v3186
          %v3337 = vadd.f32 %v3305, %v3191
          %v3338 = vadd.f32 %v3306, %v3196
          %v3339 = vadd.f32 %v3307, %v3201
          %v3340 = vadd.f32 %v3308, %v3206
          %v3341 = vadd.f32 %v3309, %v3211
          %v3342 = vadd.f32 %v3310, %v3216
          %v3343 = vadd.f32 %v3311, %v3221
          %v3344 = vadd.f32 %v3312, %v3226
          %v3345 = vadd.f32 %v3313, %v3231
          %v3346 = vadd.f32 %v3314, %v3236
          %v3347 = vadd.f32 %v3315, %v3241
          %v3348 = vadd.f32 %v3316, %v3246
          %v3349 = vadd.f32 %v3317, %v3251
          %v3350 = vadd.f32 %v3318, %v3256
          %v3351 = vadd.f32 %v3319, %v3261
          %v3352 = vadd.f32 %v3320, %v3266
          %v3353 = vadd.f32 %v3321, %v3271
          %v3354 = vadd.f32 %v3322, %v3276
          %v3355 = vadd.f32 %v3323, %v3281
          %v3356 = vadd.f32 %v3324, %v3286
          %v3357 = vadd.f32 %v3325, %v3291
          %3358 = vst [vmem:[#allocation4] sm:$0xff] %v3326
          %3359 = vst [vmem:[#allocation4 + $0x8] sm:$0xff] %v3327
          %3360 = vst [vmem:[#allocation4 + $0x10] sm:$0xff] %v3328
          %3361 = vst [vmem:[#allocation4 + $0x18] sm:$0xff] %v3329
          %3362 = vst [vmem:[#allocation4 + $0x20] sm:$0xff] %v3330
          %3363 = vst [vmem:[#allocation4 + $0x28] sm:$0xff] %v3331
          %3364 = vst [vmem:[#allocation4 + $0x30] sm:$0xff] %v3332
          %3365 = vst [vmem:[#allocation4 + $0x38] sm:$0xff] %v3333
          %3366 = vst [vmem:[#allocation4 + $0x40] sm:$0xff] %v3334
          %3367 = vst [vmem:[#allocation4 + $0x48] sm:$0xff] %v3335
          %3368 = vst [vmem:[#allocation4 + $0x50] sm:$0xff] %v3336
          %3369 = vst [vmem:[#allocation4 + $0x58] sm:$0xff] %v3337
          %3370 = vst [vmem:[#allocation4 + $0x60] sm:$0xff] %v3338
          %3371 = vst [vmem:[#allocation4 + $0x68] sm:$0xff] %v3339
          %3372 = vst [vmem:[#allocation4 + $0x70] sm:$0xff] %v3340
          %3373 = vst [vmem:[#allocation4 + $0x78] sm:$0xff] %v3341
          %3374 = vst [vmem:[#allocation4 + $0x80] sm:$0xff] %v3342
          %3375 = vst [vmem:[#allocation4 + $0x88] sm:$0xff] %v3343
          %3376 = vst [vmem:[#allocation4 + $0x90] sm:$0xff] %v3344
          %3377 = vst [vmem:[#allocation4 + $0x98] sm:$0xff] %v3345
          %3378 = vst [vmem:[#allocation4 + $0xa0] sm:$0xff] %v3346
          %3379 = vst [vmem:[#allocation4 + $0xa8] sm:$0xff] %v3347
          %3380 = vst [vmem:[#allocation4 + $0xb0] sm:$0xff] %v3348
          %3381 = vst [vmem:[#allocation4 + $0xb8] sm:$0xff] %v3349
          %3382 = vst [vmem:[#allocation4 + $0xc0] sm:$0xff] %v3350
          %3383 = vst [vmem:[#allocation4 + $0xc8] sm:$0xff] %v3351
          %3384 = vst [vmem:[#allocation4 + $0xd0] sm:$0xff] %v3352
          %3385 = vst [vmem:[#allocation4 + $0xd8] sm:$0xff] %v3353
          %3386 = vst [vmem:[#allocation4 + $0xe0] sm:$0xff] %v3354
          %3387 = vst [vmem:[#allocation4 + $0xe8] sm:$0xff] %v3355
          %3388 = vst [vmem:[#allocation4 + $0xf0] sm:$0xff] %v3356
          %3389 = vst [vmem:[#allocation4 + $0xf8] sm:$0xff] %v3357
          %v3390 = vld [vmem:[%s3019 + $0x10] sm:$0xff]
          %v3391 = vld [vmem:[%s3019 + $0x18] sm:$0xff]
          %v3392 = vld [vmem:[%s3019 + $0x38] sm:$0xff]
          %v3393 = vld [vmem:[%s3019 + $0x40] sm:$0xff]
          %v3394 = vld [vmem:[%s3019 + $0x60] sm:$0xff]
          %v3395 = vld [vmem:[%s3019 + $0x68] sm:$0xff]
          %v3396 = vld [vmem:[%s3019 + $0x88] sm:$0xff]
          %v3397 = vld [vmem:[%s3019 + $0x90] sm:$0xff]
          %v3398 = vld [vmem:[%s3019 + $0xb0] sm:$0xff]
          %v3399 = vld [vmem:[%s3019 + $0xb8] sm:$0xff]
          %v3400 = vld [vmem:[%s3019 + $0xd8] sm:$0xff]
          %v3401 = vld [vmem:[%s3019 + $0xe0] sm:$0xff]
          %v3402 = vld [vmem:[%s3019 + $0x100] sm:$0xff]
          %v3403 = vld [vmem:[%s3019 + $0x108] sm:$0xff]
          %v3404 = vld [vmem:[%s3019 + $0x128] sm:$0xff]
          %v3405 = vld [vmem:[%s3019 + $0x130] sm:$0xff]
          %v3406 = vld [vmem:[%s3019 + $0x150] sm:$0xff]
          %v3407 = vld [vmem:[%s3019 + $0x158] sm:$0xff]
          %v3408 = vld [vmem:[%s3019 + $0x178] sm:$0xff]
          %v3409 = vld [vmem:[%s3019 + $0x180] sm:$0xff]
          %v3410 = vld [vmem:[%s3019 + $0x1a0] sm:$0xff]
          %v3411 = vld [vmem:[%s3019 + $0x1a8] sm:$0xff]
          %v3412 = vld [vmem:[%s3019 + $0x1c8] sm:$0xff]
          %v3413 = vld [vmem:[%s3019 + $0x1d0] sm:$0xff]
          %v3414 = vld [vmem:[%s3019 + $0x1f0] sm:$0xff]
          %v3415 = vld [vmem:[%s3019 + $0x1f8] sm:$0xff]
          %v3416 = vld [vmem:[%s3019 + $0x218] sm:$0xff]
          %v3417 = vld [vmem:[%s3019 + $0x220] sm:$0xff]
          %v3418 = vld [vmem:[%s3019 + $0x240] sm:$0xff]
          %v3419 = vld [vmem:[%s3019 + $0x248] sm:$0xff]
          %v3420 = vld [vmem:[%s3019 + $0x268] sm:$0xff]
          %v3421 = vld [vmem:[%s3019 + $0x270] sm:$0xff]
          %s3422 = scalar_lea.vmem [#allocation9], 896
          %v3423 = vld [vmem:[%s3422] sm:$0xff]
          %v3424 = vld [vmem:[%s3422 + $0x8] sm:$0xff]
          %v3425 = vld [vmem:[%s3422 + $0x10] sm:$0xff]
          %v3426 = vld [vmem:[%s3422 + $0x18] sm:$0xff]
          %v3427 = vld [vmem:[%s3422 + $0x20] sm:$0xff]
          %v3428 = vld [vmem:[%s3422 + $0x28] sm:$0xff]
          %v3429 = vld [vmem:[%s3422 + $0x30] sm:$0xff]
          %v3430 = vld [vmem:[%s3422 + $0x38] sm:$0xff]
          %v3431 = vld [vmem:[%s3422 + $0x40] sm:$0xff]
          %v3432 = vld [vmem:[%s3422 + $0x48] sm:$0xff]
          %v3433 = vld [vmem:[%s3422 + $0x50] sm:$0xff]
          %v3434 = vld [vmem:[%s3422 + $0x58] sm:$0xff]
          %v3435 = vld [vmem:[%s3422 + $0x60] sm:$0xff]
          %v3436 = vld [vmem:[%s3422 + $0x68] sm:$0xff]
          %v3437 = vld [vmem:[%s3422 + $0x70] sm:$0xff]
          %v3438 = vld [vmem:[%s3422 + $0x78] sm:$0xff]
          %3439 = vmatprep.subr.mxu0 0.0
          %3440 = vmatpush1.msra.mxu0 %v3438
          %3441 = vmatprep.subr.mxu0 0.0
          %3442 = vmatpush1.msra.mxu0 %v3437
          %3443 = vmatprep.subr.mxu0 0.0
          %3444 = vmatpush1.msra.mxu0 %v3436
          %3445 = vmatprep.subr.mxu0 0.0
          %3446 = vmatpush1.msra.mxu0 %v3435
          %3447 = vmatprep.subr.mxu0 0.0
          %3448 = vmatpush1.msra.mxu0 %v3434
          %3449 = vmatprep.subr.mxu0 0.0
          %3450 = vmatpush1.msra.mxu0 %v3433
          %3451 = vmatprep.subr.mxu0 0.0
          %3452 = vmatpush1.msra.mxu0 %v3432
          %3453 = vmatprep.subr.mxu0 0.0
          %3454 = vmatpush1.msra.mxu0 %v3431
          %3455 = vmatprep.subr.mxu0 0.0
          %3456 = vmatpush1.msra.mxu0 %v3430
          %3457 = vmatprep.subr.mxu0 0.0
          %3458 = vmatpush1.msra.mxu0 %v3429
          %3459 = vmatprep.subr.mxu0 0.0
          %3460 = vmatpush1.msra.mxu0 %v3428
          %3461 = vmatprep.subr.mxu0 0.0
          %3462 = vmatpush1.msra.mxu0 %v3427
          %3463 = vmatprep.subr.mxu0 0.0
          %3464 = vmatpush1.msra.mxu0 %v3426
          %3465 = vmatprep.subr.mxu0 0.0
          %3466 = vmatpush1.msra.mxu0 %v3425
          %3467 = vmatprep.subr.mxu0 0.0
          %3468 = vmatpush1.msra.mxu0 %v3424
          %3469 = vmatprep.subr.mxu0 0.0
          %3470 = vmatpush1.msra.mxu0 %v3423
          %3471 = vmatprep.subr.mxu0 0.0
          %3472 = vmatpush2.msra.mxu0 0.0
          %3473 = vmatprep.subr.mxu0 0.0
          %3474 = vmatpush2.msra.mxu0 0.0
          %3475 = vmatprep.subr.mxu0 0.0
          %3476 = vmatpush2.msra.mxu0 0.0
          %3477 = vmatprep.subr.mxu0 0.0
          %3478 = vmatpush2.msra.mxu0 0.0
          %3479 = vmatprep.subr.mxu0 0.0
          %3480 = vmatpush2.msra.mxu0 0.0
          %3481 = vmatprep.subr.mxu0 0.0
          %3482 = vmatpush2.msra.mxu0 0.0
          %3483 = vmatprep.subr.mxu0 0.0
          %3484 = vmatpush2.msra.mxu0 0.0
          %3485 = vmatprep.subr.mxu0 0.0
          %3486 = vmatpush2.msra.mxu0 0.0
          %3487 = vmatprep.subr.mxu0 0.0
          %3488 = vmatpush2.msra.mxu0 0.0
          %3489 = vmatprep.subr.mxu0 0.0
          %3490 = vmatpush2.msra.mxu0 0.0
          %3491 = vmatprep.subr.mxu0 0.0
          %3492 = vmatpush2.msra.mxu0 0.0
          %3493 = vmatprep.subr.mxu0 0.0
          %3494 = vmatpush2.msra.mxu0 0.0
          %3495 = vmatprep.subr.mxu0 0.0
          %3496 = vmatpush2.msra.mxu0 0.0
          %3497 = vmatprep.subr.mxu0 0.0
          %3498 = vmatpush2.msra.mxu0 0.0
          %3499 = vmatprep.subr.mxu0 0.0
          %3500 = vmatpush2.msra.mxu0 0.0
          %3501 = vmatprep.subr.mxu0 0.0
          %3502 = vmatpush2.msra.mxu0 0.0
          %3503 = vmatprep.mubr.f32.mxu0 0.0
          %3504 = vmatmul.mubr.f32.gmra.mxu0 %v3390
          %v3505 = vpop.f32.mrf.mxu0
          %v3506 = vadd.f32 0.0, %v3505
          %v3507 = vpop.f32.mrf.mxu0
          %3508 = vmatprep.mubr.f32.mxu0 0.0
          %3509 = vmatmul.mubr.f32.gmra.mxu0 %v3391
          %v3510 = vpop.f32.mrf.mxu0
          %v3511 = vadd.f32 0.0, %v3510
          %v3512 = vpop.f32.mrf.mxu0
          %3513 = vmatprep.mubr.f32.mxu0 0.0
          %3514 = vmatmul.mubr.f32.gmra.mxu0 %v3392
          %v3515 = vpop.f32.mrf.mxu0
          %v3516 = vadd.f32 0.0, %v3515
          %v3517 = vpop.f32.mrf.mxu0
          %3518 = vmatprep.mubr.f32.mxu0 0.0
          %3519 = vmatmul.mubr.f32.gmra.mxu0 %v3393
          %v3520 = vpop.f32.mrf.mxu0
          %v3521 = vadd.f32 0.0, %v3520
          %v3522 = vpop.f32.mrf.mxu0
          %3523 = vmatprep.mubr.f32.mxu0 0.0
          %3524 = vmatmul.mubr.f32.gmra.mxu0 %v3394
          %v3525 = vpop.f32.mrf.mxu0
          %v3526 = vadd.f32 0.0, %v3525
          %v3527 = vpop.f32.mrf.mxu0
          %3528 = vmatprep.mubr.f32.mxu0 0.0
          %3529 = vmatmul.mubr.f32.gmra.mxu0 %v3395
          %v3530 = vpop.f32.mrf.mxu0
          %v3531 = vadd.f32 0.0, %v3530
          %v3532 = vpop.f32.mrf.mxu0
          %3533 = vmatprep.mubr.f32.mxu0 0.0
          %3534 = vmatmul.mubr.f32.gmra.mxu0 %v3396
          %v3535 = vpop.f32.mrf.mxu0
          %v3536 = vadd.f32 0.0, %v3535
          %v3537 = vpop.f32.mrf.mxu0
          %3538 = vmatprep.mubr.f32.mxu0 0.0
          %3539 = vmatmul.mubr.f32.gmra.mxu0 %v3397
          %v3540 = vpop.f32.mrf.mxu0
          %v3541 = vadd.f32 0.0, %v3540
          %v3542 = vpop.f32.mrf.mxu0
          %3543 = vmatprep.mubr.f32.mxu0 0.0
          %3544 = vmatmul.mubr.f32.gmra.mxu0 %v3398
          %v3545 = vpop.f32.mrf.mxu0
          %v3546 = vadd.f32 0.0, %v3545
          %v3547 = vpop.f32.mrf.mxu0
          %3548 = vmatprep.mubr.f32.mxu0 0.0
          %3549 = vmatmul.mubr.f32.gmra.mxu0 %v3399
          %v3550 = vpop.f32.mrf.mxu0
          %v3551 = vadd.f32 0.0, %v3550
          %v3552 = vpop.f32.mrf.mxu0
          %3553 = vmatprep.mubr.f32.mxu0 0.0
          %3554 = vmatmul.mubr.f32.gmra.mxu0 %v3400
          %v3555 = vpop.f32.mrf.mxu0
          %v3556 = vadd.f32 0.0, %v3555
          %v3557 = vpop.f32.mrf.mxu0
          %3558 = vmatprep.mubr.f32.mxu0 0.0
          %3559 = vmatmul.mubr.f32.gmra.mxu0 %v3401
          %v3560 = vpop.f32.mrf.mxu0
          %v3561 = vadd.f32 0.0, %v3560
          %v3562 = vpop.f32.mrf.mxu0
          %3563 = vmatprep.mubr.f32.mxu0 0.0
          %3564 = vmatmul.mubr.f32.gmra.mxu0 %v3402
          %v3565 = vpop.f32.mrf.mxu0
          %v3566 = vadd.f32 0.0, %v3565
          %v3567 = vpop.f32.mrf.mxu0
          %3568 = vmatprep.mubr.f32.mxu0 0.0
          %3569 = vmatmul.mubr.f32.gmra.mxu0 %v3403
          %v3570 = vpop.f32.mrf.mxu0
          %v3571 = vadd.f32 0.0, %v3570
          %v3572 = vpop.f32.mrf.mxu0
          %3573 = vmatprep.mubr.f32.mxu0 0.0
          %3574 = vmatmul.mubr.f32.gmra.mxu0 %v3404
          %v3575 = vpop.f32.mrf.mxu0
          %v3576 = vadd.f32 0.0, %v3575
          %v3577 = vpop.f32.mrf.mxu0
          %3578 = vmatprep.mubr.f32.mxu0 0.0
          %3579 = vmatmul.mubr.f32.gmra.mxu0 %v3405
          %v3580 = vpop.f32.mrf.mxu0
          %v3581 = vadd.f32 0.0, %v3580
          %v3582 = vpop.f32.mrf.mxu0
          %3583 = vmatprep.mubr.f32.mxu0 0.0
          %3584 = vmatmul.mubr.f32.gmra.mxu0 %v3406
          %v3585 = vpop.f32.mrf.mxu0
          %v3586 = vadd.f32 0.0, %v3585
          %v3587 = vpop.f32.mrf.mxu0
          %3588 = vmatprep.mubr.f32.mxu0 0.0
          %3589 = vmatmul.mubr.f32.gmra.mxu0 %v3407
          %v3590 = vpop.f32.mrf.mxu0
          %v3591 = vadd.f32 0.0, %v3590
          %v3592 = vpop.f32.mrf.mxu0
          %3593 = vmatprep.mubr.f32.mxu0 0.0
          %3594 = vmatmul.mubr.f32.gmra.mxu0 %v3408
          %v3595 = vpop.f32.mrf.mxu0
          %v3596 = vadd.f32 0.0, %v3595
          %v3597 = vpop.f32.mrf.mxu0
          %3598 = vmatprep.mubr.f32.mxu0 0.0
          %3599 = vmatmul.mubr.f32.gmra.mxu0 %v3409
          %v3600 = vpop.f32.mrf.mxu0
          %v3601 = vadd.f32 0.0, %v3600
          %v3602 = vpop.f32.mrf.mxu0
          %3603 = vmatprep.mubr.f32.mxu0 0.0
          %3604 = vmatmul.mubr.f32.gmra.mxu0 %v3410
          %v3605 = vpop.f32.mrf.mxu0
          %v3606 = vadd.f32 0.0, %v3605
          %v3607 = vpop.f32.mrf.mxu0
          %3608 = vmatprep.mubr.f32.mxu0 0.0
          %3609 = vmatmul.mubr.f32.gmra.mxu0 %v3411
          %v3610 = vpop.f32.mrf.mxu0
          %v3611 = vadd.f32 0.0, %v3610
          %v3612 = vpop.f32.mrf.mxu0
          %3613 = vmatprep.mubr.f32.mxu0 0.0
          %3614 = vmatmul.mubr.f32.gmra.mxu0 %v3412
          %v3615 = vpop.f32.mrf.mxu0
          %v3616 = vadd.f32 0.0, %v3615
          %v3617 = vpop.f32.mrf.mxu0
          %3618 = vmatprep.mubr.f32.mxu0 0.0
          %3619 = vmatmul.mubr.f32.gmra.mxu0 %v3413
          %v3620 = vpop.f32.mrf.mxu0
          %v3621 = vadd.f32 0.0, %v3620
          %v3622 = vpop.f32.mrf.mxu0
          %3623 = vmatprep.mubr.f32.mxu0 0.0
          %3624 = vmatmul.mubr.f32.gmra.mxu0 %v3414
          %v3625 = vpop.f32.mrf.mxu0
          %v3626 = vadd.f32 0.0, %v3625
          %v3627 = vpop.f32.mrf.mxu0
          %3628 = vmatprep.mubr.f32.mxu0 0.0
          %3629 = vmatmul.mubr.f32.gmra.mxu0 %v3415
          %v3630 = vpop.f32.mrf.mxu0
          %v3631 = vadd.f32 0.0, %v3630
          %v3632 = vpop.f32.mrf.mxu0
          %3633 = vmatprep.mubr.f32.mxu0 0.0
          %3634 = vmatmul.mubr.f32.gmra.mxu0 %v3416
          %v3635 = vpop.f32.mrf.mxu0
          %v3636 = vadd.f32 0.0, %v3635
          %v3637 = vpop.f32.mrf.mxu0
          %3638 = vmatprep.mubr.f32.mxu0 0.0
          %3639 = vmatmul.mubr.f32.gmra.mxu0 %v3417
          %v3640 = vpop.f32.mrf.mxu0
          %v3641 = vadd.f32 0.0, %v3640
          %v3642 = vpop.f32.mrf.mxu0
          %3643 = vmatprep.mubr.f32.mxu0 0.0
          %3644 = vmatmul.mubr.f32.gmra.mxu0 %v3418
          %v3645 = vpop.f32.mrf.mxu0
          %v3646 = vadd.f32 0.0, %v3645
          %v3647 = vpop.f32.mrf.mxu0
          %3648 = vmatprep.mubr.f32.mxu0 0.0
          %3649 = vmatmul.mubr.f32.gmra.mxu0 %v3419
          %v3650 = vpop.f32.mrf.mxu0
          %v3651 = vadd.f32 0.0, %v3650
          %v3652 = vpop.f32.mrf.mxu0
          %3653 = vmatprep.mubr.f32.mxu0 0.0
          %3654 = vmatmul.mubr.f32.gmra.mxu0 %v3420
          %v3655 = vpop.f32.mrf.mxu0
          %v3656 = vadd.f32 0.0, %v3655
          %v3657 = vpop.f32.mrf.mxu0
          %3658 = vmatprep.mubr.f32.mxu0 0.0
          %3659 = vmatmul.mubr.f32.gmra.mxu0 %v3421
          %v3660 = vpop.f32.mrf.mxu0
          %v3661 = vadd.f32 0.0, %v3660
          %v3662 = vpop.f32.mrf.mxu0
          %3663 = vdwg.mxu0
          %v3664 = vld [vmem:[#allocation4] sm:$0xff]
          %v3665 = vld [vmem:[#allocation4 + $0x8] sm:$0xff]
          %v3666 = vld [vmem:[#allocation4 + $0x10] sm:$0xff]
          %v3667 = vld [vmem:[#allocation4 + $0x18] sm:$0xff]
          %v3668 = vld [vmem:[#allocation4 + $0x20] sm:$0xff]
          %v3669 = vld [vmem:[#allocation4 + $0x28] sm:$0xff]
          %v3670 = vld [vmem:[#allocation4 + $0x30] sm:$0xff]
          %v3671 = vld [vmem:[#allocation4 + $0x38] sm:$0xff]
          %v3672 = vld [vmem:[#allocation4 + $0x40] sm:$0xff]
          %v3673 = vld [vmem:[#allocation4 + $0x48] sm:$0xff]
          %v3674 = vld [vmem:[#allocation4 + $0x50] sm:$0xff]
          %v3675 = vld [vmem:[#allocation4 + $0x58] sm:$0xff]
          %v3676 = vld [vmem:[#allocation4 + $0x60] sm:$0xff]
          %v3677 = vld [vmem:[#allocation4 + $0x68] sm:$0xff]
          %v3678 = vld [vmem:[#allocation4 + $0x70] sm:$0xff]
          %v3679 = vld [vmem:[#allocation4 + $0x78] sm:$0xff]
          %v3680 = vld [vmem:[#allocation4 + $0x80] sm:$0xff]
          %v3681 = vld [vmem:[#allocation4 + $0x88] sm:$0xff]
          %v3682 = vld [vmem:[#allocation4 + $0x90] sm:$0xff]
          %v3683 = vld [vmem:[#allocation4 + $0x98] sm:$0xff]
          %v3684 = vld [vmem:[#allocation4 + $0xa0] sm:$0xff]
          %v3685 = vld [vmem:[#allocation4 + $0xa8] sm:$0xff]
          %v3686 = vld [vmem:[#allocation4 + $0xb0] sm:$0xff]
          %v3687 = vld [vmem:[#allocation4 + $0xb8] sm:$0xff]
          %v3688 = vld [vmem:[#allocation4 + $0xc0] sm:$0xff]
          %v3689 = vld [vmem:[#allocation4 + $0xc8] sm:$0xff]
          %v3690 = vld [vmem:[#allocation4 + $0xd0] sm:$0xff]
          %v3691 = vld [vmem:[#allocation4 + $0xd8] sm:$0xff]
          %v3692 = vld [vmem:[#allocation4 + $0xe0] sm:$0xff]
          %v3693 = vld [vmem:[#allocation4 + $0xe8] sm:$0xff]
          %v3694 = vld [vmem:[#allocation4 + $0xf0] sm:$0xff]
          %v3695 = vld [vmem:[#allocation4 + $0xf8] sm:$0xff]
          %v3696 = vadd.f32 %v3664, %v3506
          %v3697 = vadd.f32 %v3665, %v3511
          %v3698 = vadd.f32 %v3666, %v3516
          %v3699 = vadd.f32 %v3667, %v3521
          %v3700 = vadd.f32 %v3668, %v3526
          %v3701 = vadd.f32 %v3669, %v3531
          %v3702 = vadd.f32 %v3670, %v3536
          %v3703 = vadd.f32 %v3671, %v3541
          %v3704 = vadd.f32 %v3672, %v3546
          %v3705 = vadd.f32 %v3673, %v3551
          %v3706 = vadd.f32 %v3674, %v3556
          %v3707 = vadd.f32 %v3675, %v3561
          %v3708 = vadd.f32 %v3676, %v3566
          %v3709 = vadd.f32 %v3677, %v3571
          %v3710 = vadd.f32 %v3678, %v3576
          %v3711 = vadd.f32 %v3679, %v3581
          %v3712 = vadd.f32 %v3680, %v3586
          %v3713 = vadd.f32 %v3681, %v3591
          %v3714 = vadd.f32 %v3682, %v3596
          %v3715 = vadd.f32 %v3683, %v3601
          %v3716 = vadd.f32 %v3684, %v3606
          %v3717 = vadd.f32 %v3685, %v3611
          %v3718 = vadd.f32 %v3686, %v3616
          %v3719 = vadd.f32 %v3687, %v3621
          %v3720 = vadd.f32 %v3688, %v3626
          %v3721 = vadd.f32 %v3689, %v3631
          %v3722 = vadd.f32 %v3690, %v3636
          %v3723 = vadd.f32 %v3691, %v3641
          %v3724 = vadd.f32 %v3692, %v3646
          %v3725 = vadd.f32 %v3693, %v3651
          %v3726 = vadd.f32 %v3694, %v3656
          %v3727 = vadd.f32 %v3695, %v3661
          %3728 = vst [vmem:[#allocation4] sm:$0xff] %v3696
          %3729 = vst [vmem:[#allocation4 + $0x8] sm:$0xff] %v3697
          %3730 = vst [vmem:[#allocation4 + $0x10] sm:$0xff] %v3698
          %3731 = vst [vmem:[#allocation4 + $0x18] sm:$0xff] %v3699
          %3732 = vst [vmem:[#allocation4 + $0x20] sm:$0xff] %v3700
          %3733 = vst [vmem:[#allocation4 + $0x28] sm:$0xff] %v3701
          %3734 = vst [vmem:[#allocation4 + $0x30] sm:$0xff] %v3702
          %3735 = vst [vmem:[#allocation4 + $0x38] sm:$0xff] %v3703
          %3736 = vst [vmem:[#allocation4 + $0x40] sm:$0xff] %v3704
          %3737 = vst [vmem:[#allocation4 + $0x48] sm:$0xff] %v3705
          %3738 = vst [vmem:[#allocation4 + $0x50] sm:$0xff] %v3706
          %3739 = vst [vmem:[#allocation4 + $0x58] sm:$0xff] %v3707
          %3740 = vst [vmem:[#allocation4 + $0x60] sm:$0xff] %v3708
          %3741 = vst [vmem:[#allocation4 + $0x68] sm:$0xff] %v3709
          %3742 = vst [vmem:[#allocation4 + $0x70] sm:$0xff] %v3710
          %3743 = vst [vmem:[#allocation4 + $0x78] sm:$0xff] %v3711
          %3744 = vst [vmem:[#allocation4 + $0x80] sm:$0xff] %v3712
          %3745 = vst [vmem:[#allocation4 + $0x88] sm:$0xff] %v3713
          %3746 = vst [vmem:[#allocation4 + $0x90] sm:$0xff] %v3714
          %3747 = vst [vmem:[#allocation4 + $0x98] sm:$0xff] %v3715
          %3748 = vst [vmem:[#allocation4 + $0xa0] sm:$0xff] %v3716
          %3749 = vst [vmem:[#allocation4 + $0xa8] sm:$0xff] %v3717
          %3750 = vst [vmem:[#allocation4 + $0xb0] sm:$0xff] %v3718
          %3751 = vst [vmem:[#allocation4 + $0xb8] sm:$0xff] %v3719
          %3752 = vst [vmem:[#allocation4 + $0xc0] sm:$0xff] %v3720
          %3753 = vst [vmem:[#allocation4 + $0xc8] sm:$0xff] %v3721
          %3754 = vst [vmem:[#allocation4 + $0xd0] sm:$0xff] %v3722
          %3755 = vst [vmem:[#allocation4 + $0xd8] sm:$0xff] %v3723
          %3756 = vst [vmem:[#allocation4 + $0xe0] sm:$0xff] %v3724
          %3757 = vst [vmem:[#allocation4 + $0xe8] sm:$0xff] %v3725
          %3758 = vst [vmem:[#allocation4 + $0xf0] sm:$0xff] %v3726
          %3759 = vst [vmem:[#allocation4 + $0xf8] sm:$0xff] %v3727
          %v3760 = vld [vmem:[%s3019 + $0x11] sm:$0xff]
          %v3761 = vld [vmem:[%s3019 + $0x19] sm:$0xff]
          %v3762 = vld [vmem:[%s3019 + $0x39] sm:$0xff]
          %v3763 = vld [vmem:[%s3019 + $0x41] sm:$0xff]
          %v3764 = vld [vmem:[%s3019 + $0x61] sm:$0xff]
          %v3765 = vld [vmem:[%s3019 + $0x69] sm:$0xff]
          %v3766 = vld [vmem:[%s3019 + $0x89] sm:$0xff]
          %v3767 = vld [vmem:[%s3019 + $0x91] sm:$0xff]
          %v3768 = vld [vmem:[%s3019 + $0xb1] sm:$0xff]
          %v3769 = vld [vmem:[%s3019 + $0xb9] sm:$0xff]
          %v3770 = vld [vmem:[%s3019 + $0xd9] sm:$0xff]
          %v3771 = vld [vmem:[%s3019 + $0xe1] sm:$0xff]
          %v3772 = vld [vmem:[%s3019 + $0x101] sm:$0xff]
          %v3773 = vld [vmem:[%s3019 + $0x109] sm:$0xff]
          %v3774 = vld [vmem:[%s3019 + $0x129] sm:$0xff]
          %v3775 = vld [vmem:[%s3019 + $0x131] sm:$0xff]
          %v3776 = vld [vmem:[%s3019 + $0x151] sm:$0xff]
          %v3777 = vld [vmem:[%s3019 + $0x159] sm:$0xff]
          %v3778 = vld [vmem:[%s3019 + $0x179] sm:$0xff]
          %v3779 = vld [vmem:[%s3019 + $0x181] sm:$0xff]
          %v3780 = vld [vmem:[%s3019 + $0x1a1] sm:$0xff]
          %v3781 = vld [vmem:[%s3019 + $0x1a9] sm:$0xff]
          %v3782 = vld [vmem:[%s3019 + $0x1c9] sm:$0xff]
          %v3783 = vld [vmem:[%s3019 + $0x1d1] sm:$0xff]
          %v3784 = vld [vmem:[%s3019 + $0x1f1] sm:$0xff]
          %v3785 = vld [vmem:[%s3019 + $0x1f9] sm:$0xff]
          %v3786 = vld [vmem:[%s3019 + $0x219] sm:$0xff]
          %v3787 = vld [vmem:[%s3019 + $0x221] sm:$0xff]
          %v3788 = vld [vmem:[%s3019 + $0x241] sm:$0xff]
          %v3789 = vld [vmem:[%s3019 + $0x249] sm:$0xff]
          %v3790 = vld [vmem:[%s3019 + $0x269] sm:$0xff]
          %v3791 = vld [vmem:[%s3019 + $0x271] sm:$0xff]
          %s3792 = scalar_lea.vmem [#allocation9], 1024
          %v3793 = vld [vmem:[%s3792] sm:$0xff]
          %v3794 = vld [vmem:[%s3792 + $0x8] sm:$0xff]
          %v3795 = vld [vmem:[%s3792 + $0x10] sm:$0xff]
          %v3796 = vld [vmem:[%s3792 + $0x18] sm:$0xff]
          %v3797 = vld [vmem:[%s3792 + $0x20] sm:$0xff]
          %v3798 = vld [vmem:[%s3792 + $0x28] sm:$0xff]
          %v3799 = vld [vmem:[%s3792 + $0x30] sm:$0xff]
          %v3800 = vld [vmem:[%s3792 + $0x38] sm:$0xff]
          %v3801 = vld [vmem:[%s3792 + $0x40] sm:$0xff]
          %v3802 = vld [vmem:[%s3792 + $0x48] sm:$0xff]
          %v3803 = vld [vmem:[%s3792 + $0x50] sm:$0xff]
          %v3804 = vld [vmem:[%s3792 + $0x58] sm:$0xff]
          %v3805 = vld [vmem:[%s3792 + $0x60] sm:$0xff]
          %v3806 = vld [vmem:[%s3792 + $0x68] sm:$0xff]
          %v3807 = vld [vmem:[%s3792 + $0x70] sm:$0xff]
          %v3808 = vld [vmem:[%s3792 + $0x78] sm:$0xff]
          %3809 = vmatprep.subr.mxu0 0.0
          %3810 = vmatpush1.msra.mxu0 %v3808
          %3811 = vmatprep.subr.mxu0 0.0
          %3812 = vmatpush1.msra.mxu0 %v3807
          %3813 = vmatprep.subr.mxu0 0.0
          %3814 = vmatpush1.msra.mxu0 %v3806
          %3815 = vmatprep.subr.mxu0 0.0
          %3816 = vmatpush1.msra.mxu0 %v3805
          %3817 = vmatprep.subr.mxu0 0.0
          %3818 = vmatpush1.msra.mxu0 %v3804
          %3819 = vmatprep.subr.mxu0 0.0
          %3820 = vmatpush1.msra.mxu0 %v3803
          %3821 = vmatprep.subr.mxu0 0.0
          %3822 = vmatpush1.msra.mxu0 %v3802
          %3823 = vmatprep.subr.mxu0 0.0
          %3824 = vmatpush1.msra.mxu0 %v3801
          %3825 = vmatprep.subr.mxu0 0.0
          %3826 = vmatpush1.msra.mxu0 %v3800
          %3827 = vmatprep.subr.mxu0 0.0
          %3828 = vmatpush1.msra.mxu0 %v3799
          %3829 = vmatprep.subr.mxu0 0.0
          %3830 = vmatpush1.msra.mxu0 %v3798
          %3831 = vmatprep.subr.mxu0 0.0
          %3832 = vmatpush1.msra.mxu0 %v3797
          %3833 = vmatprep.subr.mxu0 0.0
          %3834 = vmatpush1.msra.mxu0 %v3796
          %3835 = vmatprep.subr.mxu0 0.0
          %3836 = vmatpush1.msra.mxu0 %v3795
          %3837 = vmatprep.subr.mxu0 0.0
          %3838 = vmatpush1.msra.mxu0 %v3794
          %3839 = vmatprep.subr.mxu0 0.0
          %3840 = vmatpush1.msra.mxu0 %v3793
          %3841 = vmatprep.subr.mxu0 0.0
          %3842 = vmatpush2.msra.mxu0 0.0
          %3843 = vmatprep.subr.mxu0 0.0
          %3844 = vmatpush2.msra.mxu0 0.0
          %3845 = vmatprep.subr.mxu0 0.0
          %3846 = vmatpush2.msra.mxu0 0.0
          %3847 = vmatprep.subr.mxu0 0.0
          %3848 = vmatpush2.msra.mxu0 0.0
          %3849 = vmatprep.subr.mxu0 0.0
          %3850 = vmatpush2.msra.mxu0 0.0
          %3851 = vmatprep.subr.mxu0 0.0
          %3852 = vmatpush2.msra.mxu0 0.0
          %3853 = vmatprep.subr.mxu0 0.0
          %3854 = vmatpush2.msra.mxu0 0.0
          %3855 = vmatprep.subr.mxu0 0.0
          %3856 = vmatpush2.msra.mxu0 0.0
          %3857 = vmatprep.subr.mxu0 0.0
          %3858 = vmatpush2.msra.mxu0 0.0
          %3859 = vmatprep.subr.mxu0 0.0
          %3860 = vmatpush2.msra.mxu0 0.0
          %3861 = vmatprep.subr.mxu0 0.0
          %3862 = vmatpush2.msra.mxu0 0.0
          %3863 = vmatprep.subr.mxu0 0.0
          %3864 = vmatpush2.msra.mxu0 0.0
          %3865 = vmatprep.subr.mxu0 0.0
          %3866 = vmatpush2.msra.mxu0 0.0
          %3867 = vmatprep.subr.mxu0 0.0
          %3868 = vmatpush2.msra.mxu0 0.0
          %3869 = vmatprep.subr.mxu0 0.0
          %3870 = vmatpush2.msra.mxu0 0.0
          %3871 = vmatprep.subr.mxu0 0.0
          %3872 = vmatpush2.msra.mxu0 0.0
          %3873 = vmatprep.mubr.f32.mxu0 0.0
          %3874 = vmatmul.mubr.f32.gmra.mxu0 %v3760
          %v3875 = vpop.f32.mrf.mxu0
          %v3876 = vadd.f32 0.0, %v3875
          %v3877 = vpop.f32.mrf.mxu0
          %3878 = vmatprep.mubr.f32.mxu0 0.0
          %3879 = vmatmul.mubr.f32.gmra.mxu0 %v3761
          %v3880 = vpop.f32.mrf.mxu0
          %v3881 = vadd.f32 0.0, %v3880
          %v3882 = vpop.f32.mrf.mxu0
          %3883 = vmatprep.mubr.f32.mxu0 0.0
          %3884 = vmatmul.mubr.f32.gmra.mxu0 %v3762
          %v3885 = vpop.f32.mrf.mxu0
          %v3886 = vadd.f32 0.0, %v3885
          %v3887 = vpop.f32.mrf.mxu0
          %3888 = vmatprep.mubr.f32.mxu0 0.0
          %3889 = vmatmul.mubr.f32.gmra.mxu0 %v3763
          %v3890 = vpop.f32.mrf.mxu0
          %v3891 = vadd.f32 0.0, %v3890
          %v3892 = vpop.f32.mrf.mxu0
          %3893 = vmatprep.mubr.f32.mxu0 0.0
          %3894 = vmatmul.mubr.f32.gmra.mxu0 %v3764
          %v3895 = vpop.f32.mrf.mxu0
          %v3896 = vadd.f32 0.0, %v3895
          %v3897 = vpop.f32.mrf.mxu0
          %3898 = vmatprep.mubr.f32.mxu0 0.0
          %3899 = vmatmul.mubr.f32.gmra.mxu0 %v3765
          %v3900 = vpop.f32.mrf.mxu0
          %v3901 = vadd.f32 0.0, %v3900
          %v3902 = vpop.f32.mrf.mxu0
          %3903 = vmatprep.mubr.f32.mxu0 0.0
          %3904 = vmatmul.mubr.f32.gmra.mxu0 %v3766
          %v3905 = vpop.f32.mrf.mxu0
          %v3906 = vadd.f32 0.0, %v3905
          %v3907 = vpop.f32.mrf.mxu0
          %3908 = vmatprep.mubr.f32.mxu0 0.0
          %3909 = vmatmul.mubr.f32.gmra.mxu0 %v3767
          %v3910 = vpop.f32.mrf.mxu0
          %v3911 = vadd.f32 0.0, %v3910
          %v3912 = vpop.f32.mrf.mxu0
          %3913 = vmatprep.mubr.f32.mxu0 0.0
          %3914 = vmatmul.mubr.f32.gmra.mxu0 %v3768
          %v3915 = vpop.f32.mrf.mxu0
          %v3916 = vadd.f32 0.0, %v3915
          %v3917 = vpop.f32.mrf.mxu0
          %3918 = vmatprep.mubr.f32.mxu0 0.0
          %3919 = vmatmul.mubr.f32.gmra.mxu0 %v3769
          %v3920 = vpop.f32.mrf.mxu0
          %v3921 = vadd.f32 0.0, %v3920
          %v3922 = vpop.f32.mrf.mxu0
          %3923 = vmatprep.mubr.f32.mxu0 0.0
          %3924 = vmatmul.mubr.f32.gmra.mxu0 %v3770
          %v3925 = vpop.f32.mrf.mxu0
          %v3926 = vadd.f32 0.0, %v3925
          %v3927 = vpop.f32.mrf.mxu0
          %3928 = vmatprep.mubr.f32.mxu0 0.0
          %3929 = vmatmul.mubr.f32.gmra.mxu0 %v3771
          %v3930 = vpop.f32.mrf.mxu0
          %v3931 = vadd.f32 0.0, %v3930
          %v3932 = vpop.f32.mrf.mxu0
          %3933 = vmatprep.mubr.f32.mxu0 0.0
          %3934 = vmatmul.mubr.f32.gmra.mxu0 %v3772
          %v3935 = vpop.f32.mrf.mxu0
          %v3936 = vadd.f32 0.0, %v3935
          %v3937 = vpop.f32.mrf.mxu0
          %3938 = vmatprep.mubr.f32.mxu0 0.0
          %3939 = vmatmul.mubr.f32.gmra.mxu0 %v3773
          %v3940 = vpop.f32.mrf.mxu0
          %v3941 = vadd.f32 0.0, %v3940
          %v3942 = vpop.f32.mrf.mxu0
          %3943 = vmatprep.mubr.f32.mxu0 0.0
          %3944 = vmatmul.mubr.f32.gmra.mxu0 %v3774
          %v3945 = vpop.f32.mrf.mxu0
          %v3946 = vadd.f32 0.0, %v3945
          %v3947 = vpop.f32.mrf.mxu0
          %3948 = vmatprep.mubr.f32.mxu0 0.0
          %3949 = vmatmul.mubr.f32.gmra.mxu0 %v3775
          %v3950 = vpop.f32.mrf.mxu0
          %v3951 = vadd.f32 0.0, %v3950
          %v3952 = vpop.f32.mrf.mxu0
          %3953 = vmatprep.mubr.f32.mxu0 0.0
          %3954 = vmatmul.mubr.f32.gmra.mxu0 %v3776
          %v3955 = vpop.f32.mrf.mxu0
          %v3956 = vadd.f32 0.0, %v3955
          %v3957 = vpop.f32.mrf.mxu0
          %3958 = vmatprep.mubr.f32.mxu0 0.0
          %3959 = vmatmul.mubr.f32.gmra.mxu0 %v3777
          %v3960 = vpop.f32.mrf.mxu0
          %v3961 = vadd.f32 0.0, %v3960
          %v3962 = vpop.f32.mrf.mxu0
          %3963 = vmatprep.mubr.f32.mxu0 0.0
          %3964 = vmatmul.mubr.f32.gmra.mxu0 %v3778
          %v3965 = vpop.f32.mrf.mxu0
          %v3966 = vadd.f32 0.0, %v3965
          %v3967 = vpop.f32.mrf.mxu0
          %3968 = vmatprep.mubr.f32.mxu0 0.0
          %3969 = vmatmul.mubr.f32.gmra.mxu0 %v3779
          %v3970 = vpop.f32.mrf.mxu0
          %v3971 = vadd.f32 0.0, %v3970
          %v3972 = vpop.f32.mrf.mxu0
          %3973 = vmatprep.mubr.f32.mxu0 0.0
          %3974 = vmatmul.mubr.f32.gmra.mxu0 %v3780
          %v3975 = vpop.f32.mrf.mxu0
          %v3976 = vadd.f32 0.0, %v3975
          %v3977 = vpop.f32.mrf.mxu0
          %3978 = vmatprep.mubr.f32.mxu0 0.0
          %3979 = vmatmul.mubr.f32.gmra.mxu0 %v3781
          %v3980 = vpop.f32.mrf.mxu0
          %v3981 = vadd.f32 0.0, %v3980
          %v3982 = vpop.f32.mrf.mxu0
          %3983 = vmatprep.mubr.f32.mxu0 0.0
          %3984 = vmatmul.mubr.f32.gmra.mxu0 %v3782
          %v3985 = vpop.f32.mrf.mxu0
          %v3986 = vadd.f32 0.0, %v3985
          %v3987 = vpop.f32.mrf.mxu0
          %3988 = vmatprep.mubr.f32.mxu0 0.0
          %3989 = vmatmul.mubr.f32.gmra.mxu0 %v3783
          %v3990 = vpop.f32.mrf.mxu0
          %v3991 = vadd.f32 0.0, %v3990
          %v3992 = vpop.f32.mrf.mxu0
          %3993 = vmatprep.mubr.f32.mxu0 0.0
          %3994 = vmatmul.mubr.f32.gmra.mxu0 %v3784
          %v3995 = vpop.f32.mrf.mxu0
          %v3996 = vadd.f32 0.0, %v3995
          %v3997 = vpop.f32.mrf.mxu0
          %3998 = vmatprep.mubr.f32.mxu0 0.0
          %3999 = vmatmul.mubr.f32.gmra.mxu0 %v3785
          %v4000 = vpop.f32.mrf.mxu0
          %v4001 = vadd.f32 0.0, %v4000
          %v4002 = vpop.f32.mrf.mxu0
          %4003 = vmatprep.mubr.f32.mxu0 0.0
          %4004 = vmatmul.mubr.f32.gmra.mxu0 %v3786
          %v4005 = vpop.f32.mrf.mxu0
          %v4006 = vadd.f32 0.0, %v4005
          %v4007 = vpop.f32.mrf.mxu0
          %4008 = vmatprep.mubr.f32.mxu0 0.0
          %4009 = vmatmul.mubr.f32.gmra.mxu0 %v3787
          %v4010 = vpop.f32.mrf.mxu0
          %v4011 = vadd.f32 0.0, %v4010
          %v4012 = vpop.f32.mrf.mxu0
          %4013 = vmatprep.mubr.f32.mxu0 0.0
          %4014 = vmatmul.mubr.f32.gmra.mxu0 %v3788
          %v4015 = vpop.f32.mrf.mxu0
          %v4016 = vadd.f32 0.0, %v4015
          %v4017 = vpop.f32.mrf.mxu0
          %4018 = vmatprep.mubr.f32.mxu0 0.0
          %4019 = vmatmul.mubr.f32.gmra.mxu0 %v3789
          %v4020 = vpop.f32.mrf.mxu0
          %v4021 = vadd.f32 0.0, %v4020
          %v4022 = vpop.f32.mrf.mxu0
          %4023 = vmatprep.mubr.f32.mxu0 0.0
          %4024 = vmatmul.mubr.f32.gmra.mxu0 %v3790
          %v4025 = vpop.f32.mrf.mxu0
          %v4026 = vadd.f32 0.0, %v4025
          %v4027 = vpop.f32.mrf.mxu0
          %4028 = vmatprep.mubr.f32.mxu0 0.0
          %4029 = vmatmul.mubr.f32.gmra.mxu0 %v3791
          %v4030 = vpop.f32.mrf.mxu0
          %v4031 = vadd.f32 0.0, %v4030
          %v4032 = vpop.f32.mrf.mxu0
          %4033 = vdwg.mxu0
          %v4034 = vld [vmem:[#allocation4] sm:$0xff]
          %v4035 = vld [vmem:[#allocation4 + $0x8] sm:$0xff]
          %v4036 = vld [vmem:[#allocation4 + $0x10] sm:$0xff]
          %v4037 = vld [vmem:[#allocation4 + $0x18] sm:$0xff]
          %v4038 = vld [vmem:[#allocation4 + $0x20] sm:$0xff]
          %v4039 = vld [vmem:[#allocation4 + $0x28] sm:$0xff]
          %v4040 = vld [vmem:[#allocation4 + $0x30] sm:$0xff]
          %v4041 = vld [vmem:[#allocation4 + $0x38] sm:$0xff]
          %v4042 = vld [vmem:[#allocation4 + $0x40] sm:$0xff]
          %v4043 = vld [vmem:[#allocation4 + $0x48] sm:$0xff]
          %v4044 = vld [vmem:[#allocation4 + $0x50] sm:$0xff]
          %v4045 = vld [vmem:[#allocation4 + $0x58] sm:$0xff]
          %v4046 = vld [vmem:[#allocation4 + $0x60] sm:$0xff]
          %v4047 = vld [vmem:[#allocation4 + $0x68] sm:$0xff]
          %v4048 = vld [vmem:[#allocation4 + $0x70] sm:$0xff]
          %v4049 = vld [vmem:[#allocation4 + $0x78] sm:$0xff]
          %v4050 = vld [vmem:[#allocation4 + $0x80] sm:$0xff]
          %v4051 = vld [vmem:[#allocation4 + $0x88] sm:$0xff]
          %v4052 = vld [vmem:[#allocation4 + $0x90] sm:$0xff]
          %v4053 = vld [vmem:[#allocation4 + $0x98] sm:$0xff]
          %v4054 = vld [vmem:[#allocation4 + $0xa0] sm:$0xff]
          %v4055 = vld [vmem:[#allocation4 + $0xa8] sm:$0xff]
          %v4056 = vld [vmem:[#allocation4 + $0xb0] sm:$0xff]
          %v4057 = vld [vmem:[#allocation4 + $0xb8] sm:$0xff]
          %v4058 = vld [vmem:[#allocation4 + $0xc0] sm:$0xff]
          %v4059 = vld [vmem:[#allocation4 + $0xc8] sm:$0xff]
          %v4060 = vld [vmem:[#allocation4 + $0xd0] sm:$0xff]
          %v4061 = vld [vmem:[#allocation4 + $0xd8] sm:$0xff]
          %v4062 = vld [vmem:[#allocation4 + $0xe0] sm:$0xff]
          %v4063 = vld [vmem:[#allocation4 + $0xe8] sm:$0xff]
          %v4064 = vld [vmem:[#allocation4 + $0xf0] sm:$0xff]
          %v4065 = vld [vmem:[#allocation4 + $0xf8] sm:$0xff]
          %v4066 = vadd.f32 %v4034, %v3876
          %v4067 = vadd.f32 %v4035, %v3881
          %v4068 = vadd.f32 %v4036, %v3886
          %v4069 = vadd.f32 %v4037, %v3891
          %v4070 = vadd.f32 %v4038, %v3896
          %v4071 = vadd.f32 %v4039, %v3901
          %v4072 = vadd.f32 %v4040, %v3906
          %v4073 = vadd.f32 %v4041, %v3911
          %v4074 = vadd.f32 %v4042, %v3916
          %v4075 = vadd.f32 %v4043, %v3921
          %v4076 = vadd.f32 %v4044, %v3926
          %v4077 = vadd.f32 %v4045, %v3931
          %v4078 = vadd.f32 %v4046, %v3936
          %v4079 = vadd.f32 %v4047, %v3941
          %v4080 = vadd.f32 %v4048, %v3946
          %v4081 = vadd.f32 %v4049, %v3951
          %v4082 = vadd.f32 %v4050, %v3956
          %v4083 = vadd.f32 %v4051, %v3961
          %v4084 = vadd.f32 %v4052, %v3966
          %v4085 = vadd.f32 %v4053, %v3971
          %v4086 = vadd.f32 %v4054, %v3976
          %v4087 = vadd.f32 %v4055, %v3981
          %v4088 = vadd.f32 %v4056, %v3986
          %v4089 = vadd.f32 %v4057, %v3991
          %v4090 = vadd.f32 %v4058, %v3996
          %v4091 = vadd.f32 %v4059, %v4001
          %v4092 = vadd.f32 %v4060, %v4006
          %v4093 = vadd.f32 %v4061, %v4011
          %v4094 = vadd.f32 %v4062, %v4016
          %v4095 = vadd.f32 %v4063, %v4021
          %v4096 = vadd.f32 %v4064, %v4026
          %v4097 = vadd.f32 %v4065, %v4031
          %4098 = vst [vmem:[#allocation4] sm:$0xff] %v4066
          %4099 = vst [vmem:[#allocation4 + $0x8] sm:$0xff] %v4067
          %4100 = vst [vmem:[#allocation4 + $0x10] sm:$0xff] %v4068
          %4101 = vst [vmem:[#allocation4 + $0x18] sm:$0xff] %v4069
          %4102 = vst [vmem:[#allocation4 + $0x20] sm:$0xff] %v4070
          %4103 = vst [vmem:[#allocation4 + $0x28] sm:$0xff] %v4071
          %4104 = vst [vmem:[#allocation4 + $0x30] sm:$0xff] %v4072
          %4105 = vst [vmem:[#allocation4 + $0x38] sm:$0xff] %v4073
          %4106 = vst [vmem:[#allocation4 + $0x40] sm:$0xff] %v4074
          %4107 = vst [vmem:[#allocation4 + $0x48] sm:$0xff] %v4075
          %4108 = vst [vmem:[#allocation4 + $0x50] sm:$0xff] %v4076
          %4109 = vst [vmem:[#allocation4 + $0x58] sm:$0xff] %v4077
          %4110 = vst [vmem:[#allocation4 + $0x60] sm:$0xff] %v4078
          %4111 = vst [vmem:[#allocation4 + $0x68] sm:$0xff] %v4079
          %4112 = vst [vmem:[#allocation4 + $0x70] sm:$0xff] %v4080
          %4113 = vst [vmem:[#allocation4 + $0x78] sm:$0xff] %v4081
          %4114 = vst [vmem:[#allocation4 + $0x80] sm:$0xff] %v4082
          %4115 = vst [vmem:[#allocation4 + $0x88] sm:$0xff] %v4083
          %4116 = vst [vmem:[#allocation4 + $0x90] sm:$0xff] %v4084
          %4117 = vst [vmem:[#allocation4 + $0x98] sm:$0xff] %v4085
          %4118 = vst [vmem:[#allocation4 + $0xa0] sm:$0xff] %v4086
          %4119 = vst [vmem:[#allocation4 + $0xa8] sm:$0xff] %v4087
          %4120 = vst [vmem:[#allocation4 + $0xb0] sm:$0xff] %v4088
          %4121 = vst [vmem:[#allocation4 + $0xb8] sm:$0xff] %v4089
          %4122 = vst [vmem:[#allocation4 + $0xc0] sm:$0xff] %v4090
          %4123 = vst [vmem:[#allocation4 + $0xc8] sm:$0xff] %v4091
          %4124 = vst [vmem:[#allocation4 + $0xd0] sm:$0xff] %v4092
          %4125 = vst [vmem:[#allocation4 + $0xd8] sm:$0xff] %v4093
          %4126 = vst [vmem:[#allocation4 + $0xe0] sm:$0xff] %v4094
          %4127 = vst [vmem:[#allocation4 + $0xe8] sm:$0xff] %v4095
          %4128 = vst [vmem:[#allocation4 + $0xf0] sm:$0xff] %v4096
          %4129 = vst [vmem:[#allocation4 + $0xf8] sm:$0xff] %v4097
          %v4130 = vld [vmem:[#allocation4] sm:$0xff]
          %v4131 = vld [vmem:[#allocation4 + $0x8] sm:$0xff]
          %v4132 = vld [vmem:[#allocation4 + $0x10] sm:$0xff]
          %v4133 = vld [vmem:[#allocation4 + $0x18] sm:$0xff]
          %v4134 = vld [vmem:[#allocation4 + $0x20] sm:$0xff]
          %v4135 = vld [vmem:[#allocation4 + $0x28] sm:$0xff]
          %v4136 = vld [vmem:[#allocation4 + $0x30] sm:$0xff]
          %v4137 = vld [vmem:[#allocation4 + $0x38] sm:$0xff]
          %v4138 = vld [vmem:[#allocation4 + $0x40] sm:$0xff]
          %v4139 = vld [vmem:[#allocation4 + $0x48] sm:$0xff]
          %v4140 = vld [vmem:[#allocation4 + $0x50] sm:$0xff]
          %v4141 = vld [vmem:[#allocation4 + $0x58] sm:$0xff]
          %v4142 = vld [vmem:[#allocation4 + $0x60] sm:$0xff]
          %v4143 = vld [vmem:[#allocation4 + $0x68] sm:$0xff]
          %v4144 = vld [vmem:[#allocation4 + $0x70] sm:$0xff]
          %v4145 = vld [vmem:[#allocation4 + $0x78] sm:$0xff]
          %v4146 = vld [vmem:[#allocation4 + $0x80] sm:$0xff]
          %v4147 = vld [vmem:[#allocation4 + $0x88] sm:$0xff]
          %v4148 = vld [vmem:[#allocation4 + $0x90] sm:$0xff]
          %v4149 = vld [vmem:[#allocation4 + $0x98] sm:$0xff]
          %v4150 = vld [vmem:[#allocation4 + $0xa0] sm:$0xff]
          %v4151 = vld [vmem:[#allocation4 + $0xa8] sm:$0xff]
          %v4152 = vld [vmem:[#allocation4 + $0xb0] sm:$0xff]
          %v4153 = vld [vmem:[#allocation4 + $0xb8] sm:$0xff]
          %v4154 = vld [vmem:[#allocation4 + $0xc0] sm:$0xff]
          %v4155 = vld [vmem:[#allocation4 + $0xc8] sm:$0xff]
          %v4156 = vld [vmem:[#allocation4 + $0xd0] sm:$0xff]
          %v4157 = vld [vmem:[#allocation4 + $0xd8] sm:$0xff]
          %v4158 = vld [vmem:[#allocation4 + $0xe0] sm:$0xff]
          %v4159 = vld [vmem:[#allocation4 + $0xe8] sm:$0xff]
          %v4160 = vld [vmem:[#allocation4 + $0xf0] sm:$0xff]
          %v4161 = vld [vmem:[#allocation4 + $0xf8] sm:$0xff]
          %v4162 = vld [vmem:[%s4] sm:$0x1]
          %v4164 = vlaneseq
          %v4165 = vshrl.u32 %v4164, 7
          %v4166 = vsub.s32 0, %v4165
          %v4167 = vrot.slane %v4162, %v4166
          %v4169 = vadd.f32 %v4130, %v4167
          %v4170 = vadd.f32 %v4131, %v4167
          %v4171 = vadd.f32 %v4132, %v4167
          %v4172 = vadd.f32 %v4133, %v4167
          %v4173 = vadd.f32 %v4134, %v4167
          %v4174 = vadd.f32 %v4135, %v4167
          %v4175 = vadd.f32 %v4136, %v4167
          %v4176 = vadd.f32 %v4137, %v4167
          %v4177 = vadd.f32 %v4138, %v4167
          %v4178 = vadd.f32 %v4139, %v4167
          %v4179 = vadd.f32 %v4140, %v4167
          %v4180 = vadd.f32 %v4141, %v4167
          %v4181 = vadd.f32 %v4142, %v4167
          %v4182 = vadd.f32 %v4143, %v4167
          %v4183 = vadd.f32 %v4144, %v4167
          %v4184 = vadd.f32 %v4145, %v4167
          %v4185 = vadd.f32 %v4146, %v4167
          %v4186 = vadd.f32 %v4147, %v4167
          %v4187 = vadd.f32 %v4148, %v4167
          %v4188 = vadd.f32 %v4149, %v4167
          %v4189 = vadd.f32 %v4150, %v4167
          %v4190 = vadd.f32 %v4151, %v4167
          %v4191 = vadd.f32 %v4152, %v4167
          %v4192 = vadd.f32 %v4153, %v4167
          %v4193 = vadd.f32 %v4154, %v4167
          %v4194 = vadd.f32 %v4155, %v4167
          %v4195 = vadd.f32 %v4156, %v4167
          %v4196 = vadd.f32 %v4157, %v4167
          %v4197 = vadd.f32 %v4158, %v4167
          %v4198 = vadd.f32 %v4159, %v4167
          %v4199 = vadd.f32 %v4160, %v4167
          %v4200 = vadd.f32 %v4161, %v4167
          %v4201 = vld [vmem:[%s5] sm:$0x1]
          %v4203 = vlaneseq
          %v4204 = vshrl.u32 %v4203, 7
          %v4205 = vsub.s32 0, %v4204
          %v4206 = vrot.slane %v4201, %v4205
          %v4208 = vmul.f32 %v4169, %v4206
          %v4209 = vmul.f32 %v4170, %v4206
          %v4210 = vmul.f32 %v4171, %v4206
          %v4211 = vmul.f32 %v4172, %v4206
          %v4212 = vmul.f32 %v4173, %v4206
          %v4213 = vmul.f32 %v4174, %v4206
          %v4214 = vmul.f32 %v4175, %v4206
          %v4215 = vmul.f32 %v4176, %v4206
          %v4216 = vmul.f32 %v4177, %v4206
          %v4217 = vmul.f32 %v4178, %v4206
          %v4218 = vmul.f32 %v4179, %v4206
          %v4219 = vmul.f32 %v4180, %v4206
          %v4220 = vmul.f32 %v4181, %v4206
          %v4221 = vmul.f32 %v4182, %v4206
          %v4222 = vmul.f32 %v4183, %v4206
          %v4223 = vmul.f32 %v4184, %v4206
          %v4224 = vmul.f32 %v4185, %v4206
          %v4225 = vmul.f32 %v4186, %v4206
          %v4226 = vmul.f32 %v4187, %v4206
          %v4227 = vmul.f32 %v4188, %v4206
          %v4228 = vmul.f32 %v4189, %v4206
          %v4229 = vmul.f32 %v4190, %v4206
          %v4230 = vmul.f32 %v4191, %v4206
          %v4231 = vmul.f32 %v4192, %v4206
          %v4232 = vmul.f32 %v4193, %v4206
          %v4233 = vmul.f32 %v4194, %v4206
          %v4234 = vmul.f32 %v4195, %v4206
          %v4235 = vmul.f32 %v4196, %v4206
          %v4236 = vmul.f32 %v4197, %v4206
          %v4237 = vmul.f32 %v4198, %v4206
          %v4238 = vmul.f32 %v4199, %v4206
          %v4239 = vmul.f32 %v4200, %v4206
          %v4240 = vld [vmem:[%s6] sm:$0x1]
          %v4242 = vlaneseq
          %v4243 = vshrl.u32 %v4242, 7
          %v4244 = vsub.s32 0, %v4243
          %v4245 = vrot.slane %v4240, %v4244
          %v4247 = vadd.f32 %v4208, %v4245
          %v4248 = vadd.f32 %v4209, %v4245
          %v4249 = vadd.f32 %v4210, %v4245
          %v4250 = vadd.f32 %v4211, %v4245
          %v4251 = vadd.f32 %v4212, %v4245
          %v4252 = vadd.f32 %v4213, %v4245
          %v4253 = vadd.f32 %v4214, %v4245
          %v4254 = vadd.f32 %v4215, %v4245
          %v4255 = vadd.f32 %v4216, %v4245
          %v4256 = vadd.f32 %v4217, %v4245
          %v4257 = vadd.f32 %v4218, %v4245
          %v4258 = vadd.f32 %v4219, %v4245
          %v4259 = vadd.f32 %v4220, %v4245
          %v4260 = vadd.f32 %v4221, %v4245
          %v4261 = vadd.f32 %v4222, %v4245
          %v4262 = vadd.f32 %v4223, %v4245
          %v4263 = vadd.f32 %v4224, %v4245
          %v4264 = vadd.f32 %v4225, %v4245
          %v4265 = vadd.f32 %v4226, %v4245
          %v4266 = vadd.f32 %v4227, %v4245
          %v4267 = vadd.f32 %v4228, %v4245
          %v4268 = vadd.f32 %v4229, %v4245
          %v4269 = vadd.f32 %v4230, %v4245
          %v4270 = vadd.f32 %v4231, %v4245
          %v4271 = vadd.f32 %v4232, %v4245
          %v4272 = vadd.f32 %v4233, %v4245
          %v4273 = vadd.f32 %v4234, %v4245
          %v4274 = vadd.f32 %v4235, %v4245
          %v4275 = vadd.f32 %v4236, %v4245
          %v4276 = vadd.f32 %v4237, %v4245
          %v4277 = vadd.f32 %v4238, %v4245
          %v4278 = vadd.f32 %v4239, %v4245
          %v4279 = vmax.f32 %v4247, 0.0
          %v4280 = vmax.f32 %v4248, 0.0
          %v4281 = vmax.f32 %v4249, 0.0
          %v4282 = vmax.f32 %v4250, 0.0
          %v4283 = vmax.f32 %v4251, 0.0
          %v4284 = vmax.f32 %v4252, 0.0
          %v4285 = vmax.f32 %v4253, 0.0
          %v4286 = vmax.f32 %v4254, 0.0
          %v4287 = vmax.f32 %v4255, 0.0
          %v4288 = vmax.f32 %v4256, 0.0
          %v4289 = vmax.f32 %v4257, 0.0
          %v4290 = vmax.f32 %v4258, 0.0
          %v4291 = vmax.f32 %v4259, 0.0
          %v4292 = vmax.f32 %v4260, 0.0
          %v4293 = vmax.f32 %v4261, 0.0
          %v4294 = vmax.f32 %v4262, 0.0
          %v4295 = vmax.f32 %v4263, 0.0
          %v4296 = vmax.f32 %v4264, 0.0
          %v4297 = vmax.f32 %v4265, 0.0
          %v4298 = vmax.f32 %v4266, 0.0
          %v4299 = vmax.f32 %v4267, 0.0
          %v4300 = vmax.f32 %v4268, 0.0
          %v4301 = vmax.f32 %v4269, 0.0
          %v4302 = vmax.f32 %v4270, 0.0
          %v4303 = vmax.f32 %v4271, 0.0
          %v4304 = vmax.f32 %v4272, 0.0
          %v4305 = vmax.f32 %v4273, 0.0
          %v4306 = vmax.f32 %v4274, 0.0
          %v4307 = vmax.f32 %v4275, 0.0
          %v4308 = vmax.f32 %v4276, 0.0
          %v4309 = vmax.f32 %v4277, 0.0
          %v4310 = vmax.f32 %v4278, 0.0
          %s4311 = scalar_lea.vmem [#allocation3], 40
          %4312 = vst [vmem:[%s4311 + $0x10] sm:$0xff] %v4279
          %4313 = vst [vmem:[%s4311 + $0x18] sm:$0xff] %v4280
          %4314 = vst [vmem:[%s4311 + $0x38] sm:$0xff] %v4281
          %4315 = vst [vmem:[%s4311 + $0x40] sm:$0xff] %v4282
          %4316 = vst [vmem:[%s4311 + $0x60] sm:$0xff] %v4283
          %4317 = vst [vmem:[%s4311 + $0x68] sm:$0xff] %v4284
          %4318 = vst [vmem:[%s4311 + $0x88] sm:$0xff] %v4285
          %4319 = vst [vmem:[%s4311 + $0x90] sm:$0xff] %v4286
          %4320 = vst [vmem:[%s4311 + $0xb0] sm:$0xff] %v4287
          %4321 = vst [vmem:[%s4311 + $0xb8] sm:$0xff] %v4288
          %4322 = vst [vmem:[%s4311 + $0xd8] sm:$0xff] %v4289
          %4323 = vst [vmem:[%s4311 + $0xe0] sm:$0xff] %v4290
          %4324 = vst [vmem:[%s4311 + $0x100] sm:$0xff] %v4291
          %4325 = vst [vmem:[%s4311 + $0x108] sm:$0xff] %v4292
          %4326 = vst [vmem:[%s4311 + $0x128] sm:$0xff] %v4293
          %4327 = vst [vmem:[%s4311 + $0x130] sm:$0xff] %v4294
          %4328 = vst [vmem:[%s4311 + $0x150] sm:$0xff] %v4295
          %4329 = vst [vmem:[%s4311 + $0x158] sm:$0xff] %v4296
          %4330 = vst [vmem:[%s4311 + $0x178] sm:$0xff] %v4297
          %4331 = vst [vmem:[%s4311 + $0x180] sm:$0xff] %v4298
          %4332 = vst [vmem:[%s4311 + $0x1a0] sm:$0xff] %v4299
          %4333 = vst [vmem:[%s4311 + $0x1a8] sm:$0xff] %v4300
          %4334 = vst [vmem:[%s4311 + $0x1c8] sm:$0xff] %v4301
          %4335 = vst [vmem:[%s4311 + $0x1d0] sm:$0xff] %v4302
          %4336 = vst [vmem:[%s4311 + $0x1f0] sm:$0xff] %v4303
          %4337 = vst [vmem:[%s4311 + $0x1f8] sm:$0xff] %v4304
          %4338 = vst [vmem:[%s4311 + $0x218] sm:$0xff] %v4305
          %4339 = vst [vmem:[%s4311 + $0x220] sm:$0xff] %v4306
          %4340 = vst [vmem:[%s4311 + $0x240] sm:$0xff] %v4307
          %4341 = vst [vmem:[%s4311 + $0x248] sm:$0xff] %v4308
          %4342 = vst [vmem:[%s4311 + $0x268] sm:$0xff] %v4309
          %4343 = vst [vmem:[%s4311 + $0x270] sm:$0xff] %v4310
        $region84: #{tpu_custom_call.1} parent=63 // pred_fallthru
          _
        %v4344 = vld [vmem:[#allocation3 + $0xf] sm:$0xff]
        %v4345 = vld [vmem:[#allocation3 + $0x17] sm:$0xff]
        %v4346 = vld [vmem:[#allocation3 + $0x37] sm:$0xff]
        %v4347 = vld [vmem:[#allocation3 + $0x3f] sm:$0xff]
        %v4348 = vld [vmem:[#allocation3 + $0x5f] sm:$0xff]
        %v4349 = vld [vmem:[#allocation3 + $0x67] sm:$0xff]
        %v4350 = vld [vmem:[#allocation3 + $0x87] sm:$0xff]
        %v4351 = vld [vmem:[#allocation3 + $0x8f] sm:$0xff]
        %v4352 = vld [vmem:[#allocation3 + $0xaf] sm:$0xff]
        %v4353 = vld [vmem:[#allocation3 + $0xb7] sm:$0xff]
        %v4354 = vld [vmem:[#allocation3 + $0xd7] sm:$0xff]
        %v4355 = vld [vmem:[#allocation3 + $0xdf] sm:$0xff]
        %v4356 = vld [vmem:[#allocation3 + $0xff] sm:$0xff]
        %v4357 = vld [vmem:[#allocation3 + $0x107] sm:$0xff]
        %v4358 = vld [vmem:[#allocation3 + $0x127] sm:$0xff]
        %v4359 = vld [vmem:[#allocation3 + $0x12f] sm:$0xff]
        %v4360 = vld [vmem:[#allocation3 + $0x14f] sm:$0xff]
        %v4361 = vld [vmem:[#allocation3 + $0x157] sm:$0xff]
        %v4362 = vld [vmem:[#allocation3 + $0x177] sm:$0xff]
        %v4363 = vld [vmem:[#allocation3 + $0x17f] sm:$0xff]
        %v4364 = vld [vmem:[#allocation3 + $0x19f] sm:$0xff]
        %v4365 = vld [vmem:[#allocation3 + $0x1a7] sm:$0xff]
        %v4366 = vld [vmem:[#allocation3 + $0x1c7] sm:$0xff]
        %v4367 = vld [vmem:[#allocation3 + $0x1cf] sm:$0xff]
        %v4368 = vld [vmem:[#allocation3 + $0x1ef] sm:$0xff]
        %v4369 = vld [vmem:[#allocation3 + $0x1f7] sm:$0xff]
        %v4370 = vld [vmem:[#allocation3 + $0x217] sm:$0xff]
        %v4371 = vld [vmem:[#allocation3 + $0x21f] sm:$0xff]
        %v4372 = vld [vmem:[#allocation3 + $0x23f] sm:$0xff]
        %v4373 = vld [vmem:[#allocation3 + $0x247] sm:$0xff]
        %v4374 = vld [vmem:[#allocation3 + $0x267] sm:$0xff]
        %v4375 = vld [vmem:[#allocation3 + $0x26f] sm:$0xff]
        %v4376 = vld [vmem:[#allocation11] sm:$0xff]
        %v4377 = vld [vmem:[#allocation11 + $0x8] sm:$0xff]
        %v4378 = vld [vmem:[#allocation11 + $0x10] sm:$0xff]
        %v4379 = vld [vmem:[#allocation11 + $0x18] sm:$0xff]
        %v4380 = vld [vmem:[#allocation11 + $0x20] sm:$0xff]
        %v4381 = vld [vmem:[#allocation11 + $0x28] sm:$0xff]
        %v4382 = vld [vmem:[#allocation11 + $0x30] sm:$0xff]
        %v4383 = vld [vmem:[#allocation11 + $0x38] sm:$0xff]
        %v4384 = vld [vmem:[#allocation11 + $0x40] sm:$0xff]
        %v4385 = vld [vmem:[#allocation11 + $0x48] sm:$0xff]
        %v4386 = vld [vmem:[#allocation11 + $0x50] sm:$0xff]
        %v4387 = vld [vmem:[#allocation11 + $0x58] sm:$0xff]
        %v4388 = vld [vmem:[#allocation11 + $0x60] sm:$0xff]
        %v4389 = vld [vmem:[#allocation11 + $0x68] sm:$0xff]
        %v4390 = vld [vmem:[#allocation11 + $0x70] sm:$0xff]
        %v4391 = vld [vmem:[#allocation11 + $0x78] sm:$0xff]
        %4392 = vmatprep.subr.mxu0 0.0
        %4393 = vmatpush1.msra.mxu0 %v4391
        %4394 = vmatprep.subr.mxu0 0.0
        %4395 = vmatpush1.msra.mxu0 %v4390
        %4396 = vmatprep.subr.mxu0 0.0
        %4397 = vmatpush1.msra.mxu0 %v4389
        %4398 = vmatprep.subr.mxu0 0.0
        %4399 = vmatpush1.msra.mxu0 %v4388
        %4400 = vmatprep.subr.mxu0 0.0
        %4401 = vmatpush1.msra.mxu0 %v4387
        %4402 = vmatprep.subr.mxu0 0.0
        %4403 = vmatpush1.msra.mxu0 %v4386
        %4404 = vmatprep.subr.mxu0 0.0
        %4405 = vmatpush1.msra.mxu0 %v4385
        %4406 = vmatprep.subr.mxu0 0.0
        %4407 = vmatpush1.msra.mxu0 %v4384
        %4408 = vmatprep.subr.mxu0 0.0
        %4409 = vmatpush1.msra.mxu0 %v4383
        %4410 = vmatprep.subr.mxu0 0.0
        %4411 = vmatpush1.msra.mxu0 %v4382
        %4412 = vmatprep.subr.mxu0 0.0
        %4413 = vmatpush1.msra.mxu0 %v4381
        %4414 = vmatprep.subr.mxu0 0.0
        %4415 = vmatpush1.msra.mxu0 %v4380
        %4416 = vmatprep.subr.mxu0 0.0
        %4417 = vmatpush1.msra.mxu0 %v4379
        %4418 = vmatprep.subr.mxu0 0.0
        %4419 = vmatpush1.msra.mxu0 %v4378
        %4420 = vmatprep.subr.mxu0 0.0
        %4421 = vmatpush1.msra.mxu0 %v4377
        %4422 = vmatprep.subr.mxu0 0.0
        %4423 = vmatpush1.msra.mxu0 %v4376
        %4424 = vmatprep.subr.mxu0 0.0
        %4425 = vmatpush2.msra.mxu0 0.0
        %4426 = vmatprep.subr.mxu0 0.0
        %4427 = vmatpush2.msra.mxu0 0.0
        %4428 = vmatprep.subr.mxu0 0.0
        %4429 = vmatpush2.msra.mxu0 0.0
        %4430 = vmatprep.subr.mxu0 0.0
        %4431 = vmatpush2.msra.mxu0 0.0
        %4432 = vmatprep.subr.mxu0 0.0
        %4433 = vmatpush2.msra.mxu0 0.0
        %4434 = vmatprep.subr.mxu0 0.0
        %4435 = vmatpush2.msra.mxu0 0.0
        %4436 = vmatprep.subr.mxu0 0.0
        %4437 = vmatpush2.msra.mxu0 0.0
        %4438 = vmatprep.subr.mxu0 0.0
        %4439 = vmatpush2.msra.mxu0 0.0
        %4440 = vmatprep.subr.mxu0 0.0
        %4441 = vmatpush2.msra.mxu0 0.0
        %4442 = vmatprep.subr.mxu0 0.0
        %4443 = vmatpush2.msra.mxu0 0.0
        %4444 = vmatprep.subr.mxu0 0.0
        %4445 = vmatpush2.msra.mxu0 0.0
        %4446 = vmatprep.subr.mxu0 0.0
        %4447 = vmatpush2.msra.mxu0 0.0
        %4448 = vmatprep.subr.mxu0 0.0
        %4449 = vmatpush2.msra.mxu0 0.0
        %4450 = vmatprep.subr.mxu0 0.0
        %4451 = vmatpush2.msra.mxu0 0.0
        %4452 = vmatprep.subr.mxu0 0.0
        %4453 = vmatpush2.msra.mxu0 0.0
        %4454 = vmatprep.subr.mxu0 0.0
        %4455 = vmatpush2.msra.mxu0 0.0
        %4456 = vmatprep.mubr.f32.mxu0 0.0
        %4457 = vmatmul.mubr.f32.gmra.mxu0 %v4344
        %v4458 = vpop.f32.mrf.mxu0
        %v4459 = vadd.f32 0.0, %v4458
        %v4460 = vpop.f32.mrf.mxu0
        %4461 = vmatprep.mubr.f32.mxu0 0.0
        %4462 = vmatmul.mubr.f32.gmra.mxu0 %v4345
        %v4463 = vpop.f32.mrf.mxu0
        %v4464 = vadd.f32 0.0, %v4463
        %v4465 = vpop.f32.mrf.mxu0
        %4466 = vmatprep.mubr.f32.mxu0 0.0
        %4467 = vmatmul.mubr.f32.gmra.mxu0 %v4346
        %v4468 = vpop.f32.mrf.mxu0
        %v4469 = vadd.f32 0.0, %v4468
        %v4470 = vpop.f32.mrf.mxu0
        %4471 = vmatprep.mubr.f32.mxu0 0.0
        %4472 = vmatmul.mubr.f32.gmra.mxu0 %v4347
        %v4473 = vpop.f32.mrf.mxu0
        %v4474 = vadd.f32 0.0, %v4473
        %v4475 = vpop.f32.mrf.mxu0
        %4476 = vmatprep.mubr.f32.mxu0 0.0
        %4477 = vmatmul.mubr.f32.gmra.mxu0 %v4348
        %v4478 = vpop.f32.mrf.mxu0
        %v4479 = vadd.f32 0.0, %v4478
        %v4480 = vpop.f32.mrf.mxu0
        %4481 = vmatprep.mubr.f32.mxu0 0.0
        %4482 = vmatmul.mubr.f32.gmra.mxu0 %v4349
        %v4483 = vpop.f32.mrf.mxu0
        %v4484 = vadd.f32 0.0, %v4483
        %v4485 = vpop.f32.mrf.mxu0
        %4486 = vmatprep.mubr.f32.mxu0 0.0
        %4487 = vmatmul.mubr.f32.gmra.mxu0 %v4350
        %v4488 = vpop.f32.mrf.mxu0
        %v4489 = vadd.f32 0.0, %v4488
        %v4490 = vpop.f32.mrf.mxu0
        %4491 = vmatprep.mubr.f32.mxu0 0.0
        %4492 = vmatmul.mubr.f32.gmra.mxu0 %v4351
        %v4493 = vpop.f32.mrf.mxu0
        %v4494 = vadd.f32 0.0, %v4493
        %v4495 = vpop.f32.mrf.mxu0
        %4496 = vmatprep.mubr.f32.mxu0 0.0
        %4497 = vmatmul.mubr.f32.gmra.mxu0 %v4352
        %v4498 = vpop.f32.mrf.mxu0
        %v4499 = vadd.f32 0.0, %v4498
        %v4500 = vpop.f32.mrf.mxu0
        %4501 = vmatprep.mubr.f32.mxu0 0.0
        %4502 = vmatmul.mubr.f32.gmra.mxu0 %v4353
        %v4503 = vpop.f32.mrf.mxu0
        %v4504 = vadd.f32 0.0, %v4503
        %v4505 = vpop.f32.mrf.mxu0
        %4506 = vmatprep.mubr.f32.mxu0 0.0
        %4507 = vmatmul.mubr.f32.gmra.mxu0 %v4354
        %v4508 = vpop.f32.mrf.mxu0
        %v4509 = vadd.f32 0.0, %v4508
        %v4510 = vpop.f32.mrf.mxu0
        %4511 = vmatprep.mubr.f32.mxu0 0.0
        %4512 = vmatmul.mubr.f32.gmra.mxu0 %v4355
        %v4513 = vpop.f32.mrf.mxu0
        %v4514 = vadd.f32 0.0, %v4513
        %v4515 = vpop.f32.mrf.mxu0
        %4516 = vmatprep.mubr.f32.mxu0 0.0
        %4517 = vmatmul.mubr.f32.gmra.mxu0 %v4356
        %v4518 = vpop.f32.mrf.mxu0
        %v4519 = vadd.f32 0.0, %v4518
        %v4520 = vpop.f32.mrf.mxu0
        %4521 = vmatprep.mubr.f32.mxu0 0.0
        %4522 = vmatmul.mubr.f32.gmra.mxu0 %v4357
        %v4523 = vpop.f32.mrf.mxu0
        %v4524 = vadd.f32 0.0, %v4523
        %v4525 = vpop.f32.mrf.mxu0
        %4526 = vmatprep.mubr.f32.mxu0 0.0
        %4527 = vmatmul.mubr.f32.gmra.mxu0 %v4358
        %v4528 = vpop.f32.mrf.mxu0
        %v4529 = vadd.f32 0.0, %v4528
        %v4530 = vpop.f32.mrf.mxu0
        %4531 = vmatprep.mubr.f32.mxu0 0.0
        %4532 = vmatmul.mubr.f32.gmra.mxu0 %v4359
        %v4533 = vpop.f32.mrf.mxu0
        %v4534 = vadd.f32 0.0, %v4533
        %v4535 = vpop.f32.mrf.mxu0
        %4536 = vmatprep.mubr.f32.mxu0 0.0
        %4537 = vmatmul.mubr.f32.gmra.mxu0 %v4360
        %v4538 = vpop.f32.mrf.mxu0
        %v4539 = vadd.f32 0.0, %v4538
        %v4540 = vpop.f32.mrf.mxu0
        %4541 = vmatprep.mubr.f32.mxu0 0.0
        %4542 = vmatmul.mubr.f32.gmra.mxu0 %v4361
        %v4543 = vpop.f32.mrf.mxu0
        %v4544 = vadd.f32 0.0, %v4543
        %v4545 = vpop.f32.mrf.mxu0
        %4546 = vmatprep.mubr.f32.mxu0 0.0
        %4547 = vmatmul.mubr.f32.gmra.mxu0 %v4362
        %v4548 = vpop.f32.mrf.mxu0
        %v4549 = vadd.f32 0.0, %v4548
        %v4550 = vpop.f32.mrf.mxu0
        %4551 = vmatprep.mubr.f32.mxu0 0.0
        %4552 = vmatmul.mubr.f32.gmra.mxu0 %v4363
        %v4553 = vpop.f32.mrf.mxu0
        %v4554 = vadd.f32 0.0, %v4553
        %v4555 = vpop.f32.mrf.mxu0
        %4556 = vmatprep.mubr.f32.mxu0 0.0
        %4557 = vmatmul.mubr.f32.gmra.mxu0 %v4364
        %v4558 = vpop.f32.mrf.mxu0
        %v4559 = vadd.f32 0.0, %v4558
        %v4560 = vpop.f32.mrf.mxu0
        %4561 = vmatprep.mubr.f32.mxu0 0.0
        %4562 = vmatmul.mubr.f32.gmra.mxu0 %v4365
        %v4563 = vpop.f32.mrf.mxu0
        %v4564 = vadd.f32 0.0, %v4563
        %v4565 = vpop.f32.mrf.mxu0
        %4566 = vmatprep.mubr.f32.mxu0 0.0
        %4567 = vmatmul.mubr.f32.gmra.mxu0 %v4366
        %v4568 = vpop.f32.mrf.mxu0
        %v4569 = vadd.f32 0.0, %v4568
        %v4570 = vpop.f32.mrf.mxu0
        %4571 = vmatprep.mubr.f32.mxu0 0.0
        %4572 = vmatmul.mubr.f32.gmra.mxu0 %v4367
        %v4573 = vpop.f32.mrf.mxu0
        %v4574 = vadd.f32 0.0, %v4573
        %v4575 = vpop.f32.mrf.mxu0
        %4576 = vmatprep.mubr.f32.mxu0 0.0
        %4577 = vmatmul.mubr.f32.gmra.mxu0 %v4368
        %v4578 = vpop.f32.mrf.mxu0
        %v4579 = vadd.f32 0.0, %v4578
        %v4580 = vpop.f32.mrf.mxu0
        %4581 = vmatprep.mubr.f32.mxu0 0.0
        %4582 = vmatmul.mubr.f32.gmra.mxu0 %v4369
        %v4583 = vpop.f32.mrf.mxu0
        %v4584 = vadd.f32 0.0, %v4583
        %v4585 = vpop.f32.mrf.mxu0
        %4586 = vmatprep.mubr.f32.mxu0 0.0
        %4587 = vmatmul.mubr.f32.gmra.mxu0 %v4370
        %v4588 = vpop.f32.mrf.mxu0
        %v4589 = vadd.f32 0.0, %v4588
        %v4590 = vpop.f32.mrf.mxu0
        %4591 = vmatprep.mubr.f32.mxu0 0.0
        %4592 = vmatmul.mubr.f32.gmra.mxu0 %v4371
        %v4593 = vpop.f32.mrf.mxu0
        %v4594 = vadd.f32 0.0, %v4593
        %v4595 = vpop.f32.mrf.mxu0
        %4596 = vmatprep.mubr.f32.mxu0 0.0
        %4597 = vmatmul.mubr.f32.gmra.mxu0 %v4372
        %v4598 = vpop.f32.mrf.mxu0
        %v4599 = vadd.f32 0.0, %v4598
        %v4600 = vpop.f32.mrf.mxu0
        %4601 = vmatprep.mubr.f32.mxu0 0.0
        %4602 = vmatmul.mubr.f32.gmra.mxu0 %v4373
        %v4603 = vpop.f32.mrf.mxu0
        %v4604 = vadd.f32 0.0, %v4603
        %v4605 = vpop.f32.mrf.mxu0
        %4606 = vmatprep.mubr.f32.mxu0 0.0
        %4607 = vmatmul.mubr.f32.gmra.mxu0 %v4374
        %v4608 = vpop.f32.mrf.mxu0
        %v4609 = vadd.f32 0.0, %v4608
        %v4610 = vpop.f32.mrf.mxu0
        %4611 = vmatprep.mubr.f32.mxu0 0.0
        %4612 = vmatmul.mubr.f32.gmra.mxu0 %v4375
        %v4613 = vpop.f32.mrf.mxu0
        %v4614 = vadd.f32 0.0, %v4613
        %v4615 = vpop.f32.mrf.mxu0
        %4616 = vdwg.mxu0
        %4617 = vst [vmem:[#allocation5] sm:$0xff] %v4459
        %4618 = vst [vmem:[#allocation5 + $0x8] sm:$0xff] %v4464
        %4619 = vst [vmem:[#allocation5 + $0x10] sm:$0xff] %v4469
        %4620 = vst [vmem:[#allocation5 + $0x18] sm:$0xff] %v4474
        %4621 = vst [vmem:[#allocation5 + $0x20] sm:$0xff] %v4479
        %4622 = vst [vmem:[#allocation5 + $0x28] sm:$0xff] %v4484
        %4623 = vst [vmem:[#allocation5 + $0x30] sm:$0xff] %v4489
        %4624 = vst [vmem:[#allocation5 + $0x38] sm:$0xff] %v4494
        %4625 = vst [vmem:[#allocation5 + $0x40] sm:$0xff] %v4499
        %4626 = vst [vmem:[#allocation5 + $0x48] sm:$0xff] %v4504
        %4627 = vst [vmem:[#allocation5 + $0x50] sm:$0xff] %v4509
        %4628 = vst [vmem:[#allocation5 + $0x58] sm:$0xff] %v4514
        %4629 = vst [vmem:[#allocation5 + $0x60] sm:$0xff] %v4519
        %4630 = vst [vmem:[#allocation5 + $0x68] sm:$0xff] %v4524
        %4631 = vst [vmem:[#allocation5 + $0x70] sm:$0xff] %v4529
        %4632 = vst [vmem:[#allocation5 + $0x78] sm:$0xff] %v4534
        %4633 = vst [vmem:[#allocation5 + $0x80] sm:$0xff] %v4539
        %4634 = vst [vmem:[#allocation5 + $0x88] sm:$0xff] %v4544
        %4635 = vst [vmem:[#allocation5 + $0x90] sm:$0xff] %v4549
        %4636 = vst [vmem:[#allocation5 + $0x98] sm:$0xff] %v4554
        %4637 = vst [vmem:[#allocation5 + $0xa0] sm:$0xff] %v4559
        %4638 = vst [vmem:[#allocation5 + $0xa8] sm:$0xff] %v4564
        %4639 = vst [vmem:[#allocation5 + $0xb0] sm:$0xff] %v4569
        %4640 = vst [vmem:[#allocation5 + $0xb8] sm:$0xff] %v4574
        %4641 = vst [vmem:[#allocation5 + $0xc0] sm:$0xff] %v4579
        %4642 = vst [vmem:[#allocation5 + $0xc8] sm:$0xff] %v4584
        %4643 = vst [vmem:[#allocation5 + $0xd0] sm:$0xff] %v4589
        %4644 = vst [vmem:[#allocation5 + $0xd8] sm:$0xff] %v4594
        %4645 = vst [vmem:[#allocation5 + $0xe0] sm:$0xff] %v4599
        %4646 = vst [vmem:[#allocation5 + $0xe8] sm:$0xff] %v4604
        %4647 = vst [vmem:[#allocation5 + $0xf0] sm:$0xff] %v4609
        %4648 = vst [vmem:[#allocation5 + $0xf8] sm:$0xff] %v4614
        %v4649 = vld [vmem:[#allocation3 + $0x10] sm:$0xff]
        %v4650 = vld [vmem:[#allocation3 + $0x18] sm:$0xff]
        %v4651 = vld [vmem:[#allocation3 + $0x38] sm:$0xff]
        %v4652 = vld [vmem:[#allocation3 + $0x40] sm:$0xff]
        %v4653 = vld [vmem:[#allocation3 + $0x60] sm:$0xff]
        %v4654 = vld [vmem:[#allocation3 + $0x68] sm:$0xff]
        %v4655 = vld [vmem:[#allocation3 + $0x88] sm:$0xff]
        %v4656 = vld [vmem:[#allocation3 + $0x90] sm:$0xff]
        %v4657 = vld [vmem:[#allocation3 + $0xb0] sm:$0xff]
        %v4658 = vld [vmem:[#allocation3 + $0xb8] sm:$0xff]
        %v4659 = vld [vmem:[#allocation3 + $0xd8] sm:$0xff]
        %v4660 = vld [vmem:[#allocation3 + $0xe0] sm:$0xff]
        %v4661 = vld [vmem:[#allocation3 + $0x100] sm:$0xff]
        %v4662 = vld [vmem:[#allocation3 + $0x108] sm:$0xff]
        %v4663 = vld [vmem:[#allocation3 + $0x128] sm:$0xff]
        %v4664 = vld [vmem:[#allocation3 + $0x130] sm:$0xff]
        %v4665 = vld [vmem:[#allocation3 + $0x150] sm:$0xff]
        %v4666 = vld [vmem:[#allocation3 + $0x158] sm:$0xff]
        %v4667 = vld [vmem:[#allocation3 + $0x178] sm:$0xff]
        %v4668 = vld [vmem:[#allocation3 + $0x180] sm:$0xff]
        %v4669 = vld [vmem:[#allocation3 + $0x1a0] sm:$0xff]
        %v4670 = vld [vmem:[#allocation3 + $0x1a8] sm:$0xff]
        %v4671 = vld [vmem:[#allocation3 + $0x1c8] sm:$0xff]
        %v4672 = vld [vmem:[#allocation3 + $0x1d0] sm:$0xff]
        %v4673 = vld [vmem:[#allocation3 + $0x1f0] sm:$0xff]
        %v4674 = vld [vmem:[#allocation3 + $0x1f8] sm:$0xff]
        %v4675 = vld [vmem:[#allocation3 + $0x218] sm:$0xff]
        %v4676 = vld [vmem:[#allocation3 + $0x220] sm:$0xff]
        %v4677 = vld [vmem:[#allocation3 + $0x240] sm:$0xff]
        %v4678 = vld [vmem:[#allocation3 + $0x248] sm:$0xff]
        %v4679 = vld [vmem:[#allocation3 + $0x268] sm:$0xff]
        %v4680 = vld [vmem:[#allocation3 + $0x270] sm:$0xff]
        %s4681 = scalar_lea.vmem [#allocation11], 128
        %v4682 = vld [vmem:[%s4681] sm:$0xff]
        %v4683 = vld [vmem:[%s4681 + $0x8] sm:$0xff]
        %v4684 = vld [vmem:[%s4681 + $0x10] sm:$0xff]
        %v4685 = vld [vmem:[%s4681 + $0x18] sm:$0xff]
        %v4686 = vld [vmem:[%s4681 + $0x20] sm:$0xff]
        %v4687 = vld [vmem:[%s4681 + $0x28] sm:$0xff]
        %v4688 = vld [vmem:[%s4681 + $0x30] sm:$0xff]
        %v4689 = vld [vmem:[%s4681 + $0x38] sm:$0xff]
        %v4690 = vld [vmem:[%s4681 + $0x40] sm:$0xff]
        %v4691 = vld [vmem:[%s4681 + $0x48] sm:$0xff]
        %v4692 = vld [vmem:[%s4681 + $0x50] sm:$0xff]
        %v4693 = vld [vmem:[%s4681 + $0x58] sm:$0xff]
        %v4694 = vld [vmem:[%s4681 + $0x60] sm:$0xff]
        %v4695 = vld [vmem:[%s4681 + $0x68] sm:$0xff]
        %v4696 = vld [vmem:[%s4681 + $0x70] sm:$0xff]
        %v4697 = vld [vmem:[%s4681 + $0x78] sm:$0xff]
        %4698 = vmatprep.subr.mxu0 0.0
        %4699 = vmatpush1.msra.mxu0 %v4697
        %4700 = vmatprep.subr.mxu0 0.0
        %4701 = vmatpush1.msra.mxu0 %v4696
        %4702 = vmatprep.subr.mxu0 0.0
        %4703 = vmatpush1.msra.mxu0 %v4695
        %4704 = vmatprep.subr.mxu0 0.0
        %4705 = vmatpush1.msra.mxu0 %v4694
        %4706 = vmatprep.subr.mxu0 0.0
        %4707 = vmatpush1.msra.mxu0 %v4693
        %4708 = vmatprep.subr.mxu0 0.0
        %4709 = vmatpush1.msra.mxu0 %v4692
        %4710 = vmatprep.subr.mxu0 0.0
        %4711 = vmatpush1.msra.mxu0 %v4691
        %4712 = vmatprep.subr.mxu0 0.0
        %4713 = vmatpush1.msra.mxu0 %v4690
        %4714 = vmatprep.subr.mxu0 0.0
        %4715 = vmatpush1.msra.mxu0 %v4689
        %4716 = vmatprep.subr.mxu0 0.0
        %4717 = vmatpush1.msra.mxu0 %v4688
        %4718 = vmatprep.subr.mxu0 0.0
        %4719 = vmatpush1.msra.mxu0 %v4687
        %4720 = vmatprep.subr.mxu0 0.0
        %4721 = vmatpush1.msra.mxu0 %v4686
        %4722 = vmatprep.subr.mxu0 0.0
        %4723 = vmatpush1.msra.mxu0 %v4685
        %4724 = vmatprep.subr.mxu0 0.0
        %4725 = vmatpush1.msra.mxu0 %v4684
        %4726 = vmatprep.subr.mxu0 0.0
        %4727 = vmatpush1.msra.mxu0 %v4683
        %4728 = vmatprep.subr.mxu0 0.0
        %4729 = vmatpush1.msra.mxu0 %v4682
        %4730 = vmatprep.subr.mxu0 0.0
        %4731 = vmatpush2.msra.mxu0 0.0
        %4732 = vmatprep.subr.mxu0 0.0
        %4733 = vmatpush2.msra.mxu0 0.0
        %4734 = vmatprep.subr.mxu0 0.0
        %4735 = vmatpush2.msra.mxu0 0.0
        %4736 = vmatprep.subr.mxu0 0.0
        %4737 = vmatpush2.msra.mxu0 0.0
        %4738 = vmatprep.subr.mxu0 0.0
        %4739 = vmatpush2.msra.mxu0 0.0
        %4740 = vmatprep.subr.mxu0 0.0
        %4741 = vmatpush2.msra.mxu0 0.0
        %4742 = vmatprep.subr.mxu0 0.0
        %4743 = vmatpush2.msra.mxu0 0.0
        %4744 = vmatprep.subr.mxu0 0.0
        %4745 = vmatpush2.msra.mxu0 0.0
        %4746 = vmatprep.subr.mxu0 0.0
        %4747 = vmatpush2.msra.mxu0 0.0
        %4748 = vmatprep.subr.mxu0 0.0
        %4749 = vmatpush2.msra.mxu0 0.0
        %4750 = vmatprep.subr.mxu0 0.0
        %4751 = vmatpush2.msra.mxu0 0.0
        %4752 = vmatprep.subr.mxu0 0.0
        %4753 = vmatpush2.msra.mxu0 0.0
        %4754 = vmatprep.subr.mxu0 0.0
        %4755 = vmatpush2.msra.mxu0 0.0
        %4756 = vmatprep.subr.mxu0 0.0
        %4757 = vmatpush2.msra.mxu0 0.0
        %4758 = vmatprep.subr.mxu0 0.0
        %4759 = vmatpush2.msra.mxu0 0.0
        %4760 = vmatprep.subr.mxu0 0.0
        %4761 = vmatpush2.msra.mxu0 0.0
        %4762 = vmatprep.mubr.f32.mxu0 0.0
        %4763 = vmatmul.mubr.f32.gmra.mxu0 %v4649
        %v4764 = vpop.f32.mrf.mxu0
        %v4765 = vadd.f32 0.0, %v4764
        %v4766 = vpop.f32.mrf.mxu0
        %4767 = vmatprep.mubr.f32.mxu0 0.0
        %4768 = vmatmul.mubr.f32.gmra.mxu0 %v4650
        %v4769 = vpop.f32.mrf.mxu0
        %v4770 = vadd.f32 0.0, %v4769
        %v4771 = vpop.f32.mrf.mxu0
        %4772 = vmatprep.mubr.f32.mxu0 0.0
        %4773 = vmatmul.mubr.f32.gmra.mxu0 %v4651
        %v4774 = vpop.f32.mrf.mxu0
        %v4775 = vadd.f32 0.0, %v4774
        %v4776 = vpop.f32.mrf.mxu0
        %4777 = vmatprep.mubr.f32.mxu0 0.0
        %4778 = vmatmul.mubr.f32.gmra.mxu0 %v4652
        %v4779 = vpop.f32.mrf.mxu0
        %v4780 = vadd.f32 0.0, %v4779
        %v4781 = vpop.f32.mrf.mxu0
        %4782 = vmatprep.mubr.f32.mxu0 0.0
        %4783 = vmatmul.mubr.f32.gmra.mxu0 %v4653
        %v4784 = vpop.f32.mrf.mxu0
        %v4785 = vadd.f32 0.0, %v4784
        %v4786 = vpop.f32.mrf.mxu0
        %4787 = vmatprep.mubr.f32.mxu0 0.0
        %4788 = vmatmul.mubr.f32.gmra.mxu0 %v4654
        %v4789 = vpop.f32.mrf.mxu0
        %v4790 = vadd.f32 0.0, %v4789
        %v4791 = vpop.f32.mrf.mxu0
        %4792 = vmatprep.mubr.f32.mxu0 0.0
        %4793 = vmatmul.mubr.f32.gmra.mxu0 %v4655
        %v4794 = vpop.f32.mrf.mxu0
        %v4795 = vadd.f32 0.0, %v4794
        %v4796 = vpop.f32.mrf.mxu0
        %4797 = vmatprep.mubr.f32.mxu0 0.0
        %4798 = vmatmul.mubr.f32.gmra.mxu0 %v4656
        %v4799 = vpop.f32.mrf.mxu0
        %v4800 = vadd.f32 0.0, %v4799
        %v4801 = vpop.f32.mrf.mxu0
        %4802 = vmatprep.mubr.f32.mxu0 0.0
        %4803 = vmatmul.mubr.f32.gmra.mxu0 %v4657
        %v4804 = vpop.f32.mrf.mxu0
        %v4805 = vadd.f32 0.0, %v4804
        %v4806 = vpop.f32.mrf.mxu0
        %4807 = vmatprep.mubr.f32.mxu0 0.0
        %4808 = vmatmul.mubr.f32.gmra.mxu0 %v4658
        %v4809 = vpop.f32.mrf.mxu0
        %v4810 = vadd.f32 0.0, %v4809
        %v4811 = vpop.f32.mrf.mxu0
        %4812 = vmatprep.mubr.f32.mxu0 0.0
        %4813 = vmatmul.mubr.f32.gmra.mxu0 %v4659
        %v4814 = vpop.f32.mrf.mxu0
        %v4815 = vadd.f32 0.0, %v4814
        %v4816 = vpop.f32.mrf.mxu0
        %4817 = vmatprep.mubr.f32.mxu0 0.0
        %4818 = vmatmul.mubr.f32.gmra.mxu0 %v4660
        %v4819 = vpop.f32.mrf.mxu0
        %v4820 = vadd.f32 0.0, %v4819
        %v4821 = vpop.f32.mrf.mxu0
        %4822 = vmatprep.mubr.f32.mxu0 0.0
        %4823 = vmatmul.mubr.f32.gmra.mxu0 %v4661
        %v4824 = vpop.f32.mrf.mxu0
        %v4825 = vadd.f32 0.0, %v4824
        %v4826 = vpop.f32.mrf.mxu0
        %4827 = vmatprep.mubr.f32.mxu0 0.0
        %4828 = vmatmul.mubr.f32.gmra.mxu0 %v4662
        %v4829 = vpop.f32.mrf.mxu0
        %v4830 = vadd.f32 0.0, %v4829
        %v4831 = vpop.f32.mrf.mxu0
        %4832 = vmatprep.mubr.f32.mxu0 0.0
        %4833 = vmatmul.mubr.f32.gmra.mxu0 %v4663
        %v4834 = vpop.f32.mrf.mxu0
        %v4835 = vadd.f32 0.0, %v4834
        %v4836 = vpop.f32.mrf.mxu0
        %4837 = vmatprep.mubr.f32.mxu0 0.0
        %4838 = vmatmul.mubr.f32.gmra.mxu0 %v4664
        %v4839 = vpop.f32.mrf.mxu0
        %v4840 = vadd.f32 0.0, %v4839
        %v4841 = vpop.f32.mrf.mxu0
        %4842 = vmatprep.mubr.f32.mxu0 0.0
        %4843 = vmatmul.mubr.f32.gmra.mxu0 %v4665
        %v4844 = vpop.f32.mrf.mxu0
        %v4845 = vadd.f32 0.0, %v4844
        %v4846 = vpop.f32.mrf.mxu0
        %4847 = vmatprep.mubr.f32.mxu0 0.0
        %4848 = vmatmul.mubr.f32.gmra.mxu0 %v4666
        %v4849 = vpop.f32.mrf.mxu0
        %v4850 = vadd.f32 0.0, %v4849
        %v4851 = vpop.f32.mrf.mxu0
        %4852 = vmatprep.mubr.f32.mxu0 0.0
        %4853 = vmatmul.mubr.f32.gmra.mxu0 %v4667
        %v4854 = vpop.f32.mrf.mxu0
        %v4855 = vadd.f32 0.0, %v4854
        %v4856 = vpop.f32.mrf.mxu0
        %4857 = vmatprep.mubr.f32.mxu0 0.0
        %4858 = vmatmul.mubr.f32.gmra.mxu0 %v4668
        %v4859 = vpop.f32.mrf.mxu0
        %v4860 = vadd.f32 0.0, %v4859
        %v4861 = vpop.f32.mrf.mxu0
        %4862 = vmatprep.mubr.f32.mxu0 0.0
        %4863 = vmatmul.mubr.f32.gmra.mxu0 %v4669
        %v4864 = vpop.f32.mrf.mxu0
        %v4865 = vadd.f32 0.0, %v4864
        %v4866 = vpop.f32.mrf.mxu0
        %4867 = vmatprep.mubr.f32.mxu0 0.0
        %4868 = vmatmul.mubr.f32.gmra.mxu0 %v4670
        %v4869 = vpop.f32.mrf.mxu0
        %v4870 = vadd.f32 0.0, %v4869
        %v4871 = vpop.f32.mrf.mxu0
        %4872 = vmatprep.mubr.f32.mxu0 0.0
        %4873 = vmatmul.mubr.f32.gmra.mxu0 %v4671
        %v4874 = vpop.f32.mrf.mxu0
        %v4875 = vadd.f32 0.0, %v4874
        %v4876 = vpop.f32.mrf.mxu0
        %4877 = vmatprep.mubr.f32.mxu0 0.0
        %4878 = vmatmul.mubr.f32.gmra.mxu0 %v4672
        %v4879 = vpop.f32.mrf.mxu0
        %v4880 = vadd.f32 0.0, %v4879
        %v4881 = vpop.f32.mrf.mxu0
        %4882 = vmatprep.mubr.f32.mxu0 0.0
        %4883 = vmatmul.mubr.f32.gmra.mxu0 %v4673
        %v4884 = vpop.f32.mrf.mxu0
        %v4885 = vadd.f32 0.0, %v4884
        %v4886 = vpop.f32.mrf.mxu0
        %4887 = vmatprep.mubr.f32.mxu0 0.0
        %4888 = vmatmul.mubr.f32.gmra.mxu0 %v4674
        %v4889 = vpop.f32.mrf.mxu0
        %v4890 = vadd.f32 0.0, %v4889
        %v4891 = vpop.f32.mrf.mxu0
        %4892 = vmatprep.mubr.f32.mxu0 0.0
        %4893 = vmatmul.mubr.f32.gmra.mxu0 %v4675
        %v4894 = vpop.f32.mrf.mxu0
        %v4895 = vadd.f32 0.0, %v4894
        %v4896 = vpop.f32.mrf.mxu0
        %4897 = vmatprep.mubr.f32.mxu0 0.0
        %4898 = vmatmul.mubr.f32.gmra.mxu0 %v4676
        %v4899 = vpop.f32.mrf.mxu0
        %v4900 = vadd.f32 0.0, %v4899
        %v4901 = vpop.f32.mrf.mxu0
        %4902 = vmatprep.mubr.f32.mxu0 0.0
        %4903 = vmatmul.mubr.f32.gmra.mxu0 %v4677
        %v4904 = vpop.f32.mrf.mxu0
        %v4905 = vadd.f32 0.0, %v4904
        %v4906 = vpop.f32.mrf.mxu0
        %4907 = vmatprep.mubr.f32.mxu0 0.0
        %4908 = vmatmul.mubr.f32.gmra.mxu0 %v4678
        %v4909 = vpop.f32.mrf.mxu0
        %v4910 = vadd.f32 0.0, %v4909
        %v4911 = vpop.f32.mrf.mxu0
        %4912 = vmatprep.mubr.f32.mxu0 0.0
        %4913 = vmatmul.mubr.f32.gmra.mxu0 %v4679
        %v4914 = vpop.f32.mrf.mxu0
        %v4915 = vadd.f32 0.0, %v4914
        %v4916 = vpop.f32.mrf.mxu0
        %4917 = vmatprep.mubr.f32.mxu0 0.0
        %4918 = vmatmul.mubr.f32.gmra.mxu0 %v4680
        %v4919 = vpop.f32.mrf.mxu0
        %v4920 = vadd.f32 0.0, %v4919
        %v4921 = vpop.f32.mrf.mxu0
        %4922 = vdwg.mxu0
        %v4923 = vld [vmem:[#allocation5] sm:$0xff]
        %v4924 = vld [vmem:[#allocation5 + $0x8] sm:$0xff]
        %v4925 = vld [vmem:[#allocation5 + $0x10] sm:$0xff]
        %v4926 = vld [vmem:[#allocation5 + $0x18] sm:$0xff]
        %v4927 = vld [vmem:[#allocation5 + $0x20] sm:$0xff]
        %v4928 = vld [vmem:[#allocation5 + $0x28] sm:$0xff]
        %v4929 = vld [vmem:[#allocation5 + $0x30] sm:$0xff]
        %v4930 = vld [vmem:[#allocation5 + $0x38] sm:$0xff]
        %v4931 = vld [vmem:[#allocation5 + $0x40] sm:$0xff]
        %v4932 = vld [vmem:[#allocation5 + $0x48] sm:$0xff]
        %v4933 = vld [vmem:[#allocation5 + $0x50] sm:$0xff]
        %v4934 = vld [vmem:[#allocation5 + $0x58] sm:$0xff]
        %v4935 = vld [vmem:[#allocation5 + $0x60] sm:$0xff]
        %v4936 = vld [vmem:[#allocation5 + $0x68] sm:$0xff]
        %v4937 = vld [vmem:[#allocation5 + $0x70] sm:$0xff]
        %v4938 = vld [vmem:[#allocation5 + $0x78] sm:$0xff]
        %v4939 = vld [vmem:[#allocation5 + $0x80] sm:$0xff]
        %v4940 = vld [vmem:[#allocation5 + $0x88] sm:$0xff]
        %v4941 = vld [vmem:[#allocation5 + $0x90] sm:$0xff]
        %v4942 = vld [vmem:[#allocation5 + $0x98] sm:$0xff]
        %v4943 = vld [vmem:[#allocation5 + $0xa0] sm:$0xff]
        %v4944 = vld [vmem:[#allocation5 + $0xa8] sm:$0xff]
        %v4945 = vld [vmem:[#allocation5 + $0xb0] sm:$0xff]
        %v4946 = vld [vmem:[#allocation5 + $0xb8] sm:$0xff]
        %v4947 = vld [vmem:[#allocation5 + $0xc0] sm:$0xff]
        %v4948 = vld [vmem:[#allocation5 + $0xc8] sm:$0xff]
        %v4949 = vld [vmem:[#allocation5 + $0xd0] sm:$0xff]
        %v4950 = vld [vmem:[#allocation5 + $0xd8] sm:$0xff]
        %v4951 = vld [vmem:[#allocation5 + $0xe0] sm:$0xff]
        %v4952 = vld [vmem:[#allocation5 + $0xe8] sm:$0xff]
        %v4953 = vld [vmem:[#allocation5 + $0xf0] sm:$0xff]
        %v4954 = vld [vmem:[#allocation5 + $0xf8] sm:$0xff]
        %v4955 = vadd.f32 %v4923, %v4765
        %v4956 = vadd.f32 %v4924, %v4770
        %v4957 = vadd.f32 %v4925, %v4775
        %v4958 = vadd.f32 %v4926, %v4780
        %v4959 = vadd.f32 %v4927, %v4785
        %v4960 = vadd.f32 %v4928, %v4790
        %v4961 = vadd.f32 %v4929, %v4795
        %v4962 = vadd.f32 %v4930, %v4800
        %v4963 = vadd.f32 %v4931, %v4805
        %v4964 = vadd.f32 %v4932, %v4810
        %v4965 = vadd.f32 %v4933, %v4815
        %v4966 = vadd.f32 %v4934, %v4820
        %v4967 = vadd.f32 %v4935, %v4825
        %v4968 = vadd.f32 %v4936, %v4830
        %v4969 = vadd.f32 %v4937, %v4835
        %v4970 = vadd.f32 %v4938, %v4840
        %v4971 = vadd.f32 %v4939, %v4845
        %v4972 = vadd.f32 %v4940, %v4850
        %v4973 = vadd.f32 %v4941, %v4855
        %v4974 = vadd.f32 %v4942, %v4860
        %v4975 = vadd.f32 %v4943, %v4865
        %v4976 = vadd.f32 %v4944, %v4870
        %v4977 = vadd.f32 %v4945, %v4875
        %v4978 = vadd.f32 %v4946, %v4880
        %v4979 = vadd.f32 %v4947, %v4885
        %v4980 = vadd.f32 %v4948, %v4890
        %v4981 = vadd.f32 %v4949, %v4895
        %v4982 = vadd.f32 %v4950, %v4900
        %v4983 = vadd.f32 %v4951, %v4905
        %v4984 = vadd.f32 %v4952, %v4910
        %v4985 = vadd.f32 %v4953, %v4915
        %v4986 = vadd.f32 %v4954, %v4920
        %4987 = vst [vmem:[#allocation5] sm:$0xff] %v4955
        %4988 = vst [vmem:[#allocation5 + $0x8] sm:$0xff] %v4956
        %4989 = vst [vmem:[#allocation5 + $0x10] sm:$0xff] %v4957
        %4990 = vst [vmem:[#allocation5 + $0x18] sm:$0xff] %v4958
        %4991 = vst [vmem:[#allocation5 + $0x20] sm:$0xff] %v4959
        %4992 = vst [vmem:[#allocation5 + $0x28] sm:$0xff] %v4960
        %4993 = vst [vmem:[#allocation5 + $0x30] sm:$0xff] %v4961
        %4994 = vst [vmem:[#allocation5 + $0x38] sm:$0xff] %v4962
        %4995 = vst [vmem:[#allocation5 + $0x40] sm:$0xff] %v4963
        %4996 = vst [vmem:[#allocation5 + $0x48] sm:$0xff] %v4964
        %4997 = vst [vmem:[#allocation5 + $0x50] sm:$0xff] %v4965
        %4998 = vst [vmem:[#allocation5 + $0x58] sm:$0xff] %v4966
        %4999 = vst [vmem:[#allocation5 + $0x60] sm:$0xff] %v4967
        %5000 = vst [vmem:[#allocation5 + $0x68] sm:$0xff] %v4968
        %5001 = vst [vmem:[#allocation5 + $0x70] sm:$0xff] %v4969
        %5002 = vst [vmem:[#allocation5 + $0x78] sm:$0xff] %v4970
        %5003 = vst [vmem:[#allocation5 + $0x80] sm:$0xff] %v4971
        %5004 = vst [vmem:[#allocation5 + $0x88] sm:$0xff] %v4972
        %5005 = vst [vmem:[#allocation5 + $0x90] sm:$0xff] %v4973
        %5006 = vst [vmem:[#allocation5 + $0x98] sm:$0xff] %v4974
        %5007 = vst [vmem:[#allocation5 + $0xa0] sm:$0xff] %v4975
        %5008 = vst [vmem:[#allocation5 + $0xa8] sm:$0xff] %v4976
        %5009 = vst [vmem:[#allocation5 + $0xb0] sm:$0xff] %v4977
        %5010 = vst [vmem:[#allocation5 + $0xb8] sm:$0xff] %v4978
        %5011 = vst [vmem:[#allocation5 + $0xc0] sm:$0xff] %v4979
        %5012 = vst [vmem:[#allocation5 + $0xc8] sm:$0xff] %v4980
        %5013 = vst [vmem:[#allocation5 + $0xd0] sm:$0xff] %v4981
        %5014 = vst [vmem:[#allocation5 + $0xd8] sm:$0xff] %v4982
        %5015 = vst [vmem:[#allocation5 + $0xe0] sm:$0xff] %v4983
        %5016 = vst [vmem:[#allocation5 + $0xe8] sm:$0xff] %v4984
        %5017 = vst [vmem:[#allocation5 + $0xf0] sm:$0xff] %v4985
        %5018 = vst [vmem:[#allocation5 + $0xf8] sm:$0xff] %v4986
        %v5019 = vld [vmem:[#allocation3 + $0x11] sm:$0xff]
        %v5020 = vld [vmem:[#allocation3 + $0x19] sm:$0xff]
        %v5021 = vld [vmem:[#allocation3 + $0x39] sm:$0xff]
        %v5022 = vld [vmem:[#allocation3 + $0x41] sm:$0xff]
        %v5023 = vld [vmem:[#allocation3 + $0x61] sm:$0xff]
        %v5024 = vld [vmem:[#allocation3 + $0x69] sm:$0xff]
        %v5025 = vld [vmem:[#allocation3 + $0x89] sm:$0xff]
        %v5026 = vld [vmem:[#allocation3 + $0x91] sm:$0xff]
        %v5027 = vld [vmem:[#allocation3 + $0xb1] sm:$0xff]
        %v5028 = vld [vmem:[#allocation3 + $0xb9] sm:$0xff]
        %v5029 = vld [vmem:[#allocation3 + $0xd9] sm:$0xff]
        %v5030 = vld [vmem:[#allocation3 + $0xe1] sm:$0xff]
        %v5031 = vld [vmem:[#allocation3 + $0x101] sm:$0xff]
        %v5032 = vld [vmem:[#allocation3 + $0x109] sm:$0xff]
        %v5033 = vld [vmem:[#allocation3 + $0x129] sm:$0xff]
        %v5034 = vld [vmem:[#allocation3 + $0x131] sm:$0xff]
        %v5035 = vld [vmem:[#allocation3 + $0x151] sm:$0xff]
        %v5036 = vld [vmem:[#allocation3 + $0x159] sm:$0xff]
        %v5037 = vld [vmem:[#allocation3 + $0x179] sm:$0xff]
        %v5038 = vld [vmem:[#allocation3 + $0x181] sm:$0xff]
        %v5039 = vld [vmem:[#allocation3 + $0x1a1] sm:$0xff]
        %v5040 = vld [vmem:[#allocation3 + $0x1a9] sm:$0xff]
        %v5041 = vld [vmem:[#allocation3 + $0x1c9] sm:$0xff]
        %v5042 = vld [vmem:[#allocation3 + $0x1d1] sm:$0xff]
        %v5043 = vld [vmem:[#allocation3 + $0x1f1] sm:$0xff]
        %v5044 = vld [vmem:[#allocation3 + $0x1f9] sm:$0xff]
        %v5045 = vld [vmem:[#allocation3 + $0x219] sm:$0xff]
        %v5046 = vld [vmem:[#allocation3 + $0x221] sm:$0xff]
        %v5047 = vld [vmem:[#allocation3 + $0x241] sm:$0xff]
        %v5048 = vld [vmem:[#allocation3 + $0x249] sm:$0xff]
        %v5049 = vld [vmem:[#allocation3 + $0x269] sm:$0xff]
        %v5050 = vld [vmem:[#allocation3 + $0x271] sm:$0xff]
        %s5051 = scalar_lea.vmem [#allocation11], 256
        %v5052 = vld [vmem:[%s5051] sm:$0xff]
        %v5053 = vld [vmem:[%s5051 + $0x8] sm:$0xff]
        %v5054 = vld [vmem:[%s5051 + $0x10] sm:$0xff]
        %v5055 = vld [vmem:[%s5051 + $0x18] sm:$0xff]
        %v5056 = vld [vmem:[%s5051 + $0x20] sm:$0xff]
        %v5057 = vld [vmem:[%s5051 + $0x28] sm:$0xff]
        %v5058 = vld [vmem:[%s5051 + $0x30] sm:$0xff]
        %v5059 = vld [vmem:[%s5051 + $0x38] sm:$0xff]
        %v5060 = vld [vmem:[%s5051 + $0x40] sm:$0xff]
        %v5061 = vld [vmem:[%s5051 + $0x48] sm:$0xff]
        %v5062 = vld [vmem:[%s5051 + $0x50] sm:$0xff]
        %v5063 = vld [vmem:[%s5051 + $0x58] sm:$0xff]
        %v5064 = vld [vmem:[%s5051 + $0x60] sm:$0xff]
        %v5065 = vld [vmem:[%s5051 + $0x68] sm:$0xff]
        %v5066 = vld [vmem:[%s5051 + $0x70] sm:$0xff]
        %v5067 = vld [vmem:[%s5051 + $0x78] sm:$0xff]
        %5068 = vmatprep.subr.mxu0 0.0
        %5069 = vmatpush1.msra.mxu0 %v5067
        %5070 = vmatprep.subr.mxu0 0.0
        %5071 = vmatpush1.msra.mxu0 %v5066
        %5072 = vmatprep.subr.mxu0 0.0
        %5073 = vmatpush1.msra.mxu0 %v5065
        %5074 = vmatprep.subr.mxu0 0.0
        %5075 = vmatpush1.msra.mxu0 %v5064
        %5076 = vmatprep.subr.mxu0 0.0
        %5077 = vmatpush1.msra.mxu0 %v5063
        %5078 = vmatprep.subr.mxu0 0.0
        %5079 = vmatpush1.msra.mxu0 %v5062
        %5080 = vmatprep.subr.mxu0 0.0
        %5081 = vmatpush1.msra.mxu0 %v5061
        %5082 = vmatprep.subr.mxu0 0.0
        %5083 = vmatpush1.msra.mxu0 %v5060
        %5084 = vmatprep.subr.mxu0 0.0
        %5085 = vmatpush1.msra.mxu0 %v5059
        %5086 = vmatprep.subr.mxu0 0.0
        %5087 = vmatpush1.msra.mxu0 %v5058
        %5088 = vmatprep.subr.mxu0 0.0
        %5089 = vmatpush1.msra.mxu0 %v5057
        %5090 = vmatprep.subr.mxu0 0.0
        %5091 = vmatpush1.msra.mxu0 %v5056
        %5092 = vmatprep.subr.mxu0 0.0
        %5093 = vmatpush1.msra.mxu0 %v5055
        %5094 = vmatprep.subr.mxu0 0.0
        %5095 = vmatpush1.msra.mxu0 %v5054
        %5096 = vmatprep.subr.mxu0 0.0
        %5097 = vmatpush1.msra.mxu0 %v5053
        %5098 = vmatprep.subr.mxu0 0.0
        %5099 = vmatpush1.msra.mxu0 %v5052
        %5100 = vmatprep.subr.mxu0 0.0
        %5101 = vmatpush2.msra.mxu0 0.0
        %5102 = vmatprep.subr.mxu0 0.0
        %5103 = vmatpush2.msra.mxu0 0.0
        %5104 = vmatprep.subr.mxu0 0.0
        %5105 = vmatpush2.msra.mxu0 0.0
        %5106 = vmatprep.subr.mxu0 0.0
        %5107 = vmatpush2.msra.mxu0 0.0
        %5108 = vmatprep.subr.mxu0 0.0
        %5109 = vmatpush2.msra.mxu0 0.0
        %5110 = vmatprep.subr.mxu0 0.0
        %5111 = vmatpush2.msra.mxu0 0.0
        %5112 = vmatprep.subr.mxu0 0.0
        %5113 = vmatpush2.msra.mxu0 0.0
        %5114 = vmatprep.subr.mxu0 0.0
        %5115 = vmatpush2.msra.mxu0 0.0
        %5116 = vmatprep.subr.mxu0 0.0
        %5117 = vmatpush2.msra.mxu0 0.0
        %5118 = vmatprep.subr.mxu0 0.0
        %5119 = vmatpush2.msra.mxu0 0.0
        %5120 = vmatprep.subr.mxu0 0.0
        %5121 = vmatpush2.msra.mxu0 0.0
        %5122 = vmatprep.subr.mxu0 0.0
        %5123 = vmatpush2.msra.mxu0 0.0
        %5124 = vmatprep.subr.mxu0 0.0
        %5125 = vmatpush2.msra.mxu0 0.0
        %5126 = vmatprep.subr.mxu0 0.0
        %5127 = vmatpush2.msra.mxu0 0.0
        %5128 = vmatprep.subr.mxu0 0.0
        %5129 = vmatpush2.msra.mxu0 0.0
        %5130 = vmatprep.subr.mxu0 0.0
        %5131 = vmatpush2.msra.mxu0 0.0
        %5132 = vmatprep.mubr.f32.mxu0 0.0
        %5133 = vmatmul.mubr.f32.gmra.mxu0 %v5019
        %v5134 = vpop.f32.mrf.mxu0
        %v5135 = vadd.f32 0.0, %v5134
        %v5136 = vpop.f32.mrf.mxu0
        %5137 = vmatprep.mubr.f32.mxu0 0.0
        %5138 = vmatmul.mubr.f32.gmra.mxu0 %v5020
        %v5139 = vpop.f32.mrf.mxu0
        %v5140 = vadd.f32 0.0, %v5139
        %v5141 = vpop.f32.mrf.mxu0
        %5142 = vmatprep.mubr.f32.mxu0 0.0
        %5143 = vmatmul.mubr.f32.gmra.mxu0 %v5021
        %v5144 = vpop.f32.mrf.mxu0
        %v5145 = vadd.f32 0.0, %v5144
        %v5146 = vpop.f32.mrf.mxu0
        %5147 = vmatprep.mubr.f32.mxu0 0.0
        %5148 = vmatmul.mubr.f32.gmra.mxu0 %v5022
        %v5149 = vpop.f32.mrf.mxu0
        %v5150 = vadd.f32 0.0, %v5149
        %v5151 = vpop.f32.mrf.mxu0
        %5152 = vmatprep.mubr.f32.mxu0 0.0
        %5153 = vmatmul.mubr.f32.gmra.mxu0 %v5023
        %v5154 = vpop.f32.mrf.mxu0
        %v5155 = vadd.f32 0.0, %v5154
        %v5156 = vpop.f32.mrf.mxu0
        %5157 = vmatprep.mubr.f32.mxu0 0.0
        %5158 = vmatmul.mubr.f32.gmra.mxu0 %v5024
        %v5159 = vpop.f32.mrf.mxu0
        %v5160 = vadd.f32 0.0, %v5159
        %v5161 = vpop.f32.mrf.mxu0
        %5162 = vmatprep.mubr.f32.mxu0 0.0
        %5163 = vmatmul.mubr.f32.gmra.mxu0 %v5025
        %v5164 = vpop.f32.mrf.mxu0
        %v5165 = vadd.f32 0.0, %v5164
        %v5166 = vpop.f32.mrf.mxu0
        %5167 = vmatprep.mubr.f32.mxu0 0.0
        %5168 = vmatmul.mubr.f32.gmra.mxu0 %v5026
        %v5169 = vpop.f32.mrf.mxu0
        %v5170 = vadd.f32 0.0, %v5169
        %v5171 = vpop.f32.mrf.mxu0
        %5172 = vmatprep.mubr.f32.mxu0 0.0
        %5173 = vmatmul.mubr.f32.gmra.mxu0 %v5027
        %v5174 = vpop.f32.mrf.mxu0
        %v5175 = vadd.f32 0.0, %v5174
        %v5176 = vpop.f32.mrf.mxu0
        %5177 = vmatprep.mubr.f32.mxu0 0.0
        %5178 = vmatmul.mubr.f32.gmra.mxu0 %v5028
        %v5179 = vpop.f32.mrf.mxu0
        %v5180 = vadd.f32 0.0, %v5179
        %v5181 = vpop.f32.mrf.mxu0
        %5182 = vmatprep.mubr.f32.mxu0 0.0
        %5183 = vmatmul.mubr.f32.gmra.mxu0 %v5029
        %v5184 = vpop.f32.mrf.mxu0
        %v5185 = vadd.f32 0.0, %v5184
        %v5186 = vpop.f32.mrf.mxu0
        %5187 = vmatprep.mubr.f32.mxu0 0.0
        %5188 = vmatmul.mubr.f32.gmra.mxu0 %v5030
        %v5189 = vpop.f32.mrf.mxu0
        %v5190 = vadd.f32 0.0, %v5189
        %v5191 = vpop.f32.mrf.mxu0
        %5192 = vmatprep.mubr.f32.mxu0 0.0
        %5193 = vmatmul.mubr.f32.gmra.mxu0 %v5031
        %v5194 = vpop.f32.mrf.mxu0
        %v5195 = vadd.f32 0.0, %v5194
        %v5196 = vpop.f32.mrf.mxu0
        %5197 = vmatprep.mubr.f32.mxu0 0.0
        %5198 = vmatmul.mubr.f32.gmra.mxu0 %v5032
        %v5199 = vpop.f32.mrf.mxu0
        %v5200 = vadd.f32 0.0, %v5199
        %v5201 = vpop.f32.mrf.mxu0
        %5202 = vmatprep.mubr.f32.mxu0 0.0
        %5203 = vmatmul.mubr.f32.gmra.mxu0 %v5033
        %v5204 = vpop.f32.mrf.mxu0
        %v5205 = vadd.f32 0.0, %v5204
        %v5206 = vpop.f32.mrf.mxu0
        %5207 = vmatprep.mubr.f32.mxu0 0.0
        %5208 = vmatmul.mubr.f32.gmra.mxu0 %v5034
        %v5209 = vpop.f32.mrf.mxu0
        %v5210 = vadd.f32 0.0, %v5209
        %v5211 = vpop.f32.mrf.mxu0
        %5212 = vmatprep.mubr.f32.mxu0 0.0
        %5213 = vmatmul.mubr.f32.gmra.mxu0 %v5035
        %v5214 = vpop.f32.mrf.mxu0
        %v5215 = vadd.f32 0.0, %v5214
        %v5216 = vpop.f32.mrf.mxu0
        %5217 = vmatprep.mubr.f32.mxu0 0.0
        %5218 = vmatmul.mubr.f32.gmra.mxu0 %v5036
        %v5219 = vpop.f32.mrf.mxu0
        %v5220 = vadd.f32 0.0, %v5219
        %v5221 = vpop.f32.mrf.mxu0
        %5222 = vmatprep.mubr.f32.mxu0 0.0
        %5223 = vmatmul.mubr.f32.gmra.mxu0 %v5037
        %v5224 = vpop.f32.mrf.mxu0
        %v5225 = vadd.f32 0.0, %v5224
        %v5226 = vpop.f32.mrf.mxu0
        %5227 = vmatprep.mubr.f32.mxu0 0.0
        %5228 = vmatmul.mubr.f32.gmra.mxu0 %v5038
        %v5229 = vpop.f32.mrf.mxu0
        %v5230 = vadd.f32 0.0, %v5229
        %v5231 = vpop.f32.mrf.mxu0
        %5232 = vmatprep.mubr.f32.mxu0 0.0
        %5233 = vmatmul.mubr.f32.gmra.mxu0 %v5039
        %v5234 = vpop.f32.mrf.mxu0
        %v5235 = vadd.f32 0.0, %v5234
        %v5236 = vpop.f32.mrf.mxu0
        %5237 = vmatprep.mubr.f32.mxu0 0.0
        %5238 = vmatmul.mubr.f32.gmra.mxu0 %v5040
        %v5239 = vpop.f32.mrf.mxu0
        %v5240 = vadd.f32 0.0, %v5239
        %v5241 = vpop.f32.mrf.mxu0
        %5242 = vmatprep.mubr.f32.mxu0 0.0
        %5243 = vmatmul.mubr.f32.gmra.mxu0 %v5041
        %v5244 = vpop.f32.mrf.mxu0
        %v5245 = vadd.f32 0.0, %v5244
        %v5246 = vpop.f32.mrf.mxu0
        %5247 = vmatprep.mubr.f32.mxu0 0.0
        %5248 = vmatmul.mubr.f32.gmra.mxu0 %v5042
        %v5249 = vpop.f32.mrf.mxu0
        %v5250 = vadd.f32 0.0, %v5249
        %v5251 = vpop.f32.mrf.mxu0
        %5252 = vmatprep.mubr.f32.mxu0 0.0
        %5253 = vmatmul.mubr.f32.gmra.mxu0 %v5043
        %v5254 = vpop.f32.mrf.mxu0
        %v5255 = vadd.f32 0.0, %v5254
        %v5256 = vpop.f32.mrf.mxu0
        %5257 = vmatprep.mubr.f32.mxu0 0.0
        %5258 = vmatmul.mubr.f32.gmra.mxu0 %v5044
        %v5259 = vpop.f32.mrf.mxu0
        %v5260 = vadd.f32 0.0, %v5259
        %v5261 = vpop.f32.mrf.mxu0
        %5262 = vmatprep.mubr.f32.mxu0 0.0
        %5263 = vmatmul.mubr.f32.gmra.mxu0 %v5045
        %v5264 = vpop.f32.mrf.mxu0
        %v5265 = vadd.f32 0.0, %v5264
        %v5266 = vpop.f32.mrf.mxu0
        %5267 = vmatprep.mubr.f32.mxu0 0.0
        %5268 = vmatmul.mubr.f32.gmra.mxu0 %v5046
        %v5269 = vpop.f32.mrf.mxu0
        %v5270 = vadd.f32 0.0, %v5269
        %v5271 = vpop.f32.mrf.mxu0
        %5272 = vmatprep.mubr.f32.mxu0 0.0
        %5273 = vmatmul.mubr.f32.gmra.mxu0 %v5047
        %v5274 = vpop.f32.mrf.mxu0
        %v5275 = vadd.f32 0.0, %v5274
        %v5276 = vpop.f32.mrf.mxu0
        %5277 = vmatprep.mubr.f32.mxu0 0.0
        %5278 = vmatmul.mubr.f32.gmra.mxu0 %v5048
        %v5279 = vpop.f32.mrf.mxu0
        %v5280 = vadd.f32 0.0, %v5279
        %v5281 = vpop.f32.mrf.mxu0
        %5282 = vmatprep.mubr.f32.mxu0 0.0
        %5283 = vmatmul.mubr.f32.gmra.mxu0 %v5049
        %v5284 = vpop.f32.mrf.mxu0
        %v5285 = vadd.f32 0.0, %v5284
        %v5286 = vpop.f32.mrf.mxu0
        %5287 = vmatprep.mubr.f32.mxu0 0.0
        %5288 = vmatmul.mubr.f32.gmra.mxu0 %v5050
        %v5289 = vpop.f32.mrf.mxu0
        %v5290 = vadd.f32 0.0, %v5289
        %v5291 = vpop.f32.mrf.mxu0
        %5292 = vdwg.mxu0
        %v5293 = vld [vmem:[#allocation5] sm:$0xff]
        %v5294 = vld [vmem:[#allocation5 + $0x8] sm:$0xff]
        %v5295 = vld [vmem:[#allocation5 + $0x10] sm:$0xff]
        %v5296 = vld [vmem:[#allocation5 + $0x18] sm:$0xff]
        %v5297 = vld [vmem:[#allocation5 + $0x20] sm:$0xff]
        %v5298 = vld [vmem:[#allocation5 + $0x28] sm:$0xff]
        %v5299 = vld [vmem:[#allocation5 + $0x30] sm:$0xff]
        %v5300 = vld [vmem:[#allocation5 + $0x38] sm:$0xff]
        %v5301 = vld [vmem:[#allocation5 + $0x40] sm:$0xff]
        %v5302 = vld [vmem:[#allocation5 + $0x48] sm:$0xff]
        %v5303 = vld [vmem:[#allocation5 + $0x50] sm:$0xff]
        %v5304 = vld [vmem:[#allocation5 + $0x58] sm:$0xff]
        %v5305 = vld [vmem:[#allocation5 + $0x60] sm:$0xff]
        %v5306 = vld [vmem:[#allocation5 + $0x68] sm:$0xff]
        %v5307 = vld [vmem:[#allocation5 + $0x70] sm:$0xff]
        %v5308 = vld [vmem:[#allocation5 + $0x78] sm:$0xff]
        %v5309 = vld [vmem:[#allocation5 + $0x80] sm:$0xff]
        %v5310 = vld [vmem:[#allocation5 + $0x88] sm:$0xff]
        %v5311 = vld [vmem:[#allocation5 + $0x90] sm:$0xff]
        %v5312 = vld [vmem:[#allocation5 + $0x98] sm:$0xff]
        %v5313 = vld [vmem:[#allocation5 + $0xa0] sm:$0xff]
        %v5314 = vld [vmem:[#allocation5 + $0xa8] sm:$0xff]
        %v5315 = vld [vmem:[#allocation5 + $0xb0] sm:$0xff]
        %v5316 = vld [vmem:[#allocation5 + $0xb8] sm:$0xff]
        %v5317 = vld [vmem:[#allocation5 + $0xc0] sm:$0xff]
        %v5318 = vld [vmem:[#allocation5 + $0xc8] sm:$0xff]
        %v5319 = vld [vmem:[#allocation5 + $0xd0] sm:$0xff]
        %v5320 = vld [vmem:[#allocation5 + $0xd8] sm:$0xff]
        %v5321 = vld [vmem:[#allocation5 + $0xe0] sm:$0xff]
        %v5322 = vld [vmem:[#allocation5 + $0xe8] sm:$0xff]
        %v5323 = vld [vmem:[#allocation5 + $0xf0] sm:$0xff]
        %v5324 = vld [vmem:[#allocation5 + $0xf8] sm:$0xff]
        %v5325 = vadd.f32 %v5293, %v5135
        %v5326 = vadd.f32 %v5294, %v5140
        %v5327 = vadd.f32 %v5295, %v5145
        %v5328 = vadd.f32 %v5296, %v5150
        %v5329 = vadd.f32 %v5297, %v5155
        %v5330 = vadd.f32 %v5298, %v5160
        %v5331 = vadd.f32 %v5299, %v5165
        %v5332 = vadd.f32 %v5300, %v5170
        %v5333 = vadd.f32 %v5301, %v5175
        %v5334 = vadd.f32 %v5302, %v5180
        %v5335 = vadd.f32 %v5303, %v5185
        %v5336 = vadd.f32 %v5304, %v5190
        %v5337 = vadd.f32 %v5305, %v5195
        %v5338 = vadd.f32 %v5306, %v5200
        %v5339 = vadd.f32 %v5307, %v5205
        %v5340 = vadd.f32 %v5308, %v5210
        %v5341 = vadd.f32 %v5309, %v5215
        %v5342 = vadd.f32 %v5310, %v5220
        %v5343 = vadd.f32 %v5311, %v5225
        %v5344 = vadd.f32 %v5312, %v5230
        %v5345 = vadd.f32 %v5313, %v5235
        %v5346 = vadd.f32 %v5314, %v5240
        %v5347 = vadd.f32 %v5315, %v5245
        %v5348 = vadd.f32 %v5316, %v5250
        %v5349 = vadd.f32 %v5317, %v5255
        %v5350 = vadd.f32 %v5318, %v5260
        %v5351 = vadd.f32 %v5319, %v5265
        %v5352 = vadd.f32 %v5320, %v5270
        %v5353 = vadd.f32 %v5321, %v5275
        %v5354 = vadd.f32 %v5322, %v5280
        %v5355 = vadd.f32 %v5323, %v5285
        %v5356 = vadd.f32 %v5324, %v5290
        %5357 = vst [vmem:[#allocation5] sm:$0xff] %v5325
        %5358 = vst [vmem:[#allocation5 + $0x8] sm:$0xff] %v5326
        %5359 = vst [vmem:[#allocation5 + $0x10] sm:$0xff] %v5327
        %5360 = vst [vmem:[#allocation5 + $0x18] sm:$0xff] %v5328
        %5361 = vst [vmem:[#allocation5 + $0x20] sm:$0xff] %v5329
        %5362 = vst [vmem:[#allocation5 + $0x28] sm:$0xff] %v5330
        %5363 = vst [vmem:[#allocation5 + $0x30] sm:$0xff] %v5331
        %5364 = vst [vmem:[#allocation5 + $0x38] sm:$0xff] %v5332
        %5365 = vst [vmem:[#allocation5 + $0x40] sm:$0xff] %v5333
        %5366 = vst [vmem:[#allocation5 + $0x48] sm:$0xff] %v5334
        %5367 = vst [vmem:[#allocation5 + $0x50] sm:$0xff] %v5335
        %5368 = vst [vmem:[#allocation5 + $0x58] sm:$0xff] %v5336
        %5369 = vst [vmem:[#allocation5 + $0x60] sm:$0xff] %v5337
        %5370 = vst [vmem:[#allocation5 + $0x68] sm:$0xff] %v5338
        %5371 = vst [vmem:[#allocation5 + $0x70] sm:$0xff] %v5339
        %5372 = vst [vmem:[#allocation5 + $0x78] sm:$0xff] %v5340
        %5373 = vst [vmem:[#allocation5 + $0x80] sm:$0xff] %v5341
        %5374 = vst [vmem:[#allocation5 + $0x88] sm:$0xff] %v5342
        %5375 = vst [vmem:[#allocation5 + $0x90] sm:$0xff] %v5343
        %5376 = vst [vmem:[#allocation5 + $0x98] sm:$0xff] %v5344
        %5377 = vst [vmem:[#allocation5 + $0xa0] sm:$0xff] %v5345
        %5378 = vst [vmem:[#allocation5 + $0xa8] sm:$0xff] %v5346
        %5379 = vst [vmem:[#allocation5 + $0xb0] sm:$0xff] %v5347
        %5380 = vst [vmem:[#allocation5 + $0xb8] sm:$0xff] %v5348
        %5381 = vst [vmem:[#allocation5 + $0xc0] sm:$0xff] %v5349
        %5382 = vst [vmem:[#allocation5 + $0xc8] sm:$0xff] %v5350
        %5383 = vst [vmem:[#allocation5 + $0xd0] sm:$0xff] %v5351
        %5384 = vst [vmem:[#allocation5 + $0xd8] sm:$0xff] %v5352
        %5385 = vst [vmem:[#allocation5 + $0xe0] sm:$0xff] %v5353
        %5386 = vst [vmem:[#allocation5 + $0xe8] sm:$0xff] %v5354
        %5387 = vst [vmem:[#allocation5 + $0xf0] sm:$0xff] %v5355
        %5388 = vst [vmem:[#allocation5 + $0xf8] sm:$0xff] %v5356
        %s5389 = scalar_lea.vmem [#allocation3], 40
        %v5390 = vld [vmem:[%s5389 + $0xf] sm:$0xff]
        %v5391 = vld [vmem:[%s5389 + $0x17] sm:$0xff]
        %v5392 = vld [vmem:[%s5389 + $0x37] sm:$0xff]
        %v5393 = vld [vmem:[%s5389 + $0x3f] sm:$0xff]
        %v5394 = vld [vmem:[%s5389 + $0x5f] sm:$0xff]
        %v5395 = vld [vmem:[%s5389 + $0x67] sm:$0xff]
        %v5396 = vld [vmem:[%s5389 + $0x87] sm:$0xff]
        %v5397 = vld [vmem:[%s5389 + $0x8f] sm:$0xff]
        %v5398 = vld [vmem:[%s5389 + $0xaf] sm:$0xff]
        %v5399 = vld [vmem:[%s5389 + $0xb7] sm:$0xff]
        %v5400 = vld [vmem:[%s5389 + $0xd7] sm:$0xff]
        %v5401 = vld [vmem:[%s5389 + $0xdf] sm:$0xff]
        %v5402 = vld [vmem:[%s5389 + $0xff] sm:$0xff]
        %v5403 = vld [vmem:[%s5389 + $0x107] sm:$0xff]
        %v5404 = vld [vmem:[%s5389 + $0x127] sm:$0xff]
        %v5405 = vld [vmem:[%s5389 + $0x12f] sm:$0xff]
        %v5406 = vld [vmem:[%s5389 + $0x14f] sm:$0xff]
        %v5407 = vld [vmem:[%s5389 + $0x157] sm:$0xff]
        %v5408 = vld [vmem:[%s5389 + $0x177] sm:$0xff]
        %v5409 = vld [vmem:[%s5389 + $0x17f] sm:$0xff]
        %v5410 = vld [vmem:[%s5389 + $0x19f] sm:$0xff]
        %v5411 = vld [vmem:[%s5389 + $0x1a7] sm:$0xff]
        %v5412 = vld [vmem:[%s5389 + $0x1c7] sm:$0xff]
        %v5413 = vld [vmem:[%s5389 + $0x1cf] sm:$0xff]
        %v5414 = vld [vmem:[%s5389 + $0x1ef] sm:$0xff]
        %v5415 = vld [vmem:[%s5389 + $0x1f7] sm:$0xff]
        %v5416 = vld [vmem:[%s5389 + $0x217] sm:$0xff]
        %v5417 = vld [vmem:[%s5389 + $0x21f] sm:$0xff]
        %v5418 = vld [vmem:[%s5389 + $0x23f] sm:$0xff]
        %v5419 = vld [vmem:[%s5389 + $0x247] sm:$0xff]
        %v5420 = vld [vmem:[%s5389 + $0x267] sm:$0xff]
        %v5421 = vld [vmem:[%s5389 + $0x26f] sm:$0xff]
        %s5422 = scalar_lea.vmem [#allocation11], 384
        %v5423 = vld [vmem:[%s5422] sm:$0xff]
        %v5424 = vld [vmem:[%s5422 + $0x8] sm:$0xff]
        %v5425 = vld [vmem:[%s5422 + $0x10] sm:$0xff]
        %v5426 = vld [vmem:[%s5422 + $0x18] sm:$0xff]
        %v5427 = vld [vmem:[%s5422 + $0x20] sm:$0xff]
        %v5428 = vld [vmem:[%s5422 + $0x28] sm:$0xff]
        %v5429 = vld [vmem:[%s5422 + $0x30] sm:$0xff]
        %v5430 = vld [vmem:[%s5422 + $0x38] sm:$0xff]
        %v5431 = vld [vmem:[%s5422 + $0x40] sm:$0xff]
        %v5432 = vld [vmem:[%s5422 + $0x48] sm:$0xff]
        %v5433 = vld [vmem:[%s5422 + $0x50] sm:$0xff]
        %v5434 = vld [vmem:[%s5422 + $0x58] sm:$0xff]
        %v5435 = vld [vmem:[%s5422 + $0x60] sm:$0xff]
        %v5436 = vld [vmem:[%s5422 + $0x68] sm:$0xff]
        %v5437 = vld [vmem:[%s5422 + $0x70] sm:$0xff]
        %v5438 = vld [vmem:[%s5422 + $0x78] sm:$0xff]
        %5439 = vmatprep.subr.mxu0 0.0
        %5440 = vmatpush1.msra.mxu0 %v5438
        %5441 = vmatprep.subr.mxu0 0.0
        %5442 = vmatpush1.msra.mxu0 %v5437
        %5443 = vmatprep.subr.mxu0 0.0
        %5444 = vmatpush1.msra.mxu0 %v5436
        %5445 = vmatprep.subr.mxu0 0.0
        %5446 = vmatpush1.msra.mxu0 %v5435
        %5447 = vmatprep.subr.mxu0 0.0
        %5448 = vmatpush1.msra.mxu0 %v5434
        %5449 = vmatprep.subr.mxu0 0.0
        %5450 = vmatpush1.msra.mxu0 %v5433
        %5451 = vmatprep.subr.mxu0 0.0
        %5452 = vmatpush1.msra.mxu0 %v5432
        %5453 = vmatprep.subr.mxu0 0.0
        %5454 = vmatpush1.msra.mxu0 %v5431
        %5455 = vmatprep.subr.mxu0 0.0
        %5456 = vmatpush1.msra.mxu0 %v5430
        %5457 = vmatprep.subr.mxu0 0.0
        %5458 = vmatpush1.msra.mxu0 %v5429
        %5459 = vmatprep.subr.mxu0 0.0
        %5460 = vmatpush1.msra.mxu0 %v5428
        %5461 = vmatprep.subr.mxu0 0.0
        %5462 = vmatpush1.msra.mxu0 %v5427
        %5463 = vmatprep.subr.mxu0 0.0
        %5464 = vmatpush1.msra.mxu0 %v5426
        %5465 = vmatprep.subr.mxu0 0.0
        %5466 = vmatpush1.msra.mxu0 %v5425
        %5467 = vmatprep.subr.mxu0 0.0
        %5468 = vmatpush1.msra.mxu0 %v5424
        %5469 = vmatprep.subr.mxu0 0.0
        %5470 = vmatpush1.msra.mxu0 %v5423
        %5471 = vmatprep.subr.mxu0 0.0
        %5472 = vmatpush2.msra.mxu0 0.0
        %5473 = vmatprep.subr.mxu0 0.0
        %5474 = vmatpush2.msra.mxu0 0.0
        %5475 = vmatprep.subr.mxu0 0.0
        %5476 = vmatpush2.msra.mxu0 0.0
        %5477 = vmatprep.subr.mxu0 0.0
        %5478 = vmatpush2.msra.mxu0 0.0
        %5479 = vmatprep.subr.mxu0 0.0
        %5480 = vmatpush2.msra.mxu0 0.0
        %5481 = vmatprep.subr.mxu0 0.0
        %5482 = vmatpush2.msra.mxu0 0.0
        %5483 = vmatprep.subr.mxu0 0.0
        %5484 = vmatpush2.msra.mxu0 0.0
        %5485 = vmatprep.subr.mxu0 0.0
        %5486 = vmatpush2.msra.mxu0 0.0
        %5487 = vmatprep.subr.mxu0 0.0
        %5488 = vmatpush2.msra.mxu0 0.0
        %5489 = vmatprep.subr.mxu0 0.0
        %5490 = vmatpush2.msra.mxu0 0.0
        %5491 = vmatprep.subr.mxu0 0.0
        %5492 = vmatpush2.msra.mxu0 0.0
        %5493 = vmatprep.subr.mxu0 0.0
        %5494 = vmatpush2.msra.mxu0 0.0
        %5495 = vmatprep.subr.mxu0 0.0
        %5496 = vmatpush2.msra.mxu0 0.0
        %5497 = vmatprep.subr.mxu0 0.0
        %5498 = vmatpush2.msra.mxu0 0.0
        %5499 = vmatprep.subr.mxu0 0.0
        %5500 = vmatpush2.msra.mxu0 0.0
        %5501 = vmatprep.subr.mxu0 0.0
        %5502 = vmatpush2.msra.mxu0 0.0
        %5503 = vmatprep.mubr.f32.mxu0 0.0
        %5504 = vmatmul.mubr.f32.gmra.mxu0 %v5390
        %v5505 = vpop.f32.mrf.mxu0
        %v5506 = vadd.f32 0.0, %v5505
        %v5507 = vpop.f32.mrf.mxu0
        %5508 = vmatprep.mubr.f32.mxu0 0.0
        %5509 = vmatmul.mubr.f32.gmra.mxu0 %v5391
        %v5510 = vpop.f32.mrf.mxu0
        %v5511 = vadd.f32 0.0, %v5510
        %v5512 = vpop.f32.mrf.mxu0
        %5513 = vmatprep.mubr.f32.mxu0 0.0
        %5514 = vmatmul.mubr.f32.gmra.mxu0 %v5392
        %v5515 = vpop.f32.mrf.mxu0
        %v5516 = vadd.f32 0.0, %v5515
        %v5517 = vpop.f32.mrf.mxu0
        %5518 = vmatprep.mubr.f32.mxu0 0.0
        %5519 = vmatmul.mubr.f32.gmra.mxu0 %v5393
        %v5520 = vpop.f32.mrf.mxu0
        %v5521 = vadd.f32 0.0, %v5520
        %v5522 = vpop.f32.mrf.mxu0
        %5523 = vmatprep.mubr.f32.mxu0 0.0
        %5524 = vmatmul.mubr.f32.gmra.mxu0 %v5394
        %v5525 = vpop.f32.mrf.mxu0
        %v5526 = vadd.f32 0.0, %v5525
        %v5527 = vpop.f32.mrf.mxu0
        %5528 = vmatprep.mubr.f32.mxu0 0.0
        %5529 = vmatmul.mubr.f32.gmra.mxu0 %v5395
        %v5530 = vpop.f32.mrf.mxu0
        %v5531 = vadd.f32 0.0, %v5530
        %v5532 = vpop.f32.mrf.mxu0
        %5533 = vmatprep.mubr.f32.mxu0 0.0
        %5534 = vmatmul.mubr.f32.gmra.mxu0 %v5396
        %v5535 = vpop.f32.mrf.mxu0
        %v5536 = vadd.f32 0.0, %v5535
        %v5537 = vpop.f32.mrf.mxu0
        %5538 = vmatprep.mubr.f32.mxu0 0.0
        %5539 = vmatmul.mubr.f32.gmra.mxu0 %v5397
        %v5540 = vpop.f32.mrf.mxu0
        %v5541 = vadd.f32 0.0, %v5540
        %v5542 = vpop.f32.mrf.mxu0
        %5543 = vmatprep.mubr.f32.mxu0 0.0
        %5544 = vmatmul.mubr.f32.gmra.mxu0 %v5398
        %v5545 = vpop.f32.mrf.mxu0
        %v5546 = vadd.f32 0.0, %v5545
        %v5547 = vpop.f32.mrf.mxu0
        %5548 = vmatprep.mubr.f32.mxu0 0.0
        %5549 = vmatmul.mubr.f32.gmra.mxu0 %v5399
        %v5550 = vpop.f32.mrf.mxu0
        %v5551 = vadd.f32 0.0, %v5550
        %v5552 = vpop.f32.mrf.mxu0
        %5553 = vmatprep.mubr.f32.mxu0 0.0
        %5554 = vmatmul.mubr.f32.gmra.mxu0 %v5400
        %v5555 = vpop.f32.mrf.mxu0
        %v5556 = vadd.f32 0.0, %v5555
        %v5557 = vpop.f32.mrf.mxu0
        %5558 = vmatprep.mubr.f32.mxu0 0.0
        %5559 = vmatmul.mubr.f32.gmra.mxu0 %v5401
        %v5560 = vpop.f32.mrf.mxu0
        %v5561 = vadd.f32 0.0, %v5560
        %v5562 = vpop.f32.mrf.mxu0
        %5563 = vmatprep.mubr.f32.mxu0 0.0
        %5564 = vmatmul.mubr.f32.gmra.mxu0 %v5402
        %v5565 = vpop.f32.mrf.mxu0
        %v5566 = vadd.f32 0.0, %v5565
        %v5567 = vpop.f32.mrf.mxu0
        %5568 = vmatprep.mubr.f32.mxu0 0.0
        %5569 = vmatmul.mubr.f32.gmra.mxu0 %v5403
        %v5570 = vpop.f32.mrf.mxu0
        %v5571 = vadd.f32 0.0, %v5570
        %v5572 = vpop.f32.mrf.mxu0
        %5573 = vmatprep.mubr.f32.mxu0 0.0
        %5574 = vmatmul.mubr.f32.gmra.mxu0 %v5404
        %v5575 = vpop.f32.mrf.mxu0
        %v5576 = vadd.f32 0.0, %v5575
        %v5577 = vpop.f32.mrf.mxu0
        %5578 = vmatprep.mubr.f32.mxu0 0.0
        %5579 = vmatmul.mubr.f32.gmra.mxu0 %v5405
        %v5580 = vpop.f32.mrf.mxu0
        %v5581 = vadd.f32 0.0, %v5580
        %v5582 = vpop.f32.mrf.mxu0
        %5583 = vmatprep.mubr.f32.mxu0 0.0
        %5584 = vmatmul.mubr.f32.gmra.mxu0 %v5406
        %v5585 = vpop.f32.mrf.mxu0
        %v5586 = vadd.f32 0.0, %v5585
        %v5587 = vpop.f32.mrf.mxu0
        %5588 = vmatprep.mubr.f32.mxu0 0.0
        %5589 = vmatmul.mubr.f32.gmra.mxu0 %v5407
        %v5590 = vpop.f32.mrf.mxu0
        %v5591 = vadd.f32 0.0, %v5590
        %v5592 = vpop.f32.mrf.mxu0
        %5593 = vmatprep.mubr.f32.mxu0 0.0
        %5594 = vmatmul.mubr.f32.gmra.mxu0 %v5408
        %v5595 = vpop.f32.mrf.mxu0
        %v5596 = vadd.f32 0.0, %v5595
        %v5597 = vpop.f32.mrf.mxu0
        %5598 = vmatprep.mubr.f32.mxu0 0.0
        %5599 = vmatmul.mubr.f32.gmra.mxu0 %v5409
        %v5600 = vpop.f32.mrf.mxu0
        %v5601 = vadd.f32 0.0, %v5600
        %v5602 = vpop.f32.mrf.mxu0
        %5603 = vmatprep.mubr.f32.mxu0 0.0
        %5604 = vmatmul.mubr.f32.gmra.mxu0 %v5410
        %v5605 = vpop.f32.mrf.mxu0
        %v5606 = vadd.f32 0.0, %v5605
        %v5607 = vpop.f32.mrf.mxu0
        %5608 = vmatprep.mubr.f32.mxu0 0.0
        %5609 = vmatmul.mubr.f32.gmra.mxu0 %v5411
        %v5610 = vpop.f32.mrf.mxu0
        %v5611 = vadd.f32 0.0, %v5610
        %v5612 = vpop.f32.mrf.mxu0
        %5613 = vmatprep.mubr.f32.mxu0 0.0
        %5614 = vmatmul.mubr.f32.gmra.mxu0 %v5412
        %v5615 = vpop.f32.mrf.mxu0
        %v5616 = vadd.f32 0.0, %v5615
        %v5617 = vpop.f32.mrf.mxu0
        %5618 = vmatprep.mubr.f32.mxu0 0.0
        %5619 = vmatmul.mubr.f32.gmra.mxu0 %v5413
        %v5620 = vpop.f32.mrf.mxu0
        %v5621 = vadd.f32 0.0, %v5620
        %v5622 = vpop.f32.mrf.mxu0
        %5623 = vmatprep.mubr.f32.mxu0 0.0
        %5624 = vmatmul.mubr.f32.gmra.mxu0 %v5414
        %v5625 = vpop.f32.mrf.mxu0
        %v5626 = vadd.f32 0.0, %v5625
        %v5627 = vpop.f32.mrf.mxu0
        %5628 = vmatprep.mubr.f32.mxu0 0.0
        %5629 = vmatmul.mubr.f32.gmra.mxu0 %v5415
        %v5630 = vpop.f32.mrf.mxu0
        %v5631 = vadd.f32 0.0, %v5630
        %v5632 = vpop.f32.mrf.mxu0
        %5633 = vmatprep.mubr.f32.mxu0 0.0
        %5634 = vmatmul.mubr.f32.gmra.mxu0 %v5416
        %v5635 = vpop.f32.mrf.mxu0
        %v5636 = vadd.f32 0.0, %v5635
        %v5637 = vpop.f32.mrf.mxu0
        %5638 = vmatprep.mubr.f32.mxu0 0.0
        %5639 = vmatmul.mubr.f32.gmra.mxu0 %v5417
        %v5640 = vpop.f32.mrf.mxu0
        %v5641 = vadd.f32 0.0, %v5640
        %v5642 = vpop.f32.mrf.mxu0
        %5643 = vmatprep.mubr.f32.mxu0 0.0
        %5644 = vmatmul.mubr.f32.gmra.mxu0 %v5418
        %v5645 = vpop.f32.mrf.mxu0
        %v5646 = vadd.f32 0.0, %v5645
        %v5647 = vpop.f32.mrf.mxu0
        %5648 = vmatprep.mubr.f32.mxu0 0.0
        %5649 = vmatmul.mubr.f32.gmra.mxu0 %v5419
        %v5650 = vpop.f32.mrf.mxu0
        %v5651 = vadd.f32 0.0, %v5650
        %v5652 = vpop.f32.mrf.mxu0
        %5653 = vmatprep.mubr.f32.mxu0 0.0
        %5654 = vmatmul.mubr.f32.gmra.mxu0 %v5420
        %v5655 = vpop.f32.mrf.mxu0
        %v5656 = vadd.f32 0.0, %v5655
        %v5657 = vpop.f32.mrf.mxu0
        %5658 = vmatprep.mubr.f32.mxu0 0.0
        %5659 = vmatmul.mubr.f32.gmra.mxu0 %v5421
        %v5660 = vpop.f32.mrf.mxu0
        %v5661 = vadd.f32 0.0, %v5660
        %v5662 = vpop.f32.mrf.mxu0
        %5663 = vdwg.mxu0
        %v5664 = vld [vmem:[#allocation5] sm:$0xff]
        %v5665 = vld [vmem:[#allocation5 + $0x8] sm:$0xff]
        %v5666 = vld [vmem:[#allocation5 + $0x10] sm:$0xff]
        %v5667 = vld [vmem:[#allocation5 + $0x18] sm:$0xff]
        %v5668 = vld [vmem:[#allocation5 + $0x20] sm:$0xff]
        %v5669 = vld [vmem:[#allocation5 + $0x28] sm:$0xff]
        %v5670 = vld [vmem:[#allocation5 + $0x30] sm:$0xff]
        %v5671 = vld [vmem:[#allocation5 + $0x38] sm:$0xff]
        %v5672 = vld [vmem:[#allocation5 + $0x40] sm:$0xff]
        %v5673 = vld [vmem:[#allocation5 + $0x48] sm:$0xff]
        %v5674 = vld [vmem:[#allocation5 + $0x50] sm:$0xff]
        %v5675 = vld [vmem:[#allocation5 + $0x58] sm:$0xff]
        %v5676 = vld [vmem:[#allocation5 + $0x60] sm:$0xff]
        %v5677 = vld [vmem:[#allocation5 + $0x68] sm:$0xff]
        %v5678 = vld [vmem:[#allocation5 + $0x70] sm:$0xff]
        %v5679 = vld [vmem:[#allocation5 + $0x78] sm:$0xff]
        %v5680 = vld [vmem:[#allocation5 + $0x80] sm:$0xff]
        %v5681 = vld [vmem:[#allocation5 + $0x88] sm:$0xff]
        %v5682 = vld [vmem:[#allocation5 + $0x90] sm:$0xff]
        %v5683 = vld [vmem:[#allocation5 + $0x98] sm:$0xff]
        %v5684 = vld [vmem:[#allocation5 + $0xa0] sm:$0xff]
        %v5685 = vld [vmem:[#allocation5 + $0xa8] sm:$0xff]
        %v5686 = vld [vmem:[#allocation5 + $0xb0] sm:$0xff]
        %v5687 = vld [vmem:[#allocation5 + $0xb8] sm:$0xff]
        %v5688 = vld [vmem:[#allocation5 + $0xc0] sm:$0xff]
        %v5689 = vld [vmem:[#allocation5 + $0xc8] sm:$0xff]
        %v5690 = vld [vmem:[#allocation5 + $0xd0] sm:$0xff]
        %v5691 = vld [vmem:[#allocation5 + $0xd8] sm:$0xff]
        %v5692 = vld [vmem:[#allocation5 + $0xe0] sm:$0xff]
        %v5693 = vld [vmem:[#allocation5 + $0xe8] sm:$0xff]
        %v5694 = vld [vmem:[#allocation5 + $0xf0] sm:$0xff]
        %v5695 = vld [vmem:[#allocation5 + $0xf8] sm:$0xff]
        %v5696 = vadd.f32 %v5664, %v5506
        %v5697 = vadd.f32 %v5665, %v5511
        %v5698 = vadd.f32 %v5666, %v5516
        %v5699 = vadd.f32 %v5667, %v5521
        %v5700 = vadd.f32 %v5668, %v5526
        %v5701 = vadd.f32 %v5669, %v5531
        %v5702 = vadd.f32 %v5670, %v5536
        %v5703 = vadd.f32 %v5671, %v5541
        %v5704 = vadd.f32 %v5672, %v5546
        %v5705 = vadd.f32 %v5673, %v5551
        %v5706 = vadd.f32 %v5674, %v5556
        %v5707 = vadd.f32 %v5675, %v5561
        %v5708 = vadd.f32 %v5676, %v5566
        %v5709 = vadd.f32 %v5677, %v5571
        %v5710 = vadd.f32 %v5678, %v5576
        %v5711 = vadd.f32 %v5679, %v5581
        %v5712 = vadd.f32 %v5680, %v5586
        %v5713 = vadd.f32 %v5681, %v5591
        %v5714 = vadd.f32 %v5682, %v5596
        %v5715 = vadd.f32 %v5683, %v5601
        %v5716 = vadd.f32 %v5684, %v5606
        %v5717 = vadd.f32 %v5685, %v5611
        %v5718 = vadd.f32 %v5686, %v5616
        %v5719 = vadd.f32 %v5687, %v5621
        %v5720 = vadd.f32 %v5688, %v5626
        %v5721 = vadd.f32 %v5689, %v5631
        %v5722 = vadd.f32 %v5690, %v5636
        %v5723 = vadd.f32 %v5691, %v5641
        %v5724 = vadd.f32 %v5692, %v5646
        %v5725 = vadd.f32 %v5693, %v5651
        %v5726 = vadd.f32 %v5694, %v5656
        %v5727 = vadd.f32 %v5695, %v5661
        %5728 = vst [vmem:[#allocation5] sm:$0xff] %v5696
        %5729 = vst [vmem:[#allocation5 + $0x8] sm:$0xff] %v5697
        %5730 = vst [vmem:[#allocation5 + $0x10] sm:$0xff] %v5698
        %5731 = vst [vmem:[#allocation5 + $0x18] sm:$0xff] %v5699
        %5732 = vst [vmem:[#allocation5 + $0x20] sm:$0xff] %v5700
        %5733 = vst [vmem:[#allocation5 + $0x28] sm:$0xff] %v5701
        %5734 = vst [vmem:[#allocation5 + $0x30] sm:$0xff] %v5702
        %5735 = vst [vmem:[#allocation5 + $0x38] sm:$0xff] %v5703
        %5736 = vst [vmem:[#allocation5 + $0x40] sm:$0xff] %v5704
        %5737 = vst [vmem:[#allocation5 + $0x48] sm:$0xff] %v5705
        %5738 = vst [vmem:[#allocation5 + $0x50] sm:$0xff] %v5706
        %5739 = vst [vmem:[#allocation5 + $0x58] sm:$0xff] %v5707
        %5740 = vst [vmem:[#allocation5 + $0x60] sm:$0xff] %v5708
        %5741 = vst [vmem:[#allocation5 + $0x68] sm:$0xff] %v5709
        %5742 = vst [vmem:[#allocation5 + $0x70] sm:$0xff] %v5710
        %5743 = vst [vmem:[#allocation5 + $0x78] sm:$0xff] %v5711
        %5744 = vst [vmem:[#allocation5 + $0x80] sm:$0xff] %v5712
        %5745 = vst [vmem:[#allocation5 + $0x88] sm:$0xff] %v5713
        %5746 = vst [vmem:[#allocation5 + $0x90] sm:$0xff] %v5714
        %5747 = vst [vmem:[#allocation5 + $0x98] sm:$0xff] %v5715
        %5748 = vst [vmem:[#allocation5 + $0xa0] sm:$0xff] %v5716
        %5749 = vst [vmem:[#allocation5 + $0xa8] sm:$0xff] %v5717
        %5750 = vst [vmem:[#allocation5 + $0xb0] sm:$0xff] %v5718
        %5751 = vst [vmem:[#allocation5 + $0xb8] sm:$0xff] %v5719
        %5752 = vst [vmem:[#allocation5 + $0xc0] sm:$0xff] %v5720
        %5753 = vst [vmem:[#allocation5 + $0xc8] sm:$0xff] %v5721
        %5754 = vst [vmem:[#allocation5 + $0xd0] sm:$0xff] %v5722
        %5755 = vst [vmem:[#allocation5 + $0xd8] sm:$0xff] %v5723
        %5756 = vst [vmem:[#allocation5 + $0xe0] sm:$0xff] %v5724
        %5757 = vst [vmem:[#allocation5 + $0xe8] sm:$0xff] %v5725
        %5758 = vst [vmem:[#allocation5 + $0xf0] sm:$0xff] %v5726
        %5759 = vst [vmem:[#allocation5 + $0xf8] sm:$0xff] %v5727
        %v5760 = vld [vmem:[%s5389 + $0x10] sm:$0xff]
        %v5761 = vld [vmem:[%s5389 + $0x18] sm:$0xff]
        %v5762 = vld [vmem:[%s5389 + $0x38] sm:$0xff]
        %v5763 = vld [vmem:[%s5389 + $0x40] sm:$0xff]
        %v5764 = vld [vmem:[%s5389 + $0x60] sm:$0xff]
        %v5765 = vld [vmem:[%s5389 + $0x68] sm:$0xff]
        %v5766 = vld [vmem:[%s5389 + $0x88] sm:$0xff]
        %v5767 = vld [vmem:[%s5389 + $0x90] sm:$0xff]
        %v5768 = vld [vmem:[%s5389 + $0xb0] sm:$0xff]
        %v5769 = vld [vmem:[%s5389 + $0xb8] sm:$0xff]
        %v5770 = vld [vmem:[%s5389 + $0xd8] sm:$0xff]
        %v5771 = vld [vmem:[%s5389 + $0xe0] sm:$0xff]
        %v5772 = vld [vmem:[%s5389 + $0x100] sm:$0xff]
        %v5773 = vld [vmem:[%s5389 + $0x108] sm:$0xff]
        %v5774 = vld [vmem:[%s5389 + $0x128] sm:$0xff]
        %v5775 = vld [vmem:[%s5389 + $0x130] sm:$0xff]
        %v5776 = vld [vmem:[%s5389 + $0x150] sm:$0xff]
        %v5777 = vld [vmem:[%s5389 + $0x158] sm:$0xff]
        %v5778 = vld [vmem:[%s5389 + $0x178] sm:$0xff]
        %v5779 = vld [vmem:[%s5389 + $0x180] sm:$0xff]
        %v5780 = vld [vmem:[%s5389 + $0x1a0] sm:$0xff]
        %v5781 = vld [vmem:[%s5389 + $0x1a8] sm:$0xff]
        %v5782 = vld [vmem:[%s5389 + $0x1c8] sm:$0xff]
        %v5783 = vld [vmem:[%s5389 + $0x1d0] sm:$0xff]
        %v5784 = vld [vmem:[%s5389 + $0x1f0] sm:$0xff]
        %v5785 = vld [vmem:[%s5389 + $0x1f8] sm:$0xff]
        %v5786 = vld [vmem:[%s5389 + $0x218] sm:$0xff]
        %v5787 = vld [vmem:[%s5389 + $0x220] sm:$0xff]
        %v5788 = vld [vmem:[%s5389 + $0x240] sm:$0xff]
        %v5789 = vld [vmem:[%s5389 + $0x248] sm:$0xff]
        %v5790 = vld [vmem:[%s5389 + $0x268] sm:$0xff]
        %v5791 = vld [vmem:[%s5389 + $0x270] sm:$0xff]
        %s5792 = scalar_lea.vmem [#allocation11], 512
        %v5793 = vld [vmem:[%s5792] sm:$0xff]
        %v5794 = vld [vmem:[%s5792 + $0x8] sm:$0xff]
        %v5795 = vld [vmem:[%s5792 + $0x10] sm:$0xff]
        %v5796 = vld [vmem:[%s5792 + $0x18] sm:$0xff]
        %v5797 = vld [vmem:[%s5792 + $0x20] sm:$0xff]
        %v5798 = vld [vmem:[%s5792 + $0x28] sm:$0xff]
        %v5799 = vld [vmem:[%s5792 + $0x30] sm:$0xff]
        %v5800 = vld [vmem:[%s5792 + $0x38] sm:$0xff]
        %v5801 = vld [vmem:[%s5792 + $0x40] sm:$0xff]
        %v5802 = vld [vmem:[%s5792 + $0x48] sm:$0xff]
        %v5803 = vld [vmem:[%s5792 + $0x50] sm:$0xff]
        %v5804 = vld [vmem:[%s5792 + $0x58] sm:$0xff]
        %v5805 = vld [vmem:[%s5792 + $0x60] sm:$0xff]
        %v5806 = vld [vmem:[%s5792 + $0x68] sm:$0xff]
        %v5807 = vld [vmem:[%s5792 + $0x70] sm:$0xff]
        %v5808 = vld [vmem:[%s5792 + $0x78] sm:$0xff]
        %5809 = vmatprep.subr.mxu0 0.0
        %5810 = vmatpush1.msra.mxu0 %v5808
        %5811 = vmatprep.subr.mxu0 0.0
        %5812 = vmatpush1.msra.mxu0 %v5807
        %5813 = vmatprep.subr.mxu0 0.0
        %5814 = vmatpush1.msra.mxu0 %v5806
        %5815 = vmatprep.subr.mxu0 0.0
        %5816 = vmatpush1.msra.mxu0 %v5805
        %5817 = vmatprep.subr.mxu0 0.0
        %5818 = vmatpush1.msra.mxu0 %v5804
        %5819 = vmatprep.subr.mxu0 0.0
        %5820 = vmatpush1.msra.mxu0 %v5803
        %5821 = vmatprep.subr.mxu0 0.0
        %5822 = vmatpush1.msra.mxu0 %v5802
        %5823 = vmatprep.subr.mxu0 0.0
        %5824 = vmatpush1.msra.mxu0 %v5801
        %5825 = vmatprep.subr.mxu0 0.0
        %5826 = vmatpush1.msra.mxu0 %v5800
        %5827 = vmatprep.subr.mxu0 0.0
        %5828 = vmatpush1.msra.mxu0 %v5799
        %5829 = vmatprep.subr.mxu0 0.0
        %5830 = vmatpush1.msra.mxu0 %v5798
        %5831 = vmatprep.subr.mxu0 0.0
        %5832 = vmatpush1.msra.mxu0 %v5797
        %5833 = vmatprep.subr.mxu0 0.0
        %5834 = vmatpush1.msra.mxu0 %v5796
        %5835 = vmatprep.subr.mxu0 0.0
        %5836 = vmatpush1.msra.mxu0 %v5795
        %5837 = vmatprep.subr.mxu0 0.0
        %5838 = vmatpush1.msra.mxu0 %v5794
        %5839 = vmatprep.subr.mxu0 0.0
        %5840 = vmatpush1.msra.mxu0 %v5793
        %5841 = vmatprep.subr.mxu0 0.0
        %5842 = vmatpush2.msra.mxu0 0.0
        %5843 = vmatprep.subr.mxu0 0.0
        %5844 = vmatpush2.msra.mxu0 0.0
        %5845 = vmatprep.subr.mxu0 0.0
        %5846 = vmatpush2.msra.mxu0 0.0
        %5847 = vmatprep.subr.mxu0 0.0
        %5848 = vmatpush2.msra.mxu0 0.0
        %5849 = vmatprep.subr.mxu0 0.0
        %5850 = vmatpush2.msra.mxu0 0.0
        %5851 = vmatprep.subr.mxu0 0.0
        %5852 = vmatpush2.msra.mxu0 0.0
        %5853 = vmatprep.subr.mxu0 0.0
        %5854 = vmatpush2.msra.mxu0 0.0
        %5855 = vmatprep.subr.mxu0 0.0
        %5856 = vmatpush2.msra.mxu0 0.0
        %5857 = vmatprep.subr.mxu0 0.0
        %5858 = vmatpush2.msra.mxu0 0.0
        %5859 = vmatprep.subr.mxu0 0.0
        %5860 = vmatpush2.msra.mxu0 0.0
        %5861 = vmatprep.subr.mxu0 0.0
        %5862 = vmatpush2.msra.mxu0 0.0
        %5863 = vmatprep.subr.mxu0 0.0
        %5864 = vmatpush2.msra.mxu0 0.0
        %5865 = vmatprep.subr.mxu0 0.0
        %5866 = vmatpush2.msra.mxu0 0.0
        %5867 = vmatprep.subr.mxu0 0.0
        %5868 = vmatpush2.msra.mxu0 0.0
        %5869 = vmatprep.subr.mxu0 0.0
        %5870 = vmatpush2.msra.mxu0 0.0
        %5871 = vmatprep.subr.mxu0 0.0
        %5872 = vmatpush2.msra.mxu0 0.0
        %5873 = vmatprep.mubr.f32.mxu0 0.0
        %5874 = vmatmul.mubr.f32.gmra.mxu0 %v5760
        %v5875 = vpop.f32.mrf.mxu0
        %v5876 = vadd.f32 0.0, %v5875
        %v5877 = vpop.f32.mrf.mxu0
        %5878 = vmatprep.mubr.f32.mxu0 0.0
        %5879 = vmatmul.mubr.f32.gmra.mxu0 %v5761
        %v5880 = vpop.f32.mrf.mxu0
        %v5881 = vadd.f32 0.0, %v5880
        %v5882 = vpop.f32.mrf.mxu0
        %5883 = vmatprep.mubr.f32.mxu0 0.0
        %5884 = vmatmul.mubr.f32.gmra.mxu0 %v5762
        %v5885 = vpop.f32.mrf.mxu0
        %v5886 = vadd.f32 0.0, %v5885
        %v5887 = vpop.f32.mrf.mxu0
        %5888 = vmatprep.mubr.f32.mxu0 0.0
        %5889 = vmatmul.mubr.f32.gmra.mxu0 %v5763
        %v5890 = vpop.f32.mrf.mxu0
        %v5891 = vadd.f32 0.0, %v5890
        %v5892 = vpop.f32.mrf.mxu0
        %5893 = vmatprep.mubr.f32.mxu0 0.0
        %5894 = vmatmul.mubr.f32.gmra.mxu0 %v5764
        %v5895 = vpop.f32.mrf.mxu0
        %v5896 = vadd.f32 0.0, %v5895
        %v5897 = vpop.f32.mrf.mxu0
        %5898 = vmatprep.mubr.f32.mxu0 0.0
        %5899 = vmatmul.mubr.f32.gmra.mxu0 %v5765
        %v5900 = vpop.f32.mrf.mxu0
        %v5901 = vadd.f32 0.0, %v5900
        %v5902 = vpop.f32.mrf.mxu0
        %5903 = vmatprep.mubr.f32.mxu0 0.0
        %5904 = vmatmul.mubr.f32.gmra.mxu0 %v5766
        %v5905 = vpop.f32.mrf.mxu0
        %v5906 = vadd.f32 0.0, %v5905
        %v5907 = vpop.f32.mrf.mxu0
        %5908 = vmatprep.mubr.f32.mxu0 0.0
        %5909 = vmatmul.mubr.f32.gmra.mxu0 %v5767
        %v5910 = vpop.f32.mrf.mxu0
        %v5911 = vadd.f32 0.0, %v5910
        %v5912 = vpop.f32.mrf.mxu0
        %5913 = vmatprep.mubr.f32.mxu0 0.0
        %5914 = vmatmul.mubr.f32.gmra.mxu0 %v5768
        %v5915 = vpop.f32.mrf.mxu0
        %v5916 = vadd.f32 0.0, %v5915
        %v5917 = vpop.f32.mrf.mxu0
        %5918 = vmatprep.mubr.f32.mxu0 0.0
        %5919 = vmatmul.mubr.f32.gmra.mxu0 %v5769
        %v5920 = vpop.f32.mrf.mxu0
        %v5921 = vadd.f32 0.0, %v5920
        %v5922 = vpop.f32.mrf.mxu0
        %5923 = vmatprep.mubr.f32.mxu0 0.0
        %5924 = vmatmul.mubr.f32.gmra.mxu0 %v5770
        %v5925 = vpop.f32.mrf.mxu0
        %v5926 = vadd.f32 0.0, %v5925
        %v5927 = vpop.f32.mrf.mxu0
        %5928 = vmatprep.mubr.f32.mxu0 0.0
        %5929 = vmatmul.mubr.f32.gmra.mxu0 %v5771
        %v5930 = vpop.f32.mrf.mxu0
        %v5931 = vadd.f32 0.0, %v5930
        %v5932 = vpop.f32.mrf.mxu0
        %5933 = vmatprep.mubr.f32.mxu0 0.0
        %5934 = vmatmul.mubr.f32.gmra.mxu0 %v5772
        %v5935 = vpop.f32.mrf.mxu0
        %v5936 = vadd.f32 0.0, %v5935
        %v5937 = vpop.f32.mrf.mxu0
        %5938 = vmatprep.mubr.f32.mxu0 0.0
        %5939 = vmatmul.mubr.f32.gmra.mxu0 %v5773
        %v5940 = vpop.f32.mrf.mxu0
        %v5941 = vadd.f32 0.0, %v5940
        %v5942 = vpop.f32.mrf.mxu0
        %5943 = vmatprep.mubr.f32.mxu0 0.0
        %5944 = vmatmul.mubr.f32.gmra.mxu0 %v5774
        %v5945 = vpop.f32.mrf.mxu0
        %v5946 = vadd.f32 0.0, %v5945
        %v5947 = vpop.f32.mrf.mxu0
        %5948 = vmatprep.mubr.f32.mxu0 0.0
        %5949 = vmatmul.mubr.f32.gmra.mxu0 %v5775
        %v5950 = vpop.f32.mrf.mxu0
        %v5951 = vadd.f32 0.0, %v5950
        %v5952 = vpop.f32.mrf.mxu0
        %5953 = vmatprep.mubr.f32.mxu0 0.0
        %5954 = vmatmul.mubr.f32.gmra.mxu0 %v5776
        %v5955 = vpop.f32.mrf.mxu0
        %v5956 = vadd.f32 0.0, %v5955
        %v5957 = vpop.f32.mrf.mxu0
        %5958 = vmatprep.mubr.f32.mxu0 0.0
        %5959 = vmatmul.mubr.f32.gmra.mxu0 %v5777
        %v5960 = vpop.f32.mrf.mxu0
        %v5961 = vadd.f32 0.0, %v5960
        %v5962 = vpop.f32.mrf.mxu0
        %5963 = vmatprep.mubr.f32.mxu0 0.0
        %5964 = vmatmul.mubr.f32.gmra.mxu0 %v5778
        %v5965 = vpop.f32.mrf.mxu0
        %v5966 = vadd.f32 0.0, %v5965
        %v5967 = vpop.f32.mrf.mxu0
        %5968 = vmatprep.mubr.f32.mxu0 0.0
        %5969 = vmatmul.mubr.f32.gmra.mxu0 %v5779
        %v5970 = vpop.f32.mrf.mxu0
        %v5971 = vadd.f32 0.0, %v5970
        %v5972 = vpop.f32.mrf.mxu0
        %5973 = vmatprep.mubr.f32.mxu0 0.0
        %5974 = vmatmul.mubr.f32.gmra.mxu0 %v5780
        %v5975 = vpop.f32.mrf.mxu0
        %v5976 = vadd.f32 0.0, %v5975
        %v5977 = vpop.f32.mrf.mxu0
        %5978 = vmatprep.mubr.f32.mxu0 0.0
        %5979 = vmatmul.mubr.f32.gmra.mxu0 %v5781
        %v5980 = vpop.f32.mrf.mxu0
        %v5981 = vadd.f32 0.0, %v5980
        %v5982 = vpop.f32.mrf.mxu0
        %5983 = vmatprep.mubr.f32.mxu0 0.0
        %5984 = vmatmul.mubr.f32.gmra.mxu0 %v5782
        %v5985 = vpop.f32.mrf.mxu0
        %v5986 = vadd.f32 0.0, %v5985
        %v5987 = vpop.f32.mrf.mxu0
        %5988 = vmatprep.mubr.f32.mxu0 0.0
        %5989 = vmatmul.mubr.f32.gmra.mxu0 %v5783
        %v5990 = vpop.f32.mrf.mxu0
        %v5991 = vadd.f32 0.0, %v5990
        %v5992 = vpop.f32.mrf.mxu0
        %5993 = vmatprep.mubr.f32.mxu0 0.0
        %5994 = vmatmul.mubr.f32.gmra.mxu0 %v5784
        %v5995 = vpop.f32.mrf.mxu0
        %v5996 = vadd.f32 0.0, %v5995
        %v5997 = vpop.f32.mrf.mxu0
        %5998 = vmatprep.mubr.f32.mxu0 0.0
        %5999 = vmatmul.mubr.f32.gmra.mxu0 %v5785
        %v6000 = vpop.f32.mrf.mxu0
        %v6001 = vadd.f32 0.0, %v6000
        %v6002 = vpop.f32.mrf.mxu0
        %6003 = vmatprep.mubr.f32.mxu0 0.0
        %6004 = vmatmul.mubr.f32.gmra.mxu0 %v5786
        %v6005 = vpop.f32.mrf.mxu0
        %v6006 = vadd.f32 0.0, %v6005
        %v6007 = vpop.f32.mrf.mxu0
        %6008 = vmatprep.mubr.f32.mxu0 0.0
        %6009 = vmatmul.mubr.f32.gmra.mxu0 %v5787
        %v6010 = vpop.f32.mrf.mxu0
        %v6011 = vadd.f32 0.0, %v6010
        %v6012 = vpop.f32.mrf.mxu0
        %6013 = vmatprep.mubr.f32.mxu0 0.0
        %6014 = vmatmul.mubr.f32.gmra.mxu0 %v5788
        %v6015 = vpop.f32.mrf.mxu0
        %v6016 = vadd.f32 0.0, %v6015
        %v6017 = vpop.f32.mrf.mxu0
        %6018 = vmatprep.mubr.f32.mxu0 0.0
        %6019 = vmatmul.mubr.f32.gmra.mxu0 %v5789
        %v6020 = vpop.f32.mrf.mxu0
        %v6021 = vadd.f32 0.0, %v6020
        %v6022 = vpop.f32.mrf.mxu0
        %6023 = vmatprep.mubr.f32.mxu0 0.0
        %6024 = vmatmul.mubr.f32.gmra.mxu0 %v5790
        %v6025 = vpop.f32.mrf.mxu0
        %v6026 = vadd.f32 0.0, %v6025
        %v6027 = vpop.f32.mrf.mxu0
        %6028 = vmatprep.mubr.f32.mxu0 0.0
        %6029 = vmatmul.mubr.f32.gmra.mxu0 %v5791
        %v6030 = vpop.f32.mrf.mxu0
        %v6031 = vadd.f32 0.0, %v6030
        %v6032 = vpop.f32.mrf.mxu0
        %6033 = vdwg.mxu0
        %v6034 = vld [vmem:[#allocation5] sm:$0xff]
        %v6035 = vld [vmem:[#allocation5 + $0x8] sm:$0xff]
        %v6036 = vld [vmem:[#allocation5 + $0x10] sm:$0xff]
        %v6037 = vld [vmem:[#allocation5 + $0x18] sm:$0xff]
        %v6038 = vld [vmem:[#allocation5 + $0x20] sm:$0xff]
        %v6039 = vld [vmem:[#allocation5 + $0x28] sm:$0xff]
        %v6040 = vld [vmem:[#allocation5 + $0x30] sm:$0xff]
        %v6041 = vld [vmem:[#allocation5 + $0x38] sm:$0xff]
        %v6042 = vld [vmem:[#allocation5 + $0x40] sm:$0xff]
        %v6043 = vld [vmem:[#allocation5 + $0x48] sm:$0xff]
        %v6044 = vld [vmem:[#allocation5 + $0x50] sm:$0xff]
        %v6045 = vld [vmem:[#allocation5 + $0x58] sm:$0xff]
        %v6046 = vld [vmem:[#allocation5 + $0x60] sm:$0xff]
        %v6047 = vld [vmem:[#allocation5 + $0x68] sm:$0xff]
        %v6048 = vld [vmem:[#allocation5 + $0x70] sm:$0xff]
        %v6049 = vld [vmem:[#allocation5 + $0x78] sm:$0xff]
        %v6050 = vld [vmem:[#allocation5 + $0x80] sm:$0xff]
        %v6051 = vld [vmem:[#allocation5 + $0x88] sm:$0xff]
        %v6052 = vld [vmem:[#allocation5 + $0x90] sm:$0xff]
        %v6053 = vld [vmem:[#allocation5 + $0x98] sm:$0xff]
        %v6054 = vld [vmem:[#allocation5 + $0xa0] sm:$0xff]
        %v6055 = vld [vmem:[#allocation5 + $0xa8] sm:$0xff]
        %v6056 = vld [vmem:[#allocation5 + $0xb0] sm:$0xff]
        %v6057 = vld [vmem:[#allocation5 + $0xb8] sm:$0xff]
        %v6058 = vld [vmem:[#allocation5 + $0xc0] sm:$0xff]
        %v6059 = vld [vmem:[#allocation5 + $0xc8] sm:$0xff]
        %v6060 = vld [vmem:[#allocation5 + $0xd0] sm:$0xff]
        %v6061 = vld [vmem:[#allocation5 + $0xd8] sm:$0xff]
        %v6062 = vld [vmem:[#allocation5 + $0xe0] sm:$0xff]
        %v6063 = vld [vmem:[#allocation5 + $0xe8] sm:$0xff]
        %v6064 = vld [vmem:[#allocation5 + $0xf0] sm:$0xff]
        %v6065 = vld [vmem:[#allocation5 + $0xf8] sm:$0xff]
        %v6066 = vadd.f32 %v6034, %v5876
        %v6067 = vadd.f32 %v6035, %v5881
        %v6068 = vadd.f32 %v6036, %v5886
        %v6069 = vadd.f32 %v6037, %v5891
        %v6070 = vadd.f32 %v6038, %v5896
        %v6071 = vadd.f32 %v6039, %v5901
        %v6072 = vadd.f32 %v6040, %v5906
        %v6073 = vadd.f32 %v6041, %v5911
        %v6074 = vadd.f32 %v6042, %v5916
        %v6075 = vadd.f32 %v6043, %v5921
        %v6076 = vadd.f32 %v6044, %v5926
        %v6077 = vadd.f32 %v6045, %v5931
        %v6078 = vadd.f32 %v6046, %v5936
        %v6079 = vadd.f32 %v6047, %v5941
        %v6080 = vadd.f32 %v6048, %v5946
        %v6081 = vadd.f32 %v6049, %v5951
        %v6082 = vadd.f32 %v6050, %v5956
        %v6083 = vadd.f32 %v6051, %v5961
        %v6084 = vadd.f32 %v6052, %v5966
        %v6085 = vadd.f32 %v6053, %v5971
        %v6086 = vadd.f32 %v6054, %v5976
        %v6087 = vadd.f32 %v6055, %v5981
        %v6088 = vadd.f32 %v6056, %v5986
        %v6089 = vadd.f32 %v6057, %v5991
        %v6090 = vadd.f32 %v6058, %v5996
        %v6091 = vadd.f32 %v6059, %v6001
        %v6092 = vadd.f32 %v6060, %v6006
        %v6093 = vadd.f32 %v6061, %v6011
        %v6094 = vadd.f32 %v6062, %v6016
        %v6095 = vadd.f32 %v6063, %v6021
        %v6096 = vadd.f32 %v6064, %v6026
        %v6097 = vadd.f32 %v6065, %v6031
        %6098 = vst [vmem:[#allocation5] sm:$0xff] %v6066
        %6099 = vst [vmem:[#allocation5 + $0x8] sm:$0xff] %v6067
        %6100 = vst [vmem:[#allocation5 + $0x10] sm:$0xff] %v6068
        %6101 = vst [vmem:[#allocation5 + $0x18] sm:$0xff] %v6069
        %6102 = vst [vmem:[#allocation5 + $0x20] sm:$0xff] %v6070
        %6103 = vst [vmem:[#allocation5 + $0x28] sm:$0xff] %v6071
        %6104 = vst [vmem:[#allocation5 + $0x30] sm:$0xff] %v6072
        %6105 = vst [vmem:[#allocation5 + $0x38] sm:$0xff] %v6073
        %6106 = vst [vmem:[#allocation5 + $0x40] sm:$0xff] %v6074
        %6107 = vst [vmem:[#allocation5 + $0x48] sm:$0xff] %v6075
        %6108 = vst [vmem:[#allocation5 + $0x50] sm:$0xff] %v6076
        %6109 = vst [vmem:[#allocation5 + $0x58] sm:$0xff] %v6077
        %6110 = vst [vmem:[#allocation5 + $0x60] sm:$0xff] %v6078
        %6111 = vst [vmem:[#allocation5 + $0x68] sm:$0xff] %v6079
        %6112 = vst [vmem:[#allocation5 + $0x70] sm:$0xff] %v6080
        %6113 = vst [vmem:[#allocation5 + $0x78] sm:$0xff] %v6081
        %6114 = vst [vmem:[#allocation5 + $0x80] sm:$0xff] %v6082
        %6115 = vst [vmem:[#allocation5 + $0x88] sm:$0xff] %v6083
        %6116 = vst [vmem:[#allocation5 + $0x90] sm:$0xff] %v6084
        %6117 = vst [vmem:[#allocation5 + $0x98] sm:$0xff] %v6085
        %6118 = vst [vmem:[#allocation5 + $0xa0] sm:$0xff] %v6086
        %6119 = vst [vmem:[#allocation5 + $0xa8] sm:$0xff] %v6087
        %6120 = vst [vmem:[#allocation5 + $0xb0] sm:$0xff] %v6088
        %6121 = vst [vmem:[#allocation5 + $0xb8] sm:$0xff] %v6089
        %6122 = vst [vmem:[#allocation5 + $0xc0] sm:$0xff] %v6090
        %6123 = vst [vmem:[#allocation5 + $0xc8] sm:$0xff] %v6091
        %6124 = vst [vmem:[#allocation5 + $0xd0] sm:$0xff] %v6092
        %6125 = vst [vmem:[#allocation5 + $0xd8] sm:$0xff] %v6093
        %6126 = vst [vmem:[#allocation5 + $0xe0] sm:$0xff] %v6094
        %6127 = vst [vmem:[#allocation5 + $0xe8] sm:$0xff] %v6095
        %6128 = vst [vmem:[#allocation5 + $0xf0] sm:$0xff] %v6096
        %6129 = vst [vmem:[#allocation5 + $0xf8] sm:$0xff] %v6097
        %v6130 = vld [vmem:[%s5389 + $0x11] sm:$0xff]
        %v6131 = vld [vmem:[%s5389 + $0x19] sm:$0xff]
        %v6132 = vld [vmem:[%s5389 + $0x39] sm:$0xff]
        %v6133 = vld [vmem:[%s5389 + $0x41] sm:$0xff]
        %v6134 = vld [vmem:[%s5389 + $0x61] sm:$0xff]
        %v6135 = vld [vmem:[%s5389 + $0x69] sm:$0xff]
        %v6136 = vld [vmem:[%s5389 + $0x89] sm:$0xff]
        %v6137 = vld [vmem:[%s5389 + $0x91] sm:$0xff]
        %v6138 = vld [vmem:[%s5389 + $0xb1] sm:$0xff]
        %v6139 = vld [vmem:[%s5389 + $0xb9] sm:$0xff]
        %v6140 = vld [vmem:[%s5389 + $0xd9] sm:$0xff]
        %v6141 = vld [vmem:[%s5389 + $0xe1] sm:$0xff]
        %v6142 = vld [vmem:[%s5389 + $0x101] sm:$0xff]
        %v6143 = vld [vmem:[%s5389 + $0x109] sm:$0xff]
        %v6144 = vld [vmem:[%s5389 + $0x129] sm:$0xff]
        %v6145 = vld [vmem:[%s5389 + $0x131] sm:$0xff]
        %v6146 = vld [vmem:[%s5389 + $0x151] sm:$0xff]
        %v6147 = vld [vmem:[%s5389 + $0x159] sm:$0xff]
        %v6148 = vld [vmem:[%s5389 + $0x179] sm:$0xff]
        %v6149 = vld [vmem:[%s5389 + $0x181] sm:$0xff]
        %v6150 = vld [vmem:[%s5389 + $0x1a1] sm:$0xff]
        %v6151 = vld [vmem:[%s5389 + $0x1a9] sm:$0xff]
        %v6152 = vld [vmem:[%s5389 + $0x1c9] sm:$0xff]
        %v6153 = vld [vmem:[%s5389 + $0x1d1] sm:$0xff]
        %v6154 = vld [vmem:[%s5389 + $0x1f1] sm:$0xff]
        %v6155 = vld [vmem:[%s5389 + $0x1f9] sm:$0xff]
        %v6156 = vld [vmem:[%s5389 + $0x219] sm:$0xff]
        %v6157 = vld [vmem:[%s5389 + $0x221] sm:$0xff]
        %v6158 = vld [vmem:[%s5389 + $0x241] sm:$0xff]
        %v6159 = vld [vmem:[%s5389 + $0x249] sm:$0xff]
        %v6160 = vld [vmem:[%s5389 + $0x269] sm:$0xff]
        %v6161 = vld [vmem:[%s5389 + $0x271] sm:$0xff]
        %s6162 = scalar_lea.vmem [#allocation11], 640
        %v6163 = vld [vmem:[%s6162] sm:$0xff]
        %v6164 = vld [vmem:[%s6162 + $0x8] sm:$0xff]
        %v6165 = vld [vmem:[%s6162 + $0x10] sm:$0xff]
        %v6166 = vld [vmem:[%s6162 + $0x18] sm:$0xff]
        %v6167 = vld [vmem:[%s6162 + $0x20] sm:$0xff]
        %v6168 = vld [vmem:[%s6162 + $0x28] sm:$0xff]
        %v6169 = vld [vmem:[%s6162 + $0x30] sm:$0xff]
        %v6170 = vld [vmem:[%s6162 + $0x38] sm:$0xff]
        %v6171 = vld [vmem:[%s6162 + $0x40] sm:$0xff]
        %v6172 = vld [vmem:[%s6162 + $0x48] sm:$0xff]
        %v6173 = vld [vmem:[%s6162 + $0x50] sm:$0xff]
        %v6174 = vld [vmem:[%s6162 + $0x58] sm:$0xff]
        %v6175 = vld [vmem:[%s6162 + $0x60] sm:$0xff]
        %v6176 = vld [vmem:[%s6162 + $0x68] sm:$0xff]
        %v6177 = vld [vmem:[%s6162 + $0x70] sm:$0xff]
        %v6178 = vld [vmem:[%s6162 + $0x78] sm:$0xff]
        %6179 = vmatprep.subr.mxu0 0.0
        %6180 = vmatpush1.msra.mxu0 %v6178
        %6181 = vmatprep.subr.mxu0 0.0
        %6182 = vmatpush1.msra.mxu0 %v6177
        %6183 = vmatprep.subr.mxu0 0.0
        %6184 = vmatpush1.msra.mxu0 %v6176
        %6185 = vmatprep.subr.mxu0 0.0
        %6186 = vmatpush1.msra.mxu0 %v6175
        %6187 = vmatprep.subr.mxu0 0.0
        %6188 = vmatpush1.msra.mxu0 %v6174
        %6189 = vmatprep.subr.mxu0 0.0
        %6190 = vmatpush1.msra.mxu0 %v6173
        %6191 = vmatprep.subr.mxu0 0.0
        %6192 = vmatpush1.msra.mxu0 %v6172
        %6193 = vmatprep.subr.mxu0 0.0
        %6194 = vmatpush1.msra.mxu0 %v6171
        %6195 = vmatprep.subr.mxu0 0.0
        %6196 = vmatpush1.msra.mxu0 %v6170
        %6197 = vmatprep.subr.mxu0 0.0
        %6198 = vmatpush1.msra.mxu0 %v6169
        %6199 = vmatprep.subr.mxu0 0.0
        %6200 = vmatpush1.msra.mxu0 %v6168
        %6201 = vmatprep.subr.mxu0 0.0
        %6202 = vmatpush1.msra.mxu0 %v6167
        %6203 = vmatprep.subr.mxu0 0.0
        %6204 = vmatpush1.msra.mxu0 %v6166
        %6205 = vmatprep.subr.mxu0 0.0
        %6206 = vmatpush1.msra.mxu0 %v6165
        %6207 = vmatprep.subr.mxu0 0.0
        %6208 = vmatpush1.msra.mxu0 %v6164
        %6209 = vmatprep.subr.mxu0 0.0
        %6210 = vmatpush1.msra.mxu0 %v6163
        %6211 = vmatprep.subr.mxu0 0.0
        %6212 = vmatpush2.msra.mxu0 0.0
        %6213 = vmatprep.subr.mxu0 0.0
        %6214 = vmatpush2.msra.mxu0 0.0
        %6215 = vmatprep.subr.mxu0 0.0
        %6216 = vmatpush2.msra.mxu0 0.0
        %6217 = vmatprep.subr.mxu0 0.0
        %6218 = vmatpush2.msra.mxu0 0.0
        %6219 = vmatprep.subr.mxu0 0.0
        %6220 = vmatpush2.msra.mxu0 0.0
        %6221 = vmatprep.subr.mxu0 0.0
        %6222 = vmatpush2.msra.mxu0 0.0
        %6223 = vmatprep.subr.mxu0 0.0
        %6224 = vmatpush2.msra.mxu0 0.0
        %6225 = vmatprep.subr.mxu0 0.0
        %6226 = vmatpush2.msra.mxu0 0.0
        %6227 = vmatprep.subr.mxu0 0.0
        %6228 = vmatpush2.msra.mxu0 0.0
        %6229 = vmatprep.subr.mxu0 0.0
        %6230 = vmatpush2.msra.mxu0 0.0
        %6231 = vmatprep.subr.mxu0 0.0
        %6232 = vmatpush2.msra.mxu0 0.0
        %6233 = vmatprep.subr.mxu0 0.0
        %6234 = vmatpush2.msra.mxu0 0.0
        %6235 = vmatprep.subr.mxu0 0.0
        %6236 = vmatpush2.msra.mxu0 0.0
        %6237 = vmatprep.subr.mxu0 0.0
        %6238 = vmatpush2.msra.mxu0 0.0
        %6239 = vmatprep.subr.mxu0 0.0
        %6240 = vmatpush2.msra.mxu0 0.0
        %6241 = vmatprep.subr.mxu0 0.0
        %6242 = vmatpush2.msra.mxu0 0.0
        %6243 = vmatprep.mubr.f32.mxu0 0.0
        %6244 = vmatmul.mubr.f32.gmra.mxu0 %v6130
        %v6245 = vpop.f32.mrf.mxu0
        %v6246 = vadd.f32 0.0, %v6245
        %v6247 = vpop.f32.mrf.mxu0
        %6248 = vmatprep.mubr.f32.mxu0 0.0
        %6249 = vmatmul.mubr.f32.gmra.mxu0 %v6131
        %v6250 = vpop.f32.mrf.mxu0
        %v6251 = vadd.f32 0.0, %v6250
        %v6252 = vpop.f32.mrf.mxu0
        %6253 = vmatprep.mubr.f32.mxu0 0.0
        %6254 = vmatmul.mubr.f32.gmra.mxu0 %v6132
        %v6255 = vpop.f32.mrf.mxu0
        %v6256 = vadd.f32 0.0, %v6255
        %v6257 = vpop.f32.mrf.mxu0
        %6258 = vmatprep.mubr.f32.mxu0 0.0
        %6259 = vmatmul.mubr.f32.gmra.mxu0 %v6133
        %v6260 = vpop.f32.mrf.mxu0
        %v6261 = vadd.f32 0.0, %v6260
        %v6262 = vpop.f32.mrf.mxu0
        %6263 = vmatprep.mubr.f32.mxu0 0.0
        %6264 = vmatmul.mubr.f32.gmra.mxu0 %v6134
        %v6265 = vpop.f32.mrf.mxu0
        %v6266 = vadd.f32 0.0, %v6265
        %v6267 = vpop.f32.mrf.mxu0
        %6268 = vmatprep.mubr.f32.mxu0 0.0
        %6269 = vmatmul.mubr.f32.gmra.mxu0 %v6135
        %v6270 = vpop.f32.mrf.mxu0
        %v6271 = vadd.f32 0.0, %v6270
        %v6272 = vpop.f32.mrf.mxu0
        %6273 = vmatprep.mubr.f32.mxu0 0.0
        %6274 = vmatmul.mubr.f32.gmra.mxu0 %v6136
        %v6275 = vpop.f32.mrf.mxu0
        %v6276 = vadd.f32 0.0, %v6275
        %v6277 = vpop.f32.mrf.mxu0
        %6278 = vmatprep.mubr.f32.mxu0 0.0
        %6279 = vmatmul.mubr.f32.gmra.mxu0 %v6137
        %v6280 = vpop.f32.mrf.mxu0
        %v6281 = vadd.f32 0.0, %v6280
        %v6282 = vpop.f32.mrf.mxu0
        %6283 = vmatprep.mubr.f32.mxu0 0.0
        %6284 = vmatmul.mubr.f32.gmra.mxu0 %v6138
        %v6285 = vpop.f32.mrf.mxu0
        %v6286 = vadd.f32 0.0, %v6285
        %v6287 = vpop.f32.mrf.mxu0
        %6288 = vmatprep.mubr.f32.mxu0 0.0
        %6289 = vmatmul.mubr.f32.gmra.mxu0 %v6139
        %v6290 = vpop.f32.mrf.mxu0
        %v6291 = vadd.f32 0.0, %v6290
        %v6292 = vpop.f32.mrf.mxu0
        %6293 = vmatprep.mubr.f32.mxu0 0.0
        %6294 = vmatmul.mubr.f32.gmra.mxu0 %v6140
        %v6295 = vpop.f32.mrf.mxu0
        %v6296 = vadd.f32 0.0, %v6295
        %v6297 = vpop.f32.mrf.mxu0
        %6298 = vmatprep.mubr.f32.mxu0 0.0
        %6299 = vmatmul.mubr.f32.gmra.mxu0 %v6141
        %v6300 = vpop.f32.mrf.mxu0
        %v6301 = vadd.f32 0.0, %v6300
        %v6302 = vpop.f32.mrf.mxu0
        %6303 = vmatprep.mubr.f32.mxu0 0.0
        %6304 = vmatmul.mubr.f32.gmra.mxu0 %v6142
        %v6305 = vpop.f32.mrf.mxu0
        %v6306 = vadd.f32 0.0, %v6305
        %v6307 = vpop.f32.mrf.mxu0
        %6308 = vmatprep.mubr.f32.mxu0 0.0
        %6309 = vmatmul.mubr.f32.gmra.mxu0 %v6143
        %v6310 = vpop.f32.mrf.mxu0
        %v6311 = vadd.f32 0.0, %v6310
        %v6312 = vpop.f32.mrf.mxu0
        %6313 = vmatprep.mubr.f32.mxu0 0.0
        %6314 = vmatmul.mubr.f32.gmra.mxu0 %v6144
        %v6315 = vpop.f32.mrf.mxu0
        %v6316 = vadd.f32 0.0, %v6315
        %v6317 = vpop.f32.mrf.mxu0
        %6318 = vmatprep.mubr.f32.mxu0 0.0
        %6319 = vmatmul.mubr.f32.gmra.mxu0 %v6145
        %v6320 = vpop.f32.mrf.mxu0
        %v6321 = vadd.f32 0.0, %v6320
        %v6322 = vpop.f32.mrf.mxu0
        %6323 = vmatprep.mubr.f32.mxu0 0.0
        %6324 = vmatmul.mubr.f32.gmra.mxu0 %v6146
        %v6325 = vpop.f32.mrf.mxu0
        %v6326 = vadd.f32 0.0, %v6325
        %v6327 = vpop.f32.mrf.mxu0
        %6328 = vmatprep.mubr.f32.mxu0 0.0
        %6329 = vmatmul.mubr.f32.gmra.mxu0 %v6147
        %v6330 = vpop.f32.mrf.mxu0
        %v6331 = vadd.f32 0.0, %v6330
        %v6332 = vpop.f32.mrf.mxu0
        %6333 = vmatprep.mubr.f32.mxu0 0.0
        %6334 = vmatmul.mubr.f32.gmra.mxu0 %v6148
        %v6335 = vpop.f32.mrf.mxu0
        %v6336 = vadd.f32 0.0, %v6335
        %v6337 = vpop.f32.mrf.mxu0
        %6338 = vmatprep.mubr.f32.mxu0 0.0
        %6339 = vmatmul.mubr.f32.gmra.mxu0 %v6149
        %v6340 = vpop.f32.mrf.mxu0
        %v6341 = vadd.f32 0.0, %v6340
        %v6342 = vpop.f32.mrf.mxu0
        %6343 = vmatprep.mubr.f32.mxu0 0.0
        %6344 = vmatmul.mubr.f32.gmra.mxu0 %v6150
        %v6345 = vpop.f32.mrf.mxu0
        %v6346 = vadd.f32 0.0, %v6345
        %v6347 = vpop.f32.mrf.mxu0
        %6348 = vmatprep.mubr.f32.mxu0 0.0
        %6349 = vmatmul.mubr.f32.gmra.mxu0 %v6151
        %v6350 = vpop.f32.mrf.mxu0
        %v6351 = vadd.f32 0.0, %v6350
        %v6352 = vpop.f32.mrf.mxu0
        %6353 = vmatprep.mubr.f32.mxu0 0.0
        %6354 = vmatmul.mubr.f32.gmra.mxu0 %v6152
        %v6355 = vpop.f32.mrf.mxu0
        %v6356 = vadd.f32 0.0, %v6355
        %v6357 = vpop.f32.mrf.mxu0
        %6358 = vmatprep.mubr.f32.mxu0 0.0
        %6359 = vmatmul.mubr.f32.gmra.mxu0 %v6153
        %v6360 = vpop.f32.mrf.mxu0
        %v6361 = vadd.f32 0.0, %v6360
        %v6362 = vpop.f32.mrf.mxu0
        %6363 = vmatprep.mubr.f32.mxu0 0.0
        %6364 = vmatmul.mubr.f32.gmra.mxu0 %v6154
        %v6365 = vpop.f32.mrf.mxu0
        %v6366 = vadd.f32 0.0, %v6365
        %v6367 = vpop.f32.mrf.mxu0
        %6368 = vmatprep.mubr.f32.mxu0 0.0
        %6369 = vmatmul.mubr.f32.gmra.mxu0 %v6155
        %v6370 = vpop.f32.mrf.mxu0
        %v6371 = vadd.f32 0.0, %v6370
        %v6372 = vpop.f32.mrf.mxu0
        %6373 = vmatprep.mubr.f32.mxu0 0.0
        %6374 = vmatmul.mubr.f32.gmra.mxu0 %v6156
        %v6375 = vpop.f32.mrf.mxu0
        %v6376 = vadd.f32 0.0, %v6375
        %v6377 = vpop.f32.mrf.mxu0
        %6378 = vmatprep.mubr.f32.mxu0 0.0
        %6379 = vmatmul.mubr.f32.gmra.mxu0 %v6157
        %v6380 = vpop.f32.mrf.mxu0
        %v6381 = vadd.f32 0.0, %v6380
        %v6382 = vpop.f32.mrf.mxu0
        %6383 = vmatprep.mubr.f32.mxu0 0.0
        %6384 = vmatmul.mubr.f32.gmra.mxu0 %v6158
        %v6385 = vpop.f32.mrf.mxu0
        %v6386 = vadd.f32 0.0, %v6385
        %v6387 = vpop.f32.mrf.mxu0
        %6388 = vmatprep.mubr.f32.mxu0 0.0
        %6389 = vmatmul.mubr.f32.gmra.mxu0 %v6159
        %v6390 = vpop.f32.mrf.mxu0
        %v6391 = vadd.f32 0.0, %v6390
        %v6392 = vpop.f32.mrf.mxu0
        %6393 = vmatprep.mubr.f32.mxu0 0.0
        %6394 = vmatmul.mubr.f32.gmra.mxu0 %v6160
        %v6395 = vpop.f32.mrf.mxu0
        %v6396 = vadd.f32 0.0, %v6395
        %v6397 = vpop.f32.mrf.mxu0
        %6398 = vmatprep.mubr.f32.mxu0 0.0
        %6399 = vmatmul.mubr.f32.gmra.mxu0 %v6161
        %v6400 = vpop.f32.mrf.mxu0
        %v6401 = vadd.f32 0.0, %v6400
        %v6402 = vpop.f32.mrf.mxu0
        %6403 = vdwg.mxu0
        %v6404 = vld [vmem:[#allocation5] sm:$0xff]
        %v6405 = vld [vmem:[#allocation5 + $0x8] sm:$0xff]
        %v6406 = vld [vmem:[#allocation5 + $0x10] sm:$0xff]
        %v6407 = vld [vmem:[#allocation5 + $0x18] sm:$0xff]
        %v6408 = vld [vmem:[#allocation5 + $0x20] sm:$0xff]
        %v6409 = vld [vmem:[#allocation5 + $0x28] sm:$0xff]
        %v6410 = vld [vmem:[#allocation5 + $0x30] sm:$0xff]
        %v6411 = vld [vmem:[#allocation5 + $0x38] sm:$0xff]
        %v6412 = vld [vmem:[#allocation5 + $0x40] sm:$0xff]
        %v6413 = vld [vmem:[#allocation5 + $0x48] sm:$0xff]
        %v6414 = vld [vmem:[#allocation5 + $0x50] sm:$0xff]
        %v6415 = vld [vmem:[#allocation5 + $0x58] sm:$0xff]
        %v6416 = vld [vmem:[#allocation5 + $0x60] sm:$0xff]
        %v6417 = vld [vmem:[#allocation5 + $0x68] sm:$0xff]
        %v6418 = vld [vmem:[#allocation5 + $0x70] sm:$0xff]
        %v6419 = vld [vmem:[#allocation5 + $0x78] sm:$0xff]
        %v6420 = vld [vmem:[#allocation5 + $0x80] sm:$0xff]
        %v6421 = vld [vmem:[#allocation5 + $0x88] sm:$0xff]
        %v6422 = vld [vmem:[#allocation5 + $0x90] sm:$0xff]
        %v6423 = vld [vmem:[#allocation5 + $0x98] sm:$0xff]
        %v6424 = vld [vmem:[#allocation5 + $0xa0] sm:$0xff]
        %v6425 = vld [vmem:[#allocation5 + $0xa8] sm:$0xff]
        %v6426 = vld [vmem:[#allocation5 + $0xb0] sm:$0xff]
        %v6427 = vld [vmem:[#allocation5 + $0xb8] sm:$0xff]
        %v6428 = vld [vmem:[#allocation5 + $0xc0] sm:$0xff]
        %v6429 = vld [vmem:[#allocation5 + $0xc8] sm:$0xff]
        %v6430 = vld [vmem:[#allocation5 + $0xd0] sm:$0xff]
        %v6431 = vld [vmem:[#allocation5 + $0xd8] sm:$0xff]
        %v6432 = vld [vmem:[#allocation5 + $0xe0] sm:$0xff]
        %v6433 = vld [vmem:[#allocation5 + $0xe8] sm:$0xff]
        %v6434 = vld [vmem:[#allocation5 + $0xf0] sm:$0xff]
        %v6435 = vld [vmem:[#allocation5 + $0xf8] sm:$0xff]
        %v6436 = vadd.f32 %v6404, %v6246
        %v6437 = vadd.f32 %v6405, %v6251
        %v6438 = vadd.f32 %v6406, %v6256
        %v6439 = vadd.f32 %v6407, %v6261
        %v6440 = vadd.f32 %v6408, %v6266
        %v6441 = vadd.f32 %v6409, %v6271
        %v6442 = vadd.f32 %v6410, %v6276
        %v6443 = vadd.f32 %v6411, %v6281
        %v6444 = vadd.f32 %v6412, %v6286
        %v6445 = vadd.f32 %v6413, %v6291
        %v6446 = vadd.f32 %v6414, %v6296
        %v6447 = vadd.f32 %v6415, %v6301
        %v6448 = vadd.f32 %v6416, %v6306
        %v6449 = vadd.f32 %v6417, %v6311
        %v6450 = vadd.f32 %v6418, %v6316
        %v6451 = vadd.f32 %v6419, %v6321
        %v6452 = vadd.f32 %v6420, %v6326
        %v6453 = vadd.f32 %v6421, %v6331
        %v6454 = vadd.f32 %v6422, %v6336
        %v6455 = vadd.f32 %v6423, %v6341
        %v6456 = vadd.f32 %v6424, %v6346
        %v6457 = vadd.f32 %v6425, %v6351
        %v6458 = vadd.f32 %v6426, %v6356
        %v6459 = vadd.f32 %v6427, %v6361
        %v6460 = vadd.f32 %v6428, %v6366
        %v6461 = vadd.f32 %v6429, %v6371
        %v6462 = vadd.f32 %v6430, %v6376
        %v6463 = vadd.f32 %v6431, %v6381
        %v6464 = vadd.f32 %v6432, %v6386
        %v6465 = vadd.f32 %v6433, %v6391
        %v6466 = vadd.f32 %v6434, %v6396
        %v6467 = vadd.f32 %v6435, %v6401
        %6468 = vst [vmem:[#allocation5] sm:$0xff] %v6436
        %6469 = vst [vmem:[#allocation5 + $0x8] sm:$0xff] %v6437
        %6470 = vst [vmem:[#allocation5 + $0x10] sm:$0xff] %v6438
        %6471 = vst [vmem:[#allocation5 + $0x18] sm:$0xff] %v6439
        %6472 = vst [vmem:[#allocation5 + $0x20] sm:$0xff] %v6440
        %6473 = vst [vmem:[#allocation5 + $0x28] sm:$0xff] %v6441
        %6474 = vst [vmem:[#allocation5 + $0x30] sm:$0xff] %v6442
        %6475 = vst [vmem:[#allocation5 + $0x38] sm:$0xff] %v6443
        %6476 = vst [vmem:[#allocation5 + $0x40] sm:$0xff] %v6444
        %6477 = vst [vmem:[#allocation5 + $0x48] sm:$0xff] %v6445
        %6478 = vst [vmem:[#allocation5 + $0x50] sm:$0xff] %v6446
        %6479 = vst [vmem:[#allocation5 + $0x58] sm:$0xff] %v6447
        %6480 = vst [vmem:[#allocation5 + $0x60] sm:$0xff] %v6448
        %6481 = vst [vmem:[#allocation5 + $0x68] sm:$0xff] %v6449
        %6482 = vst [vmem:[#allocation5 + $0x70] sm:$0xff] %v6450
        %6483 = vst [vmem:[#allocation5 + $0x78] sm:$0xff] %v6451
        %6484 = vst [vmem:[#allocation5 + $0x80] sm:$0xff] %v6452
        %6485 = vst [vmem:[#allocation5 + $0x88] sm:$0xff] %v6453
        %6486 = vst [vmem:[#allocation5 + $0x90] sm:$0xff] %v6454
        %6487 = vst [vmem:[#allocation5 + $0x98] sm:$0xff] %v6455
        %6488 = vst [vmem:[#allocation5 + $0xa0] sm:$0xff] %v6456
        %6489 = vst [vmem:[#allocation5 + $0xa8] sm:$0xff] %v6457
        %6490 = vst [vmem:[#allocation5 + $0xb0] sm:$0xff] %v6458
        %6491 = vst [vmem:[#allocation5 + $0xb8] sm:$0xff] %v6459
        %6492 = vst [vmem:[#allocation5 + $0xc0] sm:$0xff] %v6460
        %6493 = vst [vmem:[#allocation5 + $0xc8] sm:$0xff] %v6461
        %6494 = vst [vmem:[#allocation5 + $0xd0] sm:$0xff] %v6462
        %6495 = vst [vmem:[#allocation5 + $0xd8] sm:$0xff] %v6463
        %6496 = vst [vmem:[#allocation5 + $0xe0] sm:$0xff] %v6464
        %6497 = vst [vmem:[#allocation5 + $0xe8] sm:$0xff] %v6465
        %6498 = vst [vmem:[#allocation5 + $0xf0] sm:$0xff] %v6466
        %6499 = vst [vmem:[#allocation5 + $0xf8] sm:$0xff] %v6467
        %s6500 = scalar_lea.vmem [#allocation3], 80
        %v6501 = vld [vmem:[%s6500 + $0xf] sm:$0xff]
        %v6502 = vld [vmem:[%s6500 + $0x17] sm:$0xff]
        %v6503 = vld [vmem:[%s6500 + $0x37] sm:$0xff]
        %v6504 = vld [vmem:[%s6500 + $0x3f] sm:$0xff]
        %v6505 = vld [vmem:[%s6500 + $0x5f] sm:$0xff]
        %v6506 = vld [vmem:[%s6500 + $0x67] sm:$0xff]
        %v6507 = vld [vmem:[%s6500 + $0x87] sm:$0xff]
        %v6508 = vld [vmem:[%s6500 + $0x8f] sm:$0xff]
        %v6509 = vld [vmem:[%s6500 + $0xaf] sm:$0xff]
        %v6510 = vld [vmem:[%s6500 + $0xb7] sm:$0xff]
        %v6511 = vld [vmem:[%s6500 + $0xd7] sm:$0xff]
        %v6512 = vld [vmem:[%s6500 + $0xdf] sm:$0xff]
        %v6513 = vld [vmem:[%s6500 + $0xff] sm:$0xff]
        %v6514 = vld [vmem:[%s6500 + $0x107] sm:$0xff]
        %v6515 = vld [vmem:[%s6500 + $0x127] sm:$0xff]
        %v6516 = vld [vmem:[%s6500 + $0x12f] sm:$0xff]
        %v6517 = vld [vmem:[%s6500 + $0x14f] sm:$0xff]
        %v6518 = vld [vmem:[%s6500 + $0x157] sm:$0xff]
        %v6519 = vld [vmem:[%s6500 + $0x177] sm:$0xff]
        %v6520 = vld [vmem:[%s6500 + $0x17f] sm:$0xff]
        %v6521 = vld [vmem:[%s6500 + $0x19f] sm:$0xff]
        %v6522 = vld [vmem:[%s6500 + $0x1a7] sm:$0xff]
        %v6523 = vld [vmem:[%s6500 + $0x1c7] sm:$0xff]
        %v6524 = vld [vmem:[%s6500 + $0x1cf] sm:$0xff]
        %v6525 = vld [vmem:[%s6500 + $0x1ef] sm:$0xff]
        %v6526 = vld [vmem:[%s6500 + $0x1f7] sm:$0xff]
        %v6527 = vld [vmem:[%s6500 + $0x217] sm:$0xff]
        %v6528 = vld [vmem:[%s6500 + $0x21f] sm:$0xff]
        %v6529 = vld [vmem:[%s6500 + $0x23f] sm:$0xff]
        %v6530 = vld [vmem:[%s6500 + $0x247] sm:$0xff]
        %v6531 = vld [vmem:[%s6500 + $0x267] sm:$0xff]
        %v6532 = vld [vmem:[%s6500 + $0x26f] sm:$0xff]
        %s6533 = scalar_lea.vmem [#allocation11], 768
        %v6534 = vld [vmem:[%s6533] sm:$0xff]
        %v6535 = vld [vmem:[%s6533 + $0x8] sm:$0xff]
        %v6536 = vld [vmem:[%s6533 + $0x10] sm:$0xff]
        %v6537 = vld [vmem:[%s6533 + $0x18] sm:$0xff]
        %v6538 = vld [vmem:[%s6533 + $0x20] sm:$0xff]
        %v6539 = vld [vmem:[%s6533 + $0x28] sm:$0xff]
        %v6540 = vld [vmem:[%s6533 + $0x30] sm:$0xff]
        %v6541 = vld [vmem:[%s6533 + $0x38] sm:$0xff]
        %v6542 = vld [vmem:[%s6533 + $0x40] sm:$0xff]
        %v6543 = vld [vmem:[%s6533 + $0x48] sm:$0xff]
        %v6544 = vld [vmem:[%s6533 + $0x50] sm:$0xff]
        %v6545 = vld [vmem:[%s6533 + $0x58] sm:$0xff]
        %v6546 = vld [vmem:[%s6533 + $0x60] sm:$0xff]
        %v6547 = vld [vmem:[%s6533 + $0x68] sm:$0xff]
        %v6548 = vld [vmem:[%s6533 + $0x70] sm:$0xff]
        %v6549 = vld [vmem:[%s6533 + $0x78] sm:$0xff]
        %6550 = vmatprep.subr.mxu0 0.0
        %6551 = vmatpush1.msra.mxu0 %v6549
        %6552 = vmatprep.subr.mxu0 0.0
        %6553 = vmatpush1.msra.mxu0 %v6548
        %6554 = vmatprep.subr.mxu0 0.0
        %6555 = vmatpush1.msra.mxu0 %v6547
        %6556 = vmatprep.subr.mxu0 0.0
        %6557 = vmatpush1.msra.mxu0 %v6546
        %6558 = vmatprep.subr.mxu0 0.0
        %6559 = vmatpush1.msra.mxu0 %v6545
        %6560 = vmatprep.subr.mxu0 0.0
        %6561 = vmatpush1.msra.mxu0 %v6544
        %6562 = vmatprep.subr.mxu0 0.0
        %6563 = vmatpush1.msra.mxu0 %v6543
        %6564 = vmatprep.subr.mxu0 0.0
        %6565 = vmatpush1.msra.mxu0 %v6542
        %6566 = vmatprep.subr.mxu0 0.0
        %6567 = vmatpush1.msra.mxu0 %v6541
        %6568 = vmatprep.subr.mxu0 0.0
        %6569 = vmatpush1.msra.mxu0 %v6540
        %6570 = vmatprep.subr.mxu0 0.0
        %6571 = vmatpush1.msra.mxu0 %v6539
        %6572 = vmatprep.subr.mxu0 0.0
        %6573 = vmatpush1.msra.mxu0 %v6538
        %6574 = vmatprep.subr.mxu0 0.0
        %6575 = vmatpush1.msra.mxu0 %v6537
        %6576 = vmatprep.subr.mxu0 0.0
        %6577 = vmatpush1.msra.mxu0 %v6536
        %6578 = vmatprep.subr.mxu0 0.0
        %6579 = vmatpush1.msra.mxu0 %v6535
        %6580 = vmatprep.subr.mxu0 0.0
        %6581 = vmatpush1.msra.mxu0 %v6534
        %6582 = vmatprep.subr.mxu0 0.0
        %6583 = vmatpush2.msra.mxu0 0.0
        %6584 = vmatprep.subr.mxu0 0.0
        %6585 = vmatpush2.msra.mxu0 0.0
        %6586 = vmatprep.subr.mxu0 0.0
        %6587 = vmatpush2.msra.mxu0 0.0
        %6588 = vmatprep.subr.mxu0 0.0
        %6589 = vmatpush2.msra.mxu0 0.0
        %6590 = vmatprep.subr.mxu0 0.0
        %6591 = vmatpush2.msra.mxu0 0.0
        %6592 = vmatprep.subr.mxu0 0.0
        %6593 = vmatpush2.msra.mxu0 0.0
        %6594 = vmatprep.subr.mxu0 0.0
        %6595 = vmatpush2.msra.mxu0 0.0
        %6596 = vmatprep.subr.mxu0 0.0
        %6597 = vmatpush2.msra.mxu0 0.0
        %6598 = vmatprep.subr.mxu0 0.0
        %6599 = vmatpush2.msra.mxu0 0.0
        %6600 = vmatprep.subr.mxu0 0.0
        %6601 = vmatpush2.msra.mxu0 0.0
        %6602 = vmatprep.subr.mxu0 0.0
        %6603 = vmatpush2.msra.mxu0 0.0
        %6604 = vmatprep.subr.mxu0 0.0
        %6605 = vmatpush2.msra.mxu0 0.0
        %6606 = vmatprep.subr.mxu0 0.0
        %6607 = vmatpush2.msra.mxu0 0.0
        %6608 = vmatprep.subr.mxu0 0.0
        %6609 = vmatpush2.msra.mxu0 0.0
        %6610 = vmatprep.subr.mxu0 0.0
        %6611 = vmatpush2.msra.mxu0 0.0
        %6612 = vmatprep.subr.mxu0 0.0
        %6613 = vmatpush2.msra.mxu0 0.0
        %6614 = vmatprep.mubr.f32.mxu0 0.0
        %6615 = vmatmul.mubr.f32.gmra.mxu0 %v6501
        %v6616 = vpop.f32.mrf.mxu0
        %v6617 = vadd.f32 0.0, %v6616
        %v6618 = vpop.f32.mrf.mxu0
        %6619 = vmatprep.mubr.f32.mxu0 0.0
        %6620 = vmatmul.mubr.f32.gmra.mxu0 %v6502
        %v6621 = vpop.f32.mrf.mxu0
        %v6622 = vadd.f32 0.0, %v6621
        %v6623 = vpop.f32.mrf.mxu0
        %6624 = vmatprep.mubr.f32.mxu0 0.0
        %6625 = vmatmul.mubr.f32.gmra.mxu0 %v6503
        %v6626 = vpop.f32.mrf.mxu0
        %v6627 = vadd.f32 0.0, %v6626
        %v6628 = vpop.f32.mrf.mxu0
        %6629 = vmatprep.mubr.f32.mxu0 0.0
        %6630 = vmatmul.mubr.f32.gmra.mxu0 %v6504
        %v6631 = vpop.f32.mrf.mxu0
        %v6632 = vadd.f32 0.0, %v6631
        %v6633 = vpop.f32.mrf.mxu0
        %6634 = vmatprep.mubr.f32.mxu0 0.0
        %6635 = vmatmul.mubr.f32.gmra.mxu0 %v6505
        %v6636 = vpop.f32.mrf.mxu0
        %v6637 = vadd.f32 0.0, %v6636
        %v6638 = vpop.f32.mrf.mxu0
        %6639 = vmatprep.mubr.f32.mxu0 0.0
        %6640 = vmatmul.mubr.f32.gmra.mxu0 %v6506
        %v6641 = vpop.f32.mrf.mxu0
        %v6642 = vadd.f32 0.0, %v6641
        %v6643 = vpop.f32.mrf.mxu0
        %6644 = vmatprep.mubr.f32.mxu0 0.0
        %6645 = vmatmul.mubr.f32.gmra.mxu0 %v6507
        %v6646 = vpop.f32.mrf.mxu0
        %v6647 = vadd.f32 0.0, %v6646
        %v6648 = vpop.f32.mrf.mxu0
        %6649 = vmatprep.mubr.f32.mxu0 0.0
        %6650 = vmatmul.mubr.f32.gmra.mxu0 %v6508
        %v6651 = vpop.f32.mrf.mxu0
        %v6652 = vadd.f32 0.0, %v6651
        %v6653 = vpop.f32.mrf.mxu0
        %6654 = vmatprep.mubr.f32.mxu0 0.0
        %6655 = vmatmul.mubr.f32.gmra.mxu0 %v6509
        %v6656 = vpop.f32.mrf.mxu0
        %v6657 = vadd.f32 0.0, %v6656
        %v6658 = vpop.f32.mrf.mxu0
        %6659 = vmatprep.mubr.f32.mxu0 0.0
        %6660 = vmatmul.mubr.f32.gmra.mxu0 %v6510
        %v6661 = vpop.f32.mrf.mxu0
        %v6662 = vadd.f32 0.0, %v6661
        %v6663 = vpop.f32.mrf.mxu0
        %6664 = vmatprep.mubr.f32.mxu0 0.0
        %6665 = vmatmul.mubr.f32.gmra.mxu0 %v6511
        %v6666 = vpop.f32.mrf.mxu0
        %v6667 = vadd.f32 0.0, %v6666
        %v6668 = vpop.f32.mrf.mxu0
        %6669 = vmatprep.mubr.f32.mxu0 0.0
        %6670 = vmatmul.mubr.f32.gmra.mxu0 %v6512
        %v6671 = vpop.f32.mrf.mxu0
        %v6672 = vadd.f32 0.0, %v6671
        %v6673 = vpop.f32.mrf.mxu0
        %6674 = vmatprep.mubr.f32.mxu0 0.0
        %6675 = vmatmul.mubr.f32.gmra.mxu0 %v6513
        %v6676 = vpop.f32.mrf.mxu0
        %v6677 = vadd.f32 0.0, %v6676
        %v6678 = vpop.f32.mrf.mxu0
        %6679 = vmatprep.mubr.f32.mxu0 0.0
        %6680 = vmatmul.mubr.f32.gmra.mxu0 %v6514
        %v6681 = vpop.f32.mrf.mxu0
        %v6682 = vadd.f32 0.0, %v6681
        %v6683 = vpop.f32.mrf.mxu0
        %6684 = vmatprep.mubr.f32.mxu0 0.0
        %6685 = vmatmul.mubr.f32.gmra.mxu0 %v6515
        %v6686 = vpop.f32.mrf.mxu0
        %v6687 = vadd.f32 0.0, %v6686
        %v6688 = vpop.f32.mrf.mxu0
        %6689 = vmatprep.mubr.f32.mxu0 0.0
        %6690 = vmatmul.mubr.f32.gmra.mxu0 %v6516
        %v6691 = vpop.f32.mrf.mxu0
        %v6692 = vadd.f32 0.0, %v6691
        %v6693 = vpop.f32.mrf.mxu0
        %6694 = vmatprep.mubr.f32.mxu0 0.0
        %6695 = vmatmul.mubr.f32.gmra.mxu0 %v6517
        %v6696 = vpop.f32.mrf.mxu0
        %v6697 = vadd.f32 0.0, %v6696
        %v6698 = vpop.f32.mrf.mxu0
        %6699 = vmatprep.mubr.f32.mxu0 0.0
        %6700 = vmatmul.mubr.f32.gmra.mxu0 %v6518
        %v6701 = vpop.f32.mrf.mxu0
        %v6702 = vadd.f32 0.0, %v6701
        %v6703 = vpop.f32.mrf.mxu0
        %6704 = vmatprep.mubr.f32.mxu0 0.0
        %6705 = vmatmul.mubr.f32.gmra.mxu0 %v6519
        %v6706 = vpop.f32.mrf.mxu0
        %v6707 = vadd.f32 0.0, %v6706
        %v6708 = vpop.f32.mrf.mxu0
        %6709 = vmatprep.mubr.f32.mxu0 0.0
        %6710 = vmatmul.mubr.f32.gmra.mxu0 %v6520
        %v6711 = vpop.f32.mrf.mxu0
        %v6712 = vadd.f32 0.0, %v6711
        %v6713 = vpop.f32.mrf.mxu0
        %6714 = vmatprep.mubr.f32.mxu0 0.0
        %6715 = vmatmul.mubr.f32.gmra.mxu0 %v6521
        %v6716 = vpop.f32.mrf.mxu0
        %v6717 = vadd.f32 0.0, %v6716
        %v6718 = vpop.f32.mrf.mxu0
        %6719 = vmatprep.mubr.f32.mxu0 0.0
        %6720 = vmatmul.mubr.f32.gmra.mxu0 %v6522
        %v6721 = vpop.f32.mrf.mxu0
        %v6722 = vadd.f32 0.0, %v6721
        %v6723 = vpop.f32.mrf.mxu0
        %6724 = vmatprep.mubr.f32.mxu0 0.0
        %6725 = vmatmul.mubr.f32.gmra.mxu0 %v6523
        %v6726 = vpop.f32.mrf.mxu0
        %v6727 = vadd.f32 0.0, %v6726
        %v6728 = vpop.f32.mrf.mxu0
        %6729 = vmatprep.mubr.f32.mxu0 0.0
        %6730 = vmatmul.mubr.f32.gmra.mxu0 %v6524
        %v6731 = vpop.f32.mrf.mxu0
        %v6732 = vadd.f32 0.0, %v6731
        %v6733 = vpop.f32.mrf.mxu0
        %6734 = vmatprep.mubr.f32.mxu0 0.0
        %6735 = vmatmul.mubr.f32.gmra.mxu0 %v6525
        %v6736 = vpop.f32.mrf.mxu0
        %v6737 = vadd.f32 0.0, %v6736
        %v6738 = vpop.f32.mrf.mxu0
        %6739 = vmatprep.mubr.f32.mxu0 0.0
        %6740 = vmatmul.mubr.f32.gmra.mxu0 %v6526
        %v6741 = vpop.f32.mrf.mxu0
        %v6742 = vadd.f32 0.0, %v6741
        %v6743 = vpop.f32.mrf.mxu0
        %6744 = vmatprep.mubr.f32.mxu0 0.0
        %6745 = vmatmul.mubr.f32.gmra.mxu0 %v6527
        %v6746 = vpop.f32.mrf.mxu0
        %v6747 = vadd.f32 0.0, %v6746
        %v6748 = vpop.f32.mrf.mxu0
        %6749 = vmatprep.mubr.f32.mxu0 0.0
        %6750 = vmatmul.mubr.f32.gmra.mxu0 %v6528
        %v6751 = vpop.f32.mrf.mxu0
        %v6752 = vadd.f32 0.0, %v6751
        %v6753 = vpop.f32.mrf.mxu0
        %6754 = vmatprep.mubr.f32.mxu0 0.0
        %6755 = vmatmul.mubr.f32.gmra.mxu0 %v6529
        %v6756 = vpop.f32.mrf.mxu0
        %v6757 = vadd.f32 0.0, %v6756
        %v6758 = vpop.f32.mrf.mxu0
        %6759 = vmatprep.mubr.f32.mxu0 0.0
        %6760 = vmatmul.mubr.f32.gmra.mxu0 %v6530
        %v6761 = vpop.f32.mrf.mxu0
        %v6762 = vadd.f32 0.0, %v6761
        %v6763 = vpop.f32.mrf.mxu0
        %6764 = vmatprep.mubr.f32.mxu0 0.0
        %6765 = vmatmul.mubr.f32.gmra.mxu0 %v6531
        %v6766 = vpop.f32.mrf.mxu0
        %v6767 = vadd.f32 0.0, %v6766
        %v6768 = vpop.f32.mrf.mxu0
        %6769 = vmatprep.mubr.f32.mxu0 0.0
        %6770 = vmatmul.mubr.f32.gmra.mxu0 %v6532
        %v6771 = vpop.f32.mrf.mxu0
        %v6772 = vadd.f32 0.0, %v6771
        %v6773 = vpop.f32.mrf.mxu0
        %6774 = vdwg.mxu0
        %v6775 = vld [vmem:[#allocation5] sm:$0xff]
        %v6776 = vld [vmem:[#allocation5 + $0x8] sm:$0xff]
        %v6777 = vld [vmem:[#allocation5 + $0x10] sm:$0xff]
        %v6778 = vld [vmem:[#allocation5 + $0x18] sm:$0xff]
        %v6779 = vld [vmem:[#allocation5 + $0x20] sm:$0xff]
        %v6780 = vld [vmem:[#allocation5 + $0x28] sm:$0xff]
        %v6781 = vld [vmem:[#allocation5 + $0x30] sm:$0xff]
        %v6782 = vld [vmem:[#allocation5 + $0x38] sm:$0xff]
        %v6783 = vld [vmem:[#allocation5 + $0x40] sm:$0xff]
        %v6784 = vld [vmem:[#allocation5 + $0x48] sm:$0xff]
        %v6785 = vld [vmem:[#allocation5 + $0x50] sm:$0xff]
        %v6786 = vld [vmem:[#allocation5 + $0x58] sm:$0xff]
        %v6787 = vld [vmem:[#allocation5 + $0x60] sm:$0xff]
        %v6788 = vld [vmem:[#allocation5 + $0x68] sm:$0xff]
        %v6789 = vld [vmem:[#allocation5 + $0x70] sm:$0xff]
        %v6790 = vld [vmem:[#allocation5 + $0x78] sm:$0xff]
        %v6791 = vld [vmem:[#allocation5 + $0x80] sm:$0xff]
        %v6792 = vld [vmem:[#allocation5 + $0x88] sm:$0xff]
        %v6793 = vld [vmem:[#allocation5 + $0x90] sm:$0xff]
        %v6794 = vld [vmem:[#allocation5 + $0x98] sm:$0xff]
        %v6795 = vld [vmem:[#allocation5 + $0xa0] sm:$0xff]
        %v6796 = vld [vmem:[#allocation5 + $0xa8] sm:$0xff]
        %v6797 = vld [vmem:[#allocation5 + $0xb0] sm:$0xff]
        %v6798 = vld [vmem:[#allocation5 + $0xb8] sm:$0xff]
        %v6799 = vld [vmem:[#allocation5 + $0xc0] sm:$0xff]
        %v6800 = vld [vmem:[#allocation5 + $0xc8] sm:$0xff]
        %v6801 = vld [vmem:[#allocation5 + $0xd0] sm:$0xff]
        %v6802 = vld [vmem:[#allocation5 + $0xd8] sm:$0xff]
        %v6803 = vld [vmem:[#allocation5 + $0xe0] sm:$0xff]
        %v6804 = vld [vmem:[#allocation5 + $0xe8] sm:$0xff]
        %v6805 = vld [vmem:[#allocation5 + $0xf0] sm:$0xff]
        %v6806 = vld [vmem:[#allocation5 + $0xf8] sm:$0xff]
        %v6807 = vadd.f32 %v6775, %v6617
        %v6808 = vadd.f32 %v6776, %v6622
        %v6809 = vadd.f32 %v6777, %v6627
        %v6810 = vadd.f32 %v6778, %v6632
        %v6811 = vadd.f32 %v6779, %v6637
        %v6812 = vadd.f32 %v6780, %v6642
        %v6813 = vadd.f32 %v6781, %v6647
        %v6814 = vadd.f32 %v6782, %v6652
        %v6815 = vadd.f32 %v6783, %v6657
        %v6816 = vadd.f32 %v6784, %v6662
        %v6817 = vadd.f32 %v6785, %v6667
        %v6818 = vadd.f32 %v6786, %v6672
        %v6819 = vadd.f32 %v6787, %v6677
        %v6820 = vadd.f32 %v6788, %v6682
        %v6821 = vadd.f32 %v6789, %v6687
        %v6822 = vadd.f32 %v6790, %v6692
        %v6823 = vadd.f32 %v6791, %v6697
        %v6824 = vadd.f32 %v6792, %v6702
        %v6825 = vadd.f32 %v6793, %v6707
        %v6826 = vadd.f32 %v6794, %v6712
        %v6827 = vadd.f32 %v6795, %v6717
        %v6828 = vadd.f32 %v6796, %v6722
        %v6829 = vadd.f32 %v6797, %v6727
        %v6830 = vadd.f32 %v6798, %v6732
        %v6831 = vadd.f32 %v6799, %v6737
        %v6832 = vadd.f32 %v6800, %v6742
        %v6833 = vadd.f32 %v6801, %v6747
        %v6834 = vadd.f32 %v6802, %v6752
        %v6835 = vadd.f32 %v6803, %v6757
        %v6836 = vadd.f32 %v6804, %v6762
        %v6837 = vadd.f32 %v6805, %v6767
        %v6838 = vadd.f32 %v6806, %v6772
        %6839 = vst [vmem:[#allocation5] sm:$0xff] %v6807
        %6840 = vst [vmem:[#allocation5 + $0x8] sm:$0xff] %v6808
        %6841 = vst [vmem:[#allocation5 + $0x10] sm:$0xff] %v6809
        %6842 = vst [vmem:[#allocation5 + $0x18] sm:$0xff] %v6810
        %6843 = vst [vmem:[#allocation5 + $0x20] sm:$0xff] %v6811
        %6844 = vst [vmem:[#allocation5 + $0x28] sm:$0xff] %v6812
        %6845 = vst [vmem:[#allocation5 + $0x30] sm:$0xff] %v6813
        %6846 = vst [vmem:[#allocation5 + $0x38] sm:$0xff] %v6814
        %6847 = vst [vmem:[#allocation5 + $0x40] sm:$0xff] %v6815
        %6848 = vst [vmem:[#allocation5 + $0x48] sm:$0xff] %v6816
        %6849 = vst [vmem:[#allocation5 + $0x50] sm:$0xff] %v6817
        %6850 = vst [vmem:[#allocation5 + $0x58] sm:$0xff] %v6818
        %6851 = vst [vmem:[#allocation5 + $0x60] sm:$0xff] %v6819
        %6852 = vst [vmem:[#allocation5 + $0x68] sm:$0xff] %v6820
        %6853 = vst [vmem:[#allocation5 + $0x70] sm:$0xff] %v6821
        %6854 = vst [vmem:[#allocation5 + $0x78] sm:$0xff] %v6822
        %6855 = vst [vmem:[#allocation5 + $0x80] sm:$0xff] %v6823
        %6856 = vst [vmem:[#allocation5 + $0x88] sm:$0xff] %v6824
        %6857 = vst [vmem:[#allocation5 + $0x90] sm:$0xff] %v6825
        %6858 = vst [vmem:[#allocation5 + $0x98] sm:$0xff] %v6826
        %6859 = vst [vmem:[#allocation5 + $0xa0] sm:$0xff] %v6827
        %6860 = vst [vmem:[#allocation5 + $0xa8] sm:$0xff] %v6828
        %6861 = vst [vmem:[#allocation5 + $0xb0] sm:$0xff] %v6829
        %6862 = vst [vmem:[#allocation5 + $0xb8] sm:$0xff] %v6830
        %6863 = vst [vmem:[#allocation5 + $0xc0] sm:$0xff] %v6831
        %6864 = vst [vmem:[#allocation5 + $0xc8] sm:$0xff] %v6832
        %6865 = vst [vmem:[#allocation5 + $0xd0] sm:$0xff] %v6833
        %6866 = vst [vmem:[#allocation5 + $0xd8] sm:$0xff] %v6834
        %6867 = vst [vmem:[#allocation5 + $0xe0] sm:$0xff] %v6835
        %6868 = vst [vmem:[#allocation5 + $0xe8] sm:$0xff] %v6836
        %6869 = vst [vmem:[#allocation5 + $0xf0] sm:$0xff] %v6837
        %6870 = vst [vmem:[#allocation5 + $0xf8] sm:$0xff] %v6838
        %v6871 = vld [vmem:[%s6500 + $0x10] sm:$0xff]
        %v6872 = vld [vmem:[%s6500 + $0x18] sm:$0xff]
        %v6873 = vld [vmem:[%s6500 + $0x38] sm:$0xff]
        %v6874 = vld [vmem:[%s6500 + $0x40] sm:$0xff]
        %v6875 = vld [vmem:[%s6500 + $0x60] sm:$0xff]
        %v6876 = vld [vmem:[%s6500 + $0x68] sm:$0xff]
        %v6877 = vld [vmem:[%s6500 + $0x88] sm:$0xff]
        %v6878 = vld [vmem:[%s6500 + $0x90] sm:$0xff]
        %v6879 = vld [vmem:[%s6500 + $0xb0] sm:$0xff]
        %v6880 = vld [vmem:[%s6500 + $0xb8] sm:$0xff]
        %v6881 = vld [vmem:[%s6500 + $0xd8] sm:$0xff]
        %v6882 = vld [vmem:[%s6500 + $0xe0] sm:$0xff]
        %v6883 = vld [vmem:[%s6500 + $0x100] sm:$0xff]
        %v6884 = vld [vmem:[%s6500 + $0x108] sm:$0xff]
        %v6885 = vld [vmem:[%s6500 + $0x128] sm:$0xff]
        %v6886 = vld [vmem:[%s6500 + $0x130] sm:$0xff]
        %v6887 = vld [vmem:[%s6500 + $0x150] sm:$0xff]
        %v6888 = vld [vmem:[%s6500 + $0x158] sm:$0xff]
        %v6889 = vld [vmem:[%s6500 + $0x178] sm:$0xff]
        %v6890 = vld [vmem:[%s6500 + $0x180] sm:$0xff]
        %v6891 = vld [vmem:[%s6500 + $0x1a0] sm:$0xff]
        %v6892 = vld [vmem:[%s6500 + $0x1a8] sm:$0xff]
        %v6893 = vld [vmem:[%s6500 + $0x1c8] sm:$0xff]
        %v6894 = vld [vmem:[%s6500 + $0x1d0] sm:$0xff]
        %v6895 = vld [vmem:[%s6500 + $0x1f0] sm:$0xff]
        %v6896 = vld [vmem:[%s6500 + $0x1f8] sm:$0xff]
        %v6897 = vld [vmem:[%s6500 + $0x218] sm:$0xff]
        %v6898 = vld [vmem:[%s6500 + $0x220] sm:$0xff]
        %v6899 = vld [vmem:[%s6500 + $0x240] sm:$0xff]
        %v6900 = vld [vmem:[%s6500 + $0x248] sm:$0xff]
        %v6901 = vld [vmem:[%s6500 + $0x268] sm:$0xff]
        %v6902 = vld [vmem:[%s6500 + $0x270] sm:$0xff]
        %s6903 = scalar_lea.vmem [#allocation11], 896
        %v6904 = vld [vmem:[%s6903] sm:$0xff]
        %v6905 = vld [vmem:[%s6903 + $0x8] sm:$0xff]
        %v6906 = vld [vmem:[%s6903 + $0x10] sm:$0xff]
        %v6907 = vld [vmem:[%s6903 + $0x18] sm:$0xff]
        %v6908 = vld [vmem:[%s6903 + $0x20] sm:$0xff]
        %v6909 = vld [vmem:[%s6903 + $0x28] sm:$0xff]
        %v6910 = vld [vmem:[%s6903 + $0x30] sm:$0xff]
        %v6911 = vld [vmem:[%s6903 + $0x38] sm:$0xff]
        %v6912 = vld [vmem:[%s6903 + $0x40] sm:$0xff]
        %v6913 = vld [vmem:[%s6903 + $0x48] sm:$0xff]
        %v6914 = vld [vmem:[%s6903 + $0x50] sm:$0xff]
        %v6915 = vld [vmem:[%s6903 + $0x58] sm:$0xff]
        %v6916 = vld [vmem:[%s6903 + $0x60] sm:$0xff]
        %v6917 = vld [vmem:[%s6903 + $0x68] sm:$0xff]
        %v6918 = vld [vmem:[%s6903 + $0x70] sm:$0xff]
        %v6919 = vld [vmem:[%s6903 + $0x78] sm:$0xff]
        %6920 = vmatprep.subr.mxu0 0.0
        %6921 = vmatpush1.msra.mxu0 %v6919
        %6922 = vmatprep.subr.mxu0 0.0
        %6923 = vmatpush1.msra.mxu0 %v6918
        %6924 = vmatprep.subr.mxu0 0.0
        %6925 = vmatpush1.msra.mxu0 %v6917
        %6926 = vmatprep.subr.mxu0 0.0
        %6927 = vmatpush1.msra.mxu0 %v6916
        %6928 = vmatprep.subr.mxu0 0.0
        %6929 = vmatpush1.msra.mxu0 %v6915
        %6930 = vmatprep.subr.mxu0 0.0
        %6931 = vmatpush1.msra.mxu0 %v6914
        %6932 = vmatprep.subr.mxu0 0.0
        %6933 = vmatpush1.msra.mxu0 %v6913
        %6934 = vmatprep.subr.mxu0 0.0
        %6935 = vmatpush1.msra.mxu0 %v6912
        %6936 = vmatprep.subr.mxu0 0.0
        %6937 = vmatpush1.msra.mxu0 %v6911
        %6938 = vmatprep.subr.mxu0 0.0
        %6939 = vmatpush1.msra.mxu0 %v6910
        %6940 = vmatprep.subr.mxu0 0.0
        %6941 = vmatpush1.msra.mxu0 %v6909
        %6942 = vmatprep.subr.mxu0 0.0
        %6943 = vmatpush1.msra.mxu0 %v6908
        %6944 = vmatprep.subr.mxu0 0.0
        %6945 = vmatpush1.msra.mxu0 %v6907
        %6946 = vmatprep.subr.mxu0 0.0
        %6947 = vmatpush1.msra.mxu0 %v6906
        %6948 = vmatprep.subr.mxu0 0.0
        %6949 = vmatpush1.msra.mxu0 %v6905
        %6950 = vmatprep.subr.mxu0 0.0
        %6951 = vmatpush1.msra.mxu0 %v6904
        %6952 = vmatprep.subr.mxu0 0.0
        %6953 = vmatpush2.msra.mxu0 0.0
        %6954 = vmatprep.subr.mxu0 0.0
        %6955 = vmatpush2.msra.mxu0 0.0
        %6956 = vmatprep.subr.mxu0 0.0
        %6957 = vmatpush2.msra.mxu0 0.0
        %6958 = vmatprep.subr.mxu0 0.0
        %6959 = vmatpush2.msra.mxu0 0.0
        %6960 = vmatprep.subr.mxu0 0.0
        %6961 = vmatpush2.msra.mxu0 0.0
        %6962 = vmatprep.subr.mxu0 0.0
        %6963 = vmatpush2.msra.mxu0 0.0
        %6964 = vmatprep.subr.mxu0 0.0
        %6965 = vmatpush2.msra.mxu0 0.0
        %6966 = vmatprep.subr.mxu0 0.0
        %6967 = vmatpush2.msra.mxu0 0.0
        %6968 = vmatprep.subr.mxu0 0.0
        %6969 = vmatpush2.msra.mxu0 0.0
        %6970 = vmatprep.subr.mxu0 0.0
        %6971 = vmatpush2.msra.mxu0 0.0
        %6972 = vmatprep.subr.mxu0 0.0
        %6973 = vmatpush2.msra.mxu0 0.0
        %6974 = vmatprep.subr.mxu0 0.0
        %6975 = vmatpush2.msra.mxu0 0.0
        %6976 = vmatprep.subr.mxu0 0.0
        %6977 = vmatpush2.msra.mxu0 0.0
        %6978 = vmatprep.subr.mxu0 0.0
        %6979 = vmatpush2.msra.mxu0 0.0
        %6980 = vmatprep.subr.mxu0 0.0
        %6981 = vmatpush2.msra.mxu0 0.0
        %6982 = vmatprep.subr.mxu0 0.0
        %6983 = vmatpush2.msra.mxu0 0.0
        %6984 = vmatprep.mubr.f32.mxu0 0.0
        %6985 = vmatmul.mubr.f32.gmra.mxu0 %v6871
        %v6986 = vpop.f32.mrf.mxu0
        %v6987 = vadd.f32 0.0, %v6986
        %v6988 = vpop.f32.mrf.mxu0
        %6989 = vmatprep.mubr.f32.mxu0 0.0
        %6990 = vmatmul.mubr.f32.gmra.mxu0 %v6872
        %v6991 = vpop.f32.mrf.mxu0
        %v6992 = vadd.f32 0.0, %v6991
        %v6993 = vpop.f32.mrf.mxu0
        %6994 = vmatprep.mubr.f32.mxu0 0.0
        %6995 = vmatmul.mubr.f32.gmra.mxu0 %v6873
        %v6996 = vpop.f32.mrf.mxu0
        %v6997 = vadd.f32 0.0, %v6996
        %v6998 = vpop.f32.mrf.mxu0
        %6999 = vmatprep.mubr.f32.mxu0 0.0
        %7000 = vmatmul.mubr.f32.gmra.mxu0 %v6874
        %v7001 = vpop.f32.mrf.mxu0
        %v7002 = vadd.f32 0.0, %v7001
        %v7003 = vpop.f32.mrf.mxu0
        %7004 = vmatprep.mubr.f32.mxu0 0.0
        %7005 = vmatmul.mubr.f32.gmra.mxu0 %v6875
        %v7006 = vpop.f32.mrf.mxu0
        %v7007 = vadd.f32 0.0, %v7006
        %v7008 = vpop.f32.mrf.mxu0
        %7009 = vmatprep.mubr.f32.mxu0 0.0
        %7010 = vmatmul.mubr.f32.gmra.mxu0 %v6876
        %v7011 = vpop.f32.mrf.mxu0
        %v7012 = vadd.f32 0.0, %v7011
        %v7013 = vpop.f32.mrf.mxu0
        %7014 = vmatprep.mubr.f32.mxu0 0.0
        %7015 = vmatmul.mubr.f32.gmra.mxu0 %v6877
        %v7016 = vpop.f32.mrf.mxu0
        %v7017 = vadd.f32 0.0, %v7016
        %v7018 = vpop.f32.mrf.mxu0
        %7019 = vmatprep.mubr.f32.mxu0 0.0
        %7020 = vmatmul.mubr.f32.gmra.mxu0 %v6878
        %v7021 = vpop.f32.mrf.mxu0
        %v7022 = vadd.f32 0.0, %v7021
        %v7023 = vpop.f32.mrf.mxu0
        %7024 = vmatprep.mubr.f32.mxu0 0.0
        %7025 = vmatmul.mubr.f32.gmra.mxu0 %v6879
        %v7026 = vpop.f32.mrf.mxu0
        %v7027 = vadd.f32 0.0, %v7026
        %v7028 = vpop.f32.mrf.mxu0
        %7029 = vmatprep.mubr.f32.mxu0 0.0
        %7030 = vmatmul.mubr.f32.gmra.mxu0 %v6880
        %v7031 = vpop.f32.mrf.mxu0
        %v7032 = vadd.f32 0.0, %v7031
        %v7033 = vpop.f32.mrf.mxu0
        %7034 = vmatprep.mubr.f32.mxu0 0.0
        %7035 = vmatmul.mubr.f32.gmra.mxu0 %v6881
        %v7036 = vpop.f32.mrf.mxu0
        %v7037 = vadd.f32 0.0, %v7036
        %v7038 = vpop.f32.mrf.mxu0
        %7039 = vmatprep.mubr.f32.mxu0 0.0
        %7040 = vmatmul.mubr.f32.gmra.mxu0 %v6882
        %v7041 = vpop.f32.mrf.mxu0
        %v7042 = vadd.f32 0.0, %v7041
        %v7043 = vpop.f32.mrf.mxu0
        %7044 = vmatprep.mubr.f32.mxu0 0.0
        %7045 = vmatmul.mubr.f32.gmra.mxu0 %v6883
        %v7046 = vpop.f32.mrf.mxu0
        %v7047 = vadd.f32 0.0, %v7046
        %v7048 = vpop.f32.mrf.mxu0
        %7049 = vmatprep.mubr.f32.mxu0 0.0
        %7050 = vmatmul.mubr.f32.gmra.mxu0 %v6884
        %v7051 = vpop.f32.mrf.mxu0
        %v7052 = vadd.f32 0.0, %v7051
        %v7053 = vpop.f32.mrf.mxu0
        %7054 = vmatprep.mubr.f32.mxu0 0.0
        %7055 = vmatmul.mubr.f32.gmra.mxu0 %v6885
        %v7056 = vpop.f32.mrf.mxu0
        %v7057 = vadd.f32 0.0, %v7056
        %v7058 = vpop.f32.mrf.mxu0
        %7059 = vmatprep.mubr.f32.mxu0 0.0
        %7060 = vmatmul.mubr.f32.gmra.mxu0 %v6886
        %v7061 = vpop.f32.mrf.mxu0
        %v7062 = vadd.f32 0.0, %v7061
        %v7063 = vpop.f32.mrf.mxu0
        %7064 = vmatprep.mubr.f32.mxu0 0.0
        %7065 = vmatmul.mubr.f32.gmra.mxu0 %v6887
        %v7066 = vpop.f32.mrf.mxu0
        %v7067 = vadd.f32 0.0, %v7066
        %v7068 = vpop.f32.mrf.mxu0
        %7069 = vmatprep.mubr.f32.mxu0 0.0
        %7070 = vmatmul.mubr.f32.gmra.mxu0 %v6888
        %v7071 = vpop.f32.mrf.mxu0
        %v7072 = vadd.f32 0.0, %v7071
        %v7073 = vpop.f32.mrf.mxu0
        %7074 = vmatprep.mubr.f32.mxu0 0.0
        %7075 = vmatmul.mubr.f32.gmra.mxu0 %v6889
        %v7076 = vpop.f32.mrf.mxu0
        %v7077 = vadd.f32 0.0, %v7076
        %v7078 = vpop.f32.mrf.mxu0
        %7079 = vmatprep.mubr.f32.mxu0 0.0
        %7080 = vmatmul.mubr.f32.gmra.mxu0 %v6890
        %v7081 = vpop.f32.mrf.mxu0
        %v7082 = vadd.f32 0.0, %v7081
        %v7083 = vpop.f32.mrf.mxu0
        %7084 = vmatprep.mubr.f32.mxu0 0.0
        %7085 = vmatmul.mubr.f32.gmra.mxu0 %v6891
        %v7086 = vpop.f32.mrf.mxu0
        %v7087 = vadd.f32 0.0, %v7086
        %v7088 = vpop.f32.mrf.mxu0
        %7089 = vmatprep.mubr.f32.mxu0 0.0
        %7090 = vmatmul.mubr.f32.gmra.mxu0 %v6892
        %v7091 = vpop.f32.mrf.mxu0
        %v7092 = vadd.f32 0.0, %v7091
        %v7093 = vpop.f32.mrf.mxu0
        %7094 = vmatprep.mubr.f32.mxu0 0.0
        %7095 = vmatmul.mubr.f32.gmra.mxu0 %v6893
        %v7096 = vpop.f32.mrf.mxu0
        %v7097 = vadd.f32 0.0, %v7096
        %v7098 = vpop.f32.mrf.mxu0
        %7099 = vmatprep.mubr.f32.mxu0 0.0
        %7100 = vmatmul.mubr.f32.gmra.mxu0 %v6894
        %v7101 = vpop.f32.mrf.mxu0
        %v7102 = vadd.f32 0.0, %v7101
        %v7103 = vpop.f32.mrf.mxu0
        %7104 = vmatprep.mubr.f32.mxu0 0.0
        %7105 = vmatmul.mubr.f32.gmra.mxu0 %v6895
        %v7106 = vpop.f32.mrf.mxu0
        %v7107 = vadd.f32 0.0, %v7106
        %v7108 = vpop.f32.mrf.mxu0
        %7109 = vmatprep.mubr.f32.mxu0 0.0
        %7110 = vmatmul.mubr.f32.gmra.mxu0 %v6896
        %v7111 = vpop.f32.mrf.mxu0
        %v7112 = vadd.f32 0.0, %v7111
        %v7113 = vpop.f32.mrf.mxu0
        %7114 = vmatprep.mubr.f32.mxu0 0.0
        %7115 = vmatmul.mubr.f32.gmra.mxu0 %v6897
        %v7116 = vpop.f32.mrf.mxu0
        %v7117 = vadd.f32 0.0, %v7116
        %v7118 = vpop.f32.mrf.mxu0
        %7119 = vmatprep.mubr.f32.mxu0 0.0
        %7120 = vmatmul.mubr.f32.gmra.mxu0 %v6898
        %v7121 = vpop.f32.mrf.mxu0
        %v7122 = vadd.f32 0.0, %v7121
        %v7123 = vpop.f32.mrf.mxu0
        %7124 = vmatprep.mubr.f32.mxu0 0.0
        %7125 = vmatmul.mubr.f32.gmra.mxu0 %v6899
        %v7126 = vpop.f32.mrf.mxu0
        %v7127 = vadd.f32 0.0, %v7126
        %v7128 = vpop.f32.mrf.mxu0
        %7129 = vmatprep.mubr.f32.mxu0 0.0
        %7130 = vmatmul.mubr.f32.gmra.mxu0 %v6900
        %v7131 = vpop.f32.mrf.mxu0
        %v7132 = vadd.f32 0.0, %v7131
        %v7133 = vpop.f32.mrf.mxu0
        %7134 = vmatprep.mubr.f32.mxu0 0.0
        %7135 = vmatmul.mubr.f32.gmra.mxu0 %v6901
        %v7136 = vpop.f32.mrf.mxu0
        %v7137 = vadd.f32 0.0, %v7136
        %v7138 = vpop.f32.mrf.mxu0
        %7139 = vmatprep.mubr.f32.mxu0 0.0
        %7140 = vmatmul.mubr.f32.gmra.mxu0 %v6902
        %v7141 = vpop.f32.mrf.mxu0
        %v7142 = vadd.f32 0.0, %v7141
        %v7143 = vpop.f32.mrf.mxu0
        %7144 = vdwg.mxu0
        %v7145 = vld [vmem:[#allocation5] sm:$0xff]
        %v7146 = vld [vmem:[#allocation5 + $0x8] sm:$0xff]
        %v7147 = vld [vmem:[#allocation5 + $0x10] sm:$0xff]
        %v7148 = vld [vmem:[#allocation5 + $0x18] sm:$0xff]
        %v7149 = vld [vmem:[#allocation5 + $0x20] sm:$0xff]
        %v7150 = vld [vmem:[#allocation5 + $0x28] sm:$0xff]
        %v7151 = vld [vmem:[#allocation5 + $0x30] sm:$0xff]
        %v7152 = vld [vmem:[#allocation5 + $0x38] sm:$0xff]
        %v7153 = vld [vmem:[#allocation5 + $0x40] sm:$0xff]
        %v7154 = vld [vmem:[#allocation5 + $0x48] sm:$0xff]
        %v7155 = vld [vmem:[#allocation5 + $0x50] sm:$0xff]
        %v7156 = vld [vmem:[#allocation5 + $0x58] sm:$0xff]
        %v7157 = vld [vmem:[#allocation5 + $0x60] sm:$0xff]
        %v7158 = vld [vmem:[#allocation5 + $0x68] sm:$0xff]
        %v7159 = vld [vmem:[#allocation5 + $0x70] sm:$0xff]
        %v7160 = vld [vmem:[#allocation5 + $0x78] sm:$0xff]
        %v7161 = vld [vmem:[#allocation5 + $0x80] sm:$0xff]
        %v7162 = vld [vmem:[#allocation5 + $0x88] sm:$0xff]
        %v7163 = vld [vmem:[#allocation5 + $0x90] sm:$0xff]
        %v7164 = vld [vmem:[#allocation5 + $0x98] sm:$0xff]
        %v7165 = vld [vmem:[#allocation5 + $0xa0] sm:$0xff]
        %v7166 = vld [vmem:[#allocation5 + $0xa8] sm:$0xff]
        %v7167 = vld [vmem:[#allocation5 + $0xb0] sm:$0xff]
        %v7168 = vld [vmem:[#allocation5 + $0xb8] sm:$0xff]
        %v7169 = vld [vmem:[#allocation5 + $0xc0] sm:$0xff]
        %v7170 = vld [vmem:[#allocation5 + $0xc8] sm:$0xff]
        %v7171 = vld [vmem:[#allocation5 + $0xd0] sm:$0xff]
        %v7172 = vld [vmem:[#allocation5 + $0xd8] sm:$0xff]
        %v7173 = vld [vmem:[#allocation5 + $0xe0] sm:$0xff]
        %v7174 = vld [vmem:[#allocation5 + $0xe8] sm:$0xff]
        %v7175 = vld [vmem:[#allocation5 + $0xf0] sm:$0xff]
        %v7176 = vld [vmem:[#allocation5 + $0xf8] sm:$0xff]
        %v7177 = vadd.f32 %v7145, %v6987
        %v7178 = vadd.f32 %v7146, %v6992
        %v7179 = vadd.f32 %v7147, %v6997
        %v7180 = vadd.f32 %v7148, %v7002
        %v7181 = vadd.f32 %v7149, %v7007
        %v7182 = vadd.f32 %v7150, %v7012
        %v7183 = vadd.f32 %v7151, %v7017
        %v7184 = vadd.f32 %v7152, %v7022
        %v7185 = vadd.f32 %v7153, %v7027
        %v7186 = vadd.f32 %v7154, %v7032
        %v7187 = vadd.f32 %v7155, %v7037
        %v7188 = vadd.f32 %v7156, %v7042
        %v7189 = vadd.f32 %v7157, %v7047
        %v7190 = vadd.f32 %v7158, %v7052
        %v7191 = vadd.f32 %v7159, %v7057
        %v7192 = vadd.f32 %v7160, %v7062
        %v7193 = vadd.f32 %v7161, %v7067
        %v7194 = vadd.f32 %v7162, %v7072
        %v7195 = vadd.f32 %v7163, %v7077
        %v7196 = vadd.f32 %v7164, %v7082
        %v7197 = vadd.f32 %v7165, %v7087
        %v7198 = vadd.f32 %v7166, %v7092
        %v7199 = vadd.f32 %v7167, %v7097
        %v7200 = vadd.f32 %v7168, %v7102
        %v7201 = vadd.f32 %v7169, %v7107
        %v7202 = vadd.f32 %v7170, %v7112
        %v7203 = vadd.f32 %v7171, %v7117
        %v7204 = vadd.f32 %v7172, %v7122
        %v7205 = vadd.f32 %v7173, %v7127
        %v7206 = vadd.f32 %v7174, %v7132
        %v7207 = vadd.f32 %v7175, %v7137
        %v7208 = vadd.f32 %v7176, %v7142
        %7209 = vst [vmem:[#allocation5] sm:$0xff] %v7177
        %7210 = vst [vmem:[#allocation5 + $0x8] sm:$0xff] %v7178
        %7211 = vst [vmem:[#allocation5 + $0x10] sm:$0xff] %v7179
        %7212 = vst [vmem:[#allocation5 + $0x18] sm:$0xff] %v7180
        %7213 = vst [vmem:[#allocation5 + $0x20] sm:$0xff] %v7181
        %7214 = vst [vmem:[#allocation5 + $0x28] sm:$0xff] %v7182
        %7215 = vst [vmem:[#allocation5 + $0x30] sm:$0xff] %v7183
        %7216 = vst [vmem:[#allocation5 + $0x38] sm:$0xff] %v7184
        %7217 = vst [vmem:[#allocation5 + $0x40] sm:$0xff] %v7185
        %7218 = vst [vmem:[#allocation5 + $0x48] sm:$0xff] %v7186
        %7219 = vst [vmem:[#allocation5 + $0x50] sm:$0xff] %v7187
        %7220 = vst [vmem:[#allocation5 + $0x58] sm:$0xff] %v7188
        %7221 = vst [vmem:[#allocation5 + $0x60] sm:$0xff] %v7189
        %7222 = vst [vmem:[#allocation5 + $0x68] sm:$0xff] %v7190
        %7223 = vst [vmem:[#allocation5 + $0x70] sm:$0xff] %v7191
        %7224 = vst [vmem:[#allocation5 + $0x78] sm:$0xff] %v7192
        %7225 = vst [vmem:[#allocation5 + $0x80] sm:$0xff] %v7193
        %7226 = vst [vmem:[#allocation5 + $0x88] sm:$0xff] %v7194
        %7227 = vst [vmem:[#allocation5 + $0x90] sm:$0xff] %v7195
        %7228 = vst [vmem:[#allocation5 + $0x98] sm:$0xff] %v7196
        %7229 = vst [vmem:[#allocation5 + $0xa0] sm:$0xff] %v7197
        %7230 = vst [vmem:[#allocation5 + $0xa8] sm:$0xff] %v7198
        %7231 = vst [vmem:[#allocation5 + $0xb0] sm:$0xff] %v7199
        %7232 = vst [vmem:[#allocation5 + $0xb8] sm:$0xff] %v7200
        %7233 = vst [vmem:[#allocation5 + $0xc0] sm:$0xff] %v7201
        %7234 = vst [vmem:[#allocation5 + $0xc8] sm:$0xff] %v7202
        %7235 = vst [vmem:[#allocation5 + $0xd0] sm:$0xff] %v7203
        %7236 = vst [vmem:[#allocation5 + $0xd8] sm:$0xff] %v7204
        %7237 = vst [vmem:[#allocation5 + $0xe0] sm:$0xff] %v7205
        %7238 = vst [vmem:[#allocation5 + $0xe8] sm:$0xff] %v7206
        %7239 = vst [vmem:[#allocation5 + $0xf0] sm:$0xff] %v7207
        %7240 = vst [vmem:[#allocation5 + $0xf8] sm:$0xff] %v7208
        %v7241 = vld [vmem:[%s6500 + $0x11] sm:$0xff]
        %v7242 = vld [vmem:[%s6500 + $0x19] sm:$0xff]
        %v7243 = vld [vmem:[%s6500 + $0x39] sm:$0xff]
        %v7244 = vld [vmem:[%s6500 + $0x41] sm:$0xff]
        %v7245 = vld [vmem:[%s6500 + $0x61] sm:$0xff]
        %v7246 = vld [vmem:[%s6500 + $0x69] sm:$0xff]
        %v7247 = vld [vmem:[%s6500 + $0x89] sm:$0xff]
        %v7248 = vld [vmem:[%s6500 + $0x91] sm:$0xff]
        %v7249 = vld [vmem:[%s6500 + $0xb1] sm:$0xff]
        %v7250 = vld [vmem:[%s6500 + $0xb9] sm:$0xff]
        %v7251 = vld [vmem:[%s6500 + $0xd9] sm:$0xff]
        %v7252 = vld [vmem:[%s6500 + $0xe1] sm:$0xff]
        %v7253 = vld [vmem:[%s6500 + $0x101] sm:$0xff]
        %v7254 = vld [vmem:[%s6500 + $0x109] sm:$0xff]
        %v7255 = vld [vmem:[%s6500 + $0x129] sm:$0xff]
        %v7256 = vld [vmem:[%s6500 + $0x131] sm:$0xff]
        %v7257 = vld [vmem:[%s6500 + $0x151] sm:$0xff]
        %v7258 = vld [vmem:[%s6500 + $0x159] sm:$0xff]
        %v7259 = vld [vmem:[%s6500 + $0x179] sm:$0xff]
        %v7260 = vld [vmem:[%s6500 + $0x181] sm:$0xff]
        %v7261 = vld [vmem:[%s6500 + $0x1a1] sm:$0xff]
        %v7262 = vld [vmem:[%s6500 + $0x1a9] sm:$0xff]
        %v7263 = vld [vmem:[%s6500 + $0x1c9] sm:$0xff]
        %v7264 = vld [vmem:[%s6500 + $0x1d1] sm:$0xff]
        %v7265 = vld [vmem:[%s6500 + $0x1f1] sm:$0xff]
        %v7266 = vld [vmem:[%s6500 + $0x1f9] sm:$0xff]
        %v7267 = vld [vmem:[%s6500 + $0x219] sm:$0xff]
        %v7268 = vld [vmem:[%s6500 + $0x221] sm:$0xff]
        %v7269 = vld [vmem:[%s6500 + $0x241] sm:$0xff]
        %v7270 = vld [vmem:[%s6500 + $0x249] sm:$0xff]
        %v7271 = vld [vmem:[%s6500 + $0x269] sm:$0xff]
        %v7272 = vld [vmem:[%s6500 + $0x271] sm:$0xff]
        %s7273 = scalar_lea.vmem [#allocation11], 1024
        %v7274 = vld [vmem:[%s7273] sm:$0xff]
        %v7275 = vld [vmem:[%s7273 + $0x8] sm:$0xff]
        %v7276 = vld [vmem:[%s7273 + $0x10] sm:$0xff]
        %v7277 = vld [vmem:[%s7273 + $0x18] sm:$0xff]
        %v7278 = vld [vmem:[%s7273 + $0x20] sm:$0xff]
        %v7279 = vld [vmem:[%s7273 + $0x28] sm:$0xff]
        %v7280 = vld [vmem:[%s7273 + $0x30] sm:$0xff]
        %v7281 = vld [vmem:[%s7273 + $0x38] sm:$0xff]
        %v7282 = vld [vmem:[%s7273 + $0x40] sm:$0xff]
        %v7283 = vld [vmem:[%s7273 + $0x48] sm:$0xff]
        %v7284 = vld [vmem:[%s7273 + $0x50] sm:$0xff]
        %v7285 = vld [vmem:[%s7273 + $0x58] sm:$0xff]
        %v7286 = vld [vmem:[%s7273 + $0x60] sm:$0xff]
        %v7287 = vld [vmem:[%s7273 + $0x68] sm:$0xff]
        %v7288 = vld [vmem:[%s7273 + $0x70] sm:$0xff]
        %v7289 = vld [vmem:[%s7273 + $0x78] sm:$0xff]
        %7290 = vmatprep.subr.mxu0 0.0
        %7291 = vmatpush1.msra.mxu0 %v7289
        %7292 = vmatprep.subr.mxu0 0.0
        %7293 = vmatpush1.msra.mxu0 %v7288
        %7294 = vmatprep.subr.mxu0 0.0
        %7295 = vmatpush1.msra.mxu0 %v7287
        %7296 = vmatprep.subr.mxu0 0.0
        %7297 = vmatpush1.msra.mxu0 %v7286
        %7298 = vmatprep.subr.mxu0 0.0
        %7299 = vmatpush1.msra.mxu0 %v7285
        %7300 = vmatprep.subr.mxu0 0.0
        %7301 = vmatpush1.msra.mxu0 %v7284
        %7302 = vmatprep.subr.mxu0 0.0
        %7303 = vmatpush1.msra.mxu0 %v7283
        %7304 = vmatprep.subr.mxu0 0.0
        %7305 = vmatpush1.msra.mxu0 %v7282
        %7306 = vmatprep.subr.mxu0 0.0
        %7307 = vmatpush1.msra.mxu0 %v7281
        %7308 = vmatprep.subr.mxu0 0.0
        %7309 = vmatpush1.msra.mxu0 %v7280
        %7310 = vmatprep.subr.mxu0 0.0
        %7311 = vmatpush1.msra.mxu0 %v7279
        %7312 = vmatprep.subr.mxu0 0.0
        %7313 = vmatpush1.msra.mxu0 %v7278
        %7314 = vmatprep.subr.mxu0 0.0
        %7315 = vmatpush1.msra.mxu0 %v7277
        %7316 = vmatprep.subr.mxu0 0.0
        %7317 = vmatpush1.msra.mxu0 %v7276
        %7318 = vmatprep.subr.mxu0 0.0
        %7319 = vmatpush1.msra.mxu0 %v7275
        %7320 = vmatprep.subr.mxu0 0.0
        %7321 = vmatpush1.msra.mxu0 %v7274
        %7322 = vmatprep.subr.mxu0 0.0
        %7323 = vmatpush2.msra.mxu0 0.0
        %7324 = vmatprep.subr.mxu0 0.0
        %7325 = vmatpush2.msra.mxu0 0.0
        %7326 = vmatprep.subr.mxu0 0.0
        %7327 = vmatpush2.msra.mxu0 0.0
        %7328 = vmatprep.subr.mxu0 0.0
        %7329 = vmatpush2.msra.mxu0 0.0
        %7330 = vmatprep.subr.mxu0 0.0
        %7331 = vmatpush2.msra.mxu0 0.0
        %7332 = vmatprep.subr.mxu0 0.0
        %7333 = vmatpush2.msra.mxu0 0.0
        %7334 = vmatprep.subr.mxu0 0.0
        %7335 = vmatpush2.msra.mxu0 0.0
        %7336 = vmatprep.subr.mxu0 0.0
        %7337 = vmatpush2.msra.mxu0 0.0
        %7338 = vmatprep.subr.mxu0 0.0
        %7339 = vmatpush2.msra.mxu0 0.0
        %7340 = vmatprep.subr.mxu0 0.0
        %7341 = vmatpush2.msra.mxu0 0.0
        %7342 = vmatprep.subr.mxu0 0.0
        %7343 = vmatpush2.msra.mxu0 0.0
        %7344 = vmatprep.subr.mxu0 0.0
        %7345 = vmatpush2.msra.mxu0 0.0
        %7346 = vmatprep.subr.mxu0 0.0
        %7347 = vmatpush2.msra.mxu0 0.0
        %7348 = vmatprep.subr.mxu0 0.0
        %7349 = vmatpush2.msra.mxu0 0.0
        %7350 = vmatprep.subr.mxu0 0.0
        %7351 = vmatpush2.msra.mxu0 0.0
        %7352 = vmatprep.subr.mxu0 0.0
        %7353 = vmatpush2.msra.mxu0 0.0
        %7354 = vmatprep.mubr.f32.mxu0 0.0
        %7355 = vmatmul.mubr.f32.gmra.mxu0 %v7241
        %v7356 = vpop.f32.mrf.mxu0
        %v7357 = vadd.f32 0.0, %v7356
        %v7358 = vpop.f32.mrf.mxu0
        %7359 = vmatprep.mubr.f32.mxu0 0.0
        %7360 = vmatmul.mubr.f32.gmra.mxu0 %v7242
        %v7361 = vpop.f32.mrf.mxu0
        %v7362 = vadd.f32 0.0, %v7361
        %v7363 = vpop.f32.mrf.mxu0
        %7364 = vmatprep.mubr.f32.mxu0 0.0
        %7365 = vmatmul.mubr.f32.gmra.mxu0 %v7243
        %v7366 = vpop.f32.mrf.mxu0
        %v7367 = vadd.f32 0.0, %v7366
        %v7368 = vpop.f32.mrf.mxu0
        %7369 = vmatprep.mubr.f32.mxu0 0.0
        %7370 = vmatmul.mubr.f32.gmra.mxu0 %v7244
        %v7371 = vpop.f32.mrf.mxu0
        %v7372 = vadd.f32 0.0, %v7371
        %v7373 = vpop.f32.mrf.mxu0
        %7374 = vmatprep.mubr.f32.mxu0 0.0
        %7375 = vmatmul.mubr.f32.gmra.mxu0 %v7245
        %v7376 = vpop.f32.mrf.mxu0
        %v7377 = vadd.f32 0.0, %v7376
        %v7378 = vpop.f32.mrf.mxu0
        %7379 = vmatprep.mubr.f32.mxu0 0.0
        %7380 = vmatmul.mubr.f32.gmra.mxu0 %v7246
        %v7381 = vpop.f32.mrf.mxu0
        %v7382 = vadd.f32 0.0, %v7381
        %v7383 = vpop.f32.mrf.mxu0
        %7384 = vmatprep.mubr.f32.mxu0 0.0
        %7385 = vmatmul.mubr.f32.gmra.mxu0 %v7247
        %v7386 = vpop.f32.mrf.mxu0
        %v7387 = vadd.f32 0.0, %v7386
        %v7388 = vpop.f32.mrf.mxu0
        %7389 = vmatprep.mubr.f32.mxu0 0.0
        %7390 = vmatmul.mubr.f32.gmra.mxu0 %v7248
        %v7391 = vpop.f32.mrf.mxu0
        %v7392 = vadd.f32 0.0, %v7391
        %v7393 = vpop.f32.mrf.mxu0
        %7394 = vmatprep.mubr.f32.mxu0 0.0
        %7395 = vmatmul.mubr.f32.gmra.mxu0 %v7249
        %v7396 = vpop.f32.mrf.mxu0
        %v7397 = vadd.f32 0.0, %v7396
        %v7398 = vpop.f32.mrf.mxu0
        %7399 = vmatprep.mubr.f32.mxu0 0.0
        %7400 = vmatmul.mubr.f32.gmra.mxu0 %v7250
        %v7401 = vpop.f32.mrf.mxu0
        %v7402 = vadd.f32 0.0, %v7401
        %v7403 = vpop.f32.mrf.mxu0
        %7404 = vmatprep.mubr.f32.mxu0 0.0
        %7405 = vmatmul.mubr.f32.gmra.mxu0 %v7251
        %v7406 = vpop.f32.mrf.mxu0
        %v7407 = vadd.f32 0.0, %v7406
        %v7408 = vpop.f32.mrf.mxu0
        %7409 = vmatprep.mubr.f32.mxu0 0.0
        %7410 = vmatmul.mubr.f32.gmra.mxu0 %v7252
        %v7411 = vpop.f32.mrf.mxu0
        %v7412 = vadd.f32 0.0, %v7411
        %v7413 = vpop.f32.mrf.mxu0
        %7414 = vmatprep.mubr.f32.mxu0 0.0
        %7415 = vmatmul.mubr.f32.gmra.mxu0 %v7253
        %v7416 = vpop.f32.mrf.mxu0
        %v7417 = vadd.f32 0.0, %v7416
        %v7418 = vpop.f32.mrf.mxu0
        %7419 = vmatprep.mubr.f32.mxu0 0.0
        %7420 = vmatmul.mubr.f32.gmra.mxu0 %v7254
        %v7421 = vpop.f32.mrf.mxu0
        %v7422 = vadd.f32 0.0, %v7421
        %v7423 = vpop.f32.mrf.mxu0
        %7424 = vmatprep.mubr.f32.mxu0 0.0
        %7425 = vmatmul.mubr.f32.gmra.mxu0 %v7255
        %v7426 = vpop.f32.mrf.mxu0
        %v7427 = vadd.f32 0.0, %v7426
        %v7428 = vpop.f32.mrf.mxu0
        %7429 = vmatprep.mubr.f32.mxu0 0.0
        %7430 = vmatmul.mubr.f32.gmra.mxu0 %v7256
        %v7431 = vpop.f32.mrf.mxu0
        %v7432 = vadd.f32 0.0, %v7431
        %v7433 = vpop.f32.mrf.mxu0
        %7434 = vmatprep.mubr.f32.mxu0 0.0
        %7435 = vmatmul.mubr.f32.gmra.mxu0 %v7257
        %v7436 = vpop.f32.mrf.mxu0
        %v7437 = vadd.f32 0.0, %v7436
        %v7438 = vpop.f32.mrf.mxu0
        %7439 = vmatprep.mubr.f32.mxu0 0.0
        %7440 = vmatmul.mubr.f32.gmra.mxu0 %v7258
        %v7441 = vpop.f32.mrf.mxu0
        %v7442 = vadd.f32 0.0, %v7441
        %v7443 = vpop.f32.mrf.mxu0
        %7444 = vmatprep.mubr.f32.mxu0 0.0
        %7445 = vmatmul.mubr.f32.gmra.mxu0 %v7259
        %v7446 = vpop.f32.mrf.mxu0
        %v7447 = vadd.f32 0.0, %v7446
        %v7448 = vpop.f32.mrf.mxu0
        %7449 = vmatprep.mubr.f32.mxu0 0.0
        %7450 = vmatmul.mubr.f32.gmra.mxu0 %v7260
        %v7451 = vpop.f32.mrf.mxu0
        %v7452 = vadd.f32 0.0, %v7451
        %v7453 = vpop.f32.mrf.mxu0
        %7454 = vmatprep.mubr.f32.mxu0 0.0
        %7455 = vmatmul.mubr.f32.gmra.mxu0 %v7261
        %v7456 = vpop.f32.mrf.mxu0
        %v7457 = vadd.f32 0.0, %v7456
        %v7458 = vpop.f32.mrf.mxu0
        %7459 = vmatprep.mubr.f32.mxu0 0.0
        %7460 = vmatmul.mubr.f32.gmra.mxu0 %v7262
        %v7461 = vpop.f32.mrf.mxu0
        %v7462 = vadd.f32 0.0, %v7461
        %v7463 = vpop.f32.mrf.mxu0
        %7464 = vmatprep.mubr.f32.mxu0 0.0
        %7465 = vmatmul.mubr.f32.gmra.mxu0 %v7263
        %v7466 = vpop.f32.mrf.mxu0
        %v7467 = vadd.f32 0.0, %v7466
        %v7468 = vpop.f32.mrf.mxu0
        %7469 = vmatprep.mubr.f32.mxu0 0.0
        %7470 = vmatmul.mubr.f32.gmra.mxu0 %v7264
        %v7471 = vpop.f32.mrf.mxu0
        %v7472 = vadd.f32 0.0, %v7471
        %v7473 = vpop.f32.mrf.mxu0
        %7474 = vmatprep.mubr.f32.mxu0 0.0
        %7475 = vmatmul.mubr.f32.gmra.mxu0 %v7265
        %v7476 = vpop.f32.mrf.mxu0
        %v7477 = vadd.f32 0.0, %v7476
        %v7478 = vpop.f32.mrf.mxu0
        %7479 = vmatprep.mubr.f32.mxu0 0.0
        %7480 = vmatmul.mubr.f32.gmra.mxu0 %v7266
        %v7481 = vpop.f32.mrf.mxu0
        %v7482 = vadd.f32 0.0, %v7481
        %v7483 = vpop.f32.mrf.mxu0
        %7484 = vmatprep.mubr.f32.mxu0 0.0
        %7485 = vmatmul.mubr.f32.gmra.mxu0 %v7267
        %v7486 = vpop.f32.mrf.mxu0
        %v7487 = vadd.f32 0.0, %v7486
        %v7488 = vpop.f32.mrf.mxu0
        %7489 = vmatprep.mubr.f32.mxu0 0.0
        %7490 = vmatmul.mubr.f32.gmra.mxu0 %v7268
        %v7491 = vpop.f32.mrf.mxu0
        %v7492 = vadd.f32 0.0, %v7491
        %v7493 = vpop.f32.mrf.mxu0
        %7494 = vmatprep.mubr.f32.mxu0 0.0
        %7495 = vmatmul.mubr.f32.gmra.mxu0 %v7269
        %v7496 = vpop.f32.mrf.mxu0
        %v7497 = vadd.f32 0.0, %v7496
        %v7498 = vpop.f32.mrf.mxu0
        %7499 = vmatprep.mubr.f32.mxu0 0.0
        %7500 = vmatmul.mubr.f32.gmra.mxu0 %v7270
        %v7501 = vpop.f32.mrf.mxu0
        %v7502 = vadd.f32 0.0, %v7501
        %v7503 = vpop.f32.mrf.mxu0
        %7504 = vmatprep.mubr.f32.mxu0 0.0
        %7505 = vmatmul.mubr.f32.gmra.mxu0 %v7271
        %v7506 = vpop.f32.mrf.mxu0
        %v7507 = vadd.f32 0.0, %v7506
        %v7508 = vpop.f32.mrf.mxu0
        %7509 = vmatprep.mubr.f32.mxu0 0.0
        %7510 = vmatmul.mubr.f32.gmra.mxu0 %v7272
        %v7511 = vpop.f32.mrf.mxu0
        %v7512 = vadd.f32 0.0, %v7511
        %v7513 = vpop.f32.mrf.mxu0
        %7514 = vdwg.mxu0
        %v7515 = vld [vmem:[#allocation5] sm:$0xff]
        %v7516 = vld [vmem:[#allocation5 + $0x8] sm:$0xff]
        %v7517 = vld [vmem:[#allocation5 + $0x10] sm:$0xff]
        %v7518 = vld [vmem:[#allocation5 + $0x18] sm:$0xff]
        %v7519 = vld [vmem:[#allocation5 + $0x20] sm:$0xff]
        %v7520 = vld [vmem:[#allocation5 + $0x28] sm:$0xff]
        %v7521 = vld [vmem:[#allocation5 + $0x30] sm:$0xff]
        %v7522 = vld [vmem:[#allocation5 + $0x38] sm:$0xff]
        %v7523 = vld [vmem:[#allocation5 + $0x40] sm:$0xff]
        %v7524 = vld [vmem:[#allocation5 + $0x48] sm:$0xff]
        %v7525 = vld [vmem:[#allocation5 + $0x50] sm:$0xff]
        %v7526 = vld [vmem:[#allocation5 + $0x58] sm:$0xff]
        %v7527 = vld [vmem:[#allocation5 + $0x60] sm:$0xff]
        %v7528 = vld [vmem:[#allocation5 + $0x68] sm:$0xff]
        %v7529 = vld [vmem:[#allocation5 + $0x70] sm:$0xff]
        %v7530 = vld [vmem:[#allocation5 + $0x78] sm:$0xff]
        %v7531 = vld [vmem:[#allocation5 + $0x80] sm:$0xff]
        %v7532 = vld [vmem:[#allocation5 + $0x88] sm:$0xff]
        %v7533 = vld [vmem:[#allocation5 + $0x90] sm:$0xff]
        %v7534 = vld [vmem:[#allocation5 + $0x98] sm:$0xff]
        %v7535 = vld [vmem:[#allocation5 + $0xa0] sm:$0xff]
        %v7536 = vld [vmem:[#allocation5 + $0xa8] sm:$0xff]
        %v7537 = vld [vmem:[#allocation5 + $0xb0] sm:$0xff]
        %v7538 = vld [vmem:[#allocation5 + $0xb8] sm:$0xff]
        %v7539 = vld [vmem:[#allocation5 + $0xc0] sm:$0xff]
        %v7540 = vld [vmem:[#allocation5 + $0xc8] sm:$0xff]
        %v7541 = vld [vmem:[#allocation5 + $0xd0] sm:$0xff]
        %v7542 = vld [vmem:[#allocation5 + $0xd8] sm:$0xff]
        %v7543 = vld [vmem:[#allocation5 + $0xe0] sm:$0xff]
        %v7544 = vld [vmem:[#allocation5 + $0xe8] sm:$0xff]
        %v7545 = vld [vmem:[#allocation5 + $0xf0] sm:$0xff]
        %v7546 = vld [vmem:[#allocation5 + $0xf8] sm:$0xff]
        %v7547 = vadd.f32 %v7515, %v7357
        %v7548 = vadd.f32 %v7516, %v7362
        %v7549 = vadd.f32 %v7517, %v7367
        %v7550 = vadd.f32 %v7518, %v7372
        %v7551 = vadd.f32 %v7519, %v7377
        %v7552 = vadd.f32 %v7520, %v7382
        %v7553 = vadd.f32 %v7521, %v7387
        %v7554 = vadd.f32 %v7522, %v7392
        %v7555 = vadd.f32 %v7523, %v7397
        %v7556 = vadd.f32 %v7524, %v7402
        %v7557 = vadd.f32 %v7525, %v7407
        %v7558 = vadd.f32 %v7526, %v7412
        %v7559 = vadd.f32 %v7527, %v7417
        %v7560 = vadd.f32 %v7528, %v7422
        %v7561 = vadd.f32 %v7529, %v7427
        %v7562 = vadd.f32 %v7530, %v7432
        %v7563 = vadd.f32 %v7531, %v7437
        %v7564 = vadd.f32 %v7532, %v7442
        %v7565 = vadd.f32 %v7533, %v7447
        %v7566 = vadd.f32 %v7534, %v7452
        %v7567 = vadd.f32 %v7535, %v7457
        %v7568 = vadd.f32 %v7536, %v7462
        %v7569 = vadd.f32 %v7537, %v7467
        %v7570 = vadd.f32 %v7538, %v7472
        %v7571 = vadd.f32 %v7539, %v7477
        %v7572 = vadd.f32 %v7540, %v7482
        %v7573 = vadd.f32 %v7541, %v7487
        %v7574 = vadd.f32 %v7542, %v7492
        %v7575 = vadd.f32 %v7543, %v7497
        %v7576 = vadd.f32 %v7544, %v7502
        %v7577 = vadd.f32 %v7545, %v7507
        %v7578 = vadd.f32 %v7546, %v7512
        %7579 = vst [vmem:[#allocation5] sm:$0xff] %v7547
        %7580 = vst [vmem:[#allocation5 + $0x8] sm:$0xff] %v7548
        %7581 = vst [vmem:[#allocation5 + $0x10] sm:$0xff] %v7549
        %7582 = vst [vmem:[#allocation5 + $0x18] sm:$0xff] %v7550
        %7583 = vst [vmem:[#allocation5 + $0x20] sm:$0xff] %v7551
        %7584 = vst [vmem:[#allocation5 + $0x28] sm:$0xff] %v7552
        %7585 = vst [vmem:[#allocation5 + $0x30] sm:$0xff] %v7553
        %7586 = vst [vmem:[#allocation5 + $0x38] sm:$0xff] %v7554
        %7587 = vst [vmem:[#allocation5 + $0x40] sm:$0xff] %v7555
        %7588 = vst [vmem:[#allocation5 + $0x48] sm:$0xff] %v7556
        %7589 = vst [vmem:[#allocation5 + $0x50] sm:$0xff] %v7557
        %7590 = vst [vmem:[#allocation5 + $0x58] sm:$0xff] %v7558
        %7591 = vst [vmem:[#allocation5 + $0x60] sm:$0xff] %v7559
        %7592 = vst [vmem:[#allocation5 + $0x68] sm:$0xff] %v7560
        %7593 = vst [vmem:[#allocation5 + $0x70] sm:$0xff] %v7561
        %7594 = vst [vmem:[#allocation5 + $0x78] sm:$0xff] %v7562
        %7595 = vst [vmem:[#allocation5 + $0x80] sm:$0xff] %v7563
        %7596 = vst [vmem:[#allocation5 + $0x88] sm:$0xff] %v7564
        %7597 = vst [vmem:[#allocation5 + $0x90] sm:$0xff] %v7565
        %7598 = vst [vmem:[#allocation5 + $0x98] sm:$0xff] %v7566
        %7599 = vst [vmem:[#allocation5 + $0xa0] sm:$0xff] %v7567
        %7600 = vst [vmem:[#allocation5 + $0xa8] sm:$0xff] %v7568
        %7601 = vst [vmem:[#allocation5 + $0xb0] sm:$0xff] %v7569
        %7602 = vst [vmem:[#allocation5 + $0xb8] sm:$0xff] %v7570
        %7603 = vst [vmem:[#allocation5 + $0xc0] sm:$0xff] %v7571
        %7604 = vst [vmem:[#allocation5 + $0xc8] sm:$0xff] %v7572
        %7605 = vst [vmem:[#allocation5 + $0xd0] sm:$0xff] %v7573
        %7606 = vst [vmem:[#allocation5 + $0xd8] sm:$0xff] %v7574
        %7607 = vst [vmem:[#allocation5 + $0xe0] sm:$0xff] %v7575
        %7608 = vst [vmem:[#allocation5 + $0xe8] sm:$0xff] %v7576
        %7609 = vst [vmem:[#allocation5 + $0xf0] sm:$0xff] %v7577
        %7610 = vst [vmem:[#allocation5 + $0xf8] sm:$0xff] %v7578
        %v7611 = vld [vmem:[#allocation5] sm:$0xff]
        %v7612 = vld [vmem:[#allocation5 + $0x8] sm:$0xff]
        %v7613 = vld [vmem:[#allocation5 + $0x10] sm:$0xff]
        %v7614 = vld [vmem:[#allocation5 + $0x18] sm:$0xff]
        %v7615 = vld [vmem:[#allocation5 + $0x20] sm:$0xff]
        %v7616 = vld [vmem:[#allocation5 + $0x28] sm:$0xff]
        %v7617 = vld [vmem:[#allocation5 + $0x30] sm:$0xff]
        %v7618 = vld [vmem:[#allocation5 + $0x38] sm:$0xff]
        %v7619 = vld [vmem:[#allocation5 + $0x40] sm:$0xff]
        %v7620 = vld [vmem:[#allocation5 + $0x48] sm:$0xff]
        %v7621 = vld [vmem:[#allocation5 + $0x50] sm:$0xff]
        %v7622 = vld [vmem:[#allocation5 + $0x58] sm:$0xff]
        %v7623 = vld [vmem:[#allocation5 + $0x60] sm:$0xff]
        %v7624 = vld [vmem:[#allocation5 + $0x68] sm:$0xff]
        %v7625 = vld [vmem:[#allocation5 + $0x70] sm:$0xff]
        %v7626 = vld [vmem:[#allocation5 + $0x78] sm:$0xff]
        %v7627 = vld [vmem:[#allocation5 + $0x80] sm:$0xff]
        %v7628 = vld [vmem:[#allocation5 + $0x88] sm:$0xff]
        %v7629 = vld [vmem:[#allocation5 + $0x90] sm:$0xff]
        %v7630 = vld [vmem:[#allocation5 + $0x98] sm:$0xff]
        %v7631 = vld [vmem:[#allocation5 + $0xa0] sm:$0xff]
        %v7632 = vld [vmem:[#allocation5 + $0xa8] sm:$0xff]
        %v7633 = vld [vmem:[#allocation5 + $0xb0] sm:$0xff]
        %v7634 = vld [vmem:[#allocation5 + $0xb8] sm:$0xff]
        %v7635 = vld [vmem:[#allocation5 + $0xc0] sm:$0xff]
        %v7636 = vld [vmem:[#allocation5 + $0xc8] sm:$0xff]
        %v7637 = vld [vmem:[#allocation5 + $0xd0] sm:$0xff]
        %v7638 = vld [vmem:[#allocation5 + $0xd8] sm:$0xff]
        %v7639 = vld [vmem:[#allocation5 + $0xe0] sm:$0xff]
        %v7640 = vld [vmem:[#allocation5 + $0xe8] sm:$0xff]
        %v7641 = vld [vmem:[#allocation5 + $0xf0] sm:$0xff]
        %v7642 = vld [vmem:[#allocation5 + $0xf8] sm:$0xff]
        %v7643 = vld [vmem:[%s501] sm:$0x1]
        %v7645 = vlaneseq
        %v7646 = vshrl.u32 %v7645, 7
        %v7647 = vsub.s32 0, %v7646
        %v7648 = vrot.slane %v7643, %v7647
        %v7650 = vadd.f32 %v7611, %v7648
        %v7651 = vadd.f32 %v7612, %v7648
        %v7652 = vadd.f32 %v7613, %v7648
        %v7653 = vadd.f32 %v7614, %v7648
        %v7654 = vadd.f32 %v7615, %v7648
        %v7655 = vadd.f32 %v7616, %v7648
        %v7656 = vadd.f32 %v7617, %v7648
        %v7657 = vadd.f32 %v7618, %v7648
        %v7658 = vadd.f32 %v7619, %v7648
        %v7659 = vadd.f32 %v7620, %v7648
        %v7660 = vadd.f32 %v7621, %v7648
        %v7661 = vadd.f32 %v7622, %v7648
        %v7662 = vadd.f32 %v7623, %v7648
        %v7663 = vadd.f32 %v7624, %v7648
        %v7664 = vadd.f32 %v7625, %v7648
        %v7665 = vadd.f32 %v7626, %v7648
        %v7666 = vadd.f32 %v7627, %v7648
        %v7667 = vadd.f32 %v7628, %v7648
        %v7668 = vadd.f32 %v7629, %v7648
        %v7669 = vadd.f32 %v7630, %v7648
        %v7670 = vadd.f32 %v7631, %v7648
        %v7671 = vadd.f32 %v7632, %v7648
        %v7672 = vadd.f32 %v7633, %v7648
        %v7673 = vadd.f32 %v7634, %v7648
        %v7674 = vadd.f32 %v7635, %v7648
        %v7675 = vadd.f32 %v7636, %v7648
        %v7676 = vadd.f32 %v7637, %v7648
        %v7677 = vadd.f32 %v7638, %v7648
        %v7678 = vadd.f32 %v7639, %v7648
        %v7679 = vadd.f32 %v7640, %v7648
        %v7680 = vadd.f32 %v7641, %v7648
        %v7681 = vadd.f32 %v7642, %v7648
        %v7682 = vld [vmem:[%s442] sm:$0xff]
        %v7683 = vld [vmem:[%s442 + $0x8] sm:$0xff]
        %v7684 = vld [vmem:[%s442 + $0x10] sm:$0xff]
        %v7685 = vld [vmem:[%s442 + $0x18] sm:$0xff]
        %v7686 = vld [vmem:[%s442 + $0x20] sm:$0xff]
        %v7687 = vld [vmem:[%s442 + $0x28] sm:$0xff]
        %v7688 = vld [vmem:[%s442 + $0x30] sm:$0xff]
        %v7689 = vld [vmem:[%s442 + $0x38] sm:$0xff]
        %v7690 = vld [vmem:[%s442 + $0x40] sm:$0xff]
        %v7691 = vld [vmem:[%s442 + $0x48] sm:$0xff]
        %v7692 = vld [vmem:[%s442 + $0x50] sm:$0xff]
        %v7693 = vld [vmem:[%s442 + $0x58] sm:$0xff]
        %v7694 = vld [vmem:[%s442 + $0x60] sm:$0xff]
        %v7695 = vld [vmem:[%s442 + $0x68] sm:$0xff]
        %v7696 = vld [vmem:[%s442 + $0x70] sm:$0xff]
        %v7697 = vld [vmem:[%s442 + $0x78] sm:$0xff]
        %v7698 = vld [vmem:[%s442 + $0x80] sm:$0xff]
        %v7699 = vld [vmem:[%s442 + $0x88] sm:$0xff]
        %v7700 = vld [vmem:[%s442 + $0x90] sm:$0xff]
        %v7701 = vld [vmem:[%s442 + $0x98] sm:$0xff]
        %v7702 = vld [vmem:[%s442 + $0xa0] sm:$0xff]
        %v7703 = vld [vmem:[%s442 + $0xa8] sm:$0xff]
        %v7704 = vld [vmem:[%s442 + $0xb0] sm:$0xff]
        %v7705 = vld [vmem:[%s442 + $0xb8] sm:$0xff]
        %v7706 = vld [vmem:[%s442 + $0xc0] sm:$0xff]
        %v7707 = vld [vmem:[%s442 + $0xc8] sm:$0xff]
        %v7708 = vld [vmem:[%s442 + $0xd0] sm:$0xff]
        %v7709 = vld [vmem:[%s442 + $0xd8] sm:$0xff]
        %v7710 = vld [vmem:[%s442 + $0xe0] sm:$0xff]
        %v7711 = vld [vmem:[%s442 + $0xe8] sm:$0xff]
        %v7712 = vld [vmem:[%s442 + $0xf0] sm:$0xff]
        %v7713 = vld [vmem:[%s442 + $0xf8] sm:$0xff]
        %v7714 = vld [vmem:[#allocation12] sm:$0xff]
        %v7715 = vld [vmem:[#allocation12 + $0x8] sm:$0xff]
        %v7716 = vld [vmem:[#allocation12 + $0x10] sm:$0xff]
        %v7717 = vld [vmem:[#allocation12 + $0x18] sm:$0xff]
        %v7718 = vld [vmem:[#allocation12 + $0x20] sm:$0xff]
        %v7719 = vld [vmem:[#allocation12 + $0x28] sm:$0xff]
        %v7720 = vld [vmem:[#allocation12 + $0x30] sm:$0xff]
        %v7721 = vld [vmem:[#allocation12 + $0x38] sm:$0xff]
        %v7722 = vld [vmem:[#allocation12 + $0x40] sm:$0xff]
        %v7723 = vld [vmem:[#allocation12 + $0x48] sm:$0xff]
        %v7724 = vld [vmem:[#allocation12 + $0x50] sm:$0xff]
        %v7725 = vld [vmem:[#allocation12 + $0x58] sm:$0xff]
        %v7726 = vld [vmem:[#allocation12 + $0x60] sm:$0xff]
        %v7727 = vld [vmem:[#allocation12 + $0x68] sm:$0xff]
        %v7728 = vld [vmem:[#allocation12 + $0x70] sm:$0xff]
        %v7729 = vld [vmem:[#allocation12 + $0x78] sm:$0xff]
        %v7730 = vld [vmem:[%s504] sm:$0x1]
        %v7732 = vlaneseq
        %v7733 = vshrl.u32 %v7732, 7
        %v7734 = vsub.s32 0, %v7733
        %v7735 = vrot.slane %v7730, %v7734
        %7737 = vmatprep.subr.mxu0 0.0
        %7738 = vmatpush1.msra.mxu0 %v7729
        %7739 = vmatprep.subr.mxu0 0.0
        %7740 = vmatpush1.msra.mxu0 %v7728
        %7741 = vmatprep.subr.mxu0 0.0
        %7742 = vmatpush1.msra.mxu0 %v7727
        %7743 = vmatprep.subr.mxu0 0.0
        %7744 = vmatpush1.msra.mxu0 %v7726
        %7745 = vmatprep.subr.mxu0 0.0
        %7746 = vmatpush1.msra.mxu0 %v7725
        %7747 = vmatprep.subr.mxu0 0.0
        %7748 = vmatpush1.msra.mxu0 %v7724
        %7749 = vmatprep.subr.mxu0 0.0
        %7750 = vmatpush1.msra.mxu0 %v7723
        %7751 = vmatprep.subr.mxu0 0.0
        %7752 = vmatpush1.msra.mxu0 %v7722
        %7753 = vmatprep.subr.mxu0 0.0
        %7754 = vmatpush1.msra.mxu0 %v7721
        %7755 = vmatprep.subr.mxu0 0.0
        %7756 = vmatpush1.msra.mxu0 %v7720
        %7757 = vmatprep.subr.mxu0 0.0
        %7758 = vmatpush1.msra.mxu0 %v7719
        %7759 = vmatprep.subr.mxu0 0.0
        %7760 = vmatpush1.msra.mxu0 %v7718
        %7761 = vmatprep.subr.mxu0 0.0
        %7762 = vmatpush1.msra.mxu0 %v7717
        %7763 = vmatprep.subr.mxu0 0.0
        %7764 = vmatpush1.msra.mxu0 %v7716
        %7765 = vmatprep.subr.mxu0 0.0
        %7766 = vmatpush1.msra.mxu0 %v7715
        %7767 = vmatprep.subr.mxu0 0.0
        %7768 = vmatpush1.msra.mxu0 %v7714
        %7769 = vmatprep.subr.mxu0 0.0
        %7770 = vmatpush2.msra.mxu0 0.0
        %7771 = vmatprep.subr.mxu0 0.0
        %7772 = vmatpush2.msra.mxu0 0.0
        %7773 = vmatprep.subr.mxu0 0.0
        %7774 = vmatpush2.msra.mxu0 0.0
        %7775 = vmatprep.subr.mxu0 0.0
        %7776 = vmatpush2.msra.mxu0 0.0
        %7777 = vmatprep.subr.mxu0 0.0
        %7778 = vmatpush2.msra.mxu0 0.0
        %7779 = vmatprep.subr.mxu0 0.0
        %7780 = vmatpush2.msra.mxu0 0.0
        %7781 = vmatprep.subr.mxu0 0.0
        %7782 = vmatpush2.msra.mxu0 0.0
        %7783 = vmatprep.subr.mxu0 0.0
        %7784 = vmatpush2.msra.mxu0 0.0
        %7785 = vmatprep.subr.mxu0 0.0
        %7786 = vmatpush2.msra.mxu0 0.0
        %7787 = vmatprep.subr.mxu0 0.0
        %7788 = vmatpush2.msra.mxu0 0.0
        %7789 = vmatprep.subr.mxu0 0.0
        %7790 = vmatpush2.msra.mxu0 0.0
        %7791 = vmatprep.subr.mxu0 0.0
        %7792 = vmatpush2.msra.mxu0 0.0
        %7793 = vmatprep.subr.mxu0 0.0
        %7794 = vmatpush2.msra.mxu0 0.0
        %7795 = vmatprep.subr.mxu0 0.0
        %7796 = vmatpush2.msra.mxu0 0.0
        %7797 = vmatprep.subr.mxu0 0.0
        %7798 = vmatpush2.msra.mxu0 0.0
        %7799 = vmatprep.subr.mxu0 0.0
        %7800 = vmatpush2.msra.mxu0 0.0
        %7801 = vmatprep.mubr.f32.mxu0 0.0
        %7802 = vmatmul.mubr.f32.gmra.mxu0 %v7682
        %v7803 = vpop.f32.mrf.mxu0
        %v7804 = vadd.f32 %v7735, %v7803
        %v7805 = vpop.f32.mrf.mxu0
        %7806 = vmatprep.mubr.f32.mxu0 0.0
        %7807 = vmatmul.mubr.f32.gmra.mxu0 %v7683
        %v7808 = vpop.f32.mrf.mxu0
        %v7809 = vadd.f32 %v7735, %v7808
        %v7810 = vpop.f32.mrf.mxu0
        %7811 = vmatprep.mubr.f32.mxu0 0.0
        %7812 = vmatmul.mubr.f32.gmra.mxu0 %v7684
        %v7813 = vpop.f32.mrf.mxu0
        %v7814 = vadd.f32 %v7735, %v7813
        %v7815 = vpop.f32.mrf.mxu0
        %7816 = vmatprep.mubr.f32.mxu0 0.0
        %7817 = vmatmul.mubr.f32.gmra.mxu0 %v7685
        %v7818 = vpop.f32.mrf.mxu0
        %v7819 = vadd.f32 %v7735, %v7818
        %v7820 = vpop.f32.mrf.mxu0
        %7821 = vmatprep.mubr.f32.mxu0 0.0
        %7822 = vmatmul.mubr.f32.gmra.mxu0 %v7686
        %v7823 = vpop.f32.mrf.mxu0
        %v7824 = vadd.f32 %v7735, %v7823
        %v7825 = vpop.f32.mrf.mxu0
        %7826 = vmatprep.mubr.f32.mxu0 0.0
        %7827 = vmatmul.mubr.f32.gmra.mxu0 %v7687
        %v7828 = vpop.f32.mrf.mxu0
        %v7829 = vadd.f32 %v7735, %v7828
        %v7830 = vpop.f32.mrf.mxu0
        %7831 = vmatprep.mubr.f32.mxu0 0.0
        %7832 = vmatmul.mubr.f32.gmra.mxu0 %v7688
        %v7833 = vpop.f32.mrf.mxu0
        %v7834 = vadd.f32 %v7735, %v7833
        %v7835 = vpop.f32.mrf.mxu0
        %7836 = vmatprep.mubr.f32.mxu0 0.0
        %7837 = vmatmul.mubr.f32.gmra.mxu0 %v7689
        %v7838 = vpop.f32.mrf.mxu0
        %v7839 = vadd.f32 %v7735, %v7838
        %v7840 = vpop.f32.mrf.mxu0
        %7841 = vmatprep.mubr.f32.mxu0 0.0
        %7842 = vmatmul.mubr.f32.gmra.mxu0 %v7690
        %v7843 = vpop.f32.mrf.mxu0
        %v7844 = vadd.f32 %v7735, %v7843
        %v7845 = vpop.f32.mrf.mxu0
        %7846 = vmatprep.mubr.f32.mxu0 0.0
        %7847 = vmatmul.mubr.f32.gmra.mxu0 %v7691
        %v7848 = vpop.f32.mrf.mxu0
        %v7849 = vadd.f32 %v7735, %v7848
        %v7850 = vpop.f32.mrf.mxu0
        %7851 = vmatprep.mubr.f32.mxu0 0.0
        %7852 = vmatmul.mubr.f32.gmra.mxu0 %v7692
        %v7853 = vpop.f32.mrf.mxu0
        %v7854 = vadd.f32 %v7735, %v7853
        %v7855 = vpop.f32.mrf.mxu0
        %7856 = vmatprep.mubr.f32.mxu0 0.0
        %7857 = vmatmul.mubr.f32.gmra.mxu0 %v7693
        %v7858 = vpop.f32.mrf.mxu0
        %v7859 = vadd.f32 %v7735, %v7858
        %v7860 = vpop.f32.mrf.mxu0
        %7861 = vmatprep.mubr.f32.mxu0 0.0
        %7862 = vmatmul.mubr.f32.gmra.mxu0 %v7694
        %v7863 = vpop.f32.mrf.mxu0
        %v7864 = vadd.f32 %v7735, %v7863
        %v7865 = vpop.f32.mrf.mxu0
        %7866 = vmatprep.mubr.f32.mxu0 0.0
        %7867 = vmatmul.mubr.f32.gmra.mxu0 %v7695
        %v7868 = vpop.f32.mrf.mxu0
        %v7869 = vadd.f32 %v7735, %v7868
        %v7870 = vpop.f32.mrf.mxu0
        %7871 = vmatprep.mubr.f32.mxu0 0.0
        %7872 = vmatmul.mubr.f32.gmra.mxu0 %v7696
        %v7873 = vpop.f32.mrf.mxu0
        %v7874 = vadd.f32 %v7735, %v7873
        %v7875 = vpop.f32.mrf.mxu0
        %7876 = vmatprep.mubr.f32.mxu0 0.0
        %7877 = vmatmul.mubr.f32.gmra.mxu0 %v7697
        %v7878 = vpop.f32.mrf.mxu0
        %v7879 = vadd.f32 %v7735, %v7878
        %v7880 = vpop.f32.mrf.mxu0
        %7881 = vmatprep.mubr.f32.mxu0 0.0
        %7882 = vmatmul.mubr.f32.gmra.mxu0 %v7698
        %v7883 = vpop.f32.mrf.mxu0
        %v7884 = vadd.f32 %v7735, %v7883
        %v7885 = vpop.f32.mrf.mxu0
        %7886 = vmatprep.mubr.f32.mxu0 0.0
        %7887 = vmatmul.mubr.f32.gmra.mxu0 %v7699
        %v7888 = vpop.f32.mrf.mxu0
        %v7889 = vadd.f32 %v7735, %v7888
        %v7890 = vpop.f32.mrf.mxu0
        %7891 = vmatprep.mubr.f32.mxu0 0.0
        %7892 = vmatmul.mubr.f32.gmra.mxu0 %v7700
        %v7893 = vpop.f32.mrf.mxu0
        %v7894 = vadd.f32 %v7735, %v7893
        %v7895 = vpop.f32.mrf.mxu0
        %7896 = vmatprep.mubr.f32.mxu0 0.0
        %7897 = vmatmul.mubr.f32.gmra.mxu0 %v7701
        %v7898 = vpop.f32.mrf.mxu0
        %v7899 = vadd.f32 %v7735, %v7898
        %v7900 = vpop.f32.mrf.mxu0
        %7901 = vmatprep.mubr.f32.mxu0 0.0
        %7902 = vmatmul.mubr.f32.gmra.mxu0 %v7702
        %v7903 = vpop.f32.mrf.mxu0
        %v7904 = vadd.f32 %v7735, %v7903
        %v7905 = vpop.f32.mrf.mxu0
        %7906 = vmatprep.mubr.f32.mxu0 0.0
        %7907 = vmatmul.mubr.f32.gmra.mxu0 %v7703
        %v7908 = vpop.f32.mrf.mxu0
        %v7909 = vadd.f32 %v7735, %v7908
        %v7910 = vpop.f32.mrf.mxu0
        %7911 = vmatprep.mubr.f32.mxu0 0.0
        %7912 = vmatmul.mubr.f32.gmra.mxu0 %v7704
        %v7913 = vpop.f32.mrf.mxu0
        %v7914 = vadd.f32 %v7735, %v7913
        %v7915 = vpop.f32.mrf.mxu0
        %7916 = vmatprep.mubr.f32.mxu0 0.0
        %7917 = vmatmul.mubr.f32.gmra.mxu0 %v7705
        %v7918 = vpop.f32.mrf.mxu0
        %v7919 = vadd.f32 %v7735, %v7918
        %v7920 = vpop.f32.mrf.mxu0
        %7921 = vmatprep.mubr.f32.mxu0 0.0
        %7922 = vmatmul.mubr.f32.gmra.mxu0 %v7706
        %v7923 = vpop.f32.mrf.mxu0
        %v7924 = vadd.f32 %v7735, %v7923
        %v7925 = vpop.f32.mrf.mxu0
        %7926 = vmatprep.mubr.f32.mxu0 0.0
        %7927 = vmatmul.mubr.f32.gmra.mxu0 %v7707
        %v7928 = vpop.f32.mrf.mxu0
        %v7929 = vadd.f32 %v7735, %v7928
        %v7930 = vpop.f32.mrf.mxu0
        %7931 = vmatprep.mubr.f32.mxu0 0.0
        %7932 = vmatmul.mubr.f32.gmra.mxu0 %v7708
        %v7933 = vpop.f32.mrf.mxu0
        %v7934 = vadd.f32 %v7735, %v7933
        %v7935 = vpop.f32.mrf.mxu0
        %7936 = vmatprep.mubr.f32.mxu0 0.0
        %7937 = vmatmul.mubr.f32.gmra.mxu0 %v7709
        %v7938 = vpop.f32.mrf.mxu0
        %v7939 = vadd.f32 %v7735, %v7938
        %v7940 = vpop.f32.mrf.mxu0
        %7941 = vmatprep.mubr.f32.mxu0 0.0
        %7942 = vmatmul.mubr.f32.gmra.mxu0 %v7710
        %v7943 = vpop.f32.mrf.mxu0
        %v7944 = vadd.f32 %v7735, %v7943
        %v7945 = vpop.f32.mrf.mxu0
        %7946 = vmatprep.mubr.f32.mxu0 0.0
        %7947 = vmatmul.mubr.f32.gmra.mxu0 %v7711
        %v7948 = vpop.f32.mrf.mxu0
        %v7949 = vadd.f32 %v7735, %v7948
        %v7950 = vpop.f32.mrf.mxu0
        %7951 = vmatprep.mubr.f32.mxu0 0.0
        %7952 = vmatmul.mubr.f32.gmra.mxu0 %v7712
        %v7953 = vpop.f32.mrf.mxu0
        %v7954 = vadd.f32 %v7735, %v7953
        %v7955 = vpop.f32.mrf.mxu0
        %7956 = vmatprep.mubr.f32.mxu0 0.0
        %7957 = vmatmul.mubr.f32.gmra.mxu0 %v7713
        %v7958 = vpop.f32.mrf.mxu0
        %v7959 = vadd.f32 %v7735, %v7958
        %v7960 = vpop.f32.mrf.mxu0
        %7961 = vdwg.mxu0
        %v7962 = vadd.f32 %v7650, %v7804
        %v7963 = vadd.f32 %v7651, %v7809
        %v7964 = vadd.f32 %v7652, %v7814
        %v7965 = vadd.f32 %v7653, %v7819
        %v7966 = vadd.f32 %v7654, %v7824
        %v7967 = vadd.f32 %v7655, %v7829
        %v7968 = vadd.f32 %v7656, %v7834
        %v7969 = vadd.f32 %v7657, %v7839
        %v7970 = vadd.f32 %v7658, %v7844
        %v7971 = vadd.f32 %v7659, %v7849
        %v7972 = vadd.f32 %v7660, %v7854
        %v7973 = vadd.f32 %v7661, %v7859
        %v7974 = vadd.f32 %v7662, %v7864
        %v7975 = vadd.f32 %v7663, %v7869
        %v7976 = vadd.f32 %v7664, %v7874
        %v7977 = vadd.f32 %v7665, %v7879
        %v7978 = vadd.f32 %v7666, %v7884
        %v7979 = vadd.f32 %v7667, %v7889
        %v7980 = vadd.f32 %v7668, %v7894
        %v7981 = vadd.f32 %v7669, %v7899
        %v7982 = vadd.f32 %v7670, %v7904
        %v7983 = vadd.f32 %v7671, %v7909
        %v7984 = vadd.f32 %v7672, %v7914
        %v7985 = vadd.f32 %v7673, %v7919
        %v7986 = vadd.f32 %v7674, %v7924
        %v7987 = vadd.f32 %v7675, %v7929
        %v7988 = vadd.f32 %v7676, %v7934
        %v7989 = vadd.f32 %v7677, %v7939
        %v7990 = vadd.f32 %v7678, %v7944
        %v7991 = vadd.f32 %v7679, %v7949
        %v7992 = vadd.f32 %v7680, %v7954
        %v7993 = vadd.f32 %v7681, %v7959
        %7994 = vst [vmem:[%s498] sm:$0xff] %v7962
        %7995 = vst [vmem:[%s498 + $0x8] sm:$0xff] %v7963
        %7996 = vst [vmem:[%s498 + $0x10] sm:$0xff] %v7964
        %7997 = vst [vmem:[%s498 + $0x18] sm:$0xff] %v7965
        %7998 = vst [vmem:[%s498 + $0x20] sm:$0xff] %v7966
        %7999 = vst [vmem:[%s498 + $0x28] sm:$0xff] %v7967
        %8000 = vst [vmem:[%s498 + $0x30] sm:$0xff] %v7968
        %8001 = vst [vmem:[%s498 + $0x38] sm:$0xff] %v7969
        %8002 = vst [vmem:[%s498 + $0x40] sm:$0xff] %v7970
        %8003 = vst [vmem:[%s498 + $0x48] sm:$0xff] %v7971
        %8004 = vst [vmem:[%s498 + $0x50] sm:$0xff] %v7972
        %8005 = vst [vmem:[%s498 + $0x58] sm:$0xff] %v7973
        %8006 = vst [vmem:[%s498 + $0x60] sm:$0xff] %v7974
        %8007 = vst [vmem:[%s498 + $0x68] sm:$0xff] %v7975
        %8008 = vst [vmem:[%s498 + $0x70] sm:$0xff] %v7976
        %8009 = vst [vmem:[%s498 + $0x78] sm:$0xff] %v7977
        %8010 = vst [vmem:[%s498 + $0x80] sm:$0xff] %v7978
        %8011 = vst [vmem:[%s498 + $0x88] sm:$0xff] %v7979
        %8012 = vst [vmem:[%s498 + $0x90] sm:$0xff] %v7980
        %8013 = vst [vmem:[%s498 + $0x98] sm:$0xff] %v7981
        %8014 = vst [vmem:[%s498 + $0xa0] sm:$0xff] %v7982
        %8015 = vst [vmem:[%s498 + $0xa8] sm:$0xff] %v7983
        %8016 = vst [vmem:[%s498 + $0xb0] sm:$0xff] %v7984
        %8017 = vst [vmem:[%s498 + $0xb8] sm:$0xff] %v7985
        %8018 = vst [vmem:[%s498 + $0xc0] sm:$0xff] %v7986
        %8019 = vst [vmem:[%s498 + $0xc8] sm:$0xff] %v7987
        %8020 = vst [vmem:[%s498 + $0xd0] sm:$0xff] %v7988
        %8021 = vst [vmem:[%s498 + $0xd8] sm:$0xff] %v7989
        %8022 = vst [vmem:[%s498 + $0xe0] sm:$0xff] %v7990
        %8023 = vst [vmem:[%s498 + $0xe8] sm:$0xff] %v7991
        %8024 = vst [vmem:[%s498 + $0xf0] sm:$0xff] %v7992
        %8025 = vst [vmem:[%s498 + $0xf8] sm:$0xff] %v7993
        %s8026 = sand.u32 %s308, 1
        %s8027 = scalar_lea.sflag [#allocation8], %s8026
        %s8028 = sand.u32 %s308, 1
        %s8029 = smul.addr %s8028, 256
        %s8030 = scalar_lea.vmem [#allocation14], %s8029
        // Predicated region
        $region85: #{tpu_custom_call.1} parent=63 // pred_check
          %p8031 = pneg %p318
        $region86: #{tpu_custom_call.1} parent=63 // pred_check_branch
          %8033 = sbr.rel (%p8031) target = $region88
        $region87: #{tpu_custom_call.1} parent=63 // pred_region
          %s8035 = ssub.s32 4096, 4096
          %8036 = vsyncadd %s8027, %s8035
          %s8037 = smul.addr %s34, 32
          %s8038 = sadd.s32 %s35, %s8037
          %s8039 = smul.addr %s8038, 128
          %s8040 = scalar_lea.hbm %s11, %s8039
          %s8041 = sshll.u32 %s8030, 4
          %s8042 = int_to_ptr.vmem [resolvable:$true] %s8041
          %8047 = dma.vmem_to_hbm [thread:$0]  %s8042, 4096, %s8040, %s8027, 128, 128, 8
        $region88: #{tpu_custom_call.1} parent=63 // pred_fallthru
          _
      $region64: #{tpu_custom_call.1} parent=5 // pred_fallthru
        _
      %p8048 = scmp.le.s32.totalorder 2, %s25
      // Predicated region
      $region89: #{tpu_custom_call.1} parent=5 // pred_check
        %p8049 = pneg %p8048
      $region90: #{tpu_custom_call.1} parent=5 // pred_check_branch
        %8051 = sbr.rel (%p8049) target = $region92
      $region91: #{tpu_custom_call.1} parent=5 // pred_region
        %s8052 = ssub.s32 %s25, 2
        // Predicated region
        $region93: #{tpu_custom_call.1} parent=91 // pred_check
          %p8053 = pneg %p324
        $region94: #{tpu_custom_call.1} parent=91 // pred_check_branch
          %8055 = sbr.rel (%p8053) target = $region96
        $region95: #{tpu_custom_call.1} parent=91 // pred_region
          %s8056 = sand.u32 %s309, 1
          %s8057 = scalar_lea.sflag [#allocation8], %s8056
          %s8058 = sand.u32 %s309, 1
          %s8059 = smul.addr %s8058, 256
          %s8060 = scalar_lea.vmem [#allocation14], %s8059
          %8061 = dma.done %s8057, 4096
        $region96: #{tpu_custom_call.1} parent=91 // pred_fallthru
          _
      $region92: #{tpu_custom_call.1} parent=5 // pred_fallthru
        _
    $region6: #{tpu_custom_call.1} parent=1 // loop_footer
      %s29 = sadd.s32 1, %s25
    $region7: #{tpu_custom_call.1} parent=1 // loop_footer_branch
      %24 = sbr.rel target = $region3
    $region8: #{tpu_custom_call.1} parent=1 // loop_exit
      _
    %8062 = vsyncpa [#allocation7], 1
    %s8063 = scalar_lea.sflag [#allocation7], 1
    %8064 = vsyncpa %s8063, 1
    %8065 = vsyncpa [#allocation10], 1
    %8066 = vsyncpa [#allocation13], 1
    %8067 = vsyncpa [#allocation8], 1
    %s8068 = scalar_lea.sflag [#allocation8], 1
    %8069 = vsyncpa %s8068, 1

</llo_original>
